<compile_context>
chip_gen: v7x
topology: tpu7x:2x2x1
jax: 0.10.0
libtpu: 0.0.40
codegen_flags: <defaults>
</compile_context>

<pallas_src>
import jax
import jax.numpy as jnp
import numpy as np
from jax import lax
from jax.experimental import pallas as pl
from jax.experimental.pallas import tpu as pltpu


def _round_up(x, m):
    return ((x + m - 1) // m) * m


# ---------------------------------------------------------------------------
# Pallas kernel factory: tap-accumulated (25-tap ASPP + fuse conv) matmul +
# channel log-softmax / softmax(5x) epilogue.  Layout: channels on sublanes,
# flattened padded spatial positions on lanes.
# ---------------------------------------------------------------------------
def _make_aspp_softmax_kernel(tap_offsets, tile_s, cin):
    def kernel(x_cur_ref, x_halo_ref, w_ref, b_ref, gan_ref, l1_ref):
        f32 = jnp.float32
        # Window covering this tile plus its (small) halo block.
        win = jnp.concatenate([x_cur_ref[...], x_halo_ref[...]], axis=-1)  # (Cin, tile_s+halo_pad)
        w = w_ref[...]                                                     # (Cout, 25*Cin)

        # Tap-accumulated matmul: 25 skinny dots summed into one f32
        # accumulator — nothing of size (25*Cin, tile_s) ever hits VMEM.
        acc = None
        for i, off in enumerate(tap_offsets):        # static offsets, trace-unrolled
            xi = win[:, off:off + tile_s]            # (Cin, tile_s), static slice
            d = jnp.dot(w[:, i * cin:(i + 1) * cin], xi, preferred_element_type=f32)
            acc = d if acc is None else acc + d
        y = acc + b_ref[...]                         # (Cout, tile_s) + (Cout, 1)

        # t = log_softmax(y) over channels (axis 0 = sublanes).
        m = jnp.max(y, axis=0, keepdims=True)
        s = y - m
        e = jnp.exp(s)
        sum_e = jnp.sum(e, axis=0, keepdims=True)
        t = s - jnp.log(sum_e)

        # L1 = log_softmax(log_softmax(y)) == log_softmax(y) exactly.
        l1_ref[...] = t.astype(l1_ref.dtype)

        # GAN = Softmax2d(5*t) == softmax(5*s) (max_c(5*t) = -5*lse cancels),
        # and max_c(5*s) = 0, so reuse exp(s): e^5 = exp(5*s).  Exact divide.
        e2 = e * e
        e5 = e2 * e2 * e
        gan_ref[...] = (e5 / jnp.sum(e5, axis=0, keepdims=True)).astype(gan_ref.dtype)

    return kernel


# ---------------------------------------------------------------------------
# Host-side algebra: fold the 1x1 fuse conv and all biases into 25 effective
# per-tap weights (Cout, Cin) and one effective bias (Cout, 1).
# ---------------------------------------------------------------------------
def _build_fused_taps(params, Wp, pad):
    Cout = params["w_fuse"].shape[0]
    wf = params["w_fuse"][:, :, 0, 0]                          # (Cout, 4*Cout)
    wf_k = [wf[:, k * Cout:(k + 1) * Cout] for k in range(4)]  # per-branch fuse slices

    # Branch 0: 1x1 conv -> tap (0, 0).
    tap_w = {(0, 0): wf_k[0] @ params["w_conv0"][:, :, 0, 0]}
    # Branches 1..3: 3x3 convs with dilation 2k (center taps merge into (0,0)).
    for k in (1, 2, 3):
        d = 2 * k
        wk = params[f"w_conv{k}"]                              # (Cout, Cin, 3, 3)
        for ky in range(3):
            for kx in range(3):
                dy, dx = d * (ky - 1), d * (kx - 1)
                eff = wf_k[k] @ wk[:, :, ky, kx]               # (Cout, Cin)
                tap_w[(dy, dx)] = tap_w.get((dy, dx), 0.0) + eff

    b_eff = params["b_fuse"] + sum(wf_k[k] @ params[f"b_conv{k}"] for k in range(4))

    keys = sorted(tap_w, key=lambda p: (p[0] + pad) * Wp + (p[1] + pad))
    tap_offsets = tuple(int((dy + pad) * Wp + (dx + pad)) for dy, dx in keys)
    w_all = jnp.concatenate([tap_w[key] for key in keys], axis=1)       # (Cout, 25*Cin)
    b_col = jnp.asarray(b_eff, jnp.float32).reshape(Cout, 1)
    return tap_offsets, jnp.asarray(w_all, jnp.float32), b_col


# ---------------------------------------------------------------------------
# Parameter init (deterministic; matches PyTorch parameter shapes.  The module
# initializes ASPP weights with normal(0, 0.01)).
# ---------------------------------------------------------------------------
def init_params(key, inner_nc, outer_nc):
    ks = jax.random.split(key, 10)
    p = {}
    p["w_conv0"] = 0.01 * jax.random.normal(ks[0], (outer_nc, inner_nc, 1, 1), jnp.float32)
    p["b_conv0"] = 0.02 * jax.random.normal(ks[1], (outer_nc,), jnp.float32)
    for n in range(1, 4):
        p[f"w_conv{n}"] = 0.01 * jax.random.normal(
            ks[2 * n], (outer_nc, inner_nc, 3, 3), jnp.float32)
        p[f"b_conv{n}"] = 0.02 * jax.random.normal(ks[2 * n + 1], (outer_nc,), jnp.float32)
    p["w_fuse"] = 0.01 * jax.random.normal(ks[8], (outer_nc, 4 * outer_nc, 1, 1), jnp.float32)
    p["b_fuse"] = 0.02 * jax.random.normal(ks[9], (outer_nc,), jnp.float32)
    return p


# ---------------------------------------------------------------------------
# Wrapper: UnetSkipConnectionBlock.forward for depth == -2.
# ---------------------------------------------------------------------------
def unet_block_depth_m2(x_nchw, params, tile_target=1024,
                        stream_dtype=jnp.float32,
                        vmem_limit_bytes=48 * 1024 * 1024):
    N, Cin, H, W = x_nchw.shape
    Cout = params["w_fuse"].shape[0]
    PAD = 6                                  # max dilation of the 3x3 branches
    Hp, Wp = H + 2 * PAD, W + 2 * PAD
    halo = 2 * PAD * Wp + 2 * PAD            # largest tap offset (12*Wp + 12)
    halo_pad = _round_up(halo, 128)          # lane-aligned halo block width
    # tile_s: >= tile_target and a multiple of halo_pad (hence of 128).
    # Sweep 1024..4096 on v5e/v6e; on v7x keep it modest (64 MiB VMEM) and
    # keep N*num_tiles >= a few so both TensorCores get balanced work.
    tile_s = _round_up(max(tile_target, halo_pad), halo_pad)

    tap_offsets, w_all, b_col = _build_fused_taps(params, Wp, PAD)
    K = w_all.shape[1]                       # 25 * Cin

    # Zero-pad spatially by 6, flatten spatial, pad the flat axis so the halo
    # block past the last tile exists.  Output slot q = h*Wp + w.
    S_valid = H * Wp
    num_tiles = -(-S_valid // tile_s)
    S_out = num_tiles * tile_s
    S_in = (num_tiles + 1) * tile_s          # multiple of both tile_s and halo_pad
    xp = jnp.pad(x_nchw.astype(stream_dtype),
                 ((0, 0), (0, 0), (PAD, PAD), (PAD, PAD)))
    xf = xp.reshape(N, Cin, Hp * Wp)
    xf = jnp.pad(xf, ((0, 0), (0, 0), (0, S_in - Hp * Wp)))

    kernel = _make_aspp_softmax_kernel(tap_offsets, tile_s, Cin)

    x_cur_spec = pl.BlockSpec((None, Cin, tile_s), lambda n, q: (n, 0, q))
    # Halo input: only halo_pad lanes re-read per tile (not a full duplicate
    # tile) -> input HBM traffic ~(1 + halo_pad/tile_s)x instead of 2x.
    x_halo_spec = pl.BlockSpec(
        (None, Cin, halo_pad),
        lambda n, q: (n, 0, (q + 1) * (tile_s // halo_pad)))
    # Resident weight/bias blocks (constant index_map).  On realistic Cin/Cout,
    # pipeline_mode=pl.Buffered(1) would single-buffer them for extra VMEM headroom.
    w_spec = pl.BlockSpec((Cout, K), lambda n, q: (0, 0))
    b_spec = pl.BlockSpec((Cout, 1), lambda n, q: (0, 0))
    o_spec = pl.BlockSpec((None, Cout, tile_s), lambda n, q: (n, 0, q))

    gan_f, l1_f = pl.pallas_call(
        kernel,
        out_shape=(jax.ShapeDtypeStruct((N, Cout, S_out), jnp.float32),
                   jax.ShapeDtypeStruct((N, Cout, S_out), jnp.float32)),
        grid_spec=pltpu.PrefetchScalarGridSpec(
            num_scalar_prefetch=0,
            grid=(N, num_tiles),
            in_specs=[x_cur_spec, x_halo_spec, w_spec, b_spec],
            out_specs=[o_spec, o_spec],
        ),
        compiler_params=pltpu.CompilerParams(
            dimension_semantics=("parallel", "parallel"),
            vmem_limit_bytes=vmem_limit_bytes,
        ),
    )(xf, xf, w_all.astype(stream_dtype), b_col)

    def unflatten(y):
        return y[:, :, :S_valid].reshape(N, Cout, H, Wp)[:, :, :, :W]

    return {"GAN": unflatten(gan_f), "L1": unflatten(l1_f)}


# ---------------------------------------------------------------------------
# Pure-JAX reference (semantics of the PyTorch forward) for validation.
# ---------------------------------------------------------------------------
def ref_forward(x, params):
    def conv(inp, w, b, d):
        y = lax.conv_general_dilated(
            inp, w, window_strides=(1, 1),
            padding=((d, d), (d, d)),
            rhs_dilation=(max(d, 1), max(d, 1)),
            dimension_numbers=("NCHW", "OIHW", "NCHW"))
        return y + b[None, :, None, None]

    o0 = conv(x, params["w_conv0"], params["b_conv0"], 0)
    o1 = conv(x, params["w_conv1"], params["b_conv1"], 2)
    o2 = conv(x, params["w_conv2"], params["b_conv2"], 4)
    o3 = conv(x, params["w_conv3"], params["b_conv3"], 6)
    cat = jnp.concatenate([o0, o1, o2, o3], axis=1)
    y = conv(cat, params["w_fuse"], params["b_fuse"], 0)
    t = jax.nn.log_softmax(y, axis=1)
    return {"GAN": jax.nn.softmax(5.0 * t, axis=1),
            "L1": jax.nn.log_softmax(t, axis=1)}


if __name__ == "__main__":
    key = jax.random.PRNGKey(0)
    kx, kp = jax.random.split(key)

    # Small shapes: batch=2, inner_nc=8 (input channels), outer_nc=8, 16x16.
    N, inner_nc, outer_nc, H, W = 2, 8, 8, 16, 16
    x = jax.random.normal(kx, (N, inner_nc, H, W), jnp.float32)
    params = init_params(kp, inner_nc, outer_nc)

    out = unet_block_depth_m2(x, params)
    jax.block_until_ready(out)

    ref = ref_forward(x, params)
    # f32 streaming + exact divide in the softmax -> tight tolerances on both.
    np.testing.assert_allclose(np.asarray(out["L1"]), np.asarray(ref["L1"]),
                               rtol=1e-5, atol=1e-5)
    np.testing.assert_allclose(np.asarray(out["GAN"]), np.asarray(ref["GAN"]),
                               rtol=1e-5, atol=1e-5)
    print("KERNEL_OK")
</pallas_src>

<mosaic_0001>
module attributes {stable_mosaic.version = 11 : i64} {
  func.func @kernel(%arg0: i32, %arg1: i32, %arg2: memref<1x8x1152xf32, #tpu.memory_space<vmem>>, %arg3: memref<1x8x384xf32, #tpu.memory_space<vmem>>, %arg4: memref<8x200xf32, #tpu.memory_space<vmem>>, %arg5: memref<8x1xf32, #tpu.memory_space<vmem>>, %arg6: memref<1x8x1152xf32, #tpu.memory_space<vmem>>, %arg7: memref<1x8x1152xf32, #tpu.memory_space<vmem>>) attributes {dimension_semantics = [#tpu.dimension_semantics<parallel>, #tpu.dimension_semantics<parallel>], iteration_bounds = array<i64: 2, 1>, scalar_prefetch = 0 : i64, scratch_operands = 0 : i64, tpu.core_type = #tpu.core_type<tc>, window_params = [{transform_indices = @transform_0, window_bounds = array<i64: 1, 8, 1152>}, {transform_indices = @transform_1, window_bounds = array<i64: 1, 8, 384>}, {pipeline_mode = #tpu.pipeline_mode<synchronous>, transform_indices = @transform_2, window_bounds = array<i64: 8, 200>}, {pipeline_mode = #tpu.pipeline_mode<synchronous>, transform_indices = @transform_3, window_bounds = array<i64: 8, 1>}, {transform_indices = @transform_4, window_bounds = array<i64: 1, 8, 1152>}, {transform_indices = @transform_5, window_bounds = array<i64: 1, 8, 1152>}]} {
    %c0 = arith.constant 0 : index
    %c0_0 = arith.constant 0 : index
    %c0_1 = arith.constant 0 : index
    %0 = vector.load %arg2[%c0, %c0_0, %c0_1] : memref<1x8x1152xf32, #tpu.memory_space<vmem>>, vector<1x8x1152xf32>
    %1 = vector.shape_cast %0 : vector<1x8x1152xf32> to vector<8x1152xf32>
    %c0_2 = arith.constant 0 : index
    %c0_3 = arith.constant 0 : index
    %c0_4 = arith.constant 0 : index
    %2 = vector.load %arg3[%c0_2, %c0_3, %c0_4] : memref<1x8x384xf32, #tpu.memory_space<vmem>>, vector<1x8x384xf32>
    %3 = vector.shape_cast %2 : vector<1x8x384xf32> to vector<8x384xf32>
    %4 = tpu.concatenate %1, %3 in 1 : vector<8x1152xf32>, vector<8x384xf32> -> vector<8x1536xf32>
    %c0_5 = arith.constant 0 : index
    %c0_6 = arith.constant 0 : index
    %5 = vector.load %arg4[%c0_5, %c0_6] : memref<8x200xf32, #tpu.memory_space<vmem>>, vector<8x200xf32>
    %6 = vector.extract_strided_slice %4 {offsets = [0, 0], sizes = [8, 1152], strides = [1, 1]} : vector<8x1536xf32> to vector<8x1152xf32>
    %7 = vector.extract_strided_slice %5 {offsets = [0, 0], sizes = [8, 8], strides = [1, 1]} : vector<8x200xf32> to vector<8x8xf32>
    %cst = arith.constant dense<0.000000e+00> : vector<8x1152xf32>
    %8 = tpu.matmul %7, %6, %cst {dimension_numbers = #tpu.dot_dimension_numbers<[1], [0], [0], [1], [0, 0, 1, 1], [], []>} : vector<8x8xf32>, vector<8x1152xf32>, vector<8x1152xf32> -> vector<8x1152xf32>
    %9 = vector.extract_strided_slice %4 {offsets = [0, 6], sizes = [8, 1152], strides = [1, 1]} : vector<8x1536xf32> to vector<8x1152xf32>
    %10 = vector.extract_strided_slice %5 {offsets = [0, 8], sizes = [8, 8], strides = [1, 1]} : vector<8x200xf32> to vector<8x8xf32>
    %cst_7 = arith.constant dense<0.000000e+00> : vector<8x1152xf32>
    %11 = tpu.matmul %10, %9, %cst_7 {dimension_numbers = #tpu.dot_dimension_numbers<[1], [0], [0], [1], [0, 0, 1, 1], [], []>} : vector<8x8xf32>, vector<8x1152xf32>, vector<8x1152xf32> -> vector<8x1152xf32>
    %12 = arith.addf %8, %11 : vector<8x1152xf32>
    %13 = vector.extract_strided_slice %4 {offsets = [0, 12], sizes = [8, 1152], strides = [1, 1]} : vector<8x1536xf32> to vector<8x1152xf32>
    %14 = vector.extract_strided_slice %5 {offsets = [0, 16], sizes = [8, 8], strides = [1, 1]} : vector<8x200xf32> to vector<8x8xf32>
    %cst_8 = arith.constant dense<0.000000e+00> : vector<8x1152xf32>
    %15 = tpu.matmul %14, %13, %cst_8 {dimension_numbers = #tpu.dot_dimension_numbers<[1], [0], [0], [1], [0, 0, 1, 1], [], []>} : vector<8x8xf32>, vector<8x1152xf32>, vector<8x1152xf32> -> vector<8x1152xf32>
    %16 = arith.addf %12, %15 : vector<8x1152xf32>
    %17 = vector.extract_strided_slice %4 {offsets = [0, 58], sizes = [8, 1152], strides = [1, 1]} : vector<8x1536xf32> to vector<8x1152xf32>
    %18 = vector.extract_strided_slice %5 {offsets = [0, 24], sizes = [8, 8], strides = [1, 1]} : vector<8x200xf32> to vector<8x8xf32>
    %cst_9 = arith.constant dense<0.000000e+00> : vector<8x1152xf32>
    %19 = tpu.matmul %18, %17, %cst_9 {dimension_numbers = #tpu.dot_dimension_numbers<[1], [0], [0], [1], [0, 0, 1, 1], [], []>} : vector<8x8xf32>, vector<8x1152xf32>, vector<8x1152xf32> -> vector<8x1152xf32>
    %20 = arith.addf %16, %19 : vector<8x1152xf32>
    %21 = vector.extract_strided_slice %4 {offsets = [0, 62], sizes = [8, 1152], strides = [1, 1]} : vector<8x1536xf32> to vector<8x1152xf32>
    %22 = vector.extract_strided_slice %5 {offsets = [0, 32], sizes = [8, 8], strides = [1, 1]} : vector<8x200xf32> to vector<8x8xf32>
    %cst_10 = arith.constant dense<0.000000e+00> : vector<8x1152xf32>
    %23 = tpu.matmul %22, %21, %cst_10 {dimension_numbers = #tpu.dot_dimension_numbers<[1], [0], [0], [1], [0, 0, 1, 1], [], []>} : vector<8x8xf32>, vector<8x1152xf32>, vector<8x1152xf32> -> vector<8x1152xf32>
    %24 = arith.addf %20, %23 : vector<8x1152xf32>
    %25 = vector.extract_strided_slice %4 {offsets = [0, 66], sizes = [8, 1152], strides = [1, 1]} : vector<8x1536xf32> to vector<8x1152xf32>
    %26 = vector.extract_strided_slice %5 {offsets = [0, 40], sizes = [8, 8], strides = [1, 1]} : vector<8x200xf32> to vector<8x8xf32>
    %cst_11 = arith.constant dense<0.000000e+00> : vector<8x1152xf32>
    %27 = tpu.matmul %26, %25, %cst_11 {dimension_numbers = #tpu.dot_dimension_numbers<[1], [0], [0], [1], [0, 0, 1, 1], [], []>} : vector<8x8xf32>, vector<8x1152xf32>, vector<8x1152xf32> -> vector<8x1152xf32>
    %28 = arith.addf %24, %27 : vector<8x1152xf32>
    %29 = vector.extract_strided_slice %4 {offsets = [0, 116], sizes = [8, 1152], strides = [1, 1]} : vector<8x1536xf32> to vector<8x1152xf32>
    %30 = vector.extract_strided_slice %5 {offsets = [0, 48], sizes = [8, 8], strides = [1, 1]} : vector<8x200xf32> to vector<8x8xf32>
    %cst_12 = arith.constant dense<0.000000e+00> : vector<8x1152xf32>
    %31 = tpu.matmul %30, %29, %cst_12 {dimension_numbers = #tpu.dot_dimension_numbers<[1], [0], [0], [1], [0, 0, 1, 1], [], []>} : vector<8x8xf32>, vector<8x1152xf32>, vector<8x1152xf32> -> vector<8x1152xf32>
    %32 = arith.addf %28, %31 : vector<8x1152xf32>
    %33 = vector.extract_strided_slice %4 {offsets = [0, 118], sizes = [8, 1152], strides = [1, 1]} : vector<8x1536xf32> to vector<8x1152xf32>
    %34 = vector.extract_strided_slice %5 {offsets = [0, 56], sizes = [8, 8], strides = [1, 1]} : vector<8x200xf32> to vector<8x8xf32>
    %cst_13 = arith.constant dense<0.000000e+00> : vector<8x1152xf32>
    %35 = tpu.matmul %34, %33, %cst_13 {dimension_numbers = #tpu.dot_dimension_numbers<[1], [0], [0], [1], [0, 0, 1, 1], [], []>} : vector<8x8xf32>, vector<8x1152xf32>, vector<8x1152xf32> -> vector<8x1152xf32>
    %36 = arith.addf %32, %35 : vector<8x1152xf32>
    %37 = vector.extract_strided_slice %4 {offsets = [0, 120], sizes = [8, 1152], strides = [1, 1]} : vector<8x1536xf32> to vector<8x1152xf32>
    %38 = vector.extract_strided_slice %5 {offsets = [0, 64], sizes = [8, 8], strides = [1, 1]} : vector<8x200xf32> to vector<8x8xf32>
    %cst_14 = arith.constant dense<0.000000e+00> : vector<8x1152xf32>
    %39 = tpu.matmul %38, %37, %cst_14 {dimension_numbers = #tpu.dot_dimension_numbers<[1], [0], [0], [1], [0, 0, 1, 1], [], []>} : vector<8x8xf32>, vector<8x1152xf32>, vector<8x1152xf32> -> vector<8x1152xf32>
    %40 = arith.addf %36, %39 : vector<8x1152xf32>
    %41 = vector.extract_strided_slice %4 {offsets = [0, 168], sizes = [8, 1152], strides = [1, 1]} : vector<8x1536xf32> to vector<8x1152xf32>
    %42 = vector.extract_strided_slice %5 {offsets = [0, 72], sizes = [8, 8], strides = [1, 1]} : vector<8x200xf32> to vector<8x8xf32>
    %cst_15 = arith.constant dense<0.000000e+00> : vector<8x1152xf32>
    %43 = tpu.matmul %42, %41, %cst_15 {dimension_numbers = #tpu.dot_dimension_numbers<[1], [0], [0], [1], [0, 0, 1, 1], [], []>} : vector<8x8xf32>, vector<8x1152xf32>, vector<8x1152xf32> -> vector<8x1152xf32>
    %44 = arith.addf %40, %43 : vector<8x1152xf32>
    %45 = vector.extract_strided_slice %4 {offsets = [0, 170], sizes = [8, 1152], strides = [1, 1]} : vector<8x1536xf32> to vector<8x1152xf32>
    %46 = vector.extract_strided_slice %5 {offsets = [0, 80], sizes = [8, 8], strides = [1, 1]} : vector<8x200xf32> to vector<8x8xf32>
    %cst_16 = arith.constant dense<0.000000e+00> : vector<8x1152xf32>
    %47 = tpu.matmul %46, %45, %cst_16 {dimension_numbers = #tpu.dot_dimension_numbers<[1], [0], [0], [1], [0, 0, 1, 1], [], []>} : vector<8x8xf32>, vector<8x1152xf32>, vector<8x1152xf32> -> vector<8x1152xf32>
    %48 = arith.addf %44, %47 : vector<8x1152xf32>
    %49 = vector.extract_strided_slice %4 {offsets = [0, 172], sizes = [8, 1152], strides = [1, 1]} : vector<8x1536xf32> to vector<8x1152xf32>
    %50 = vector.extract_strided_slice %5 {offsets = [0, 88], sizes = [8, 8], strides = [1, 1]} : vector<8x200xf32> to vector<8x8xf32>
    %cst_17 = arith.constant dense<0.000000e+00> : vector<8x1152xf32>
    %51 = tpu.matmul %50, %49, %cst_17 {dimension_numbers = #tpu.dot_dimension_numbers<[1], [0], [0], [1], [0, 0, 1, 1], [], []>} : vector<8x8xf32>, vector<8x1152xf32>, vector<8x1152xf32> -> vector<8x1152xf32>
    %52 = arith.addf %48, %51 : vector<8x1152xf32>
    %53 = vector.extract_strided_slice %4 {offsets = [0, 174], sizes = [8, 1152], strides = [1, 1]} : vector<8x1536xf32> to vector<8x1152xf32>
    %54 = vector.extract_strided_slice %5 {offsets = [0, 96], sizes = [8, 8], strides = [1, 1]} : vector<8x200xf32> to vector<8x8xf32>
    %cst_18 = arith.constant dense<0.000000e+00> : vector<8x1152xf32>
    %55 = tpu.matmul %54, %53, %cst_18 {dimension_numbers = #tpu.dot_dimension_numbers<[1], [0], [0], [1], [0, 0, 1, 1], [], []>} : vector<8x8xf32>, vector<8x1152xf32>, vector<8x1152xf32> -> vector<8x1152xf32>
    %56 = arith.addf %52, %55 : vector<8x1152xf32>
    %57 = vector.extract_strided_slice %4 {offsets = [0, 176], sizes = [8, 1152], strides = [1, 1]} : vector<8x1536xf32> to vector<8x1152xf32>
    %58 = vector.extract_strided_slice %5 {offsets = [0, 104], sizes = [8, 8], strides = [1, 1]} : vector<8x200xf32> to vector<8x8xf32>
    %cst_19 = arith.constant dense<0.000000e+00> : vector<8x1152xf32>
    %59 = tpu.matmul %58, %57, %cst_19 {dimension_numbers = #tpu.dot_dimension_numbers<[1], [0], [0], [1], [0, 0, 1, 1], [], []>} : vector<8x8xf32>, vector<8x1152xf32>, vector<8x1152xf32> -> vector<8x1152xf32>
    %60 = arith.addf %56, %59 : vector<8x1152xf32>
    %61 = vector.extract_strided_slice %4 {offsets = [0, 178], sizes = [8, 1152], strides = [1, 1]} : vector<8x1536xf32> to vector<8x1152xf32>
    %62 = vector.extract_strided_slice %5 {offsets = [0, 112], sizes = [8, 8], strides = [1, 1]} : vector<8x200xf32> to vector<8x8xf32>
    %cst_20 = arith.constant dense<0.000000e+00> : vector<8x1152xf32>
    %63 = tpu.matmul %62, %61, %cst_20 {dimension_numbers = #tpu.dot_dimension_numbers<[1], [0], [0], [1], [0, 0, 1, 1], [], []>} : vector<8x8xf32>, vector<8x1152xf32>, vector<8x1152xf32> -> vector<8x1152xf32>
    %64 = arith.addf %60, %63 : vector<8x1152xf32>
    %65 = vector.extract_strided_slice %4 {offsets = [0, 180], sizes = [8, 1152], strides = [1, 1]} : vector<8x1536xf32> to vector<8x1152xf32>
    %66 = vector.extract_strided_slice %5 {offsets = [0, 120], sizes = [8, 8], strides = [1, 1]} : vector<8x200xf32> to vector<8x8xf32>
    %cst_21 = arith.constant dense<0.000000e+00> : vector<8x1152xf32>
    %67 = tpu.matmul %66, %65, %cst_21 {dimension_numbers = #tpu.dot_dimension_numbers<[1], [0], [0], [1], [0, 0, 1, 1], [], []>} : vector<8x8xf32>, vector<8x1152xf32>, vector<8x1152xf32> -> vector<8x1152xf32>
    %68 = arith.addf %64, %67 : vector<8x1152xf32>
    %69 = vector.extract_strided_slice %4 {offsets = [0, 228], sizes = [8, 1152], strides = [1, 1]} : vector<8x1536xf32> to vector<8x1152xf32>
    %70 = vector.extract_strided_slice %5 {offsets = [0, 128], sizes = [8, 8], strides = [1, 1]} : vector<8x200xf32> to vector<8x8xf32>
    %cst_22 = arith.constant dense<0.000000e+00> : vector<8x1152xf32>
    %71 = tpu.matmul %70, %69, %cst_22 {dimension_numbers = #tpu.dot_dimension_numbers<[1], [0], [0], [1], [0, 0, 1, 1], [], []>} : vector<8x8xf32>, vector<8x1152xf32>, vector<8x1152xf32> -> vector<8x1152xf32>
    %72 = arith.addf %68, %71 : vector<8x1152xf32>
    %73 = vector.extract_strided_slice %4 {offsets = [0, 230], sizes = [8, 1152], strides = [1, 1]} : vector<8x1536xf32> to vector<8x1152xf32>
    %74 = vector.extract_strided_slice %5 {offsets = [0, 136], sizes = [8, 8], strides = [1, 1]} : vector<8x200xf32> to vector<8x8xf32>
    %cst_23 = arith.constant dense<0.000000e+00> : vector<8x1152xf32>
    %75 = tpu.matmul %74, %73, %cst_23 {dimension_numbers = #tpu.dot_dimension_numbers<[1], [0], [0], [1], [0, 0, 1, 1], [], []>} : vector<8x8xf32>, vector<8x1152xf32>, vector<8x1152xf32> -> vector<8x1152xf32>
    %76 = arith.addf %72, %75 : vector<8x1152xf32>
    %77 = vector.extract_strided_slice %4 {offsets = [0, 232], sizes = [8, 1152], strides = [1, 1]} : vector<8x1536xf32> to vector<8x1152xf32>
    %78 = vector.extract_strided_slice %5 {offsets = [0, 144], sizes = [8, 8], strides = [1, 1]} : vector<8x200xf32> to vector<8x8xf32>
    %cst_24 = arith.constant dense<0.000000e+00> : vector<8x1152xf32>
    %79 = tpu.matmul %78, %77, %cst_24 {dimension_numbers = #tpu.dot_dimension_numbers<[1], [0], [0], [1], [0, 0, 1, 1], [], []>} : vector<8x8xf32>, vector<8x1152xf32>, vector<8x1152xf32> -> vector<8x1152xf32>
    %80 = arith.addf %76, %79 : vector<8x1152xf32>
    %81 = vector.extract_strided_slice %4 {offsets = [0, 282], sizes = [8, 1152], strides = [1, 1]} : vector<8x1536xf32> to vector<8x1152xf32>
    %82 = vector.extract_strided_slice %5 {offsets = [0, 152], sizes = [8, 8], strides = [1, 1]} : vector<8x200xf32> to vector<8x8xf32>
    %cst_25 = arith.constant dense<0.000000e+00> : vector<8x1152xf32>
    %83 = tpu.matmul %82, %81, %cst_25 {dimension_numbers = #tpu.dot_dimension_numbers<[1], [0], [0], [1], [0, 0, 1, 1], [], []>} : vector<8x8xf32>, vector<8x1152xf32>, vector<8x1152xf32> -> vector<8x1152xf32>
    %84 = arith.addf %80, %83 : vector<8x1152xf32>
    %85 = vector.extract_strided_slice %4 {offsets = [0, 286], sizes = [8, 1152], strides = [1, 1]} : vector<8x1536xf32> to vector<8x1152xf32>
    %86 = vector.extract_strided_slice %5 {offsets = [0, 160], sizes = [8, 8], strides = [1, 1]} : vector<8x200xf32> to vector<8x8xf32>
    %cst_26 = arith.constant dense<0.000000e+00> : vector<8x1152xf32>
    %87 = tpu.matmul %86, %85, %cst_26 {dimension_numbers = #tpu.dot_dimension_numbers<[1], [0], [0], [1], [0, 0, 1, 1], [], []>} : vector<8x8xf32>, vector<8x1152xf32>, vector<8x1152xf32> -> vector<8x1152xf32>
    %88 = arith.addf %84, %87 : vector<8x1152xf32>
    %89 = vector.extract_strided_slice %4 {offsets = [0, 290], sizes = [8, 1152], strides = [1, 1]} : vector<8x1536xf32> to vector<8x1152xf32>
    %90 = vector.extract_strided_slice %5 {offsets = [0, 168], sizes = [8, 8], strides = [1, 1]} : vector<8x200xf32> to vector<8x8xf32>
    %cst_27 = arith.constant dense<0.000000e+00> : vector<8x1152xf32>
    %91 = tpu.matmul %90, %89, %cst_27 {dimension_numbers = #tpu.dot_dimension_numbers<[1], [0], [0], [1], [0, 0, 1, 1], [], []>} : vector<8x8xf32>, vector<8x1152xf32>, vector<8x1152xf32> -> vector<8x1152xf32>
    %92 = arith.addf %88, %91 : vector<8x1152xf32>
    %93 = vector.extract_strided_slice %4 {offsets = [0, 336], sizes = [8, 1152], strides = [1, 1]} : vector<8x1536xf32> to vector<8x1152xf32>
    %94 = vector.extract_strided_slice %5 {offsets = [0, 176], sizes = [8, 8], strides = [1, 1]} : vector<8x200xf32> to vector<8x8xf32>
    %cst_28 = arith.constant dense<0.000000e+00> : vector<8x1152xf32>
    %95 = tpu.matmul %94, %93, %cst_28 {dimension_numbers = #tpu.dot_dimension_numbers<[1], [0], [0], [1], [0, 0, 1, 1], [], []>} : vector<8x8xf32>, vector<8x1152xf32>, vector<8x1152xf32> -> vector<8x1152xf32>
    %96 = arith.addf %92, %95 : vector<8x1152xf32>
    %97 = vector.extract_strided_slice %4 {offsets = [0, 342], sizes = [8, 1152], strides = [1, 1]} : vector<8x1536xf32> to vector<8x1152xf32>
    %98 = vector.extract_strided_slice %5 {offsets = [0, 184], sizes = [8, 8], strides = [1, 1]} : vector<8x200xf32> to vector<8x8xf32>
    %cst_29 = arith.constant dense<0.000000e+00> : vector<8x1152xf32>
    %99 = tpu.matmul %98, %97, %cst_29 {dimension_numbers = #tpu.dot_dimension_numbers<[1], [0], [0], [1], [0, 0, 1, 1], [], []>} : vector<8x8xf32>, vector<8x1152xf32>, vector<8x1152xf32> -> vector<8x1152xf32>
    %100 = arith.addf %96, %99 : vector<8x1152xf32>
    %101 = vector.extract_strided_slice %4 {offsets = [0, 348], sizes = [8, 1152], strides = [1, 1]} : vector<8x1536xf32> to vector<8x1152xf32>
    %102 = vector.extract_strided_slice %5 {offsets = [0, 192], sizes = [8, 8], strides = [1, 1]} : vector<8x200xf32> to vector<8x8xf32>
    %cst_30 = arith.constant dense<0.000000e+00> : vector<8x1152xf32>
    %103 = tpu.matmul %102, %101, %cst_30 {dimension_numbers = #tpu.dot_dimension_numbers<[1], [0], [0], [1], [0, 0, 1, 1], [], []>} : vector<8x8xf32>, vector<8x1152xf32>, vector<8x1152xf32> -> vector<8x1152xf32>
    %104 = arith.addf %100, %103 : vector<8x1152xf32>
    %c0_31 = arith.constant 0 : index
    %c0_32 = arith.constant 0 : index
    %105 = vector.load %arg5[%c0_31, %c0_32] : memref<8x1xf32, #tpu.memory_space<vmem>>, vector<8x1xf32>
    %106 = vector.broadcast %105 : vector<8x1xf32> to vector<8x1152xf32>
    %107 = arith.addf %104, %106 : vector<8x1152xf32>
    %cst_33 = arith.constant dense<0xFF800000> : vector<1152xf32>
    %108 = vector.multi_reduction <maximumf>, %107, %cst_33 [0] : vector<8x1152xf32> to vector<1152xf32>
    %109 = vector.shape_cast %108 : vector<1152xf32> to vector<1x1152xf32>
    %110 = vector.broadcast %109 : vector<1x1152xf32> to vector<8x1152xf32>
    %111 = arith.subf %107, %110 : vector<8x1152xf32>
    %112 = math.exp %111 : vector<8x1152xf32>
    %cst_34 = arith.constant dense<0.000000e+00> : vector<1152xf32>
    %113 = vector.multi_reduction <add>, %112, %cst_34 [0] : vector<8x1152xf32> to vector<1152xf32>
    %114 = vector.shape_cast %113 : vector<1152xf32> to vector<1x1152xf32>
    %115 = math.log %114 : vector<1x1152xf32>
    %116 = vector.broadcast %115 : vector<1x1152xf32> to vector<8x1152xf32>
    %117 = arith.subf %111, %116 : vector<8x1152xf32>
    %c0_35 = arith.constant 0 : index
    %c0_36 = arith.constant 0 : index
    %c0_37 = arith.constant 0 : index
    %118 = vector.load %arg7[%c0_35, %c0_36, %c0_37] : memref<1x8x1152xf32, #tpu.memory_space<vmem>>, vector<1x8x1152xf32>
    %119 = vector.shape_cast %118 : vector<1x8x1152xf32> to vector<8x1152xf32>
    %120 = vector.shape_cast %117 : vector<8x1152xf32> to vector<1x8x1152xf32>
    tpu.vector_store %arg7[%c0_35, %c0_36, %c0_37], %120 {strides = array<i32>} : memref<1x8x1152xf32, #tpu.memory_space<vmem>>, vector<1x8x1152xf32>,
    %121 = arith.mulf %112, %112 : vector<8x1152xf32>
    %122 = arith.mulf %121, %121 : vector<8x1152xf32>
    %123 = arith.mulf %122, %112 : vector<8x1152xf32>
    %cst_38 = arith.constant dense<0.000000e+00> : vector<1152xf32>
    %124 = vector.multi_reduction <add>, %123, %cst_38 [0] : vector<8x1152xf32> to vector<1152xf32>
    %125 = vector.shape_cast %124 : vector<1152xf32> to vector<1x1152xf32>
    %126 = vector.broadcast %125 : vector<1x1152xf32> to vector<8x1152xf32>
    %127 = arith.divf %123, %126 : vector<8x1152xf32>
    %c0_39 = arith.constant 0 : index
    %c0_40 = arith.constant 0 : index
    %c0_41 = arith.constant 0 : index
    %128 = vector.load %arg6[%c0_39, %c0_40, %c0_41] : memref<1x8x1152xf32, #tpu.memory_space<vmem>>, vector<1x8x1152xf32>
    %129 = vector.shape_cast %128 : vector<1x8x1152xf32> to vector<8x1152xf32>
    %130 = vector.shape_cast %127 : vector<8x1152xf32> to vector<1x8x1152xf32>
    tpu.vector_store %arg6[%c0_39, %c0_40, %c0_41], %130 {strides = array<i32>} : memref<1x8x1152xf32, #tpu.memory_space<vmem>>, vector<1x8x1152xf32>,
    return
  }
  func.func @transform_0(%arg0: i32, %arg1: i32) -> (i32, i32, i32) {
    %c0_i32 = arith.constant 0 : i32
    %c0_i32_0 = arith.constant 0 : i32
    return %arg0, %c0_i32, %arg1 : i32, i32, i32
  }
  func.func @transform_1(%arg0: i32, %arg1: i32) -> (i32, i32, i32) {
    %c1_i32 = arith.constant 1 : i32
    %0 = arith.addi %arg1, %c1_i32 : i32
    %c3_i32 = arith.constant 3 : i32
    %1 = arith.muli %0, %c3_i32 : i32
    %c0_i32 = arith.constant 0 : i32
    %c0_i32_0 = arith.constant 0 : i32
    return %arg0, %c0_i32, %1 : i32, i32, i32
  }
  func.func @transform_2(%arg0: i32, %arg1: i32) -> (i32, i32) {
    %c0_i32 = arith.constant 0 : i32
    %c0_i32_0 = arith.constant 0 : i32
    %c0_i32_1 = arith.constant 0 : i32
    return %c0_i32, %c0_i32_0 : i32, i32
  }
  func.func @transform_3(%arg0: i32, %arg1: i32) -> (i32, i32) {
    %c0_i32 = arith.constant 0 : i32
    %c0_i32_0 = arith.constant 0 : i32
    %c0_i32_1 = arith.constant 0 : i32
    return %c0_i32, %c0_i32_0 : i32, i32
  }
  func.func @transform_4(%arg0: i32, %arg1: i32) -> (i32, i32, i32) {
    %c0_i32 = arith.constant 0 : i32
    %c0_i32_0 = arith.constant 0 : i32
    return %arg0, %c0_i32, %arg1 : i32, i32, i32
  }
  func.func @transform_5(%arg0: i32, %arg1: i32) -> (i32, i32, i32) {
    %c0_i32 = arith.constant 0 : i32
    %c0_i32_0 = arith.constant 0 : i32
    return %arg0, %c0_i32, %arg1 : i32, i32, i32
  }
}

</mosaic_0001>

<llo_original>
// kernel: tpu_custom_call.1
$region0: #{tpu_custom_call.1}
  #allocation0 [shape = 'u32[]', space=smem, size = 0x4, offset = 0x4, fixed_abs, tag = 'smem constant byte address 0x4 - core index']
  #allocation1 [shape = 'u32[144,128]{1,0:T(1,128)}', space=vmem, size = 0x12000, scoped, tag = 'internal scratch']
  %s0 = inlined_call_operand.hbm [shape: f32[2,8,2304], index: 0, kind: input, shape index: {}]
  %s1 = inlined_call_operand.hbm [shape: f32[2,8,2304], index: 1, kind: input, shape index: {}]
  %s2 = inlined_call_operand.vmem [shape: f32[8,200], index: 2, kind: input, shape index: {}]
  %s3 = inlined_call_operand.vmem [shape: f32[8,1], index: 3, kind: input, shape index: {}]
  %s4 = inlined_call_operand.hbm [shape: f32[2,8,1152], index: 4, kind: output, shape index: {0}]
  %s5 = inlined_call_operand.hbm [shape: f32[2,8,1152], index: 5, kind: output, shape index: {1}]
  %6 = xla_tuple %s4, %s5
  %s7 = sld [smem:[#allocation0]]
  $region65: #{tpu_custom_call.1} parent=0
    _
  %s9 = ssub.s32 1, %s7
  %s10 = scalar_select 0, %s9, %s7
  $region1: #{tpu_custom_call.1} parent=0
    #allocation2 [shape = 'u8[73728]{0}', space=vmem, size = 0x12000, scoped, tag = 'input window, operand 0']
    #allocation3 [shape = 's32[2]{0}', space=sflag, size = 0x8, scoped, tag = 'scoped memory for tpu_custom_call.1']
    #allocation4 [shape = 's32[2]{0}', space=sflag, size = 0x8, scoped, tag = 'scoped memory for tpu_custom_call.1']
    #allocation5 [shape = 'u8[24576]{0}', space=vmem, size = 0x6000, scoped, tag = 'input window, operand 1']
    #allocation6 [shape = 's32[2]{0}', space=sflag, size = 0x8, scoped, tag = 'scoped memory for tpu_custom_call.1']
    #allocation7 [shape = 'u8[73728]{0}', space=vmem, size = 0x12000, scoped, tag = 'output window, operand 0']
    #allocation8 [shape = 'u8[73728]{0}', space=vmem, size = 0x12000, scoped, tag = 'output window, operand 1']
    #allocation9 [shape = 's32[2]{0}', space=sflag, size = 0x8, scoped, tag = 'scoped memory for tpu_custom_call.1']
    %11 = vsyncpa [#allocation3], 0
    %s12 = scalar_lea.sflag [#allocation3], 1
    %13 = vsyncpa %s12, 0
    %14 = vsyncpa [#allocation6], 0
    %s15 = scalar_lea.sflag [#allocation6], 1
    %16 = vsyncpa %s15, 0
    %17 = vsyncpa [#allocation4], 0
    %s18 = scalar_lea.sflag [#allocation4], 1
    %19 = vsyncpa %s18, 0
    %20 = vsyncpa [#allocation9], 0
    %s21 = scalar_lea.sflag [#allocation9], 1
    %22 = vsyncpa %s21, 0
    loop: start=0, step=1, limit=4
    $region2: #{tpu_custom_call.1} parent=1 // loop_pre_header
      _
    $region3: #{tpu_custom_call.1} parent=1 // loop_header
      %s24 = sphi 0, %s28
      %p25 = scmp.ge.s32.totalorder %s24, 4
      %s31 = sphi 0, %s43
      %s32 = sphi 0, %s39
      %s33 = sphi 0, %s31
      %s34 = sphi 0, %s32
      %s35 = sphi 0, %s33
      %s36 = sphi 0, %s34
      %s48 = sphi 0, %s50
      %s51 = sphi 0, %s48
      %s52 = sphi 0, %s51
      %s68 = sphi 0, %s52
      %s80 = sphi 0, %s82
      %s83 = sphi 0, %s80
      %s84 = sphi 0, %s83
      %s100 = sphi 0, %s84
      %s104 = sphi 0, %s104
      %s106 = sphi 0, %s104
      %s107 = sphi 0, %s106
      %s121 = sphi 0, %s107
      %s125 = sphi 0, %s125
      %s127 = sphi 0, %s125
      %s128 = sphi 0, %s127
      %s142 = sphi 0, %s128
      %s150 = sphi 0, %s152
      %s153 = sphi 0, %s150
      %s154 = sphi 0, %s153
      %s170 = sphi 0, %s154
      %s178 = sphi 0, %s180
      %s181 = sphi 0, %s178
      %s182 = sphi 0, %s181
      %s198 = sphi 0, %s182
    $region4: #{tpu_custom_call.1} parent=1 // loop_header_branch
      %27 = sbr.rel (%p25) target = $region8
    $region5: #{tpu_custom_call.1} parent=1 // loop_body
      %s29 = ssub.s32 %s24, 1
      %s30 = ssub.s32 %s24, 2
      %s37 = sadd.s32 1, %s32
      %p38 = scmp.ge.s32.totalorder %s37, 1
      %s39 = scalar_select %p38, 0, %s37
      %s40 = sadd.s32 1, %s31
      %s41 = scalar_select %p38, %s40, %s31
      %p42 = scmp.ge.s32.totalorder %s41, 2
      %s43 = scalar_select %p42, 0, %s41
      %s44 = ssub.s32 %s31, %s43
      %s45 = ssub.s32 %s32, %s39
      %s46 = sor.u32 %s44, %s45
      %p47 = scmp.eq.s32.totalorder %s46, 0
      %s49 = sadd.s32 %s48, 1
      %s50 = scalar_select %p47, %s48, %s49
      %p53 = pneg %p47
      %p54 = scmp.eq.s32.totalorder %s24, 1
      %p55 = por %p53, %p54
      %p56 = scmp.ne.s32.totalorder %s48, %s51
      %p57 = scmp.eq.s32.totalorder %s24, 0
      %p58 = por %p56, %p57
      %p59 = scmp.ne.s32.totalorder %s48, %s51
      %p60 = scmp.eq.s32.totalorder %s29, 1
      %p61 = por %p59, %p60
      %p62 = scmp.ne.s32.totalorder %s51, %s52
      %p63 = scmp.eq.s32.totalorder %s29, 0
      %p64 = por %p62, %p63
      %p65 = scmp.ne.s32.totalorder %s51, %s52
      %p66 = scmp.eq.s32.totalorder %s30, 1
      %p67 = por %p65, %p66
      %p69 = scmp.ne.s32.totalorder %s52, %s68
      %p70 = scmp.eq.s32.totalorder %s30, 0
      %p71 = por %p69, %p70
      %s72 = sadd.s32 %s32, 1
      %s73 = smul.u32 %s72, 3
      %s74 = sadd.s32 %s39, 1
      %s75 = smul.u32 %s74, 3
      %s76 = ssub.s32 %s31, %s43
      %s77 = ssub.s32 %s73, %s75
      %s78 = sor.u32 %s76, %s77
      %p79 = scmp.eq.s32.totalorder %s78, 0
      %s81 = sadd.s32 %s80, 1
      %s82 = scalar_select %p79, %s80, %s81
      %p85 = pneg %p79
      %p86 = scmp.eq.s32.totalorder %s24, 1
      %p87 = por %p85, %p86
      %p88 = scmp.ne.s32.totalorder %s80, %s83
      %p89 = scmp.eq.s32.totalorder %s24, 0
      %p90 = por %p88, %p89
      %p91 = scmp.ne.s32.totalorder %s80, %s83
      %p92 = scmp.eq.s32.totalorder %s29, 1
      %p93 = por %p91, %p92
      %p94 = scmp.ne.s32.totalorder %s83, %s84
      %p95 = scmp.eq.s32.totalorder %s29, 0
      %p96 = por %p94, %p95
      %p97 = scmp.ne.s32.totalorder %s83, %s84
      %p98 = scmp.eq.s32.totalorder %s30, 1
      %p99 = por %p97, %p98
      %p101 = scmp.ne.s32.totalorder %s84, %s100
      %p102 = scmp.eq.s32.totalorder %s30, 0
      %p103 = por %p101, %p102
      %s105 = sadd.s32 %s104, 1
      %p108 = scmp.eq.s32.totalorder %s24, 1
      %p109 = scmp.ne.s32.totalorder %s104, %s106
      %p110 = scmp.eq.s32.totalorder %s24, 0
      %p111 = por %p109, %p110
      %p112 = scmp.ne.s32.totalorder %s104, %s106
      %p113 = scmp.eq.s32.totalorder %s29, 1
      %p114 = por %p112, %p113
      %p115 = scmp.ne.s32.totalorder %s106, %s107
      %p116 = scmp.eq.s32.totalorder %s29, 0
      %p117 = por %p115, %p116
      %p118 = scmp.ne.s32.totalorder %s106, %s107
      %p119 = scmp.eq.s32.totalorder %s30, 1
      %p120 = por %p118, %p119
      %p122 = scmp.ne.s32.totalorder %s107, %s121
      %p123 = scmp.eq.s32.totalorder %s30, 0
      %p124 = por %p122, %p123
      %s126 = sadd.s32 %s125, 1
      %p129 = scmp.eq.s32.totalorder %s24, 1
      %p130 = scmp.ne.s32.totalorder %s125, %s127
      %p131 = scmp.eq.s32.totalorder %s24, 0
      %p132 = por %p130, %p131
      %p133 = scmp.ne.s32.totalorder %s125, %s127
      %p134 = scmp.eq.s32.totalorder %s29, 1
      %p135 = por %p133, %p134
      %p136 = scmp.ne.s32.totalorder %s127, %s128
      %p137 = scmp.eq.s32.totalorder %s29, 0
      %p138 = por %p136, %p137
      %p139 = scmp.ne.s32.totalorder %s127, %s128
      %p140 = scmp.eq.s32.totalorder %s30, 1
      %p141 = por %p139, %p140
      %p143 = scmp.ne.s32.totalorder %s128, %s142
      %p144 = scmp.eq.s32.totalorder %s30, 0
      %p145 = por %p143, %p144
      %s146 = ssub.s32 %s31, %s43
      %s147 = ssub.s32 %s32, %s39
      %s148 = sor.u32 %s146, %s147
      %p149 = scmp.eq.s32.totalorder %s148, 0
      %s151 = sadd.s32 %s150, 1
      %s152 = scalar_select %p149, %s150, %s151
      %p155 = pneg %p149
      %p156 = scmp.eq.s32.totalorder %s24, 1
      %p157 = por %p155, %p156
      %p158 = scmp.ne.s32.totalorder %s150, %s153
      %p159 = scmp.eq.s32.totalorder %s24, 0
      %p160 = por %p158, %p159
      %p161 = scmp.ne.s32.totalorder %s150, %s153
      %p162 = scmp.eq.s32.totalorder %s29, 1
      %p163 = por %p161, %p162
      %p164 = scmp.ne.s32.totalorder %s153, %s154
      %p165 = scmp.eq.s32.totalorder %s29, 0
      %p166 = por %p164, %p165
      %p167 = scmp.ne.s32.totalorder %s153, %s154
      %p168 = scmp.eq.s32.totalorder %s30, 1
      %p169 = por %p167, %p168
      %p171 = scmp.ne.s32.totalorder %s154, %s170
      %p172 = scmp.eq.s32.totalorder %s30, 0
      %p173 = por %p171, %p172
      %s174 = ssub.s32 %s31, %s43
      %s175 = ssub.s32 %s32, %s39
      %s176 = sor.u32 %s174, %s175
      %p177 = scmp.eq.s32.totalorder %s176, 0
      %s179 = sadd.s32 %s178, 1
      %s180 = scalar_select %p177, %s178, %s179
      %p183 = pneg %p177
      %p184 = scmp.eq.s32.totalorder %s24, 1
      %p185 = por %p183, %p184
      %p186 = scmp.ne.s32.totalorder %s178, %s181
      %p187 = scmp.eq.s32.totalorder %s24, 0
      %p188 = por %p186, %p187
      %p189 = scmp.ne.s32.totalorder %s178, %s181
      %p190 = scmp.eq.s32.totalorder %s29, 1
      %p191 = por %p189, %p190
      %p192 = scmp.ne.s32.totalorder %s181, %s182
      %p193 = scmp.eq.s32.totalorder %s29, 0
      %p194 = por %p192, %p193
      %p195 = scmp.ne.s32.totalorder %s181, %s182
      %p196 = scmp.eq.s32.totalorder %s30, 1
      %p197 = por %p195, %p196
      %p199 = scmp.ne.s32.totalorder %s182, %s198
      %p200 = scmp.eq.s32.totalorder %s30, 0
      %p201 = por %p199, %p200
      %p202 = scmp.le.s32.totalorder 1, %s24
      %p203 = scmp.lt.s32.totalorder %s24, 3
      %p204 = pnand %p202, %p203
      %p205 = pneg %p204
      // Predicated region
      $region9: #{tpu_custom_call.1} parent=5 // pred_check
        _
      $region10: #{tpu_custom_call.1} parent=5 // pred_check_branch
        %207 = sbr.rel (%p204) target = $region12
      $region11: #{tpu_custom_call.1} parent=5 // pred_region
        %s208 = ssub.s32 %s24, 1
        // Predicated region
        $region13: #{tpu_custom_call.1} parent=11 // pred_check
          %p209 = pneg %p117
        $region14: #{tpu_custom_call.1} parent=11 // pred_check_branch
          %211 = sbr.rel (%p209) target = $region16
        $region15: #{tpu_custom_call.1} parent=11 // pred_region
          _
        $region16: #{tpu_custom_call.1} parent=11 // pred_fallthru
          _
        // Predicated region
        $region17: #{tpu_custom_call.1} parent=11 // pred_check
          %p212 = pneg %p138
        $region18: #{tpu_custom_call.1} parent=11 // pred_check_branch
          %214 = sbr.rel (%p212) target = $region20
        $region19: #{tpu_custom_call.1} parent=11 // pred_region
          _
        $region20: #{tpu_custom_call.1} parent=11 // pred_fallthru
          _
      $region12: #{tpu_custom_call.1} parent=5 // pred_fallthru
        _
      %p215 = scmp.lt.s32.totalorder %s24, 2
      // Predicated region
      $region21: #{tpu_custom_call.1} parent=5 // pred_check
        %p216 = pneg %p215
      $region22: #{tpu_custom_call.1} parent=5 // pred_check_branch
        %218 = sbr.rel (%p216) target = $region24
      $region23: #{tpu_custom_call.1} parent=5 // pred_region
        // Predicated region
        $region25: #{tpu_custom_call.1} parent=23 // pred_check
          %p219 = pneg %p58
        $region26: #{tpu_custom_call.1} parent=23 // pred_check_branch
          %221 = sbr.rel (%p219) target = $region28
        $region27: #{tpu_custom_call.1} parent=23 // pred_region
          %s222 = sand.u32 %s48, 1
          %s223 = scalar_lea.sflag [#allocation3], %s222
          %s224 = sand.u32 %s48, 1
          %s225 = smul.addr %s224, 72
          %s226 = scalar_lea.vmem [#allocation2], %s225
          %s227 = smul.u32 9, %s32
          %s229 = ssub.s32 1152, 1152
          %230 = vsyncadd %s223, %s229
          %s231 = smul.addr %s31, 18
          %s232 = sadd.s32 %s227, %s231
          %s233 = smul.addr %s232, 128
          %s234 = scalar_lea.hbm %s0, %s233
          %s236 = sshll.u32 %s226, 4
          %s237 = int_to_ptr.vmem [resolvable:$true] %s236
          %239 = dma.hbm_to_vmem [thread:$0]  %s234, 1152, %s237, %s223
        $region28: #{tpu_custom_call.1} parent=23 // pred_fallthru
          _
        // Predicated region
        $region29: #{tpu_custom_call.1} parent=23 // pred_check
          %p240 = pneg %p90
        $region30: #{tpu_custom_call.1} parent=23 // pred_check_branch
          %242 = sbr.rel (%p240) target = $region32
        $region31: #{tpu_custom_call.1} parent=23 // pred_region
          %s243 = sand.u32 %s80, 1
          %s244 = scalar_lea.sflag [#allocation6], %s243
          %s245 = sand.u32 %s80, 1
          %s246 = smul.addr %s245, 24
          %s247 = scalar_lea.vmem [#allocation5], %s246
          %s248 = sadd.s32 %s32, 1
          %s249 = smul.u32 %s248, 3
          %s250 = smul.u32 3, %s249
          %s252 = ssub.s32 384, 384
          %253 = vsyncadd %s244, %s252
          %s254 = smul.addr %s31, 18
          %s255 = sadd.s32 %s250, %s254
          %s256 = smul.addr %s255, 128
          %s257 = scalar_lea.hbm %s1, %s256
          %s259 = sshll.u32 %s247, 4
          %s260 = int_to_ptr.vmem [resolvable:$true] %s259
          %262 = dma.hbm_to_vmem [thread:$0]  %s257, 384, %s260, %s244
        $region32: #{tpu_custom_call.1} parent=23 // pred_fallthru
          _
      $region24: #{tpu_custom_call.1} parent=5 // pred_fallthru
        _
      %p263 = scmp.le.s32.totalorder 1, %s24
      %p264 = scmp.lt.s32.totalorder %s24, 3
      %p265 = pnand %p263, %p264
      %p266 = pneg %p265
      // Predicated region
      $region33: #{tpu_custom_call.1} parent=5 // pred_check
        _
      $region34: #{tpu_custom_call.1} parent=5 // pred_check_branch
        %268 = sbr.rel (%p265) target = $region36
      $region35: #{tpu_custom_call.1} parent=5 // pred_region
        %s269 = ssub.s32 %s24, 1
        %s270 = sand.u32 %s51, 1
        %s271 = scalar_lea.sflag [#allocation3], %s270
        %s272 = sand.u32 %s51, 1
        %s273 = smul.addr %s272, 72
        %s274 = scalar_lea.vmem [#allocation2], %s273
        // Predicated region
        $region37: #{tpu_custom_call.1} parent=35 // pred_check
          %p275 = pneg %p64
        $region38: #{tpu_custom_call.1} parent=35 // pred_check_branch
          %277 = sbr.rel (%p275) target = $region40
        $region39: #{tpu_custom_call.1} parent=35 // pred_region
          %278 = dma.done %s271, 1152
        $region40: #{tpu_custom_call.1} parent=35 // pred_fallthru
          _
        %s279 = sand.u32 %s83, 1
        %s280 = scalar_lea.sflag [#allocation6], %s279
        %s281 = sand.u32 %s83, 1
        %s282 = smul.addr %s281, 24
        %s283 = scalar_lea.vmem [#allocation5], %s282
        // Predicated region
        $region41: #{tpu_custom_call.1} parent=35 // pred_check
          %p284 = pneg %p96
        $region42: #{tpu_custom_call.1} parent=35 // pred_check_branch
          %286 = sbr.rel (%p284) target = $region44
        $region43: #{tpu_custom_call.1} parent=35 // pred_region
          %287 = dma.done %s280, 384
        $region44: #{tpu_custom_call.1} parent=35 // pred_fallthru
          _
        %s288 = sand.u32 %s51, 1
        %s289 = scalar_lea.sflag [#allocation3], %s288
        %s290 = sand.u32 %s51, 1
        %s291 = smul.addr %s290, 72
        %s292 = scalar_lea.vmem [#allocation2], %s291
        %p293 = pneg %p64
        %p294 = pneg %p61
        %s295 = sand.u32 %s83, 1
        %s296 = scalar_lea.sflag [#allocation6], %s295
        %s297 = sand.u32 %s83, 1
        %s298 = smul.addr %s297, 24
        %s299 = scalar_lea.vmem [#allocation5], %s298
        %p300 = pneg %p96
        %p301 = pneg %p93
        %p302 = pneg %p117
        %p303 = pneg %p114
        %p304 = pneg %p138
        %p305 = pneg %p135
        %p306 = pneg %p166
        %p307 = pneg %p163
        %s308 = sand.u32 %s153, 1
        %s309 = scalar_lea.sflag [#allocation4], %s308
        %s310 = sand.u32 %s153, 1
        %s311 = smul.addr %s310, 72
        %s312 = scalar_lea.vmem [#allocation7], %s311
        %p313 = pneg %p194
        %p314 = pneg %p191
        %s315 = sand.u32 %s181, 1
        %s316 = scalar_lea.sflag [#allocation9], %s315
        %s317 = sand.u32 %s181, 1
        %s318 = smul.addr %s317, 72
        %s319 = scalar_lea.vmem [#allocation8], %s318
        %s320 = smul.u32 9, %s34
        %s321 = sadd.s32 %s34, 1
        %s322 = smul.u32 %s321, 3
        %s323 = smul.u32 3, %s322
        %s324 = smul.u32 9, %s34
        %s325 = smul.u32 9, %s34
        %v326 = vld [vmem:[%s274] sm:$0xff]
        %v327 = vld [vmem:[%s274 + $0x8] sm:$0xff]
        %v328 = vld [vmem:[%s274 + $0x10] sm:$0xff]
        %v329 = vld [vmem:[%s274 + $0x18] sm:$0xff]
        %v330 = vld [vmem:[%s274 + $0x20] sm:$0xff]
        %v331 = vld [vmem:[%s274 + $0x28] sm:$0xff]
        %v332 = vld [vmem:[%s274 + $0x30] sm:$0xff]
        %v333 = vld [vmem:[%s274 + $0x38] sm:$0xff]
        %v334 = vld [vmem:[%s274 + $0x40] sm:$0xff]
        %v335 = vld [vmem:[%s283] sm:$0xff]
        %v336 = vld [vmem:[%s283 + $0x8] sm:$0xff]
        %v337 = vld [vmem:[%s283 + $0x10] sm:$0xff]
        %v338 = vld [vmem:[%s2] sm:$0xff]
        %v339 = vld [vmem:[%s2 + $0x8] sm:$0xff]
        %341 = vrot.lane.b32.xlu0 %v338, 120
        %v342 = vpop.permute.xlu0 %341
        %353 = vrot.lane.b32.xlu0 %v326, 122
        %v354 = vpop.permute.xlu0 %353
        %355 = vrot.lane.b32.xlu0 %v327, 122
        %v356 = vpop.permute.xlu0 %355
        %357 = vrot.lane.b32.xlu0 %v328, 122
        %v358 = vpop.permute.xlu0 %357
        %359 = vrot.lane.b32.xlu0 %v329, 122
        %v360 = vpop.permute.xlu0 %359
        %361 = vrot.lane.b32.xlu0 %v330, 122
        %v362 = vpop.permute.xlu0 %361
        %363 = vrot.lane.b32.xlu0 %v331, 122
        %v364 = vpop.permute.xlu0 %363
        %365 = vrot.lane.b32.xlu0 %v332, 122
        %v366 = vpop.permute.xlu0 %365
        %367 = vrot.lane.b32.xlu0 %v333, 122
        %v368 = vpop.permute.xlu0 %367
        %369 = vrot.lane.b32.xlu0 %v334, 122
        %v370 = vpop.permute.xlu0 %369
        %371 = vrot.lane.b32.xlu0 %v335, 122
        %v372 = vpop.permute.xlu0 %371
        %vm373 = vcmask 998400
        %v374 = vsel %vm373, %v354, %v356
        %v375 = vsel %vm373, %v356, %v358
        %v376 = vsel %vm373, %v358, %v360
        %v377 = vsel %vm373, %v360, %v362
        %v378 = vsel %vm373, %v362, %v364
        %v379 = vsel %vm373, %v364, %v366
        %v380 = vsel %vm373, %v366, %v368
        %v381 = vsel %vm373, %v368, %v370
        %v382 = vsel %vm373, %v370, %v372
        %vm392 = vcmask 64512
        %v393 = vsel %vm392, %v342, 0
        %395 = vmatprep.subr.mxu0 %v375
        %396 = vmatpush1.msra.mxu0 %v374
        %397 = vmatprep.subr.mxu0 0.0
        %398 = vmatpush1.msra.mxu0 0.0
        %399 = vmatprep.subr.mxu0 0.0
        %400 = vmatpush1.msra.mxu0 0.0
        %401 = vmatprep.subr.mxu0 0.0
        %402 = vmatpush1.msra.mxu0 0.0
        %403 = vmatprep.subr.mxu0 0.0
        %404 = vmatpush1.msra.mxu0 0.0
        %405 = vmatprep.subr.mxu0 0.0
        %406 = vmatpush1.msra.mxu0 0.0
        %407 = vmatprep.subr.mxu0 0.0
        %408 = vmatpush1.msra.mxu0 0.0
        %409 = vmatprep.subr.mxu0 0.0
        %410 = vmatpush1.msra.mxu0 0.0
        %411 = vmatprep.subr.mxu0 0.0
        %412 = vmatpush1.msra.mxu0 0.0
        %413 = vmatprep.subr.mxu0 0.0
        %414 = vmatpush1.msra.mxu0 0.0
        %415 = vmatprep.subr.mxu0 0.0
        %416 = vmatpush1.msra.mxu0 0.0
        %417 = vmatprep.subr.mxu0 0.0
        %418 = vmatpush1.msra.mxu0 0.0
        %419 = vmatprep.subr.mxu0 0.0
        %420 = vmatpush1.msra.mxu0 0.0
        %421 = vmatprep.subr.mxu0 0.0
        %422 = vmatpush1.msra.mxu0 0.0
        %423 = vmatprep.subr.mxu0 0.0
        %424 = vmatpush1.msra.mxu0 0.0
        %425 = vmatprep.subr.mxu0 0.0
        %426 = vmatpush1.msra.mxu0 0.0
        %427 = vmatprep.subr.mxu0 0.0
        %428 = vmatpush1.msra.mxu0 0.0
        %429 = vmatprep.subr.mxu0 0.0
        %430 = vmatpush1.msra.mxu0 0.0
        %431 = vmatprep.subr.mxu0 0.0
        %432 = vmatpush1.msra.mxu0 0.0
        %433 = vmatprep.subr.mxu0 0.0
        %434 = vmatpush1.msra.mxu0 0.0
        %435 = vmatprep.subr.mxu0 0.0
        %436 = vmatpush1.msra.mxu0 0.0
        %437 = vmatprep.subr.mxu0 0.0
        %438 = vmatpush1.msra.mxu0 0.0
        %439 = vmatprep.subr.mxu0 0.0
        %440 = vmatpush1.msra.mxu0 0.0
        %441 = vmatprep.subr.mxu0 0.0
        %442 = vmatpush1.msra.mxu0 0.0
        %443 = vmatprep.subr.mxu0 0.0
        %444 = vmatpush1.msra.mxu0 0.0
        %445 = vmatprep.subr.mxu0 0.0
        %446 = vmatpush1.msra.mxu0 0.0
        %447 = vmatprep.subr.mxu0 0.0
        %448 = vmatpush1.msra.mxu0 0.0
        %449 = vmatprep.subr.mxu0 0.0
        %450 = vmatpush1.msra.mxu0 0.0
        %451 = vmatprep.subr.mxu0 0.0
        %452 = vmatpush1.msra.mxu0 0.0
        %453 = vmatprep.subr.mxu0 0.0
        %454 = vmatpush1.msra.mxu0 0.0
        %455 = vmatprep.subr.mxu0 0.0
        %456 = vmatpush1.msra.mxu0 0.0
        %457 = vmatprep.subr.mxu0 0.0
        %458 = vmatpush1.msra.mxu0 0.0
        %459 = vmatprep.mubr.f32.mxu0 0.0
        %460 = vmatmul.mubr.f32.gmra.mrb[0].mxu0 %v393
        %v461 = vpop.f32.mrb[0].mxu0
        %v462 = vadd.f32 0.0, %v461
        %v463 = vpop.f32.mrb[0].mxu0
        %v464 = vadd.f32 0.0, %v463
        %465 = vdwg.mxu0
        %466 = vmatprep.subr.mxu0 %v377
        %467 = vmatpush1.msra.mxu0 %v376
        %468 = vmatprep.subr.mxu0 0.0
        %469 = vmatpush1.msra.mxu0 0.0
        %470 = vmatprep.subr.mxu0 0.0
        %471 = vmatpush1.msra.mxu0 0.0
        %472 = vmatprep.subr.mxu0 0.0
        %473 = vmatpush1.msra.mxu0 0.0
        %474 = vmatprep.subr.mxu0 0.0
        %475 = vmatpush1.msra.mxu0 0.0
        %476 = vmatprep.subr.mxu0 0.0
        %477 = vmatpush1.msra.mxu0 0.0
        %478 = vmatprep.subr.mxu0 0.0
        %479 = vmatpush1.msra.mxu0 0.0
        %480 = vmatprep.subr.mxu0 0.0
        %481 = vmatpush1.msra.mxu0 0.0
        %482 = vmatprep.subr.mxu0 0.0
        %483 = vmatpush1.msra.mxu0 0.0
        %484 = vmatprep.subr.mxu0 0.0
        %485 = vmatpush1.msra.mxu0 0.0
        %486 = vmatprep.subr.mxu0 0.0
        %487 = vmatpush1.msra.mxu0 0.0
        %488 = vmatprep.subr.mxu0 0.0
        %489 = vmatpush1.msra.mxu0 0.0
        %490 = vmatprep.subr.mxu0 0.0
        %491 = vmatpush1.msra.mxu0 0.0
        %492 = vmatprep.subr.mxu0 0.0
        %493 = vmatpush1.msra.mxu0 0.0
        %494 = vmatprep.subr.mxu0 0.0
        %495 = vmatpush1.msra.mxu0 0.0
        %496 = vmatprep.subr.mxu0 0.0
        %497 = vmatpush1.msra.mxu0 0.0
        %498 = vmatprep.subr.mxu0 0.0
        %499 = vmatpush1.msra.mxu0 0.0
        %500 = vmatprep.subr.mxu0 0.0
        %501 = vmatpush1.msra.mxu0 0.0
        %502 = vmatprep.subr.mxu0 0.0
        %503 = vmatpush1.msra.mxu0 0.0
        %504 = vmatprep.subr.mxu0 0.0
        %505 = vmatpush1.msra.mxu0 0.0
        %506 = vmatprep.subr.mxu0 0.0
        %507 = vmatpush1.msra.mxu0 0.0
        %508 = vmatprep.subr.mxu0 0.0
        %509 = vmatpush1.msra.mxu0 0.0
        %510 = vmatprep.subr.mxu0 0.0
        %511 = vmatpush1.msra.mxu0 0.0
        %512 = vmatprep.subr.mxu0 0.0
        %513 = vmatpush1.msra.mxu0 0.0
        %514 = vmatprep.subr.mxu0 0.0
        %515 = vmatpush1.msra.mxu0 0.0
        %516 = vmatprep.subr.mxu0 0.0
        %517 = vmatpush1.msra.mxu0 0.0
        %518 = vmatprep.subr.mxu0 0.0
        %519 = vmatpush1.msra.mxu0 0.0
        %520 = vmatprep.subr.mxu0 0.0
        %521 = vmatpush1.msra.mxu0 0.0
        %522 = vmatprep.subr.mxu0 0.0
        %523 = vmatpush1.msra.mxu0 0.0
        %524 = vmatprep.subr.mxu0 0.0
        %525 = vmatpush1.msra.mxu0 0.0
        %526 = vmatprep.subr.mxu0 0.0
        %527 = vmatpush1.msra.mxu0 0.0
        %528 = vmatprep.subr.mxu0 0.0
        %529 = vmatpush1.msra.mxu0 0.0
        %530 = vmatprep.mubr.f32.mxu0 0.0
        %531 = vmatmul.mubr.f32.gmra.mrb[0].mxu0 %v393
        %v532 = vpop.f32.mrb[0].mxu0
        %v533 = vadd.f32 0.0, %v532
        %v534 = vpop.f32.mrb[0].mxu0
        %v535 = vadd.f32 0.0, %v534
        %536 = vdwg.mxu0
        %537 = vmatprep.subr.mxu0 %v379
        %538 = vmatpush1.msra.mxu0 %v378
        %539 = vmatprep.subr.mxu0 0.0
        %540 = vmatpush1.msra.mxu0 0.0
        %541 = vmatprep.subr.mxu0 0.0
        %542 = vmatpush1.msra.mxu0 0.0
        %543 = vmatprep.subr.mxu0 0.0
        %544 = vmatpush1.msra.mxu0 0.0
        %545 = vmatprep.subr.mxu0 0.0
        %546 = vmatpush1.msra.mxu0 0.0
        %547 = vmatprep.subr.mxu0 0.0
        %548 = vmatpush1.msra.mxu0 0.0
        %549 = vmatprep.subr.mxu0 0.0
        %550 = vmatpush1.msra.mxu0 0.0
        %551 = vmatprep.subr.mxu0 0.0
        %552 = vmatpush1.msra.mxu0 0.0
        %553 = vmatprep.subr.mxu0 0.0
        %554 = vmatpush1.msra.mxu0 0.0
        %555 = vmatprep.subr.mxu0 0.0
        %556 = vmatpush1.msra.mxu0 0.0
        %557 = vmatprep.subr.mxu0 0.0
        %558 = vmatpush1.msra.mxu0 0.0
        %559 = vmatprep.subr.mxu0 0.0
        %560 = vmatpush1.msra.mxu0 0.0
        %561 = vmatprep.subr.mxu0 0.0
        %562 = vmatpush1.msra.mxu0 0.0
        %563 = vmatprep.subr.mxu0 0.0
        %564 = vmatpush1.msra.mxu0 0.0
        %565 = vmatprep.subr.mxu0 0.0
        %566 = vmatpush1.msra.mxu0 0.0
        %567 = vmatprep.subr.mxu0 0.0
        %568 = vmatpush1.msra.mxu0 0.0
        %569 = vmatprep.subr.mxu0 0.0
        %570 = vmatpush1.msra.mxu0 0.0
        %571 = vmatprep.subr.mxu0 0.0
        %572 = vmatpush1.msra.mxu0 0.0
        %573 = vmatprep.subr.mxu0 0.0
        %574 = vmatpush1.msra.mxu0 0.0
        %575 = vmatprep.subr.mxu0 0.0
        %576 = vmatpush1.msra.mxu0 0.0
        %577 = vmatprep.subr.mxu0 0.0
        %578 = vmatpush1.msra.mxu0 0.0
        %579 = vmatprep.subr.mxu0 0.0
        %580 = vmatpush1.msra.mxu0 0.0
        %581 = vmatprep.subr.mxu0 0.0
        %582 = vmatpush1.msra.mxu0 0.0
        %583 = vmatprep.subr.mxu0 0.0
        %584 = vmatpush1.msra.mxu0 0.0
        %585 = vmatprep.subr.mxu0 0.0
        %586 = vmatpush1.msra.mxu0 0.0
        %587 = vmatprep.subr.mxu0 0.0
        %588 = vmatpush1.msra.mxu0 0.0
        %589 = vmatprep.subr.mxu0 0.0
        %590 = vmatpush1.msra.mxu0 0.0
        %591 = vmatprep.subr.mxu0 0.0
        %592 = vmatpush1.msra.mxu0 0.0
        %593 = vmatprep.subr.mxu0 0.0
        %594 = vmatpush1.msra.mxu0 0.0
        %595 = vmatprep.subr.mxu0 0.0
        %596 = vmatpush1.msra.mxu0 0.0
        %597 = vmatprep.subr.mxu0 0.0
        %598 = vmatpush1.msra.mxu0 0.0
        %599 = vmatprep.subr.mxu0 0.0
        %600 = vmatpush1.msra.mxu0 0.0
        %601 = vmatprep.mubr.f32.mxu0 0.0
        %602 = vmatmul.mubr.f32.gmra.mrb[0].mxu0 %v393
        %v603 = vpop.f32.mrb[0].mxu0
        %v604 = vadd.f32 0.0, %v603
        %v605 = vpop.f32.mrb[0].mxu0
        %v606 = vadd.f32 0.0, %v605
        %607 = vdwg.mxu0
        %608 = vmatprep.subr.mxu0 %v381
        %609 = vmatpush1.msra.mxu0 %v380
        %610 = vmatprep.subr.mxu0 0.0
        %611 = vmatpush1.msra.mxu0 0.0
        %612 = vmatprep.subr.mxu0 0.0
        %613 = vmatpush1.msra.mxu0 0.0
        %614 = vmatprep.subr.mxu0 0.0
        %615 = vmatpush1.msra.mxu0 0.0
        %616 = vmatprep.subr.mxu0 0.0
        %617 = vmatpush1.msra.mxu0 0.0
        %618 = vmatprep.subr.mxu0 0.0
        %619 = vmatpush1.msra.mxu0 0.0
        %620 = vmatprep.subr.mxu0 0.0
        %621 = vmatpush1.msra.mxu0 0.0
        %622 = vmatprep.subr.mxu0 0.0
        %623 = vmatpush1.msra.mxu0 0.0
        %624 = vmatprep.subr.mxu0 0.0
        %625 = vmatpush1.msra.mxu0 0.0
        %626 = vmatprep.subr.mxu0 0.0
        %627 = vmatpush1.msra.mxu0 0.0
        %628 = vmatprep.subr.mxu0 0.0
        %629 = vmatpush1.msra.mxu0 0.0
        %630 = vmatprep.subr.mxu0 0.0
        %631 = vmatpush1.msra.mxu0 0.0
        %632 = vmatprep.subr.mxu0 0.0
        %633 = vmatpush1.msra.mxu0 0.0
        %634 = vmatprep.subr.mxu0 0.0
        %635 = vmatpush1.msra.mxu0 0.0
        %636 = vmatprep.subr.mxu0 0.0
        %637 = vmatpush1.msra.mxu0 0.0
        %638 = vmatprep.subr.mxu0 0.0
        %639 = vmatpush1.msra.mxu0 0.0
        %640 = vmatprep.subr.mxu0 0.0
        %641 = vmatpush1.msra.mxu0 0.0
        %642 = vmatprep.subr.mxu0 0.0
        %643 = vmatpush1.msra.mxu0 0.0
        %644 = vmatprep.subr.mxu0 0.0
        %645 = vmatpush1.msra.mxu0 0.0
        %646 = vmatprep.subr.mxu0 0.0
        %647 = vmatpush1.msra.mxu0 0.0
        %648 = vmatprep.subr.mxu0 0.0
        %649 = vmatpush1.msra.mxu0 0.0
        %650 = vmatprep.subr.mxu0 0.0
        %651 = vmatpush1.msra.mxu0 0.0
        %652 = vmatprep.subr.mxu0 0.0
        %653 = vmatpush1.msra.mxu0 0.0
        %654 = vmatprep.subr.mxu0 0.0
        %655 = vmatpush1.msra.mxu0 0.0
        %656 = vmatprep.subr.mxu0 0.0
        %657 = vmatpush1.msra.mxu0 0.0
        %658 = vmatprep.subr.mxu0 0.0
        %659 = vmatpush1.msra.mxu0 0.0
        %660 = vmatprep.subr.mxu0 0.0
        %661 = vmatpush1.msra.mxu0 0.0
        %662 = vmatprep.subr.mxu0 0.0
        %663 = vmatpush1.msra.mxu0 0.0
        %664 = vmatprep.subr.mxu0 0.0
        %665 = vmatpush1.msra.mxu0 0.0
        %666 = vmatprep.subr.mxu0 0.0
        %667 = vmatpush1.msra.mxu0 0.0
        %668 = vmatprep.subr.mxu0 0.0
        %669 = vmatpush1.msra.mxu0 0.0
        %670 = vmatprep.subr.mxu0 0.0
        %671 = vmatpush1.msra.mxu0 0.0
        %672 = vmatprep.mubr.f32.mxu0 0.0
        %673 = vmatmul.mubr.f32.gmra.mrb[0].mxu0 %v393
        %v674 = vpop.f32.mrb[0].mxu0
        %v675 = vadd.f32 0.0, %v674
        %v676 = vpop.f32.mrb[0].mxu0
        %v677 = vadd.f32 0.0, %v676
        %678 = vdwg.mxu0
        %679 = vmatprep.subr.mxu0 0.0
        %680 = vmatpush1.msra.mxu0 %v382
        %681 = vmatprep.subr.mxu0 0.0
        %682 = vmatpush1.msra.mxu0 0.0
        %683 = vmatprep.subr.mxu0 0.0
        %684 = vmatpush1.msra.mxu0 0.0
        %685 = vmatprep.subr.mxu0 0.0
        %686 = vmatpush1.msra.mxu0 0.0
        %687 = vmatprep.subr.mxu0 0.0
        %688 = vmatpush1.msra.mxu0 0.0
        %689 = vmatprep.subr.mxu0 0.0
        %690 = vmatpush1.msra.mxu0 0.0
        %691 = vmatprep.subr.mxu0 0.0
        %692 = vmatpush1.msra.mxu0 0.0
        %693 = vmatprep.subr.mxu0 0.0
        %694 = vmatpush1.msra.mxu0 0.0
        %695 = vmatprep.subr.mxu0 0.0
        %696 = vmatpush1.msra.mxu0 0.0
        %697 = vmatprep.subr.mxu0 0.0
        %698 = vmatpush1.msra.mxu0 0.0
        %699 = vmatprep.subr.mxu0 0.0
        %700 = vmatpush1.msra.mxu0 0.0
        %701 = vmatprep.subr.mxu0 0.0
        %702 = vmatpush1.msra.mxu0 0.0
        %703 = vmatprep.subr.mxu0 0.0
        %704 = vmatpush1.msra.mxu0 0.0
        %705 = vmatprep.subr.mxu0 0.0
        %706 = vmatpush1.msra.mxu0 0.0
        %707 = vmatprep.subr.mxu0 0.0
        %708 = vmatpush1.msra.mxu0 0.0
        %709 = vmatprep.subr.mxu0 0.0
        %710 = vmatpush1.msra.mxu0 0.0
        %711 = vmatprep.subr.mxu0 0.0
        %712 = vmatpush1.msra.mxu0 0.0
        %713 = vmatprep.subr.mxu0 0.0
        %714 = vmatpush1.msra.mxu0 0.0
        %715 = vmatprep.subr.mxu0 0.0
        %716 = vmatpush1.msra.mxu0 0.0
        %717 = vmatprep.subr.mxu0 0.0
        %718 = vmatpush1.msra.mxu0 0.0
        %719 = vmatprep.subr.mxu0 0.0
        %720 = vmatpush1.msra.mxu0 0.0
        %721 = vmatprep.subr.mxu0 0.0
        %722 = vmatpush1.msra.mxu0 0.0
        %723 = vmatprep.subr.mxu0 0.0
        %724 = vmatpush1.msra.mxu0 0.0
        %725 = vmatprep.subr.mxu0 0.0
        %726 = vmatpush1.msra.mxu0 0.0
        %727 = vmatprep.subr.mxu0 0.0
        %728 = vmatpush1.msra.mxu0 0.0
        %729 = vmatprep.subr.mxu0 0.0
        %730 = vmatpush1.msra.mxu0 0.0
        %731 = vmatprep.subr.mxu0 0.0
        %732 = vmatpush1.msra.mxu0 0.0
        %733 = vmatprep.subr.mxu0 0.0
        %734 = vmatpush1.msra.mxu0 0.0
        %735 = vmatprep.subr.mxu0 0.0
        %736 = vmatpush1.msra.mxu0 0.0
        %737 = vmatprep.subr.mxu0 0.0
        %738 = vmatpush1.msra.mxu0 0.0
        %739 = vmatprep.subr.mxu0 0.0
        %740 = vmatpush1.msra.mxu0 0.0
        %741 = vmatprep.subr.mxu0 0.0
        %742 = vmatpush1.msra.mxu0 0.0
        %743 = vmatprep.mubr.f32.mxu0 0.0
        %744 = vmatmul.mubr.f32.gmra.mrb[0].mxu0 %v393
        %v745 = vpop.f32.mrb[0].mxu0
        %v746 = vadd.f32 0.0, %v745
        %v747 = vpop.f32.mrb[0].mxu0
        %748 = vdwg.mxu0
        %v749 = vsel %vm392, %v338, 0
        %751 = vmatprep.subr.mxu0 %v327
        %752 = vmatpush1.msra.mxu0 %v326
        %753 = vmatprep.subr.mxu0 0.0
        %754 = vmatpush1.msra.mxu0 0.0
        %755 = vmatprep.subr.mxu0 0.0
        %756 = vmatpush1.msra.mxu0 0.0
        %757 = vmatprep.subr.mxu0 0.0
        %758 = vmatpush1.msra.mxu0 0.0
        %759 = vmatprep.subr.mxu0 0.0
        %760 = vmatpush1.msra.mxu0 0.0
        %761 = vmatprep.subr.mxu0 0.0
        %762 = vmatpush1.msra.mxu0 0.0
        %763 = vmatprep.subr.mxu0 0.0
        %764 = vmatpush1.msra.mxu0 0.0
        %765 = vmatprep.subr.mxu0 0.0
        %766 = vmatpush1.msra.mxu0 0.0
        %767 = vmatprep.subr.mxu0 0.0
        %768 = vmatpush1.msra.mxu0 0.0
        %769 = vmatprep.subr.mxu0 0.0
        %770 = vmatpush1.msra.mxu0 0.0
        %771 = vmatprep.subr.mxu0 0.0
        %772 = vmatpush1.msra.mxu0 0.0
        %773 = vmatprep.subr.mxu0 0.0
        %774 = vmatpush1.msra.mxu0 0.0
        %775 = vmatprep.subr.mxu0 0.0
        %776 = vmatpush1.msra.mxu0 0.0
        %777 = vmatprep.subr.mxu0 0.0
        %778 = vmatpush1.msra.mxu0 0.0
        %779 = vmatprep.subr.mxu0 0.0
        %780 = vmatpush1.msra.mxu0 0.0
        %781 = vmatprep.subr.mxu0 0.0
        %782 = vmatpush1.msra.mxu0 0.0
        %783 = vmatprep.subr.mxu0 0.0
        %784 = vmatpush1.msra.mxu0 0.0
        %785 = vmatprep.subr.mxu0 0.0
        %786 = vmatpush1.msra.mxu0 0.0
        %787 = vmatprep.subr.mxu0 0.0
        %788 = vmatpush1.msra.mxu0 0.0
        %789 = vmatprep.subr.mxu0 0.0
        %790 = vmatpush1.msra.mxu0 0.0
        %791 = vmatprep.subr.mxu0 0.0
        %792 = vmatpush1.msra.mxu0 0.0
        %793 = vmatprep.subr.mxu0 0.0
        %794 = vmatpush1.msra.mxu0 0.0
        %795 = vmatprep.subr.mxu0 0.0
        %796 = vmatpush1.msra.mxu0 0.0
        %797 = vmatprep.subr.mxu0 0.0
        %798 = vmatpush1.msra.mxu0 0.0
        %799 = vmatprep.subr.mxu0 0.0
        %800 = vmatpush1.msra.mxu0 0.0
        %801 = vmatprep.subr.mxu0 0.0
        %802 = vmatpush1.msra.mxu0 0.0
        %803 = vmatprep.subr.mxu0 0.0
        %804 = vmatpush1.msra.mxu0 0.0
        %805 = vmatprep.subr.mxu0 0.0
        %806 = vmatpush1.msra.mxu0 0.0
        %807 = vmatprep.subr.mxu0 0.0
        %808 = vmatpush1.msra.mxu0 0.0
        %809 = vmatprep.subr.mxu0 0.0
        %810 = vmatpush1.msra.mxu0 0.0
        %811 = vmatprep.subr.mxu0 0.0
        %812 = vmatpush1.msra.mxu0 0.0
        %813 = vmatprep.subr.mxu0 0.0
        %814 = vmatpush1.msra.mxu0 0.0
        %815 = vmatprep.mubr.f32.mxu0 0.0
        %816 = vmatmul.mubr.f32.gmra.mrb[0].mxu0 %v749
        %v817 = vpop.f32.mrb[0].mxu0
        %v818 = vadd.f32 %v462, %v817
        %v819 = vpop.f32.mrb[0].mxu0
        %v820 = vadd.f32 %v464, %v819
        %821 = vdwg.mxu0
        %822 = vmatprep.subr.mxu0 %v329
        %823 = vmatpush1.msra.mxu0 %v328
        %824 = vmatprep.subr.mxu0 0.0
        %825 = vmatpush1.msra.mxu0 0.0
        %826 = vmatprep.subr.mxu0 0.0
        %827 = vmatpush1.msra.mxu0 0.0
        %828 = vmatprep.subr.mxu0 0.0
        %829 = vmatpush1.msra.mxu0 0.0
        %830 = vmatprep.subr.mxu0 0.0
        %831 = vmatpush1.msra.mxu0 0.0
        %832 = vmatprep.subr.mxu0 0.0
        %833 = vmatpush1.msra.mxu0 0.0
        %834 = vmatprep.subr.mxu0 0.0
        %835 = vmatpush1.msra.mxu0 0.0
        %836 = vmatprep.subr.mxu0 0.0
        %837 = vmatpush1.msra.mxu0 0.0
        %838 = vmatprep.subr.mxu0 0.0
        %839 = vmatpush1.msra.mxu0 0.0
        %840 = vmatprep.subr.mxu0 0.0
        %841 = vmatpush1.msra.mxu0 0.0
        %842 = vmatprep.subr.mxu0 0.0
        %843 = vmatpush1.msra.mxu0 0.0
        %844 = vmatprep.subr.mxu0 0.0
        %845 = vmatpush1.msra.mxu0 0.0
        %846 = vmatprep.subr.mxu0 0.0
        %847 = vmatpush1.msra.mxu0 0.0
        %848 = vmatprep.subr.mxu0 0.0
        %849 = vmatpush1.msra.mxu0 0.0
        %850 = vmatprep.subr.mxu0 0.0
        %851 = vmatpush1.msra.mxu0 0.0
        %852 = vmatprep.subr.mxu0 0.0
        %853 = vmatpush1.msra.mxu0 0.0
        %854 = vmatprep.subr.mxu0 0.0
        %855 = vmatpush1.msra.mxu0 0.0
        %856 = vmatprep.subr.mxu0 0.0
        %857 = vmatpush1.msra.mxu0 0.0
        %858 = vmatprep.subr.mxu0 0.0
        %859 = vmatpush1.msra.mxu0 0.0
        %860 = vmatprep.subr.mxu0 0.0
        %861 = vmatpush1.msra.mxu0 0.0
        %862 = vmatprep.subr.mxu0 0.0
        %863 = vmatpush1.msra.mxu0 0.0
        %864 = vmatprep.subr.mxu0 0.0
        %865 = vmatpush1.msra.mxu0 0.0
        %866 = vmatprep.subr.mxu0 0.0
        %867 = vmatpush1.msra.mxu0 0.0
        %868 = vmatprep.subr.mxu0 0.0
        %869 = vmatpush1.msra.mxu0 0.0
        %870 = vmatprep.subr.mxu0 0.0
        %871 = vmatpush1.msra.mxu0 0.0
        %872 = vmatprep.subr.mxu0 0.0
        %873 = vmatpush1.msra.mxu0 0.0
        %874 = vmatprep.subr.mxu0 0.0
        %875 = vmatpush1.msra.mxu0 0.0
        %876 = vmatprep.subr.mxu0 0.0
        %877 = vmatpush1.msra.mxu0 0.0
        %878 = vmatprep.subr.mxu0 0.0
        %879 = vmatpush1.msra.mxu0 0.0
        %880 = vmatprep.subr.mxu0 0.0
        %881 = vmatpush1.msra.mxu0 0.0
        %882 = vmatprep.subr.mxu0 0.0
        %883 = vmatpush1.msra.mxu0 0.0
        %884 = vmatprep.subr.mxu0 0.0
        %885 = vmatpush1.msra.mxu0 0.0
        %886 = vmatprep.mubr.f32.mxu0 0.0
        %887 = vmatmul.mubr.f32.gmra.mrb[0].mxu0 %v749
        %v888 = vpop.f32.mrb[0].mxu0
        %v889 = vadd.f32 %v533, %v888
        %v890 = vpop.f32.mrb[0].mxu0
        %v891 = vadd.f32 %v535, %v890
        %892 = vdwg.mxu0
        %893 = vmatprep.subr.mxu0 %v331
        %894 = vmatpush1.msra.mxu0 %v330
        %895 = vmatprep.subr.mxu0 0.0
        %896 = vmatpush1.msra.mxu0 0.0
        %897 = vmatprep.subr.mxu0 0.0
        %898 = vmatpush1.msra.mxu0 0.0
        %899 = vmatprep.subr.mxu0 0.0
        %900 = vmatpush1.msra.mxu0 0.0
        %901 = vmatprep.subr.mxu0 0.0
        %902 = vmatpush1.msra.mxu0 0.0
        %903 = vmatprep.subr.mxu0 0.0
        %904 = vmatpush1.msra.mxu0 0.0
        %905 = vmatprep.subr.mxu0 0.0
        %906 = vmatpush1.msra.mxu0 0.0
        %907 = vmatprep.subr.mxu0 0.0
        %908 = vmatpush1.msra.mxu0 0.0
        %909 = vmatprep.subr.mxu0 0.0
        %910 = vmatpush1.msra.mxu0 0.0
        %911 = vmatprep.subr.mxu0 0.0
        %912 = vmatpush1.msra.mxu0 0.0
        %913 = vmatprep.subr.mxu0 0.0
        %914 = vmatpush1.msra.mxu0 0.0
        %915 = vmatprep.subr.mxu0 0.0
        %916 = vmatpush1.msra.mxu0 0.0
        %917 = vmatprep.subr.mxu0 0.0
        %918 = vmatpush1.msra.mxu0 0.0
        %919 = vmatprep.subr.mxu0 0.0
        %920 = vmatpush1.msra.mxu0 0.0
        %921 = vmatprep.subr.mxu0 0.0
        %922 = vmatpush1.msra.mxu0 0.0
        %923 = vmatprep.subr.mxu0 0.0
        %924 = vmatpush1.msra.mxu0 0.0
        %925 = vmatprep.subr.mxu0 0.0
        %926 = vmatpush1.msra.mxu0 0.0
        %927 = vmatprep.subr.mxu0 0.0
        %928 = vmatpush1.msra.mxu0 0.0
        %929 = vmatprep.subr.mxu0 0.0
        %930 = vmatpush1.msra.mxu0 0.0
        %931 = vmatprep.subr.mxu0 0.0
        %932 = vmatpush1.msra.mxu0 0.0
        %933 = vmatprep.subr.mxu0 0.0
        %934 = vmatpush1.msra.mxu0 0.0
        %935 = vmatprep.subr.mxu0 0.0
        %936 = vmatpush1.msra.mxu0 0.0
        %937 = vmatprep.subr.mxu0 0.0
        %938 = vmatpush1.msra.mxu0 0.0
        %939 = vmatprep.subr.mxu0 0.0
        %940 = vmatpush1.msra.mxu0 0.0
        %941 = vmatprep.subr.mxu0 0.0
        %942 = vmatpush1.msra.mxu0 0.0
        %943 = vmatprep.subr.mxu0 0.0
        %944 = vmatpush1.msra.mxu0 0.0
        %945 = vmatprep.subr.mxu0 0.0
        %946 = vmatpush1.msra.mxu0 0.0
        %947 = vmatprep.subr.mxu0 0.0
        %948 = vmatpush1.msra.mxu0 0.0
        %949 = vmatprep.subr.mxu0 0.0
        %950 = vmatpush1.msra.mxu0 0.0
        %951 = vmatprep.subr.mxu0 0.0
        %952 = vmatpush1.msra.mxu0 0.0
        %953 = vmatprep.subr.mxu0 0.0
        %954 = vmatpush1.msra.mxu0 0.0
        %955 = vmatprep.subr.mxu0 0.0
        %956 = vmatpush1.msra.mxu0 0.0
        %957 = vmatprep.mubr.f32.mxu0 0.0
        %958 = vmatmul.mubr.f32.gmra.mrb[0].mxu0 %v749
        %v959 = vpop.f32.mrb[0].mxu0
        %v960 = vadd.f32 %v604, %v959
        %v961 = vpop.f32.mrb[0].mxu0
        %v962 = vadd.f32 %v606, %v961
        %963 = vdwg.mxu0
        %964 = vmatprep.subr.mxu0 %v333
        %965 = vmatpush1.msra.mxu0 %v332
        %966 = vmatprep.subr.mxu0 0.0
        %967 = vmatpush1.msra.mxu0 0.0
        %968 = vmatprep.subr.mxu0 0.0
        %969 = vmatpush1.msra.mxu0 0.0
        %970 = vmatprep.subr.mxu0 0.0
        %971 = vmatpush1.msra.mxu0 0.0
        %972 = vmatprep.subr.mxu0 0.0
        %973 = vmatpush1.msra.mxu0 0.0
        %974 = vmatprep.subr.mxu0 0.0
        %975 = vmatpush1.msra.mxu0 0.0
        %976 = vmatprep.subr.mxu0 0.0
        %977 = vmatpush1.msra.mxu0 0.0
        %978 = vmatprep.subr.mxu0 0.0
        %979 = vmatpush1.msra.mxu0 0.0
        %980 = vmatprep.subr.mxu0 0.0
        %981 = vmatpush1.msra.mxu0 0.0
        %982 = vmatprep.subr.mxu0 0.0
        %983 = vmatpush1.msra.mxu0 0.0
        %984 = vmatprep.subr.mxu0 0.0
        %985 = vmatpush1.msra.mxu0 0.0
        %986 = vmatprep.subr.mxu0 0.0
        %987 = vmatpush1.msra.mxu0 0.0
        %988 = vmatprep.subr.mxu0 0.0
        %989 = vmatpush1.msra.mxu0 0.0
        %990 = vmatprep.subr.mxu0 0.0
        %991 = vmatpush1.msra.mxu0 0.0
        %992 = vmatprep.subr.mxu0 0.0
        %993 = vmatpush1.msra.mxu0 0.0
        %994 = vmatprep.subr.mxu0 0.0
        %995 = vmatpush1.msra.mxu0 0.0
        %996 = vmatprep.subr.mxu0 0.0
        %997 = vmatpush1.msra.mxu0 0.0
        %998 = vmatprep.subr.mxu0 0.0
        %999 = vmatpush1.msra.mxu0 0.0
        %1000 = vmatprep.subr.mxu0 0.0
        %1001 = vmatpush1.msra.mxu0 0.0
        %1002 = vmatprep.subr.mxu0 0.0
        %1003 = vmatpush1.msra.mxu0 0.0
        %1004 = vmatprep.subr.mxu0 0.0
        %1005 = vmatpush1.msra.mxu0 0.0
        %1006 = vmatprep.subr.mxu0 0.0
        %1007 = vmatpush1.msra.mxu0 0.0
        %1008 = vmatprep.subr.mxu0 0.0
        %1009 = vmatpush1.msra.mxu0 0.0
        %1010 = vmatprep.subr.mxu0 0.0
        %1011 = vmatpush1.msra.mxu0 0.0
        %1012 = vmatprep.subr.mxu0 0.0
        %1013 = vmatpush1.msra.mxu0 0.0
        %1014 = vmatprep.subr.mxu0 0.0
        %1015 = vmatpush1.msra.mxu0 0.0
        %1016 = vmatprep.subr.mxu0 0.0
        %1017 = vmatpush1.msra.mxu0 0.0
        %1018 = vmatprep.subr.mxu0 0.0
        %1019 = vmatpush1.msra.mxu0 0.0
        %1020 = vmatprep.subr.mxu0 0.0
        %1021 = vmatpush1.msra.mxu0 0.0
        %1022 = vmatprep.subr.mxu0 0.0
        %1023 = vmatpush1.msra.mxu0 0.0
        %1024 = vmatprep.subr.mxu0 0.0
        %1025 = vmatpush1.msra.mxu0 0.0
        %1026 = vmatprep.subr.mxu0 0.0
        %1027 = vmatpush1.msra.mxu0 0.0
        %1028 = vmatprep.mubr.f32.mxu0 0.0
        %1029 = vmatmul.mubr.f32.gmra.mrb[0].mxu0 %v749
        %v1030 = vpop.f32.mrb[0].mxu0
        %v1031 = vadd.f32 %v675, %v1030
        %v1032 = vpop.f32.mrb[0].mxu0
        %v1033 = vadd.f32 %v677, %v1032
        %1034 = vdwg.mxu0
        %1035 = vmatprep.subr.mxu0 0.0
        %1036 = vmatpush1.msra.mxu0 %v334
        %1037 = vmatprep.subr.mxu0 0.0
        %1038 = vmatpush1.msra.mxu0 0.0
        %1039 = vmatprep.subr.mxu0 0.0
        %1040 = vmatpush1.msra.mxu0 0.0
        %1041 = vmatprep.subr.mxu0 0.0
        %1042 = vmatpush1.msra.mxu0 0.0
        %1043 = vmatprep.subr.mxu0 0.0
        %1044 = vmatpush1.msra.mxu0 0.0
        %1045 = vmatprep.subr.mxu0 0.0
        %1046 = vmatpush1.msra.mxu0 0.0
        %1047 = vmatprep.subr.mxu0 0.0
        %1048 = vmatpush1.msra.mxu0 0.0
        %1049 = vmatprep.subr.mxu0 0.0
        %1050 = vmatpush1.msra.mxu0 0.0
        %1051 = vmatprep.subr.mxu0 0.0
        %1052 = vmatpush1.msra.mxu0 0.0
        %1053 = vmatprep.subr.mxu0 0.0
        %1054 = vmatpush1.msra.mxu0 0.0
        %1055 = vmatprep.subr.mxu0 0.0
        %1056 = vmatpush1.msra.mxu0 0.0
        %1057 = vmatprep.subr.mxu0 0.0
        %1058 = vmatpush1.msra.mxu0 0.0
        %1059 = vmatprep.subr.mxu0 0.0
        %1060 = vmatpush1.msra.mxu0 0.0
        %1061 = vmatprep.subr.mxu0 0.0
        %1062 = vmatpush1.msra.mxu0 0.0
        %1063 = vmatprep.subr.mxu0 0.0
        %1064 = vmatpush1.msra.mxu0 0.0
        %1065 = vmatprep.subr.mxu0 0.0
        %1066 = vmatpush1.msra.mxu0 0.0
        %1067 = vmatprep.subr.mxu0 0.0
        %1068 = vmatpush1.msra.mxu0 0.0
        %1069 = vmatprep.subr.mxu0 0.0
        %1070 = vmatpush1.msra.mxu0 0.0
        %1071 = vmatprep.subr.mxu0 0.0
        %1072 = vmatpush1.msra.mxu0 0.0
        %1073 = vmatprep.subr.mxu0 0.0
        %1074 = vmatpush1.msra.mxu0 0.0
        %1075 = vmatprep.subr.mxu0 0.0
        %1076 = vmatpush1.msra.mxu0 0.0
        %1077 = vmatprep.subr.mxu0 0.0
        %1078 = vmatpush1.msra.mxu0 0.0
        %1079 = vmatprep.subr.mxu0 0.0
        %1080 = vmatpush1.msra.mxu0 0.0
        %1081 = vmatprep.subr.mxu0 0.0
        %1082 = vmatpush1.msra.mxu0 0.0
        %1083 = vmatprep.subr.mxu0 0.0
        %1084 = vmatpush1.msra.mxu0 0.0
        %1085 = vmatprep.subr.mxu0 0.0
        %1086 = vmatpush1.msra.mxu0 0.0
        %1087 = vmatprep.subr.mxu0 0.0
        %1088 = vmatpush1.msra.mxu0 0.0
        %1089 = vmatprep.subr.mxu0 0.0
        %1090 = vmatpush1.msra.mxu0 0.0
        %1091 = vmatprep.subr.mxu0 0.0
        %1092 = vmatpush1.msra.mxu0 0.0
        %1093 = vmatprep.subr.mxu0 0.0
        %1094 = vmatpush1.msra.mxu0 0.0
        %1095 = vmatprep.subr.mxu0 0.0
        %1096 = vmatpush1.msra.mxu0 0.0
        %1097 = vmatprep.subr.mxu0 0.0
        %1098 = vmatpush1.msra.mxu0 0.0
        %1099 = vmatprep.mubr.f32.mxu0 0.0
        %1100 = vmatmul.mubr.f32.gmra.mrb[0].mxu0 %v749
        %v1101 = vpop.f32.mrb[0].mxu0
        %v1102 = vadd.f32 %v746, %v1101
        %v1103 = vpop.f32.mrb[0].mxu0
        %1104 = vdwg.mxu0
        %1105 = vrot.lane.b32.xlu0 %v338, 112
        %v1106 = vpop.permute.xlu0 %1105
        %1107 = vrot.lane.b32.xlu0 %v326, 116
        %v1108 = vpop.permute.xlu0 %1107
        %1109 = vrot.lane.b32.xlu0 %v327, 116
        %v1110 = vpop.permute.xlu0 %1109
        %1111 = vrot.lane.b32.xlu0 %v328, 116
        %v1112 = vpop.permute.xlu0 %1111
        %1113 = vrot.lane.b32.xlu0 %v329, 116
        %v1114 = vpop.permute.xlu0 %1113
        %1115 = vrot.lane.b32.xlu0 %v330, 116
        %v1116 = vpop.permute.xlu0 %1115
        %1117 = vrot.lane.b32.xlu0 %v331, 116
        %v1118 = vpop.permute.xlu0 %1117
        %1119 = vrot.lane.b32.xlu0 %v332, 116
        %v1120 = vpop.permute.xlu0 %1119
        %1121 = vrot.lane.b32.xlu0 %v333, 116
        %v1122 = vpop.permute.xlu0 %1121
        %1123 = vrot.lane.b32.xlu0 %v334, 116
        %v1124 = vpop.permute.xlu0 %1123
        %1125 = vrot.lane.b32.xlu0 %v335, 116
        %v1126 = vpop.permute.xlu0 %1125
        %vm1127 = vcmask 949248
        %v1128 = vsel %vm1127, %v1108, %v1110
        %v1129 = vsel %vm1127, %v1110, %v1112
        %v1130 = vsel %vm1127, %v1112, %v1114
        %v1131 = vsel %vm1127, %v1114, %v1116
        %v1132 = vsel %vm1127, %v1116, %v1118
        %v1133 = vsel %vm1127, %v1118, %v1120
        %v1134 = vsel %vm1127, %v1120, %v1122
        %v1135 = vsel %vm1127, %v1122, %v1124
        %v1136 = vsel %vm1127, %v1124, %v1126
        %v1146 = vsel %vm392, %v1106, 0
        %1148 = vmatprep.subr.mxu0 %v1129
        %1149 = vmatpush1.msra.mxu0 %v1128
        %1150 = vmatprep.subr.mxu0 0.0
        %1151 = vmatpush1.msra.mxu0 0.0
        %1152 = vmatprep.subr.mxu0 0.0
        %1153 = vmatpush1.msra.mxu0 0.0
        %1154 = vmatprep.subr.mxu0 0.0
        %1155 = vmatpush1.msra.mxu0 0.0
        %1156 = vmatprep.subr.mxu0 0.0
        %1157 = vmatpush1.msra.mxu0 0.0
        %1158 = vmatprep.subr.mxu0 0.0
        %1159 = vmatpush1.msra.mxu0 0.0
        %1160 = vmatprep.subr.mxu0 0.0
        %1161 = vmatpush1.msra.mxu0 0.0
        %1162 = vmatprep.subr.mxu0 0.0
        %1163 = vmatpush1.msra.mxu0 0.0
        %1164 = vmatprep.subr.mxu0 0.0
        %1165 = vmatpush1.msra.mxu0 0.0
        %1166 = vmatprep.subr.mxu0 0.0
        %1167 = vmatpush1.msra.mxu0 0.0
        %1168 = vmatprep.subr.mxu0 0.0
        %1169 = vmatpush1.msra.mxu0 0.0
        %1170 = vmatprep.subr.mxu0 0.0
        %1171 = vmatpush1.msra.mxu0 0.0
        %1172 = vmatprep.subr.mxu0 0.0
        %1173 = vmatpush1.msra.mxu0 0.0
        %1174 = vmatprep.subr.mxu0 0.0
        %1175 = vmatpush1.msra.mxu0 0.0
        %1176 = vmatprep.subr.mxu0 0.0
        %1177 = vmatpush1.msra.mxu0 0.0
        %1178 = vmatprep.subr.mxu0 0.0
        %1179 = vmatpush1.msra.mxu0 0.0
        %1180 = vmatprep.subr.mxu0 0.0
        %1181 = vmatpush1.msra.mxu0 0.0
        %1182 = vmatprep.subr.mxu0 0.0
        %1183 = vmatpush1.msra.mxu0 0.0
        %1184 = vmatprep.subr.mxu0 0.0
        %1185 = vmatpush1.msra.mxu0 0.0
        %1186 = vmatprep.subr.mxu0 0.0
        %1187 = vmatpush1.msra.mxu0 0.0
        %1188 = vmatprep.subr.mxu0 0.0
        %1189 = vmatpush1.msra.mxu0 0.0
        %1190 = vmatprep.subr.mxu0 0.0
        %1191 = vmatpush1.msra.mxu0 0.0
        %1192 = vmatprep.subr.mxu0 0.0
        %1193 = vmatpush1.msra.mxu0 0.0
        %1194 = vmatprep.subr.mxu0 0.0
        %1195 = vmatpush1.msra.mxu0 0.0
        %1196 = vmatprep.subr.mxu0 0.0
        %1197 = vmatpush1.msra.mxu0 0.0
        %1198 = vmatprep.subr.mxu0 0.0
        %1199 = vmatpush1.msra.mxu0 0.0
        %1200 = vmatprep.subr.mxu0 0.0
        %1201 = vmatpush1.msra.mxu0 0.0
        %1202 = vmatprep.subr.mxu0 0.0
        %1203 = vmatpush1.msra.mxu0 0.0
        %1204 = vmatprep.subr.mxu0 0.0
        %1205 = vmatpush1.msra.mxu0 0.0
        %1206 = vmatprep.subr.mxu0 0.0
        %1207 = vmatpush1.msra.mxu0 0.0
        %1208 = vmatprep.subr.mxu0 0.0
        %1209 = vmatpush1.msra.mxu0 0.0
        %1210 = vmatprep.subr.mxu0 0.0
        %1211 = vmatpush1.msra.mxu0 0.0
        %1212 = vmatprep.mubr.f32.mxu0 0.0
        %1213 = vmatmul.mubr.f32.gmra.mrb[0].mxu0 %v1146
        %v1214 = vpop.f32.mrb[0].mxu0
        %v1215 = vadd.f32 0.0, %v1214
        %v1216 = vpop.f32.mrb[0].mxu0
        %v1217 = vadd.f32 0.0, %v1216
        %1218 = vdwg.mxu0
        %1219 = vmatprep.subr.mxu0 %v1131
        %1220 = vmatpush1.msra.mxu0 %v1130
        %1221 = vmatprep.subr.mxu0 0.0
        %1222 = vmatpush1.msra.mxu0 0.0
        %1223 = vmatprep.subr.mxu0 0.0
        %1224 = vmatpush1.msra.mxu0 0.0
        %1225 = vmatprep.subr.mxu0 0.0
        %1226 = vmatpush1.msra.mxu0 0.0
        %1227 = vmatprep.subr.mxu0 0.0
        %1228 = vmatpush1.msra.mxu0 0.0
        %1229 = vmatprep.subr.mxu0 0.0
        %1230 = vmatpush1.msra.mxu0 0.0
        %1231 = vmatprep.subr.mxu0 0.0
        %1232 = vmatpush1.msra.mxu0 0.0
        %1233 = vmatprep.subr.mxu0 0.0
        %1234 = vmatpush1.msra.mxu0 0.0
        %1235 = vmatprep.subr.mxu0 0.0
        %1236 = vmatpush1.msra.mxu0 0.0
        %1237 = vmatprep.subr.mxu0 0.0
        %1238 = vmatpush1.msra.mxu0 0.0
        %1239 = vmatprep.subr.mxu0 0.0
        %1240 = vmatpush1.msra.mxu0 0.0
        %1241 = vmatprep.subr.mxu0 0.0
        %1242 = vmatpush1.msra.mxu0 0.0
        %1243 = vmatprep.subr.mxu0 0.0
        %1244 = vmatpush1.msra.mxu0 0.0
        %1245 = vmatprep.subr.mxu0 0.0
        %1246 = vmatpush1.msra.mxu0 0.0
        %1247 = vmatprep.subr.mxu0 0.0
        %1248 = vmatpush1.msra.mxu0 0.0
        %1249 = vmatprep.subr.mxu0 0.0
        %1250 = vmatpush1.msra.mxu0 0.0
        %1251 = vmatprep.subr.mxu0 0.0
        %1252 = vmatpush1.msra.mxu0 0.0
        %1253 = vmatprep.subr.mxu0 0.0
        %1254 = vmatpush1.msra.mxu0 0.0
        %1255 = vmatprep.subr.mxu0 0.0
        %1256 = vmatpush1.msra.mxu0 0.0
        %1257 = vmatprep.subr.mxu0 0.0
        %1258 = vmatpush1.msra.mxu0 0.0
        %1259 = vmatprep.subr.mxu0 0.0
        %1260 = vmatpush1.msra.mxu0 0.0
        %1261 = vmatprep.subr.mxu0 0.0
        %1262 = vmatpush1.msra.mxu0 0.0
        %1263 = vmatprep.subr.mxu0 0.0
        %1264 = vmatpush1.msra.mxu0 0.0
        %1265 = vmatprep.subr.mxu0 0.0
        %1266 = vmatpush1.msra.mxu0 0.0
        %1267 = vmatprep.subr.mxu0 0.0
        %1268 = vmatpush1.msra.mxu0 0.0
        %1269 = vmatprep.subr.mxu0 0.0
        %1270 = vmatpush1.msra.mxu0 0.0
        %1271 = vmatprep.subr.mxu0 0.0
        %1272 = vmatpush1.msra.mxu0 0.0
        %1273 = vmatprep.subr.mxu0 0.0
        %1274 = vmatpush1.msra.mxu0 0.0
        %1275 = vmatprep.subr.mxu0 0.0
        %1276 = vmatpush1.msra.mxu0 0.0
        %1277 = vmatprep.subr.mxu0 0.0
        %1278 = vmatpush1.msra.mxu0 0.0
        %1279 = vmatprep.subr.mxu0 0.0
        %1280 = vmatpush1.msra.mxu0 0.0
        %1281 = vmatprep.subr.mxu0 0.0
        %1282 = vmatpush1.msra.mxu0 0.0
        %1283 = vmatprep.mubr.f32.mxu0 0.0
        %1284 = vmatmul.mubr.f32.gmra.mrb[0].mxu0 %v1146
        %v1285 = vpop.f32.mrb[0].mxu0
        %v1286 = vadd.f32 0.0, %v1285
        %v1287 = vpop.f32.mrb[0].mxu0
        %v1288 = vadd.f32 0.0, %v1287
        %1289 = vdwg.mxu0
        %1290 = vmatprep.subr.mxu0 %v1133
        %1291 = vmatpush1.msra.mxu0 %v1132
        %1292 = vmatprep.subr.mxu0 0.0
        %1293 = vmatpush1.msra.mxu0 0.0
        %1294 = vmatprep.subr.mxu0 0.0
        %1295 = vmatpush1.msra.mxu0 0.0
        %1296 = vmatprep.subr.mxu0 0.0
        %1297 = vmatpush1.msra.mxu0 0.0
        %1298 = vmatprep.subr.mxu0 0.0
        %1299 = vmatpush1.msra.mxu0 0.0
        %1300 = vmatprep.subr.mxu0 0.0
        %1301 = vmatpush1.msra.mxu0 0.0
        %1302 = vmatprep.subr.mxu0 0.0
        %1303 = vmatpush1.msra.mxu0 0.0
        %1304 = vmatprep.subr.mxu0 0.0
        %1305 = vmatpush1.msra.mxu0 0.0
        %1306 = vmatprep.subr.mxu0 0.0
        %1307 = vmatpush1.msra.mxu0 0.0
        %1308 = vmatprep.subr.mxu0 0.0
        %1309 = vmatpush1.msra.mxu0 0.0
        %1310 = vmatprep.subr.mxu0 0.0
        %1311 = vmatpush1.msra.mxu0 0.0
        %1312 = vmatprep.subr.mxu0 0.0
        %1313 = vmatpush1.msra.mxu0 0.0
        %1314 = vmatprep.subr.mxu0 0.0
        %1315 = vmatpush1.msra.mxu0 0.0
        %1316 = vmatprep.subr.mxu0 0.0
        %1317 = vmatpush1.msra.mxu0 0.0
        %1318 = vmatprep.subr.mxu0 0.0
        %1319 = vmatpush1.msra.mxu0 0.0
        %1320 = vmatprep.subr.mxu0 0.0
        %1321 = vmatpush1.msra.mxu0 0.0
        %1322 = vmatprep.subr.mxu0 0.0
        %1323 = vmatpush1.msra.mxu0 0.0
        %1324 = vmatprep.subr.mxu0 0.0
        %1325 = vmatpush1.msra.mxu0 0.0
        %1326 = vmatprep.subr.mxu0 0.0
        %1327 = vmatpush1.msra.mxu0 0.0
        %1328 = vmatprep.subr.mxu0 0.0
        %1329 = vmatpush1.msra.mxu0 0.0
        %1330 = vmatprep.subr.mxu0 0.0
        %1331 = vmatpush1.msra.mxu0 0.0
        %1332 = vmatprep.subr.mxu0 0.0
        %1333 = vmatpush1.msra.mxu0 0.0
        %1334 = vmatprep.subr.mxu0 0.0
        %1335 = vmatpush1.msra.mxu0 0.0
        %1336 = vmatprep.subr.mxu0 0.0
        %1337 = vmatpush1.msra.mxu0 0.0
        %1338 = vmatprep.subr.mxu0 0.0
        %1339 = vmatpush1.msra.mxu0 0.0
        %1340 = vmatprep.subr.mxu0 0.0
        %1341 = vmatpush1.msra.mxu0 0.0
        %1342 = vmatprep.subr.mxu0 0.0
        %1343 = vmatpush1.msra.mxu0 0.0
        %1344 = vmatprep.subr.mxu0 0.0
        %1345 = vmatpush1.msra.mxu0 0.0
        %1346 = vmatprep.subr.mxu0 0.0
        %1347 = vmatpush1.msra.mxu0 0.0
        %1348 = vmatprep.subr.mxu0 0.0
        %1349 = vmatpush1.msra.mxu0 0.0
        %1350 = vmatprep.subr.mxu0 0.0
        %1351 = vmatpush1.msra.mxu0 0.0
        %1352 = vmatprep.subr.mxu0 0.0
        %1353 = vmatpush1.msra.mxu0 0.0
        %1354 = vmatprep.mubr.f32.mxu0 0.0
        %1355 = vmatmul.mubr.f32.gmra.mrb[0].mxu0 %v1146
        %v1356 = vpop.f32.mrb[0].mxu0
        %v1357 = vadd.f32 0.0, %v1356
        %v1358 = vpop.f32.mrb[0].mxu0
        %v1359 = vadd.f32 0.0, %v1358
        %1360 = vdwg.mxu0
        %1361 = vmatprep.subr.mxu0 %v1135
        %1362 = vmatpush1.msra.mxu0 %v1134
        %1363 = vmatprep.subr.mxu0 0.0
        %1364 = vmatpush1.msra.mxu0 0.0
        %1365 = vmatprep.subr.mxu0 0.0
        %1366 = vmatpush1.msra.mxu0 0.0
        %1367 = vmatprep.subr.mxu0 0.0
        %1368 = vmatpush1.msra.mxu0 0.0
        %1369 = vmatprep.subr.mxu0 0.0
        %1370 = vmatpush1.msra.mxu0 0.0
        %1371 = vmatprep.subr.mxu0 0.0
        %1372 = vmatpush1.msra.mxu0 0.0
        %1373 = vmatprep.subr.mxu0 0.0
        %1374 = vmatpush1.msra.mxu0 0.0
        %1375 = vmatprep.subr.mxu0 0.0
        %1376 = vmatpush1.msra.mxu0 0.0
        %1377 = vmatprep.subr.mxu0 0.0
        %1378 = vmatpush1.msra.mxu0 0.0
        %1379 = vmatprep.subr.mxu0 0.0
        %1380 = vmatpush1.msra.mxu0 0.0
        %1381 = vmatprep.subr.mxu0 0.0
        %1382 = vmatpush1.msra.mxu0 0.0
        %1383 = vmatprep.subr.mxu0 0.0
        %1384 = vmatpush1.msra.mxu0 0.0
        %1385 = vmatprep.subr.mxu0 0.0
        %1386 = vmatpush1.msra.mxu0 0.0
        %1387 = vmatprep.subr.mxu0 0.0
        %1388 = vmatpush1.msra.mxu0 0.0
        %1389 = vmatprep.subr.mxu0 0.0
        %1390 = vmatpush1.msra.mxu0 0.0
        %1391 = vmatprep.subr.mxu0 0.0
        %1392 = vmatpush1.msra.mxu0 0.0
        %1393 = vmatprep.subr.mxu0 0.0
        %1394 = vmatpush1.msra.mxu0 0.0
        %1395 = vmatprep.subr.mxu0 0.0
        %1396 = vmatpush1.msra.mxu0 0.0
        %1397 = vmatprep.subr.mxu0 0.0
        %1398 = vmatpush1.msra.mxu0 0.0
        %1399 = vmatprep.subr.mxu0 0.0
        %1400 = vmatpush1.msra.mxu0 0.0
        %1401 = vmatprep.subr.mxu0 0.0
        %1402 = vmatpush1.msra.mxu0 0.0
        %1403 = vmatprep.subr.mxu0 0.0
        %1404 = vmatpush1.msra.mxu0 0.0
        %1405 = vmatprep.subr.mxu0 0.0
        %1406 = vmatpush1.msra.mxu0 0.0
        %1407 = vmatprep.subr.mxu0 0.0
        %1408 = vmatpush1.msra.mxu0 0.0
        %1409 = vmatprep.subr.mxu0 0.0
        %1410 = vmatpush1.msra.mxu0 0.0
        %1411 = vmatprep.subr.mxu0 0.0
        %1412 = vmatpush1.msra.mxu0 0.0
        %1413 = vmatprep.subr.mxu0 0.0
        %1414 = vmatpush1.msra.mxu0 0.0
        %1415 = vmatprep.subr.mxu0 0.0
        %1416 = vmatpush1.msra.mxu0 0.0
        %1417 = vmatprep.subr.mxu0 0.0
        %1418 = vmatpush1.msra.mxu0 0.0
        %1419 = vmatprep.subr.mxu0 0.0
        %1420 = vmatpush1.msra.mxu0 0.0
        %1421 = vmatprep.subr.mxu0 0.0
        %1422 = vmatpush1.msra.mxu0 0.0
        %1423 = vmatprep.subr.mxu0 0.0
        %1424 = vmatpush1.msra.mxu0 0.0
        %1425 = vmatprep.mubr.f32.mxu0 0.0
        %1426 = vmatmul.mubr.f32.gmra.mrb[0].mxu0 %v1146
        %v1427 = vpop.f32.mrb[0].mxu0
        %v1428 = vadd.f32 0.0, %v1427
        %v1429 = vpop.f32.mrb[0].mxu0
        %v1430 = vadd.f32 0.0, %v1429
        %1431 = vdwg.mxu0
        %1432 = vmatprep.subr.mxu0 0.0
        %1433 = vmatpush1.msra.mxu0 %v1136
        %1434 = vmatprep.subr.mxu0 0.0
        %1435 = vmatpush1.msra.mxu0 0.0
        %1436 = vmatprep.subr.mxu0 0.0
        %1437 = vmatpush1.msra.mxu0 0.0
        %1438 = vmatprep.subr.mxu0 0.0
        %1439 = vmatpush1.msra.mxu0 0.0
        %1440 = vmatprep.subr.mxu0 0.0
        %1441 = vmatpush1.msra.mxu0 0.0
        %1442 = vmatprep.subr.mxu0 0.0
        %1443 = vmatpush1.msra.mxu0 0.0
        %1444 = vmatprep.subr.mxu0 0.0
        %1445 = vmatpush1.msra.mxu0 0.0
        %1446 = vmatprep.subr.mxu0 0.0
        %1447 = vmatpush1.msra.mxu0 0.0
        %1448 = vmatprep.subr.mxu0 0.0
        %1449 = vmatpush1.msra.mxu0 0.0
        %1450 = vmatprep.subr.mxu0 0.0
        %1451 = vmatpush1.msra.mxu0 0.0
        %1452 = vmatprep.subr.mxu0 0.0
        %1453 = vmatpush1.msra.mxu0 0.0
        %1454 = vmatprep.subr.mxu0 0.0
        %1455 = vmatpush1.msra.mxu0 0.0
        %1456 = vmatprep.subr.mxu0 0.0
        %1457 = vmatpush1.msra.mxu0 0.0
        %1458 = vmatprep.subr.mxu0 0.0
        %1459 = vmatpush1.msra.mxu0 0.0
        %1460 = vmatprep.subr.mxu0 0.0
        %1461 = vmatpush1.msra.mxu0 0.0
        %1462 = vmatprep.subr.mxu0 0.0
        %1463 = vmatpush1.msra.mxu0 0.0
        %1464 = vmatprep.subr.mxu0 0.0
        %1465 = vmatpush1.msra.mxu0 0.0
        %1466 = vmatprep.subr.mxu0 0.0
        %1467 = vmatpush1.msra.mxu0 0.0
        %1468 = vmatprep.subr.mxu0 0.0
        %1469 = vmatpush1.msra.mxu0 0.0
        %1470 = vmatprep.subr.mxu0 0.0
        %1471 = vmatpush1.msra.mxu0 0.0
        %1472 = vmatprep.subr.mxu0 0.0
        %1473 = vmatpush1.msra.mxu0 0.0
        %1474 = vmatprep.subr.mxu0 0.0
        %1475 = vmatpush1.msra.mxu0 0.0
        %1476 = vmatprep.subr.mxu0 0.0
        %1477 = vmatpush1.msra.mxu0 0.0
        %1478 = vmatprep.subr.mxu0 0.0
        %1479 = vmatpush1.msra.mxu0 0.0
        %1480 = vmatprep.subr.mxu0 0.0
        %1481 = vmatpush1.msra.mxu0 0.0
        %1482 = vmatprep.subr.mxu0 0.0
        %1483 = vmatpush1.msra.mxu0 0.0
        %1484 = vmatprep.subr.mxu0 0.0
        %1485 = vmatpush1.msra.mxu0 0.0
        %1486 = vmatprep.subr.mxu0 0.0
        %1487 = vmatpush1.msra.mxu0 0.0
        %1488 = vmatprep.subr.mxu0 0.0
        %1489 = vmatpush1.msra.mxu0 0.0
        %1490 = vmatprep.subr.mxu0 0.0
        %1491 = vmatpush1.msra.mxu0 0.0
        %1492 = vmatprep.subr.mxu0 0.0
        %1493 = vmatpush1.msra.mxu0 0.0
        %1494 = vmatprep.subr.mxu0 0.0
        %1495 = vmatpush1.msra.mxu0 0.0
        %1496 = vmatprep.mubr.f32.mxu0 0.0
        %1497 = vmatmul.mubr.f32.gmra.mrb[0].mxu0 %v1146
        %v1498 = vpop.f32.mrb[0].mxu0
        %v1499 = vadd.f32 0.0, %v1498
        %v1500 = vpop.f32.mrb[0].mxu0
        %1501 = vdwg.mxu0
        %v1502 = vadd.f32 %v818, %v1215
        %v1503 = vadd.f32 %v820, %v1217
        %v1504 = vadd.f32 %v889, %v1286
        %v1505 = vadd.f32 %v891, %v1288
        %v1506 = vadd.f32 %v960, %v1357
        %v1507 = vadd.f32 %v962, %v1359
        %v1508 = vadd.f32 %v1031, %v1428
        %v1509 = vadd.f32 %v1033, %v1430
        %v1510 = vadd.f32 %v1102, %v1499
        %1511 = vrot.lane.b32.xlu0 %v338, 104
        %v1512 = vpop.permute.xlu0 %1511
        %1513 = vrot.lane.b32.xlu0 %v326, 70
        %v1514 = vpop.permute.xlu0 %1513
        %1515 = vrot.lane.b32.xlu0 %v327, 70
        %v1516 = vpop.permute.xlu0 %1515
        %1517 = vrot.lane.b32.xlu0 %v328, 70
        %v1518 = vpop.permute.xlu0 %1517
        %1519 = vrot.lane.b32.xlu0 %v329, 70
        %v1520 = vpop.permute.xlu0 %1519
        %1521 = vrot.lane.b32.xlu0 %v330, 70
        %v1522 = vpop.permute.xlu0 %1521
        %1523 = vrot.lane.b32.xlu0 %v331, 70
        %v1524 = vpop.permute.xlu0 %1523
        %1525 = vrot.lane.b32.xlu0 %v332, 70
        %v1526 = vpop.permute.xlu0 %1525
        %1527 = vrot.lane.b32.xlu0 %v333, 70
        %v1528 = vpop.permute.xlu0 %1527
        %1529 = vrot.lane.b32.xlu0 %v334, 70
        %v1530 = vpop.permute.xlu0 %1529
        %1531 = vrot.lane.b32.xlu0 %v335, 70
        %v1532 = vpop.permute.xlu0 %1531
        %vm1533 = vcmask 572416
        %v1534 = vsel %vm1533, %v1514, %v1516
        %v1535 = vsel %vm1533, %v1516, %v1518
        %v1536 = vsel %vm1533, %v1518, %v1520
        %v1537 = vsel %vm1533, %v1520, %v1522
        %v1538 = vsel %vm1533, %v1522, %v1524
        %v1539 = vsel %vm1533, %v1524, %v1526
        %v1540 = vsel %vm1533, %v1526, %v1528
        %v1541 = vsel %vm1533, %v1528, %v1530
        %v1542 = vsel %vm1533, %v1530, %v1532
        %v1552 = vsel %vm392, %v1512, 0
        %1554 = vmatprep.subr.mxu0 %v1535
        %1555 = vmatpush1.msra.mxu0 %v1534
        %1556 = vmatprep.subr.mxu0 0.0
        %1557 = vmatpush1.msra.mxu0 0.0
        %1558 = vmatprep.subr.mxu0 0.0
        %1559 = vmatpush1.msra.mxu0 0.0
        %1560 = vmatprep.subr.mxu0 0.0
        %1561 = vmatpush1.msra.mxu0 0.0
        %1562 = vmatprep.subr.mxu0 0.0
        %1563 = vmatpush1.msra.mxu0 0.0
        %1564 = vmatprep.subr.mxu0 0.0
        %1565 = vmatpush1.msra.mxu0 0.0
        %1566 = vmatprep.subr.mxu0 0.0
        %1567 = vmatpush1.msra.mxu0 0.0
        %1568 = vmatprep.subr.mxu0 0.0
        %1569 = vmatpush1.msra.mxu0 0.0
        %1570 = vmatprep.subr.mxu0 0.0
        %1571 = vmatpush1.msra.mxu0 0.0
        %1572 = vmatprep.subr.mxu0 0.0
        %1573 = vmatpush1.msra.mxu0 0.0
        %1574 = vmatprep.subr.mxu0 0.0
        %1575 = vmatpush1.msra.mxu0 0.0
        %1576 = vmatprep.subr.mxu0 0.0
        %1577 = vmatpush1.msra.mxu0 0.0
        %1578 = vmatprep.subr.mxu0 0.0
        %1579 = vmatpush1.msra.mxu0 0.0
        %1580 = vmatprep.subr.mxu0 0.0
        %1581 = vmatpush1.msra.mxu0 0.0
        %1582 = vmatprep.subr.mxu0 0.0
        %1583 = vmatpush1.msra.mxu0 0.0
        %1584 = vmatprep.subr.mxu0 0.0
        %1585 = vmatpush1.msra.mxu0 0.0
        %1586 = vmatprep.subr.mxu0 0.0
        %1587 = vmatpush1.msra.mxu0 0.0
        %1588 = vmatprep.subr.mxu0 0.0
        %1589 = vmatpush1.msra.mxu0 0.0
        %1590 = vmatprep.subr.mxu0 0.0
        %1591 = vmatpush1.msra.mxu0 0.0
        %1592 = vmatprep.subr.mxu0 0.0
        %1593 = vmatpush1.msra.mxu0 0.0
        %1594 = vmatprep.subr.mxu0 0.0
        %1595 = vmatpush1.msra.mxu0 0.0
        %1596 = vmatprep.subr.mxu0 0.0
        %1597 = vmatpush1.msra.mxu0 0.0
        %1598 = vmatprep.subr.mxu0 0.0
        %1599 = vmatpush1.msra.mxu0 0.0
        %1600 = vmatprep.subr.mxu0 0.0
        %1601 = vmatpush1.msra.mxu0 0.0
        %1602 = vmatprep.subr.mxu0 0.0
        %1603 = vmatpush1.msra.mxu0 0.0
        %1604 = vmatprep.subr.mxu0 0.0
        %1605 = vmatpush1.msra.mxu0 0.0
        %1606 = vmatprep.subr.mxu0 0.0
        %1607 = vmatpush1.msra.mxu0 0.0
        %1608 = vmatprep.subr.mxu0 0.0
        %1609 = vmatpush1.msra.mxu0 0.0
        %1610 = vmatprep.subr.mxu0 0.0
        %1611 = vmatpush1.msra.mxu0 0.0
        %1612 = vmatprep.subr.mxu0 0.0
        %1613 = vmatpush1.msra.mxu0 0.0
        %1614 = vmatprep.subr.mxu0 0.0
        %1615 = vmatpush1.msra.mxu0 0.0
        %1616 = vmatprep.subr.mxu0 0.0
        %1617 = vmatpush1.msra.mxu0 0.0
        %1618 = vmatprep.mubr.f32.mxu0 0.0
        %1619 = vmatmul.mubr.f32.gmra.mrb[0].mxu0 %v1552
        %v1620 = vpop.f32.mrb[0].mxu0
        %v1621 = vadd.f32 0.0, %v1620
        %v1622 = vpop.f32.mrb[0].mxu0
        %v1623 = vadd.f32 0.0, %v1622
        %1624 = vdwg.mxu0
        %1625 = vmatprep.subr.mxu0 %v1537
        %1626 = vmatpush1.msra.mxu0 %v1536
        %1627 = vmatprep.subr.mxu0 0.0
        %1628 = vmatpush1.msra.mxu0 0.0
        %1629 = vmatprep.subr.mxu0 0.0
        %1630 = vmatpush1.msra.mxu0 0.0
        %1631 = vmatprep.subr.mxu0 0.0
        %1632 = vmatpush1.msra.mxu0 0.0
        %1633 = vmatprep.subr.mxu0 0.0
        %1634 = vmatpush1.msra.mxu0 0.0
        %1635 = vmatprep.subr.mxu0 0.0
        %1636 = vmatpush1.msra.mxu0 0.0
        %1637 = vmatprep.subr.mxu0 0.0
        %1638 = vmatpush1.msra.mxu0 0.0
        %1639 = vmatprep.subr.mxu0 0.0
        %1640 = vmatpush1.msra.mxu0 0.0
        %1641 = vmatprep.subr.mxu0 0.0
        %1642 = vmatpush1.msra.mxu0 0.0
        %1643 = vmatprep.subr.mxu0 0.0
        %1644 = vmatpush1.msra.mxu0 0.0
        %1645 = vmatprep.subr.mxu0 0.0
        %1646 = vmatpush1.msra.mxu0 0.0
        %1647 = vmatprep.subr.mxu0 0.0
        %1648 = vmatpush1.msra.mxu0 0.0
        %1649 = vmatprep.subr.mxu0 0.0
        %1650 = vmatpush1.msra.mxu0 0.0
        %1651 = vmatprep.subr.mxu0 0.0
        %1652 = vmatpush1.msra.mxu0 0.0
        %1653 = vmatprep.subr.mxu0 0.0
        %1654 = vmatpush1.msra.mxu0 0.0
        %1655 = vmatprep.subr.mxu0 0.0
        %1656 = vmatpush1.msra.mxu0 0.0
        %1657 = vmatprep.subr.mxu0 0.0
        %1658 = vmatpush1.msra.mxu0 0.0
        %1659 = vmatprep.subr.mxu0 0.0
        %1660 = vmatpush1.msra.mxu0 0.0
        %1661 = vmatprep.subr.mxu0 0.0
        %1662 = vmatpush1.msra.mxu0 0.0
        %1663 = vmatprep.subr.mxu0 0.0
        %1664 = vmatpush1.msra.mxu0 0.0
        %1665 = vmatprep.subr.mxu0 0.0
        %1666 = vmatpush1.msra.mxu0 0.0
        %1667 = vmatprep.subr.mxu0 0.0
        %1668 = vmatpush1.msra.mxu0 0.0
        %1669 = vmatprep.subr.mxu0 0.0
        %1670 = vmatpush1.msra.mxu0 0.0
        %1671 = vmatprep.subr.mxu0 0.0
        %1672 = vmatpush1.msra.mxu0 0.0
        %1673 = vmatprep.subr.mxu0 0.0
        %1674 = vmatpush1.msra.mxu0 0.0
        %1675 = vmatprep.subr.mxu0 0.0
        %1676 = vmatpush1.msra.mxu0 0.0
        %1677 = vmatprep.subr.mxu0 0.0
        %1678 = vmatpush1.msra.mxu0 0.0
        %1679 = vmatprep.subr.mxu0 0.0
        %1680 = vmatpush1.msra.mxu0 0.0
        %1681 = vmatprep.subr.mxu0 0.0
        %1682 = vmatpush1.msra.mxu0 0.0
        %1683 = vmatprep.subr.mxu0 0.0
        %1684 = vmatpush1.msra.mxu0 0.0
        %1685 = vmatprep.subr.mxu0 0.0
        %1686 = vmatpush1.msra.mxu0 0.0
        %1687 = vmatprep.subr.mxu0 0.0
        %1688 = vmatpush1.msra.mxu0 0.0
        %1689 = vmatprep.mubr.f32.mxu0 0.0
        %1690 = vmatmul.mubr.f32.gmra.mrb[0].mxu0 %v1552
        %v1691 = vpop.f32.mrb[0].mxu0
        %v1692 = vadd.f32 0.0, %v1691
        %v1693 = vpop.f32.mrb[0].mxu0
        %v1694 = vadd.f32 0.0, %v1693
        %1695 = vdwg.mxu0
        %1696 = vmatprep.subr.mxu0 %v1539
        %1697 = vmatpush1.msra.mxu0 %v1538
        %1698 = vmatprep.subr.mxu0 0.0
        %1699 = vmatpush1.msra.mxu0 0.0
        %1700 = vmatprep.subr.mxu0 0.0
        %1701 = vmatpush1.msra.mxu0 0.0
        %1702 = vmatprep.subr.mxu0 0.0
        %1703 = vmatpush1.msra.mxu0 0.0
        %1704 = vmatprep.subr.mxu0 0.0
        %1705 = vmatpush1.msra.mxu0 0.0
        %1706 = vmatprep.subr.mxu0 0.0
        %1707 = vmatpush1.msra.mxu0 0.0
        %1708 = vmatprep.subr.mxu0 0.0
        %1709 = vmatpush1.msra.mxu0 0.0
        %1710 = vmatprep.subr.mxu0 0.0
        %1711 = vmatpush1.msra.mxu0 0.0
        %1712 = vmatprep.subr.mxu0 0.0
        %1713 = vmatpush1.msra.mxu0 0.0
        %1714 = vmatprep.subr.mxu0 0.0
        %1715 = vmatpush1.msra.mxu0 0.0
        %1716 = vmatprep.subr.mxu0 0.0
        %1717 = vmatpush1.msra.mxu0 0.0
        %1718 = vmatprep.subr.mxu0 0.0
        %1719 = vmatpush1.msra.mxu0 0.0
        %1720 = vmatprep.subr.mxu0 0.0
        %1721 = vmatpush1.msra.mxu0 0.0
        %1722 = vmatprep.subr.mxu0 0.0
        %1723 = vmatpush1.msra.mxu0 0.0
        %1724 = vmatprep.subr.mxu0 0.0
        %1725 = vmatpush1.msra.mxu0 0.0
        %1726 = vmatprep.subr.mxu0 0.0
        %1727 = vmatpush1.msra.mxu0 0.0
        %1728 = vmatprep.subr.mxu0 0.0
        %1729 = vmatpush1.msra.mxu0 0.0
        %1730 = vmatprep.subr.mxu0 0.0
        %1731 = vmatpush1.msra.mxu0 0.0
        %1732 = vmatprep.subr.mxu0 0.0
        %1733 = vmatpush1.msra.mxu0 0.0
        %1734 = vmatprep.subr.mxu0 0.0
        %1735 = vmatpush1.msra.mxu0 0.0
        %1736 = vmatprep.subr.mxu0 0.0
        %1737 = vmatpush1.msra.mxu0 0.0
        %1738 = vmatprep.subr.mxu0 0.0
        %1739 = vmatpush1.msra.mxu0 0.0
        %1740 = vmatprep.subr.mxu0 0.0
        %1741 = vmatpush1.msra.mxu0 0.0
        %1742 = vmatprep.subr.mxu0 0.0
        %1743 = vmatpush1.msra.mxu0 0.0
        %1744 = vmatprep.subr.mxu0 0.0
        %1745 = vmatpush1.msra.mxu0 0.0
        %1746 = vmatprep.subr.mxu0 0.0
        %1747 = vmatpush1.msra.mxu0 0.0
        %1748 = vmatprep.subr.mxu0 0.0
        %1749 = vmatpush1.msra.mxu0 0.0
        %1750 = vmatprep.subr.mxu0 0.0
        %1751 = vmatpush1.msra.mxu0 0.0
        %1752 = vmatprep.subr.mxu0 0.0
        %1753 = vmatpush1.msra.mxu0 0.0
        %1754 = vmatprep.subr.mxu0 0.0
        %1755 = vmatpush1.msra.mxu0 0.0
        %1756 = vmatprep.subr.mxu0 0.0
        %1757 = vmatpush1.msra.mxu0 0.0
        %1758 = vmatprep.subr.mxu0 0.0
        %1759 = vmatpush1.msra.mxu0 0.0
        %1760 = vmatprep.mubr.f32.mxu0 0.0
        %1761 = vmatmul.mubr.f32.gmra.mrb[0].mxu0 %v1552
        %v1762 = vpop.f32.mrb[0].mxu0
        %v1763 = vadd.f32 0.0, %v1762
        %v1764 = vpop.f32.mrb[0].mxu0
        %v1765 = vadd.f32 0.0, %v1764
        %1766 = vdwg.mxu0
        %1767 = vmatprep.subr.mxu0 %v1541
        %1768 = vmatpush1.msra.mxu0 %v1540
        %1769 = vmatprep.subr.mxu0 0.0
        %1770 = vmatpush1.msra.mxu0 0.0
        %1771 = vmatprep.subr.mxu0 0.0
        %1772 = vmatpush1.msra.mxu0 0.0
        %1773 = vmatprep.subr.mxu0 0.0
        %1774 = vmatpush1.msra.mxu0 0.0
        %1775 = vmatprep.subr.mxu0 0.0
        %1776 = vmatpush1.msra.mxu0 0.0
        %1777 = vmatprep.subr.mxu0 0.0
        %1778 = vmatpush1.msra.mxu0 0.0
        %1779 = vmatprep.subr.mxu0 0.0
        %1780 = vmatpush1.msra.mxu0 0.0
        %1781 = vmatprep.subr.mxu0 0.0
        %1782 = vmatpush1.msra.mxu0 0.0
        %1783 = vmatprep.subr.mxu0 0.0
        %1784 = vmatpush1.msra.mxu0 0.0
        %1785 = vmatprep.subr.mxu0 0.0
        %1786 = vmatpush1.msra.mxu0 0.0
        %1787 = vmatprep.subr.mxu0 0.0
        %1788 = vmatpush1.msra.mxu0 0.0
        %1789 = vmatprep.subr.mxu0 0.0
        %1790 = vmatpush1.msra.mxu0 0.0
        %1791 = vmatprep.subr.mxu0 0.0
        %1792 = vmatpush1.msra.mxu0 0.0
        %1793 = vmatprep.subr.mxu0 0.0
        %1794 = vmatpush1.msra.mxu0 0.0
        %1795 = vmatprep.subr.mxu0 0.0
        %1796 = vmatpush1.msra.mxu0 0.0
        %1797 = vmatprep.subr.mxu0 0.0
        %1798 = vmatpush1.msra.mxu0 0.0
        %1799 = vmatprep.subr.mxu0 0.0
        %1800 = vmatpush1.msra.mxu0 0.0
        %1801 = vmatprep.subr.mxu0 0.0
        %1802 = vmatpush1.msra.mxu0 0.0
        %1803 = vmatprep.subr.mxu0 0.0
        %1804 = vmatpush1.msra.mxu0 0.0
        %1805 = vmatprep.subr.mxu0 0.0
        %1806 = vmatpush1.msra.mxu0 0.0
        %1807 = vmatprep.subr.mxu0 0.0
        %1808 = vmatpush1.msra.mxu0 0.0
        %1809 = vmatprep.subr.mxu0 0.0
        %1810 = vmatpush1.msra.mxu0 0.0
        %1811 = vmatprep.subr.mxu0 0.0
        %1812 = vmatpush1.msra.mxu0 0.0
        %1813 = vmatprep.subr.mxu0 0.0
        %1814 = vmatpush1.msra.mxu0 0.0
        %1815 = vmatprep.subr.mxu0 0.0
        %1816 = vmatpush1.msra.mxu0 0.0
        %1817 = vmatprep.subr.mxu0 0.0
        %1818 = vmatpush1.msra.mxu0 0.0
        %1819 = vmatprep.subr.mxu0 0.0
        %1820 = vmatpush1.msra.mxu0 0.0
        %1821 = vmatprep.subr.mxu0 0.0
        %1822 = vmatpush1.msra.mxu0 0.0
        %1823 = vmatprep.subr.mxu0 0.0
        %1824 = vmatpush1.msra.mxu0 0.0
        %1825 = vmatprep.subr.mxu0 0.0
        %1826 = vmatpush1.msra.mxu0 0.0
        %1827 = vmatprep.subr.mxu0 0.0
        %1828 = vmatpush1.msra.mxu0 0.0
        %1829 = vmatprep.subr.mxu0 0.0
        %1830 = vmatpush1.msra.mxu0 0.0
        %1831 = vmatprep.mubr.f32.mxu0 0.0
        %1832 = vmatmul.mubr.f32.gmra.mrb[0].mxu0 %v1552
        %v1833 = vpop.f32.mrb[0].mxu0
        %v1834 = vadd.f32 0.0, %v1833
        %v1835 = vpop.f32.mrb[0].mxu0
        %v1836 = vadd.f32 0.0, %v1835
        %1837 = vdwg.mxu0
        %1838 = vmatprep.subr.mxu0 0.0
        %1839 = vmatpush1.msra.mxu0 %v1542
        %1840 = vmatprep.subr.mxu0 0.0
        %1841 = vmatpush1.msra.mxu0 0.0
        %1842 = vmatprep.subr.mxu0 0.0
        %1843 = vmatpush1.msra.mxu0 0.0
        %1844 = vmatprep.subr.mxu0 0.0
        %1845 = vmatpush1.msra.mxu0 0.0
        %1846 = vmatprep.subr.mxu0 0.0
        %1847 = vmatpush1.msra.mxu0 0.0
        %1848 = vmatprep.subr.mxu0 0.0
        %1849 = vmatpush1.msra.mxu0 0.0
        %1850 = vmatprep.subr.mxu0 0.0
        %1851 = vmatpush1.msra.mxu0 0.0
        %1852 = vmatprep.subr.mxu0 0.0
        %1853 = vmatpush1.msra.mxu0 0.0
        %1854 = vmatprep.subr.mxu0 0.0
        %1855 = vmatpush1.msra.mxu0 0.0
        %1856 = vmatprep.subr.mxu0 0.0
        %1857 = vmatpush1.msra.mxu0 0.0
        %1858 = vmatprep.subr.mxu0 0.0
        %1859 = vmatpush1.msra.mxu0 0.0
        %1860 = vmatprep.subr.mxu0 0.0
        %1861 = vmatpush1.msra.mxu0 0.0
        %1862 = vmatprep.subr.mxu0 0.0
        %1863 = vmatpush1.msra.mxu0 0.0
        %1864 = vmatprep.subr.mxu0 0.0
        %1865 = vmatpush1.msra.mxu0 0.0
        %1866 = vmatprep.subr.mxu0 0.0
        %1867 = vmatpush1.msra.mxu0 0.0
        %1868 = vmatprep.subr.mxu0 0.0
        %1869 = vmatpush1.msra.mxu0 0.0
        %1870 = vmatprep.subr.mxu0 0.0
        %1871 = vmatpush1.msra.mxu0 0.0
        %1872 = vmatprep.subr.mxu0 0.0
        %1873 = vmatpush1.msra.mxu0 0.0
        %1874 = vmatprep.subr.mxu0 0.0
        %1875 = vmatpush1.msra.mxu0 0.0
        %1876 = vmatprep.subr.mxu0 0.0
        %1877 = vmatpush1.msra.mxu0 0.0
        %1878 = vmatprep.subr.mxu0 0.0
        %1879 = vmatpush1.msra.mxu0 0.0
        %1880 = vmatprep.subr.mxu0 0.0
        %1881 = vmatpush1.msra.mxu0 0.0
        %1882 = vmatprep.subr.mxu0 0.0
        %1883 = vmatpush1.msra.mxu0 0.0
        %1884 = vmatprep.subr.mxu0 0.0
        %1885 = vmatpush1.msra.mxu0 0.0
        %1886 = vmatprep.subr.mxu0 0.0
        %1887 = vmatpush1.msra.mxu0 0.0
        %1888 = vmatprep.subr.mxu0 0.0
        %1889 = vmatpush1.msra.mxu0 0.0
        %1890 = vmatprep.subr.mxu0 0.0
        %1891 = vmatpush1.msra.mxu0 0.0
        %1892 = vmatprep.subr.mxu0 0.0
        %1893 = vmatpush1.msra.mxu0 0.0
        %1894 = vmatprep.subr.mxu0 0.0
        %1895 = vmatpush1.msra.mxu0 0.0
        %1896 = vmatprep.subr.mxu0 0.0
        %1897 = vmatpush1.msra.mxu0 0.0
        %1898 = vmatprep.subr.mxu0 0.0
        %1899 = vmatpush1.msra.mxu0 0.0
        %1900 = vmatprep.subr.mxu0 0.0
        %1901 = vmatpush1.msra.mxu0 0.0
        %1902 = vmatprep.mubr.f32.mxu0 0.0
        %1903 = vmatmul.mubr.f32.gmra.mrb[0].mxu0 %v1552
        %v1904 = vpop.f32.mrb[0].mxu0
        %v1905 = vadd.f32 0.0, %v1904
        %v1906 = vpop.f32.mrb[0].mxu0
        %1907 = vdwg.mxu0
        %v1908 = vadd.f32 %v1502, %v1621
        %v1909 = vadd.f32 %v1503, %v1623
        %v1910 = vadd.f32 %v1504, %v1692
        %v1911 = vadd.f32 %v1505, %v1694
        %v1912 = vadd.f32 %v1506, %v1763
        %v1913 = vadd.f32 %v1507, %v1765
        %v1914 = vadd.f32 %v1508, %v1834
        %v1915 = vadd.f32 %v1509, %v1836
        %v1916 = vadd.f32 %v1510, %v1905
        %1917 = vrot.lane.b32.xlu0 %v338, 96
        %v1918 = vpop.permute.xlu0 %1917
        %1919 = vrot.lane.b32.xlu0 %v326, 66
        %v1920 = vpop.permute.xlu0 %1919
        %1921 = vrot.lane.b32.xlu0 %v327, 66
        %v1922 = vpop.permute.xlu0 %1921
        %1923 = vrot.lane.b32.xlu0 %v328, 66
        %v1924 = vpop.permute.xlu0 %1923
        %1925 = vrot.lane.b32.xlu0 %v329, 66
        %v1926 = vpop.permute.xlu0 %1925
        %1927 = vrot.lane.b32.xlu0 %v330, 66
        %v1928 = vpop.permute.xlu0 %1927
        %1929 = vrot.lane.b32.xlu0 %v331, 66
        %v1930 = vpop.permute.xlu0 %1929
        %1931 = vrot.lane.b32.xlu0 %v332, 66
        %v1932 = vpop.permute.xlu0 %1931
        %1933 = vrot.lane.b32.xlu0 %v333, 66
        %v1934 = vpop.permute.xlu0 %1933
        %1935 = vrot.lane.b32.xlu0 %v334, 66
        %v1936 = vpop.permute.xlu0 %1935
        %1937 = vrot.lane.b32.xlu0 %v335, 66
        %v1938 = vpop.permute.xlu0 %1937
        %vm1939 = vcmask 539648
        %v1940 = vsel %vm1939, %v1920, %v1922
        %v1941 = vsel %vm1939, %v1922, %v1924
        %v1942 = vsel %vm1939, %v1924, %v1926
        %v1943 = vsel %vm1939, %v1926, %v1928
        %v1944 = vsel %vm1939, %v1928, %v1930
        %v1945 = vsel %vm1939, %v1930, %v1932
        %v1946 = vsel %vm1939, %v1932, %v1934
        %v1947 = vsel %vm1939, %v1934, %v1936
        %v1948 = vsel %vm1939, %v1936, %v1938
        %v1958 = vsel %vm392, %v1918, 0
        %1960 = vmatprep.subr.mxu0 %v1941
        %1961 = vmatpush1.msra.mxu0 %v1940
        %1962 = vmatprep.subr.mxu0 0.0
        %1963 = vmatpush1.msra.mxu0 0.0
        %1964 = vmatprep.subr.mxu0 0.0
        %1965 = vmatpush1.msra.mxu0 0.0
        %1966 = vmatprep.subr.mxu0 0.0
        %1967 = vmatpush1.msra.mxu0 0.0
        %1968 = vmatprep.subr.mxu0 0.0
        %1969 = vmatpush1.msra.mxu0 0.0
        %1970 = vmatprep.subr.mxu0 0.0
        %1971 = vmatpush1.msra.mxu0 0.0
        %1972 = vmatprep.subr.mxu0 0.0
        %1973 = vmatpush1.msra.mxu0 0.0
        %1974 = vmatprep.subr.mxu0 0.0
        %1975 = vmatpush1.msra.mxu0 0.0
        %1976 = vmatprep.subr.mxu0 0.0
        %1977 = vmatpush1.msra.mxu0 0.0
        %1978 = vmatprep.subr.mxu0 0.0
        %1979 = vmatpush1.msra.mxu0 0.0
        %1980 = vmatprep.subr.mxu0 0.0
        %1981 = vmatpush1.msra.mxu0 0.0
        %1982 = vmatprep.subr.mxu0 0.0
        %1983 = vmatpush1.msra.mxu0 0.0
        %1984 = vmatprep.subr.mxu0 0.0
        %1985 = vmatpush1.msra.mxu0 0.0
        %1986 = vmatprep.subr.mxu0 0.0
        %1987 = vmatpush1.msra.mxu0 0.0
        %1988 = vmatprep.subr.mxu0 0.0
        %1989 = vmatpush1.msra.mxu0 0.0
        %1990 = vmatprep.subr.mxu0 0.0
        %1991 = vmatpush1.msra.mxu0 0.0
        %1992 = vmatprep.subr.mxu0 0.0
        %1993 = vmatpush1.msra.mxu0 0.0
        %1994 = vmatprep.subr.mxu0 0.0
        %1995 = vmatpush1.msra.mxu0 0.0
        %1996 = vmatprep.subr.mxu0 0.0
        %1997 = vmatpush1.msra.mxu0 0.0
        %1998 = vmatprep.subr.mxu0 0.0
        %1999 = vmatpush1.msra.mxu0 0.0
        %2000 = vmatprep.subr.mxu0 0.0
        %2001 = vmatpush1.msra.mxu0 0.0
        %2002 = vmatprep.subr.mxu0 0.0
        %2003 = vmatpush1.msra.mxu0 0.0
        %2004 = vmatprep.subr.mxu0 0.0
        %2005 = vmatpush1.msra.mxu0 0.0
        %2006 = vmatprep.subr.mxu0 0.0
        %2007 = vmatpush1.msra.mxu0 0.0
        %2008 = vmatprep.subr.mxu0 0.0
        %2009 = vmatpush1.msra.mxu0 0.0
        %2010 = vmatprep.subr.mxu0 0.0
        %2011 = vmatpush1.msra.mxu0 0.0
        %2012 = vmatprep.subr.mxu0 0.0
        %2013 = vmatpush1.msra.mxu0 0.0
        %2014 = vmatprep.subr.mxu0 0.0
        %2015 = vmatpush1.msra.mxu0 0.0
        %2016 = vmatprep.subr.mxu0 0.0
        %2017 = vmatpush1.msra.mxu0 0.0
        %2018 = vmatprep.subr.mxu0 0.0
        %2019 = vmatpush1.msra.mxu0 0.0
        %2020 = vmatprep.subr.mxu0 0.0
        %2021 = vmatpush1.msra.mxu0 0.0
        %2022 = vmatprep.subr.mxu0 0.0
        %2023 = vmatpush1.msra.mxu0 0.0
        %2024 = vmatprep.mubr.f32.mxu0 0.0
        %2025 = vmatmul.mubr.f32.gmra.mrb[0].mxu0 %v1958
        %v2026 = vpop.f32.mrb[0].mxu0
        %v2027 = vadd.f32 0.0, %v2026
        %v2028 = vpop.f32.mrb[0].mxu0
        %v2029 = vadd.f32 0.0, %v2028
        %2030 = vdwg.mxu0
        %2031 = vmatprep.subr.mxu0 %v1943
        %2032 = vmatpush1.msra.mxu0 %v1942
        %2033 = vmatprep.subr.mxu0 0.0
        %2034 = vmatpush1.msra.mxu0 0.0
        %2035 = vmatprep.subr.mxu0 0.0
        %2036 = vmatpush1.msra.mxu0 0.0
        %2037 = vmatprep.subr.mxu0 0.0
        %2038 = vmatpush1.msra.mxu0 0.0
        %2039 = vmatprep.subr.mxu0 0.0
        %2040 = vmatpush1.msra.mxu0 0.0
        %2041 = vmatprep.subr.mxu0 0.0
        %2042 = vmatpush1.msra.mxu0 0.0
        %2043 = vmatprep.subr.mxu0 0.0
        %2044 = vmatpush1.msra.mxu0 0.0
        %2045 = vmatprep.subr.mxu0 0.0
        %2046 = vmatpush1.msra.mxu0 0.0
        %2047 = vmatprep.subr.mxu0 0.0
        %2048 = vmatpush1.msra.mxu0 0.0
        %2049 = vmatprep.subr.mxu0 0.0
        %2050 = vmatpush1.msra.mxu0 0.0
        %2051 = vmatprep.subr.mxu0 0.0
        %2052 = vmatpush1.msra.mxu0 0.0
        %2053 = vmatprep.subr.mxu0 0.0
        %2054 = vmatpush1.msra.mxu0 0.0
        %2055 = vmatprep.subr.mxu0 0.0
        %2056 = vmatpush1.msra.mxu0 0.0
        %2057 = vmatprep.subr.mxu0 0.0
        %2058 = vmatpush1.msra.mxu0 0.0
        %2059 = vmatprep.subr.mxu0 0.0
        %2060 = vmatpush1.msra.mxu0 0.0
        %2061 = vmatprep.subr.mxu0 0.0
        %2062 = vmatpush1.msra.mxu0 0.0
        %2063 = vmatprep.subr.mxu0 0.0
        %2064 = vmatpush1.msra.mxu0 0.0
        %2065 = vmatprep.subr.mxu0 0.0
        %2066 = vmatpush1.msra.mxu0 0.0
        %2067 = vmatprep.subr.mxu0 0.0
        %2068 = vmatpush1.msra.mxu0 0.0
        %2069 = vmatprep.subr.mxu0 0.0
        %2070 = vmatpush1.msra.mxu0 0.0
        %2071 = vmatprep.subr.mxu0 0.0
        %2072 = vmatpush1.msra.mxu0 0.0
        %2073 = vmatprep.subr.mxu0 0.0
        %2074 = vmatpush1.msra.mxu0 0.0
        %2075 = vmatprep.subr.mxu0 0.0
        %2076 = vmatpush1.msra.mxu0 0.0
        %2077 = vmatprep.subr.mxu0 0.0
        %2078 = vmatpush1.msra.mxu0 0.0
        %2079 = vmatprep.subr.mxu0 0.0
        %2080 = vmatpush1.msra.mxu0 0.0
        %2081 = vmatprep.subr.mxu0 0.0
        %2082 = vmatpush1.msra.mxu0 0.0
        %2083 = vmatprep.subr.mxu0 0.0
        %2084 = vmatpush1.msra.mxu0 0.0
        %2085 = vmatprep.subr.mxu0 0.0
        %2086 = vmatpush1.msra.mxu0 0.0
        %2087 = vmatprep.subr.mxu0 0.0
        %2088 = vmatpush1.msra.mxu0 0.0
        %2089 = vmatprep.subr.mxu0 0.0
        %2090 = vmatpush1.msra.mxu0 0.0
        %2091 = vmatprep.subr.mxu0 0.0
        %2092 = vmatpush1.msra.mxu0 0.0
        %2093 = vmatprep.subr.mxu0 0.0
        %2094 = vmatpush1.msra.mxu0 0.0
        %2095 = vmatprep.mubr.f32.mxu0 0.0
        %2096 = vmatmul.mubr.f32.gmra.mrb[0].mxu0 %v1958
        %v2097 = vpop.f32.mrb[0].mxu0
        %v2098 = vadd.f32 0.0, %v2097
        %v2099 = vpop.f32.mrb[0].mxu0
        %v2100 = vadd.f32 0.0, %v2099
        %2101 = vdwg.mxu0
        %2102 = vmatprep.subr.mxu0 %v1945
        %2103 = vmatpush1.msra.mxu0 %v1944
        %2104 = vmatprep.subr.mxu0 0.0
        %2105 = vmatpush1.msra.mxu0 0.0
        %2106 = vmatprep.subr.mxu0 0.0
        %2107 = vmatpush1.msra.mxu0 0.0
        %2108 = vmatprep.subr.mxu0 0.0
        %2109 = vmatpush1.msra.mxu0 0.0
        %2110 = vmatprep.subr.mxu0 0.0
        %2111 = vmatpush1.msra.mxu0 0.0
        %2112 = vmatprep.subr.mxu0 0.0
        %2113 = vmatpush1.msra.mxu0 0.0
        %2114 = vmatprep.subr.mxu0 0.0
        %2115 = vmatpush1.msra.mxu0 0.0
        %2116 = vmatprep.subr.mxu0 0.0
        %2117 = vmatpush1.msra.mxu0 0.0
        %2118 = vmatprep.subr.mxu0 0.0
        %2119 = vmatpush1.msra.mxu0 0.0
        %2120 = vmatprep.subr.mxu0 0.0
        %2121 = vmatpush1.msra.mxu0 0.0
        %2122 = vmatprep.subr.mxu0 0.0
        %2123 = vmatpush1.msra.mxu0 0.0
        %2124 = vmatprep.subr.mxu0 0.0
        %2125 = vmatpush1.msra.mxu0 0.0
        %2126 = vmatprep.subr.mxu0 0.0
        %2127 = vmatpush1.msra.mxu0 0.0
        %2128 = vmatprep.subr.mxu0 0.0
        %2129 = vmatpush1.msra.mxu0 0.0
        %2130 = vmatprep.subr.mxu0 0.0
        %2131 = vmatpush1.msra.mxu0 0.0
        %2132 = vmatprep.subr.mxu0 0.0
        %2133 = vmatpush1.msra.mxu0 0.0
        %2134 = vmatprep.subr.mxu0 0.0
        %2135 = vmatpush1.msra.mxu0 0.0
        %2136 = vmatprep.subr.mxu0 0.0
        %2137 = vmatpush1.msra.mxu0 0.0
        %2138 = vmatprep.subr.mxu0 0.0
        %2139 = vmatpush1.msra.mxu0 0.0
        %2140 = vmatprep.subr.mxu0 0.0
        %2141 = vmatpush1.msra.mxu0 0.0
        %2142 = vmatprep.subr.mxu0 0.0
        %2143 = vmatpush1.msra.mxu0 0.0
        %2144 = vmatprep.subr.mxu0 0.0
        %2145 = vmatpush1.msra.mxu0 0.0
        %2146 = vmatprep.subr.mxu0 0.0
        %2147 = vmatpush1.msra.mxu0 0.0
        %2148 = vmatprep.subr.mxu0 0.0
        %2149 = vmatpush1.msra.mxu0 0.0
        %2150 = vmatprep.subr.mxu0 0.0
        %2151 = vmatpush1.msra.mxu0 0.0
        %2152 = vmatprep.subr.mxu0 0.0
        %2153 = vmatpush1.msra.mxu0 0.0
        %2154 = vmatprep.subr.mxu0 0.0
        %2155 = vmatpush1.msra.mxu0 0.0
        %2156 = vmatprep.subr.mxu0 0.0
        %2157 = vmatpush1.msra.mxu0 0.0
        %2158 = vmatprep.subr.mxu0 0.0
        %2159 = vmatpush1.msra.mxu0 0.0
        %2160 = vmatprep.subr.mxu0 0.0
        %2161 = vmatpush1.msra.mxu0 0.0
        %2162 = vmatprep.subr.mxu0 0.0
        %2163 = vmatpush1.msra.mxu0 0.0
        %2164 = vmatprep.subr.mxu0 0.0
        %2165 = vmatpush1.msra.mxu0 0.0
        %2166 = vmatprep.mubr.f32.mxu0 0.0
        %2167 = vmatmul.mubr.f32.gmra.mrb[0].mxu0 %v1958
        %v2168 = vpop.f32.mrb[0].mxu0
        %v2169 = vadd.f32 0.0, %v2168
        %v2170 = vpop.f32.mrb[0].mxu0
        %v2171 = vadd.f32 0.0, %v2170
        %2172 = vdwg.mxu0
        %2173 = vmatprep.subr.mxu0 %v1947
        %2174 = vmatpush1.msra.mxu0 %v1946
        %2175 = vmatprep.subr.mxu0 0.0
        %2176 = vmatpush1.msra.mxu0 0.0
        %2177 = vmatprep.subr.mxu0 0.0
        %2178 = vmatpush1.msra.mxu0 0.0
        %2179 = vmatprep.subr.mxu0 0.0
        %2180 = vmatpush1.msra.mxu0 0.0
        %2181 = vmatprep.subr.mxu0 0.0
        %2182 = vmatpush1.msra.mxu0 0.0
        %2183 = vmatprep.subr.mxu0 0.0
        %2184 = vmatpush1.msra.mxu0 0.0
        %2185 = vmatprep.subr.mxu0 0.0
        %2186 = vmatpush1.msra.mxu0 0.0
        %2187 = vmatprep.subr.mxu0 0.0
        %2188 = vmatpush1.msra.mxu0 0.0
        %2189 = vmatprep.subr.mxu0 0.0
        %2190 = vmatpush1.msra.mxu0 0.0
        %2191 = vmatprep.subr.mxu0 0.0
        %2192 = vmatpush1.msra.mxu0 0.0
        %2193 = vmatprep.subr.mxu0 0.0
        %2194 = vmatpush1.msra.mxu0 0.0
        %2195 = vmatprep.subr.mxu0 0.0
        %2196 = vmatpush1.msra.mxu0 0.0
        %2197 = vmatprep.subr.mxu0 0.0
        %2198 = vmatpush1.msra.mxu0 0.0
        %2199 = vmatprep.subr.mxu0 0.0
        %2200 = vmatpush1.msra.mxu0 0.0
        %2201 = vmatprep.subr.mxu0 0.0
        %2202 = vmatpush1.msra.mxu0 0.0
        %2203 = vmatprep.subr.mxu0 0.0
        %2204 = vmatpush1.msra.mxu0 0.0
        %2205 = vmatprep.subr.mxu0 0.0
        %2206 = vmatpush1.msra.mxu0 0.0
        %2207 = vmatprep.subr.mxu0 0.0
        %2208 = vmatpush1.msra.mxu0 0.0
        %2209 = vmatprep.subr.mxu0 0.0
        %2210 = vmatpush1.msra.mxu0 0.0
        %2211 = vmatprep.subr.mxu0 0.0
        %2212 = vmatpush1.msra.mxu0 0.0
        %2213 = vmatprep.subr.mxu0 0.0
        %2214 = vmatpush1.msra.mxu0 0.0
        %2215 = vmatprep.subr.mxu0 0.0
        %2216 = vmatpush1.msra.mxu0 0.0
        %2217 = vmatprep.subr.mxu0 0.0
        %2218 = vmatpush1.msra.mxu0 0.0
        %2219 = vmatprep.subr.mxu0 0.0
        %2220 = vmatpush1.msra.mxu0 0.0
        %2221 = vmatprep.subr.mxu0 0.0
        %2222 = vmatpush1.msra.mxu0 0.0
        %2223 = vmatprep.subr.mxu0 0.0
        %2224 = vmatpush1.msra.mxu0 0.0
        %2225 = vmatprep.subr.mxu0 0.0
        %2226 = vmatpush1.msra.mxu0 0.0
        %2227 = vmatprep.subr.mxu0 0.0
        %2228 = vmatpush1.msra.mxu0 0.0
        %2229 = vmatprep.subr.mxu0 0.0
        %2230 = vmatpush1.msra.mxu0 0.0
        %2231 = vmatprep.subr.mxu0 0.0
        %2232 = vmatpush1.msra.mxu0 0.0
        %2233 = vmatprep.subr.mxu0 0.0
        %2234 = vmatpush1.msra.mxu0 0.0
        %2235 = vmatprep.subr.mxu0 0.0
        %2236 = vmatpush1.msra.mxu0 0.0
        %2237 = vmatprep.mubr.f32.mxu0 0.0
        %2238 = vmatmul.mubr.f32.gmra.mrb[0].mxu0 %v1958
        %v2239 = vpop.f32.mrb[0].mxu0
        %v2240 = vadd.f32 0.0, %v2239
        %v2241 = vpop.f32.mrb[0].mxu0
        %v2242 = vadd.f32 0.0, %v2241
        %2243 = vdwg.mxu0
        %2244 = vmatprep.subr.mxu0 0.0
        %2245 = vmatpush1.msra.mxu0 %v1948
        %2246 = vmatprep.subr.mxu0 0.0
        %2247 = vmatpush1.msra.mxu0 0.0
        %2248 = vmatprep.subr.mxu0 0.0
        %2249 = vmatpush1.msra.mxu0 0.0
        %2250 = vmatprep.subr.mxu0 0.0
        %2251 = vmatpush1.msra.mxu0 0.0
        %2252 = vmatprep.subr.mxu0 0.0
        %2253 = vmatpush1.msra.mxu0 0.0
        %2254 = vmatprep.subr.mxu0 0.0
        %2255 = vmatpush1.msra.mxu0 0.0
        %2256 = vmatprep.subr.mxu0 0.0
        %2257 = vmatpush1.msra.mxu0 0.0
        %2258 = vmatprep.subr.mxu0 0.0
        %2259 = vmatpush1.msra.mxu0 0.0
        %2260 = vmatprep.subr.mxu0 0.0
        %2261 = vmatpush1.msra.mxu0 0.0
        %2262 = vmatprep.subr.mxu0 0.0
        %2263 = vmatpush1.msra.mxu0 0.0
        %2264 = vmatprep.subr.mxu0 0.0
        %2265 = vmatpush1.msra.mxu0 0.0
        %2266 = vmatprep.subr.mxu0 0.0
        %2267 = vmatpush1.msra.mxu0 0.0
        %2268 = vmatprep.subr.mxu0 0.0
        %2269 = vmatpush1.msra.mxu0 0.0
        %2270 = vmatprep.subr.mxu0 0.0
        %2271 = vmatpush1.msra.mxu0 0.0
        %2272 = vmatprep.subr.mxu0 0.0
        %2273 = vmatpush1.msra.mxu0 0.0
        %2274 = vmatprep.subr.mxu0 0.0
        %2275 = vmatpush1.msra.mxu0 0.0
        %2276 = vmatprep.subr.mxu0 0.0
        %2277 = vmatpush1.msra.mxu0 0.0
        %2278 = vmatprep.subr.mxu0 0.0
        %2279 = vmatpush1.msra.mxu0 0.0
        %2280 = vmatprep.subr.mxu0 0.0
        %2281 = vmatpush1.msra.mxu0 0.0
        %2282 = vmatprep.subr.mxu0 0.0
        %2283 = vmatpush1.msra.mxu0 0.0
        %2284 = vmatprep.subr.mxu0 0.0
        %2285 = vmatpush1.msra.mxu0 0.0
        %2286 = vmatprep.subr.mxu0 0.0
        %2287 = vmatpush1.msra.mxu0 0.0
        %2288 = vmatprep.subr.mxu0 0.0
        %2289 = vmatpush1.msra.mxu0 0.0
        %2290 = vmatprep.subr.mxu0 0.0
        %2291 = vmatpush1.msra.mxu0 0.0
        %2292 = vmatprep.subr.mxu0 0.0
        %2293 = vmatpush1.msra.mxu0 0.0
        %2294 = vmatprep.subr.mxu0 0.0
        %2295 = vmatpush1.msra.mxu0 0.0
        %2296 = vmatprep.subr.mxu0 0.0
        %2297 = vmatpush1.msra.mxu0 0.0
        %2298 = vmatprep.subr.mxu0 0.0
        %2299 = vmatpush1.msra.mxu0 0.0
        %2300 = vmatprep.subr.mxu0 0.0
        %2301 = vmatpush1.msra.mxu0 0.0
        %2302 = vmatprep.subr.mxu0 0.0
        %2303 = vmatpush1.msra.mxu0 0.0
        %2304 = vmatprep.subr.mxu0 0.0
        %2305 = vmatpush1.msra.mxu0 0.0
        %2306 = vmatprep.subr.mxu0 0.0
        %2307 = vmatpush1.msra.mxu0 0.0
        %2308 = vmatprep.mubr.f32.mxu0 0.0
        %2309 = vmatmul.mubr.f32.gmra.mrb[0].mxu0 %v1958
        %v2310 = vpop.f32.mrb[0].mxu0
        %v2311 = vadd.f32 0.0, %v2310
        %v2312 = vpop.f32.mrb[0].mxu0
        %2313 = vdwg.mxu0
        %v2314 = vadd.f32 %v1908, %v2027
        %v2315 = vadd.f32 %v1909, %v2029
        %v2316 = vadd.f32 %v1910, %v2098
        %v2317 = vadd.f32 %v1911, %v2100
        %v2318 = vadd.f32 %v1912, %v2169
        %v2319 = vadd.f32 %v1913, %v2171
        %v2320 = vadd.f32 %v1914, %v2240
        %v2321 = vadd.f32 %v1915, %v2242
        %v2322 = vadd.f32 %v1916, %v2311
        %2323 = vrot.lane.b32.xlu0 %v338, 88
        %v2324 = vpop.permute.xlu0 %2323
        %2325 = vrot.lane.b32.xlu0 %v326, 62
        %v2326 = vpop.permute.xlu0 %2325
        %2327 = vrot.lane.b32.xlu0 %v327, 62
        %v2328 = vpop.permute.xlu0 %2327
        %2329 = vrot.lane.b32.xlu0 %v328, 62
        %v2330 = vpop.permute.xlu0 %2329
        %2331 = vrot.lane.b32.xlu0 %v329, 62
        %v2332 = vpop.permute.xlu0 %2331
        %2333 = vrot.lane.b32.xlu0 %v330, 62
        %v2334 = vpop.permute.xlu0 %2333
        %2335 = vrot.lane.b32.xlu0 %v331, 62
        %v2336 = vpop.permute.xlu0 %2335
        %2337 = vrot.lane.b32.xlu0 %v332, 62
        %v2338 = vpop.permute.xlu0 %2337
        %2339 = vrot.lane.b32.xlu0 %v333, 62
        %v2340 = vpop.permute.xlu0 %2339
        %2341 = vrot.lane.b32.xlu0 %v334, 62
        %v2342 = vpop.permute.xlu0 %2341
        %2343 = vrot.lane.b32.xlu0 %v335, 62
        %v2344 = vpop.permute.xlu0 %2343
        %vm2345 = vcmask 506880
        %v2346 = vsel %vm2345, %v2326, %v2328
        %v2347 = vsel %vm2345, %v2328, %v2330
        %v2348 = vsel %vm2345, %v2330, %v2332
        %v2349 = vsel %vm2345, %v2332, %v2334
        %v2350 = vsel %vm2345, %v2334, %v2336
        %v2351 = vsel %vm2345, %v2336, %v2338
        %v2352 = vsel %vm2345, %v2338, %v2340
        %v2353 = vsel %vm2345, %v2340, %v2342
        %v2354 = vsel %vm2345, %v2342, %v2344
        %v2364 = vsel %vm392, %v2324, 0
        %2366 = vmatprep.subr.mxu0 %v2347
        %2367 = vmatpush1.msra.mxu0 %v2346
        %2368 = vmatprep.subr.mxu0 0.0
        %2369 = vmatpush1.msra.mxu0 0.0
        %2370 = vmatprep.subr.mxu0 0.0
        %2371 = vmatpush1.msra.mxu0 0.0
        %2372 = vmatprep.subr.mxu0 0.0
        %2373 = vmatpush1.msra.mxu0 0.0
        %2374 = vmatprep.subr.mxu0 0.0
        %2375 = vmatpush1.msra.mxu0 0.0
        %2376 = vmatprep.subr.mxu0 0.0
        %2377 = vmatpush1.msra.mxu0 0.0
        %2378 = vmatprep.subr.mxu0 0.0
        %2379 = vmatpush1.msra.mxu0 0.0
        %2380 = vmatprep.subr.mxu0 0.0
        %2381 = vmatpush1.msra.mxu0 0.0
        %2382 = vmatprep.subr.mxu0 0.0
        %2383 = vmatpush1.msra.mxu0 0.0
        %2384 = vmatprep.subr.mxu0 0.0
        %2385 = vmatpush1.msra.mxu0 0.0
        %2386 = vmatprep.subr.mxu0 0.0
        %2387 = vmatpush1.msra.mxu0 0.0
        %2388 = vmatprep.subr.mxu0 0.0
        %2389 = vmatpush1.msra.mxu0 0.0
        %2390 = vmatprep.subr.mxu0 0.0
        %2391 = vmatpush1.msra.mxu0 0.0
        %2392 = vmatprep.subr.mxu0 0.0
        %2393 = vmatpush1.msra.mxu0 0.0
        %2394 = vmatprep.subr.mxu0 0.0
        %2395 = vmatpush1.msra.mxu0 0.0
        %2396 = vmatprep.subr.mxu0 0.0
        %2397 = vmatpush1.msra.mxu0 0.0
        %2398 = vmatprep.subr.mxu0 0.0
        %2399 = vmatpush1.msra.mxu0 0.0
        %2400 = vmatprep.subr.mxu0 0.0
        %2401 = vmatpush1.msra.mxu0 0.0
        %2402 = vmatprep.subr.mxu0 0.0
        %2403 = vmatpush1.msra.mxu0 0.0
        %2404 = vmatprep.subr.mxu0 0.0
        %2405 = vmatpush1.msra.mxu0 0.0
        %2406 = vmatprep.subr.mxu0 0.0
        %2407 = vmatpush1.msra.mxu0 0.0
        %2408 = vmatprep.subr.mxu0 0.0
        %2409 = vmatpush1.msra.mxu0 0.0
        %2410 = vmatprep.subr.mxu0 0.0
        %2411 = vmatpush1.msra.mxu0 0.0
        %2412 = vmatprep.subr.mxu0 0.0
        %2413 = vmatpush1.msra.mxu0 0.0
        %2414 = vmatprep.subr.mxu0 0.0
        %2415 = vmatpush1.msra.mxu0 0.0
        %2416 = vmatprep.subr.mxu0 0.0
        %2417 = vmatpush1.msra.mxu0 0.0
        %2418 = vmatprep.subr.mxu0 0.0
        %2419 = vmatpush1.msra.mxu0 0.0
        %2420 = vmatprep.subr.mxu0 0.0
        %2421 = vmatpush1.msra.mxu0 0.0
        %2422 = vmatprep.subr.mxu0 0.0
        %2423 = vmatpush1.msra.mxu0 0.0
        %2424 = vmatprep.subr.mxu0 0.0
        %2425 = vmatpush1.msra.mxu0 0.0
        %2426 = vmatprep.subr.mxu0 0.0
        %2427 = vmatpush1.msra.mxu0 0.0
        %2428 = vmatprep.subr.mxu0 0.0
        %2429 = vmatpush1.msra.mxu0 0.0
        %2430 = vmatprep.mubr.f32.mxu0 0.0
        %2431 = vmatmul.mubr.f32.gmra.mrb[0].mxu0 %v2364
        %v2432 = vpop.f32.mrb[0].mxu0
        %v2433 = vadd.f32 0.0, %v2432
        %v2434 = vpop.f32.mrb[0].mxu0
        %v2435 = vadd.f32 0.0, %v2434
        %2436 = vdwg.mxu0
        %2437 = vmatprep.subr.mxu0 %v2349
        %2438 = vmatpush1.msra.mxu0 %v2348
        %2439 = vmatprep.subr.mxu0 0.0
        %2440 = vmatpush1.msra.mxu0 0.0
        %2441 = vmatprep.subr.mxu0 0.0
        %2442 = vmatpush1.msra.mxu0 0.0
        %2443 = vmatprep.subr.mxu0 0.0
        %2444 = vmatpush1.msra.mxu0 0.0
        %2445 = vmatprep.subr.mxu0 0.0
        %2446 = vmatpush1.msra.mxu0 0.0
        %2447 = vmatprep.subr.mxu0 0.0
        %2448 = vmatpush1.msra.mxu0 0.0
        %2449 = vmatprep.subr.mxu0 0.0
        %2450 = vmatpush1.msra.mxu0 0.0
        %2451 = vmatprep.subr.mxu0 0.0
        %2452 = vmatpush1.msra.mxu0 0.0
        %2453 = vmatprep.subr.mxu0 0.0
        %2454 = vmatpush1.msra.mxu0 0.0
        %2455 = vmatprep.subr.mxu0 0.0
        %2456 = vmatpush1.msra.mxu0 0.0
        %2457 = vmatprep.subr.mxu0 0.0
        %2458 = vmatpush1.msra.mxu0 0.0
        %2459 = vmatprep.subr.mxu0 0.0
        %2460 = vmatpush1.msra.mxu0 0.0
        %2461 = vmatprep.subr.mxu0 0.0
        %2462 = vmatpush1.msra.mxu0 0.0
        %2463 = vmatprep.subr.mxu0 0.0
        %2464 = vmatpush1.msra.mxu0 0.0
        %2465 = vmatprep.subr.mxu0 0.0
        %2466 = vmatpush1.msra.mxu0 0.0
        %2467 = vmatprep.subr.mxu0 0.0
        %2468 = vmatpush1.msra.mxu0 0.0
        %2469 = vmatprep.subr.mxu0 0.0
        %2470 = vmatpush1.msra.mxu0 0.0
        %2471 = vmatprep.subr.mxu0 0.0
        %2472 = vmatpush1.msra.mxu0 0.0
        %2473 = vmatprep.subr.mxu0 0.0
        %2474 = vmatpush1.msra.mxu0 0.0
        %2475 = vmatprep.subr.mxu0 0.0
        %2476 = vmatpush1.msra.mxu0 0.0
        %2477 = vmatprep.subr.mxu0 0.0
        %2478 = vmatpush1.msra.mxu0 0.0
        %2479 = vmatprep.subr.mxu0 0.0
        %2480 = vmatpush1.msra.mxu0 0.0
        %2481 = vmatprep.subr.mxu0 0.0
        %2482 = vmatpush1.msra.mxu0 0.0
        %2483 = vmatprep.subr.mxu0 0.0
        %2484 = vmatpush1.msra.mxu0 0.0
        %2485 = vmatprep.subr.mxu0 0.0
        %2486 = vmatpush1.msra.mxu0 0.0
        %2487 = vmatprep.subr.mxu0 0.0
        %2488 = vmatpush1.msra.mxu0 0.0
        %2489 = vmatprep.subr.mxu0 0.0
        %2490 = vmatpush1.msra.mxu0 0.0
        %2491 = vmatprep.subr.mxu0 0.0
        %2492 = vmatpush1.msra.mxu0 0.0
        %2493 = vmatprep.subr.mxu0 0.0
        %2494 = vmatpush1.msra.mxu0 0.0
        %2495 = vmatprep.subr.mxu0 0.0
        %2496 = vmatpush1.msra.mxu0 0.0
        %2497 = vmatprep.subr.mxu0 0.0
        %2498 = vmatpush1.msra.mxu0 0.0
        %2499 = vmatprep.subr.mxu0 0.0
        %2500 = vmatpush1.msra.mxu0 0.0
        %2501 = vmatprep.mubr.f32.mxu0 0.0
        %2502 = vmatmul.mubr.f32.gmra.mrb[0].mxu0 %v2364
        %v2503 = vpop.f32.mrb[0].mxu0
        %v2504 = vadd.f32 0.0, %v2503
        %v2505 = vpop.f32.mrb[0].mxu0
        %v2506 = vadd.f32 0.0, %v2505
        %2507 = vdwg.mxu0
        %2508 = vmatprep.subr.mxu0 %v2351
        %2509 = vmatpush1.msra.mxu0 %v2350
        %2510 = vmatprep.subr.mxu0 0.0
        %2511 = vmatpush1.msra.mxu0 0.0
        %2512 = vmatprep.subr.mxu0 0.0
        %2513 = vmatpush1.msra.mxu0 0.0
        %2514 = vmatprep.subr.mxu0 0.0
        %2515 = vmatpush1.msra.mxu0 0.0
        %2516 = vmatprep.subr.mxu0 0.0
        %2517 = vmatpush1.msra.mxu0 0.0
        %2518 = vmatprep.subr.mxu0 0.0
        %2519 = vmatpush1.msra.mxu0 0.0
        %2520 = vmatprep.subr.mxu0 0.0
        %2521 = vmatpush1.msra.mxu0 0.0
        %2522 = vmatprep.subr.mxu0 0.0
        %2523 = vmatpush1.msra.mxu0 0.0
        %2524 = vmatprep.subr.mxu0 0.0
        %2525 = vmatpush1.msra.mxu0 0.0
        %2526 = vmatprep.subr.mxu0 0.0
        %2527 = vmatpush1.msra.mxu0 0.0
        %2528 = vmatprep.subr.mxu0 0.0
        %2529 = vmatpush1.msra.mxu0 0.0
        %2530 = vmatprep.subr.mxu0 0.0
        %2531 = vmatpush1.msra.mxu0 0.0
        %2532 = vmatprep.subr.mxu0 0.0
        %2533 = vmatpush1.msra.mxu0 0.0
        %2534 = vmatprep.subr.mxu0 0.0
        %2535 = vmatpush1.msra.mxu0 0.0
        %2536 = vmatprep.subr.mxu0 0.0
        %2537 = vmatpush1.msra.mxu0 0.0
        %2538 = vmatprep.subr.mxu0 0.0
        %2539 = vmatpush1.msra.mxu0 0.0
        %2540 = vmatprep.subr.mxu0 0.0
        %2541 = vmatpush1.msra.mxu0 0.0
        %2542 = vmatprep.subr.mxu0 0.0
        %2543 = vmatpush1.msra.mxu0 0.0
        %2544 = vmatprep.subr.mxu0 0.0
        %2545 = vmatpush1.msra.mxu0 0.0
        %2546 = vmatprep.subr.mxu0 0.0
        %2547 = vmatpush1.msra.mxu0 0.0
        %2548 = vmatprep.subr.mxu0 0.0
        %2549 = vmatpush1.msra.mxu0 0.0
        %2550 = vmatprep.subr.mxu0 0.0
        %2551 = vmatpush1.msra.mxu0 0.0
        %2552 = vmatprep.subr.mxu0 0.0
        %2553 = vmatpush1.msra.mxu0 0.0
        %2554 = vmatprep.subr.mxu0 0.0
        %2555 = vmatpush1.msra.mxu0 0.0
        %2556 = vmatprep.subr.mxu0 0.0
        %2557 = vmatpush1.msra.mxu0 0.0
        %2558 = vmatprep.subr.mxu0 0.0
        %2559 = vmatpush1.msra.mxu0 0.0
        %2560 = vmatprep.subr.mxu0 0.0
        %2561 = vmatpush1.msra.mxu0 0.0
        %2562 = vmatprep.subr.mxu0 0.0
        %2563 = vmatpush1.msra.mxu0 0.0
        %2564 = vmatprep.subr.mxu0 0.0
        %2565 = vmatpush1.msra.mxu0 0.0
        %2566 = vmatprep.subr.mxu0 0.0
        %2567 = vmatpush1.msra.mxu0 0.0
        %2568 = vmatprep.subr.mxu0 0.0
        %2569 = vmatpush1.msra.mxu0 0.0
        %2570 = vmatprep.subr.mxu0 0.0
        %2571 = vmatpush1.msra.mxu0 0.0
        %2572 = vmatprep.mubr.f32.mxu0 0.0
        %2573 = vmatmul.mubr.f32.gmra.mrb[0].mxu0 %v2364
        %v2574 = vpop.f32.mrb[0].mxu0
        %v2575 = vadd.f32 0.0, %v2574
        %v2576 = vpop.f32.mrb[0].mxu0
        %v2577 = vadd.f32 0.0, %v2576
        %2578 = vdwg.mxu0
        %2579 = vmatprep.subr.mxu0 %v2353
        %2580 = vmatpush1.msra.mxu0 %v2352
        %2581 = vmatprep.subr.mxu0 0.0
        %2582 = vmatpush1.msra.mxu0 0.0
        %2583 = vmatprep.subr.mxu0 0.0
        %2584 = vmatpush1.msra.mxu0 0.0
        %2585 = vmatprep.subr.mxu0 0.0
        %2586 = vmatpush1.msra.mxu0 0.0
        %2587 = vmatprep.subr.mxu0 0.0
        %2588 = vmatpush1.msra.mxu0 0.0
        %2589 = vmatprep.subr.mxu0 0.0
        %2590 = vmatpush1.msra.mxu0 0.0
        %2591 = vmatprep.subr.mxu0 0.0
        %2592 = vmatpush1.msra.mxu0 0.0
        %2593 = vmatprep.subr.mxu0 0.0
        %2594 = vmatpush1.msra.mxu0 0.0
        %2595 = vmatprep.subr.mxu0 0.0
        %2596 = vmatpush1.msra.mxu0 0.0
        %2597 = vmatprep.subr.mxu0 0.0
        %2598 = vmatpush1.msra.mxu0 0.0
        %2599 = vmatprep.subr.mxu0 0.0
        %2600 = vmatpush1.msra.mxu0 0.0
        %2601 = vmatprep.subr.mxu0 0.0
        %2602 = vmatpush1.msra.mxu0 0.0
        %2603 = vmatprep.subr.mxu0 0.0
        %2604 = vmatpush1.msra.mxu0 0.0
        %2605 = vmatprep.subr.mxu0 0.0
        %2606 = vmatpush1.msra.mxu0 0.0
        %2607 = vmatprep.subr.mxu0 0.0
        %2608 = vmatpush1.msra.mxu0 0.0
        %2609 = vmatprep.subr.mxu0 0.0
        %2610 = vmatpush1.msra.mxu0 0.0
        %2611 = vmatprep.subr.mxu0 0.0
        %2612 = vmatpush1.msra.mxu0 0.0
        %2613 = vmatprep.subr.mxu0 0.0
        %2614 = vmatpush1.msra.mxu0 0.0
        %2615 = vmatprep.subr.mxu0 0.0
        %2616 = vmatpush1.msra.mxu0 0.0
        %2617 = vmatprep.subr.mxu0 0.0
        %2618 = vmatpush1.msra.mxu0 0.0
        %2619 = vmatprep.subr.mxu0 0.0
        %2620 = vmatpush1.msra.mxu0 0.0
        %2621 = vmatprep.subr.mxu0 0.0
        %2622 = vmatpush1.msra.mxu0 0.0
        %2623 = vmatprep.subr.mxu0 0.0
        %2624 = vmatpush1.msra.mxu0 0.0
        %2625 = vmatprep.subr.mxu0 0.0
        %2626 = vmatpush1.msra.mxu0 0.0
        %2627 = vmatprep.subr.mxu0 0.0
        %2628 = vmatpush1.msra.mxu0 0.0
        %2629 = vmatprep.subr.mxu0 0.0
        %2630 = vmatpush1.msra.mxu0 0.0
        %2631 = vmatprep.subr.mxu0 0.0
        %2632 = vmatpush1.msra.mxu0 0.0
        %2633 = vmatprep.subr.mxu0 0.0
        %2634 = vmatpush1.msra.mxu0 0.0
        %2635 = vmatprep.subr.mxu0 0.0
        %2636 = vmatpush1.msra.mxu0 0.0
        %2637 = vmatprep.subr.mxu0 0.0
        %2638 = vmatpush1.msra.mxu0 0.0
        %2639 = vmatprep.subr.mxu0 0.0
        %2640 = vmatpush1.msra.mxu0 0.0
        %2641 = vmatprep.subr.mxu0 0.0
        %2642 = vmatpush1.msra.mxu0 0.0
        %2643 = vmatprep.mubr.f32.mxu0 0.0
        %2644 = vmatmul.mubr.f32.gmra.mrb[0].mxu0 %v2364
        %v2645 = vpop.f32.mrb[0].mxu0
        %v2646 = vadd.f32 0.0, %v2645
        %v2647 = vpop.f32.mrb[0].mxu0
        %v2648 = vadd.f32 0.0, %v2647
        %2649 = vdwg.mxu0
        %2650 = vmatprep.subr.mxu0 0.0
        %2651 = vmatpush1.msra.mxu0 %v2354
        %2652 = vmatprep.subr.mxu0 0.0
        %2653 = vmatpush1.msra.mxu0 0.0
        %2654 = vmatprep.subr.mxu0 0.0
        %2655 = vmatpush1.msra.mxu0 0.0
        %2656 = vmatprep.subr.mxu0 0.0
        %2657 = vmatpush1.msra.mxu0 0.0
        %2658 = vmatprep.subr.mxu0 0.0
        %2659 = vmatpush1.msra.mxu0 0.0
        %2660 = vmatprep.subr.mxu0 0.0
        %2661 = vmatpush1.msra.mxu0 0.0
        %2662 = vmatprep.subr.mxu0 0.0
        %2663 = vmatpush1.msra.mxu0 0.0
        %2664 = vmatprep.subr.mxu0 0.0
        %2665 = vmatpush1.msra.mxu0 0.0
        %2666 = vmatprep.subr.mxu0 0.0
        %2667 = vmatpush1.msra.mxu0 0.0
        %2668 = vmatprep.subr.mxu0 0.0
        %2669 = vmatpush1.msra.mxu0 0.0
        %2670 = vmatprep.subr.mxu0 0.0
        %2671 = vmatpush1.msra.mxu0 0.0
        %2672 = vmatprep.subr.mxu0 0.0
        %2673 = vmatpush1.msra.mxu0 0.0
        %2674 = vmatprep.subr.mxu0 0.0
        %2675 = vmatpush1.msra.mxu0 0.0
        %2676 = vmatprep.subr.mxu0 0.0
        %2677 = vmatpush1.msra.mxu0 0.0
        %2678 = vmatprep.subr.mxu0 0.0
        %2679 = vmatpush1.msra.mxu0 0.0
        %2680 = vmatprep.subr.mxu0 0.0
        %2681 = vmatpush1.msra.mxu0 0.0
        %2682 = vmatprep.subr.mxu0 0.0
        %2683 = vmatpush1.msra.mxu0 0.0
        %2684 = vmatprep.subr.mxu0 0.0
        %2685 = vmatpush1.msra.mxu0 0.0
        %2686 = vmatprep.subr.mxu0 0.0
        %2687 = vmatpush1.msra.mxu0 0.0
        %2688 = vmatprep.subr.mxu0 0.0
        %2689 = vmatpush1.msra.mxu0 0.0
        %2690 = vmatprep.subr.mxu0 0.0
        %2691 = vmatpush1.msra.mxu0 0.0
        %2692 = vmatprep.subr.mxu0 0.0
        %2693 = vmatpush1.msra.mxu0 0.0
        %2694 = vmatprep.subr.mxu0 0.0
        %2695 = vmatpush1.msra.mxu0 0.0
        %2696 = vmatprep.subr.mxu0 0.0
        %2697 = vmatpush1.msra.mxu0 0.0
        %2698 = vmatprep.subr.mxu0 0.0
        %2699 = vmatpush1.msra.mxu0 0.0
        %2700 = vmatprep.subr.mxu0 0.0
        %2701 = vmatpush1.msra.mxu0 0.0
        %2702 = vmatprep.subr.mxu0 0.0
        %2703 = vmatpush1.msra.mxu0 0.0
        %2704 = vmatprep.subr.mxu0 0.0
        %2705 = vmatpush1.msra.mxu0 0.0
        %2706 = vmatprep.subr.mxu0 0.0
        %2707 = vmatpush1.msra.mxu0 0.0
        %2708 = vmatprep.subr.mxu0 0.0
        %2709 = vmatpush1.msra.mxu0 0.0
        %2710 = vmatprep.subr.mxu0 0.0
        %2711 = vmatpush1.msra.mxu0 0.0
        %2712 = vmatprep.subr.mxu0 0.0
        %2713 = vmatpush1.msra.mxu0 0.0
        %2714 = vmatprep.mubr.f32.mxu0 0.0
        %2715 = vmatmul.mubr.f32.gmra.mrb[0].mxu0 %v2364
        %v2716 = vpop.f32.mrb[0].mxu0
        %v2717 = vadd.f32 0.0, %v2716
        %v2718 = vpop.f32.mrb[0].mxu0
        %2719 = vdwg.mxu0
        %v2720 = vadd.f32 %v2314, %v2433
        %v2721 = vadd.f32 %v2315, %v2435
        %v2722 = vadd.f32 %v2316, %v2504
        %v2723 = vadd.f32 %v2317, %v2506
        %v2724 = vadd.f32 %v2318, %v2575
        %v2725 = vadd.f32 %v2319, %v2577
        %v2726 = vadd.f32 %v2320, %v2646
        %v2727 = vadd.f32 %v2321, %v2648
        %v2728 = vadd.f32 %v2322, %v2717
        %2729 = vrot.lane.b32.xlu0 %v338, 80
        %v2730 = vpop.permute.xlu0 %2729
        %2731 = vrot.lane.b32.xlu0 %v326, 12
        %v2732 = vpop.permute.xlu0 %2731
        %2733 = vrot.lane.b32.xlu0 %v327, 12
        %v2734 = vpop.permute.xlu0 %2733
        %2735 = vrot.lane.b32.xlu0 %v328, 12
        %v2736 = vpop.permute.xlu0 %2735
        %2737 = vrot.lane.b32.xlu0 %v329, 12
        %v2738 = vpop.permute.xlu0 %2737
        %2739 = vrot.lane.b32.xlu0 %v330, 12
        %v2740 = vpop.permute.xlu0 %2739
        %2741 = vrot.lane.b32.xlu0 %v331, 12
        %v2742 = vpop.permute.xlu0 %2741
        %2743 = vrot.lane.b32.xlu0 %v332, 12
        %v2744 = vpop.permute.xlu0 %2743
        %2745 = vrot.lane.b32.xlu0 %v333, 12
        %v2746 = vpop.permute.xlu0 %2745
        %2747 = vrot.lane.b32.xlu0 %v334, 12
        %v2748 = vpop.permute.xlu0 %2747
        %2749 = vrot.lane.b32.xlu0 %v335, 12
        %v2750 = vpop.permute.xlu0 %2749
        %vm2751 = vcmask 97280
        %v2752 = vsel %vm2751, %v2732, %v2734
        %v2753 = vsel %vm2751, %v2734, %v2736
        %v2754 = vsel %vm2751, %v2736, %v2738
        %v2755 = vsel %vm2751, %v2738, %v2740
        %v2756 = vsel %vm2751, %v2740, %v2742
        %v2757 = vsel %vm2751, %v2742, %v2744
        %v2758 = vsel %vm2751, %v2744, %v2746
        %v2759 = vsel %vm2751, %v2746, %v2748
        %v2760 = vsel %vm2751, %v2748, %v2750
        %v2770 = vsel %vm392, %v2730, 0
        %2772 = vmatprep.subr.mxu0 %v2753
        %2773 = vmatpush1.msra.mxu0 %v2752
        %2774 = vmatprep.subr.mxu0 0.0
        %2775 = vmatpush1.msra.mxu0 0.0
        %2776 = vmatprep.subr.mxu0 0.0
        %2777 = vmatpush1.msra.mxu0 0.0
        %2778 = vmatprep.subr.mxu0 0.0
        %2779 = vmatpush1.msra.mxu0 0.0
        %2780 = vmatprep.subr.mxu0 0.0
        %2781 = vmatpush1.msra.mxu0 0.0
        %2782 = vmatprep.subr.mxu0 0.0
        %2783 = vmatpush1.msra.mxu0 0.0
        %2784 = vmatprep.subr.mxu0 0.0
        %2785 = vmatpush1.msra.mxu0 0.0
        %2786 = vmatprep.subr.mxu0 0.0
        %2787 = vmatpush1.msra.mxu0 0.0
        %2788 = vmatprep.subr.mxu0 0.0
        %2789 = vmatpush1.msra.mxu0 0.0
        %2790 = vmatprep.subr.mxu0 0.0
        %2791 = vmatpush1.msra.mxu0 0.0
        %2792 = vmatprep.subr.mxu0 0.0
        %2793 = vmatpush1.msra.mxu0 0.0
        %2794 = vmatprep.subr.mxu0 0.0
        %2795 = vmatpush1.msra.mxu0 0.0
        %2796 = vmatprep.subr.mxu0 0.0
        %2797 = vmatpush1.msra.mxu0 0.0
        %2798 = vmatprep.subr.mxu0 0.0
        %2799 = vmatpush1.msra.mxu0 0.0
        %2800 = vmatprep.subr.mxu0 0.0
        %2801 = vmatpush1.msra.mxu0 0.0
        %2802 = vmatprep.subr.mxu0 0.0
        %2803 = vmatpush1.msra.mxu0 0.0
        %2804 = vmatprep.subr.mxu0 0.0
        %2805 = vmatpush1.msra.mxu0 0.0
        %2806 = vmatprep.subr.mxu0 0.0
        %2807 = vmatpush1.msra.mxu0 0.0
        %2808 = vmatprep.subr.mxu0 0.0
        %2809 = vmatpush1.msra.mxu0 0.0
        %2810 = vmatprep.subr.mxu0 0.0
        %2811 = vmatpush1.msra.mxu0 0.0
        %2812 = vmatprep.subr.mxu0 0.0
        %2813 = vmatpush1.msra.mxu0 0.0
        %2814 = vmatprep.subr.mxu0 0.0
        %2815 = vmatpush1.msra.mxu0 0.0
        %2816 = vmatprep.subr.mxu0 0.0
        %2817 = vmatpush1.msra.mxu0 0.0
        %2818 = vmatprep.subr.mxu0 0.0
        %2819 = vmatpush1.msra.mxu0 0.0
        %2820 = vmatprep.subr.mxu0 0.0
        %2821 = vmatpush1.msra.mxu0 0.0
        %2822 = vmatprep.subr.mxu0 0.0
        %2823 = vmatpush1.msra.mxu0 0.0
        %2824 = vmatprep.subr.mxu0 0.0
        %2825 = vmatpush1.msra.mxu0 0.0
        %2826 = vmatprep.subr.mxu0 0.0
        %2827 = vmatpush1.msra.mxu0 0.0
        %2828 = vmatprep.subr.mxu0 0.0
        %2829 = vmatpush1.msra.mxu0 0.0
        %2830 = vmatprep.subr.mxu0 0.0
        %2831 = vmatpush1.msra.mxu0 0.0
        %2832 = vmatprep.subr.mxu0 0.0
        %2833 = vmatpush1.msra.mxu0 0.0
        %2834 = vmatprep.subr.mxu0 0.0
        %2835 = vmatpush1.msra.mxu0 0.0
        %2836 = vmatprep.mubr.f32.mxu0 0.0
        %2837 = vmatmul.mubr.f32.gmra.mrb[0].mxu0 %v2770
        %v2838 = vpop.f32.mrb[0].mxu0
        %v2839 = vadd.f32 0.0, %v2838
        %v2840 = vpop.f32.mrb[0].mxu0
        %v2841 = vadd.f32 0.0, %v2840
        %2842 = vdwg.mxu0
        %2843 = vmatprep.subr.mxu0 %v2755
        %2844 = vmatpush1.msra.mxu0 %v2754
        %2845 = vmatprep.subr.mxu0 0.0
        %2846 = vmatpush1.msra.mxu0 0.0
        %2847 = vmatprep.subr.mxu0 0.0
        %2848 = vmatpush1.msra.mxu0 0.0
        %2849 = vmatprep.subr.mxu0 0.0
        %2850 = vmatpush1.msra.mxu0 0.0
        %2851 = vmatprep.subr.mxu0 0.0
        %2852 = vmatpush1.msra.mxu0 0.0
        %2853 = vmatprep.subr.mxu0 0.0
        %2854 = vmatpush1.msra.mxu0 0.0
        %2855 = vmatprep.subr.mxu0 0.0
        %2856 = vmatpush1.msra.mxu0 0.0
        %2857 = vmatprep.subr.mxu0 0.0
        %2858 = vmatpush1.msra.mxu0 0.0
        %2859 = vmatprep.subr.mxu0 0.0
        %2860 = vmatpush1.msra.mxu0 0.0
        %2861 = vmatprep.subr.mxu0 0.0
        %2862 = vmatpush1.msra.mxu0 0.0
        %2863 = vmatprep.subr.mxu0 0.0
        %2864 = vmatpush1.msra.mxu0 0.0
        %2865 = vmatprep.subr.mxu0 0.0
        %2866 = vmatpush1.msra.mxu0 0.0
        %2867 = vmatprep.subr.mxu0 0.0
        %2868 = vmatpush1.msra.mxu0 0.0
        %2869 = vmatprep.subr.mxu0 0.0
        %2870 = vmatpush1.msra.mxu0 0.0
        %2871 = vmatprep.subr.mxu0 0.0
        %2872 = vmatpush1.msra.mxu0 0.0
        %2873 = vmatprep.subr.mxu0 0.0
        %2874 = vmatpush1.msra.mxu0 0.0
        %2875 = vmatprep.subr.mxu0 0.0
        %2876 = vmatpush1.msra.mxu0 0.0
        %2877 = vmatprep.subr.mxu0 0.0
        %2878 = vmatpush1.msra.mxu0 0.0
        %2879 = vmatprep.subr.mxu0 0.0
        %2880 = vmatpush1.msra.mxu0 0.0
        %2881 = vmatprep.subr.mxu0 0.0
        %2882 = vmatpush1.msra.mxu0 0.0
        %2883 = vmatprep.subr.mxu0 0.0
        %2884 = vmatpush1.msra.mxu0 0.0
        %2885 = vmatprep.subr.mxu0 0.0
        %2886 = vmatpush1.msra.mxu0 0.0
        %2887 = vmatprep.subr.mxu0 0.0
        %2888 = vmatpush1.msra.mxu0 0.0
        %2889 = vmatprep.subr.mxu0 0.0
        %2890 = vmatpush1.msra.mxu0 0.0
        %2891 = vmatprep.subr.mxu0 0.0
        %2892 = vmatpush1.msra.mxu0 0.0
        %2893 = vmatprep.subr.mxu0 0.0
        %2894 = vmatpush1.msra.mxu0 0.0
        %2895 = vmatprep.subr.mxu0 0.0
        %2896 = vmatpush1.msra.mxu0 0.0
        %2897 = vmatprep.subr.mxu0 0.0
        %2898 = vmatpush1.msra.mxu0 0.0
        %2899 = vmatprep.subr.mxu0 0.0
        %2900 = vmatpush1.msra.mxu0 0.0
        %2901 = vmatprep.subr.mxu0 0.0
        %2902 = vmatpush1.msra.mxu0 0.0
        %2903 = vmatprep.subr.mxu0 0.0
        %2904 = vmatpush1.msra.mxu0 0.0
        %2905 = vmatprep.subr.mxu0 0.0
        %2906 = vmatpush1.msra.mxu0 0.0
        %2907 = vmatprep.mubr.f32.mxu0 0.0
        %2908 = vmatmul.mubr.f32.gmra.mrb[0].mxu0 %v2770
        %v2909 = vpop.f32.mrb[0].mxu0
        %v2910 = vadd.f32 0.0, %v2909
        %v2911 = vpop.f32.mrb[0].mxu0
        %v2912 = vadd.f32 0.0, %v2911
        %2913 = vdwg.mxu0
        %2914 = vmatprep.subr.mxu0 %v2757
        %2915 = vmatpush1.msra.mxu0 %v2756
        %2916 = vmatprep.subr.mxu0 0.0
        %2917 = vmatpush1.msra.mxu0 0.0
        %2918 = vmatprep.subr.mxu0 0.0
        %2919 = vmatpush1.msra.mxu0 0.0
        %2920 = vmatprep.subr.mxu0 0.0
        %2921 = vmatpush1.msra.mxu0 0.0
        %2922 = vmatprep.subr.mxu0 0.0
        %2923 = vmatpush1.msra.mxu0 0.0
        %2924 = vmatprep.subr.mxu0 0.0
        %2925 = vmatpush1.msra.mxu0 0.0
        %2926 = vmatprep.subr.mxu0 0.0
        %2927 = vmatpush1.msra.mxu0 0.0
        %2928 = vmatprep.subr.mxu0 0.0
        %2929 = vmatpush1.msra.mxu0 0.0
        %2930 = vmatprep.subr.mxu0 0.0
        %2931 = vmatpush1.msra.mxu0 0.0
        %2932 = vmatprep.subr.mxu0 0.0
        %2933 = vmatpush1.msra.mxu0 0.0
        %2934 = vmatprep.subr.mxu0 0.0
        %2935 = vmatpush1.msra.mxu0 0.0
        %2936 = vmatprep.subr.mxu0 0.0
        %2937 = vmatpush1.msra.mxu0 0.0
        %2938 = vmatprep.subr.mxu0 0.0
        %2939 = vmatpush1.msra.mxu0 0.0
        %2940 = vmatprep.subr.mxu0 0.0
        %2941 = vmatpush1.msra.mxu0 0.0
        %2942 = vmatprep.subr.mxu0 0.0
        %2943 = vmatpush1.msra.mxu0 0.0
        %2944 = vmatprep.subr.mxu0 0.0
        %2945 = vmatpush1.msra.mxu0 0.0
        %2946 = vmatprep.subr.mxu0 0.0
        %2947 = vmatpush1.msra.mxu0 0.0
        %2948 = vmatprep.subr.mxu0 0.0
        %2949 = vmatpush1.msra.mxu0 0.0
        %2950 = vmatprep.subr.mxu0 0.0
        %2951 = vmatpush1.msra.mxu0 0.0
        %2952 = vmatprep.subr.mxu0 0.0
        %2953 = vmatpush1.msra.mxu0 0.0
        %2954 = vmatprep.subr.mxu0 0.0
        %2955 = vmatpush1.msra.mxu0 0.0
        %2956 = vmatprep.subr.mxu0 0.0
        %2957 = vmatpush1.msra.mxu0 0.0
        %2958 = vmatprep.subr.mxu0 0.0
        %2959 = vmatpush1.msra.mxu0 0.0
        %2960 = vmatprep.subr.mxu0 0.0
        %2961 = vmatpush1.msra.mxu0 0.0
        %2962 = vmatprep.subr.mxu0 0.0
        %2963 = vmatpush1.msra.mxu0 0.0
        %2964 = vmatprep.subr.mxu0 0.0
        %2965 = vmatpush1.msra.mxu0 0.0
        %2966 = vmatprep.subr.mxu0 0.0
        %2967 = vmatpush1.msra.mxu0 0.0
        %2968 = vmatprep.subr.mxu0 0.0
        %2969 = vmatpush1.msra.mxu0 0.0
        %2970 = vmatprep.subr.mxu0 0.0
        %2971 = vmatpush1.msra.mxu0 0.0
        %2972 = vmatprep.subr.mxu0 0.0
        %2973 = vmatpush1.msra.mxu0 0.0
        %2974 = vmatprep.subr.mxu0 0.0
        %2975 = vmatpush1.msra.mxu0 0.0
        %2976 = vmatprep.subr.mxu0 0.0
        %2977 = vmatpush1.msra.mxu0 0.0
        %2978 = vmatprep.mubr.f32.mxu0 0.0
        %2979 = vmatmul.mubr.f32.gmra.mrb[0].mxu0 %v2770
        %v2980 = vpop.f32.mrb[0].mxu0
        %v2981 = vadd.f32 0.0, %v2980
        %v2982 = vpop.f32.mrb[0].mxu0
        %v2983 = vadd.f32 0.0, %v2982
        %2984 = vdwg.mxu0
        %2985 = vmatprep.subr.mxu0 %v2759
        %2986 = vmatpush1.msra.mxu0 %v2758
        %2987 = vmatprep.subr.mxu0 0.0
        %2988 = vmatpush1.msra.mxu0 0.0
        %2989 = vmatprep.subr.mxu0 0.0
        %2990 = vmatpush1.msra.mxu0 0.0
        %2991 = vmatprep.subr.mxu0 0.0
        %2992 = vmatpush1.msra.mxu0 0.0
        %2993 = vmatprep.subr.mxu0 0.0
        %2994 = vmatpush1.msra.mxu0 0.0
        %2995 = vmatprep.subr.mxu0 0.0
        %2996 = vmatpush1.msra.mxu0 0.0
        %2997 = vmatprep.subr.mxu0 0.0
        %2998 = vmatpush1.msra.mxu0 0.0
        %2999 = vmatprep.subr.mxu0 0.0
        %3000 = vmatpush1.msra.mxu0 0.0
        %3001 = vmatprep.subr.mxu0 0.0
        %3002 = vmatpush1.msra.mxu0 0.0
        %3003 = vmatprep.subr.mxu0 0.0
        %3004 = vmatpush1.msra.mxu0 0.0
        %3005 = vmatprep.subr.mxu0 0.0
        %3006 = vmatpush1.msra.mxu0 0.0
        %3007 = vmatprep.subr.mxu0 0.0
        %3008 = vmatpush1.msra.mxu0 0.0
        %3009 = vmatprep.subr.mxu0 0.0
        %3010 = vmatpush1.msra.mxu0 0.0
        %3011 = vmatprep.subr.mxu0 0.0
        %3012 = vmatpush1.msra.mxu0 0.0
        %3013 = vmatprep.subr.mxu0 0.0
        %3014 = vmatpush1.msra.mxu0 0.0
        %3015 = vmatprep.subr.mxu0 0.0
        %3016 = vmatpush1.msra.mxu0 0.0
        %3017 = vmatprep.subr.mxu0 0.0
        %3018 = vmatpush1.msra.mxu0 0.0
        %3019 = vmatprep.subr.mxu0 0.0
        %3020 = vmatpush1.msra.mxu0 0.0
        %3021 = vmatprep.subr.mxu0 0.0
        %3022 = vmatpush1.msra.mxu0 0.0
        %3023 = vmatprep.subr.mxu0 0.0
        %3024 = vmatpush1.msra.mxu0 0.0
        %3025 = vmatprep.subr.mxu0 0.0
        %3026 = vmatpush1.msra.mxu0 0.0
        %3027 = vmatprep.subr.mxu0 0.0
        %3028 = vmatpush1.msra.mxu0 0.0
        %3029 = vmatprep.subr.mxu0 0.0
        %3030 = vmatpush1.msra.mxu0 0.0
        %3031 = vmatprep.subr.mxu0 0.0
        %3032 = vmatpush1.msra.mxu0 0.0
        %3033 = vmatprep.subr.mxu0 0.0
        %3034 = vmatpush1.msra.mxu0 0.0
        %3035 = vmatprep.subr.mxu0 0.0
        %3036 = vmatpush1.msra.mxu0 0.0
        %3037 = vmatprep.subr.mxu0 0.0
        %3038 = vmatpush1.msra.mxu0 0.0
        %3039 = vmatprep.subr.mxu0 0.0
        %3040 = vmatpush1.msra.mxu0 0.0
        %3041 = vmatprep.subr.mxu0 0.0
        %3042 = vmatpush1.msra.mxu0 0.0
        %3043 = vmatprep.subr.mxu0 0.0
        %3044 = vmatpush1.msra.mxu0 0.0
        %3045 = vmatprep.subr.mxu0 0.0
        %3046 = vmatpush1.msra.mxu0 0.0
        %3047 = vmatprep.subr.mxu0 0.0
        %3048 = vmatpush1.msra.mxu0 0.0
        %3049 = vmatprep.mubr.f32.mxu0 0.0
        %3050 = vmatmul.mubr.f32.gmra.mrb[0].mxu0 %v2770
        %v3051 = vpop.f32.mrb[0].mxu0
        %v3052 = vadd.f32 0.0, %v3051
        %v3053 = vpop.f32.mrb[0].mxu0
        %v3054 = vadd.f32 0.0, %v3053
        %3055 = vdwg.mxu0
        %3056 = vmatprep.subr.mxu0 0.0
        %3057 = vmatpush1.msra.mxu0 %v2760
        %3058 = vmatprep.subr.mxu0 0.0
        %3059 = vmatpush1.msra.mxu0 0.0
        %3060 = vmatprep.subr.mxu0 0.0
        %3061 = vmatpush1.msra.mxu0 0.0
        %3062 = vmatprep.subr.mxu0 0.0
        %3063 = vmatpush1.msra.mxu0 0.0
        %3064 = vmatprep.subr.mxu0 0.0
        %3065 = vmatpush1.msra.mxu0 0.0
        %3066 = vmatprep.subr.mxu0 0.0
        %3067 = vmatpush1.msra.mxu0 0.0
        %3068 = vmatprep.subr.mxu0 0.0
        %3069 = vmatpush1.msra.mxu0 0.0
        %3070 = vmatprep.subr.mxu0 0.0
        %3071 = vmatpush1.msra.mxu0 0.0
        %3072 = vmatprep.subr.mxu0 0.0
        %3073 = vmatpush1.msra.mxu0 0.0
        %3074 = vmatprep.subr.mxu0 0.0
        %3075 = vmatpush1.msra.mxu0 0.0
        %3076 = vmatprep.subr.mxu0 0.0
        %3077 = vmatpush1.msra.mxu0 0.0
        %3078 = vmatprep.subr.mxu0 0.0
        %3079 = vmatpush1.msra.mxu0 0.0
        %3080 = vmatprep.subr.mxu0 0.0
        %3081 = vmatpush1.msra.mxu0 0.0
        %3082 = vmatprep.subr.mxu0 0.0
        %3083 = vmatpush1.msra.mxu0 0.0
        %3084 = vmatprep.subr.mxu0 0.0
        %3085 = vmatpush1.msra.mxu0 0.0
        %3086 = vmatprep.subr.mxu0 0.0
        %3087 = vmatpush1.msra.mxu0 0.0
        %3088 = vmatprep.subr.mxu0 0.0
        %3089 = vmatpush1.msra.mxu0 0.0
        %3090 = vmatprep.subr.mxu0 0.0
        %3091 = vmatpush1.msra.mxu0 0.0
        %3092 = vmatprep.subr.mxu0 0.0
        %3093 = vmatpush1.msra.mxu0 0.0
        %3094 = vmatprep.subr.mxu0 0.0
        %3095 = vmatpush1.msra.mxu0 0.0
        %3096 = vmatprep.subr.mxu0 0.0
        %3097 = vmatpush1.msra.mxu0 0.0
        %3098 = vmatprep.subr.mxu0 0.0
        %3099 = vmatpush1.msra.mxu0 0.0
        %3100 = vmatprep.subr.mxu0 0.0
        %3101 = vmatpush1.msra.mxu0 0.0
        %3102 = vmatprep.subr.mxu0 0.0
        %3103 = vmatpush1.msra.mxu0 0.0
        %3104 = vmatprep.subr.mxu0 0.0
        %3105 = vmatpush1.msra.mxu0 0.0
        %3106 = vmatprep.subr.mxu0 0.0
        %3107 = vmatpush1.msra.mxu0 0.0
        %3108 = vmatprep.subr.mxu0 0.0
        %3109 = vmatpush1.msra.mxu0 0.0
        %3110 = vmatprep.subr.mxu0 0.0
        %3111 = vmatpush1.msra.mxu0 0.0
        %3112 = vmatprep.subr.mxu0 0.0
        %3113 = vmatpush1.msra.mxu0 0.0
        %3114 = vmatprep.subr.mxu0 0.0
        %3115 = vmatpush1.msra.mxu0 0.0
        %3116 = vmatprep.subr.mxu0 0.0
        %3117 = vmatpush1.msra.mxu0 0.0
        %3118 = vmatprep.subr.mxu0 0.0
        %3119 = vmatpush1.msra.mxu0 0.0
        %3120 = vmatprep.mubr.f32.mxu0 0.0
        %3121 = vmatmul.mubr.f32.gmra.mrb[0].mxu0 %v2770
        %v3122 = vpop.f32.mrb[0].mxu0
        %v3123 = vadd.f32 0.0, %v3122
        %v3124 = vpop.f32.mrb[0].mxu0
        %3125 = vdwg.mxu0
        %v3126 = vadd.f32 %v2720, %v2839
        %v3127 = vadd.f32 %v2721, %v2841
        %v3128 = vadd.f32 %v2722, %v2910
        %v3129 = vadd.f32 %v2723, %v2912
        %v3130 = vadd.f32 %v2724, %v2981
        %v3131 = vadd.f32 %v2725, %v2983
        %v3132 = vadd.f32 %v2726, %v3052
        %v3133 = vadd.f32 %v2727, %v3054
        %v3134 = vadd.f32 %v2728, %v3123
        %3135 = vrot.lane.b32.xlu0 %v338, 72
        %v3136 = vpop.permute.xlu0 %3135
        %3137 = vrot.lane.b32.xlu0 %v326, 10
        %v3138 = vpop.permute.xlu0 %3137
        %3139 = vrot.lane.b32.xlu0 %v327, 10
        %v3140 = vpop.permute.xlu0 %3139
        %3141 = vrot.lane.b32.xlu0 %v328, 10
        %v3142 = vpop.permute.xlu0 %3141
        %3143 = vrot.lane.b32.xlu0 %v329, 10
        %v3144 = vpop.permute.xlu0 %3143
        %3145 = vrot.lane.b32.xlu0 %v330, 10
        %v3146 = vpop.permute.xlu0 %3145
        %3147 = vrot.lane.b32.xlu0 %v331, 10
        %v3148 = vpop.permute.xlu0 %3147
        %3149 = vrot.lane.b32.xlu0 %v332, 10
        %v3150 = vpop.permute.xlu0 %3149
        %3151 = vrot.lane.b32.xlu0 %v333, 10
        %v3152 = vpop.permute.xlu0 %3151
        %3153 = vrot.lane.b32.xlu0 %v334, 10
        %v3154 = vpop.permute.xlu0 %3153
        %3155 = vrot.lane.b32.xlu0 %v335, 10
        %v3156 = vpop.permute.xlu0 %3155
        %vm3157 = vcmask 80896
        %v3158 = vsel %vm3157, %v3138, %v3140
        %v3159 = vsel %vm3157, %v3140, %v3142
        %v3160 = vsel %vm3157, %v3142, %v3144
        %v3161 = vsel %vm3157, %v3144, %v3146
        %v3162 = vsel %vm3157, %v3146, %v3148
        %v3163 = vsel %vm3157, %v3148, %v3150
        %v3164 = vsel %vm3157, %v3150, %v3152
        %v3165 = vsel %vm3157, %v3152, %v3154
        %v3166 = vsel %vm3157, %v3154, %v3156
        %v3176 = vsel %vm392, %v3136, 0
        %3178 = vmatprep.subr.mxu0 %v3159
        %3179 = vmatpush1.msra.mxu0 %v3158
        %3180 = vmatprep.subr.mxu0 0.0
        %3181 = vmatpush1.msra.mxu0 0.0
        %3182 = vmatprep.subr.mxu0 0.0
        %3183 = vmatpush1.msra.mxu0 0.0
        %3184 = vmatprep.subr.mxu0 0.0
        %3185 = vmatpush1.msra.mxu0 0.0
        %3186 = vmatprep.subr.mxu0 0.0
        %3187 = vmatpush1.msra.mxu0 0.0
        %3188 = vmatprep.subr.mxu0 0.0
        %3189 = vmatpush1.msra.mxu0 0.0
        %3190 = vmatprep.subr.mxu0 0.0
        %3191 = vmatpush1.msra.mxu0 0.0
        %3192 = vmatprep.subr.mxu0 0.0
        %3193 = vmatpush1.msra.mxu0 0.0
        %3194 = vmatprep.subr.mxu0 0.0
        %3195 = vmatpush1.msra.mxu0 0.0
        %3196 = vmatprep.subr.mxu0 0.0
        %3197 = vmatpush1.msra.mxu0 0.0
        %3198 = vmatprep.subr.mxu0 0.0
        %3199 = vmatpush1.msra.mxu0 0.0
        %3200 = vmatprep.subr.mxu0 0.0
        %3201 = vmatpush1.msra.mxu0 0.0
        %3202 = vmatprep.subr.mxu0 0.0
        %3203 = vmatpush1.msra.mxu0 0.0
        %3204 = vmatprep.subr.mxu0 0.0
        %3205 = vmatpush1.msra.mxu0 0.0
        %3206 = vmatprep.subr.mxu0 0.0
        %3207 = vmatpush1.msra.mxu0 0.0
        %3208 = vmatprep.subr.mxu0 0.0
        %3209 = vmatpush1.msra.mxu0 0.0
        %3210 = vmatprep.subr.mxu0 0.0
        %3211 = vmatpush1.msra.mxu0 0.0
        %3212 = vmatprep.subr.mxu0 0.0
        %3213 = vmatpush1.msra.mxu0 0.0
        %3214 = vmatprep.subr.mxu0 0.0
        %3215 = vmatpush1.msra.mxu0 0.0
        %3216 = vmatprep.subr.mxu0 0.0
        %3217 = vmatpush1.msra.mxu0 0.0
        %3218 = vmatprep.subr.mxu0 0.0
        %3219 = vmatpush1.msra.mxu0 0.0
        %3220 = vmatprep.subr.mxu0 0.0
        %3221 = vmatpush1.msra.mxu0 0.0
        %3222 = vmatprep.subr.mxu0 0.0
        %3223 = vmatpush1.msra.mxu0 0.0
        %3224 = vmatprep.subr.mxu0 0.0
        %3225 = vmatpush1.msra.mxu0 0.0
        %3226 = vmatprep.subr.mxu0 0.0
        %3227 = vmatpush1.msra.mxu0 0.0
        %3228 = vmatprep.subr.mxu0 0.0
        %3229 = vmatpush1.msra.mxu0 0.0
        %3230 = vmatprep.subr.mxu0 0.0
        %3231 = vmatpush1.msra.mxu0 0.0
        %3232 = vmatprep.subr.mxu0 0.0
        %3233 = vmatpush1.msra.mxu0 0.0
        %3234 = vmatprep.subr.mxu0 0.0
        %3235 = vmatpush1.msra.mxu0 0.0
        %3236 = vmatprep.subr.mxu0 0.0
        %3237 = vmatpush1.msra.mxu0 0.0
        %3238 = vmatprep.subr.mxu0 0.0
        %3239 = vmatpush1.msra.mxu0 0.0
        %3240 = vmatprep.subr.mxu0 0.0
        %3241 = vmatpush1.msra.mxu0 0.0
        %3242 = vmatprep.mubr.f32.mxu0 0.0
        %3243 = vmatmul.mubr.f32.gmra.mrb[0].mxu0 %v3176
        %v3244 = vpop.f32.mrb[0].mxu0
        %v3245 = vadd.f32 0.0, %v3244
        %v3246 = vpop.f32.mrb[0].mxu0
        %v3247 = vadd.f32 0.0, %v3246
        %3248 = vdwg.mxu0
        %3249 = vmatprep.subr.mxu0 %v3161
        %3250 = vmatpush1.msra.mxu0 %v3160
        %3251 = vmatprep.subr.mxu0 0.0
        %3252 = vmatpush1.msra.mxu0 0.0
        %3253 = vmatprep.subr.mxu0 0.0
        %3254 = vmatpush1.msra.mxu0 0.0
        %3255 = vmatprep.subr.mxu0 0.0
        %3256 = vmatpush1.msra.mxu0 0.0
        %3257 = vmatprep.subr.mxu0 0.0
        %3258 = vmatpush1.msra.mxu0 0.0
        %3259 = vmatprep.subr.mxu0 0.0
        %3260 = vmatpush1.msra.mxu0 0.0
        %3261 = vmatprep.subr.mxu0 0.0
        %3262 = vmatpush1.msra.mxu0 0.0
        %3263 = vmatprep.subr.mxu0 0.0
        %3264 = vmatpush1.msra.mxu0 0.0
        %3265 = vmatprep.subr.mxu0 0.0
        %3266 = vmatpush1.msra.mxu0 0.0
        %3267 = vmatprep.subr.mxu0 0.0
        %3268 = vmatpush1.msra.mxu0 0.0
        %3269 = vmatprep.subr.mxu0 0.0
        %3270 = vmatpush1.msra.mxu0 0.0
        %3271 = vmatprep.subr.mxu0 0.0
        %3272 = vmatpush1.msra.mxu0 0.0
        %3273 = vmatprep.subr.mxu0 0.0
        %3274 = vmatpush1.msra.mxu0 0.0
        %3275 = vmatprep.subr.mxu0 0.0
        %3276 = vmatpush1.msra.mxu0 0.0
        %3277 = vmatprep.subr.mxu0 0.0
        %3278 = vmatpush1.msra.mxu0 0.0
        %3279 = vmatprep.subr.mxu0 0.0
        %3280 = vmatpush1.msra.mxu0 0.0
        %3281 = vmatprep.subr.mxu0 0.0
        %3282 = vmatpush1.msra.mxu0 0.0
        %3283 = vmatprep.subr.mxu0 0.0
        %3284 = vmatpush1.msra.mxu0 0.0
        %3285 = vmatprep.subr.mxu0 0.0
        %3286 = vmatpush1.msra.mxu0 0.0
        %3287 = vmatprep.subr.mxu0 0.0
        %3288 = vmatpush1.msra.mxu0 0.0
        %3289 = vmatprep.subr.mxu0 0.0
        %3290 = vmatpush1.msra.mxu0 0.0
        %3291 = vmatprep.subr.mxu0 0.0
        %3292 = vmatpush1.msra.mxu0 0.0
        %3293 = vmatprep.subr.mxu0 0.0
        %3294 = vmatpush1.msra.mxu0 0.0
        %3295 = vmatprep.subr.mxu0 0.0
        %3296 = vmatpush1.msra.mxu0 0.0
        %3297 = vmatprep.subr.mxu0 0.0
        %3298 = vmatpush1.msra.mxu0 0.0
        %3299 = vmatprep.subr.mxu0 0.0
        %3300 = vmatpush1.msra.mxu0 0.0
        %3301 = vmatprep.subr.mxu0 0.0
        %3302 = vmatpush1.msra.mxu0 0.0
        %3303 = vmatprep.subr.mxu0 0.0
        %3304 = vmatpush1.msra.mxu0 0.0
        %3305 = vmatprep.subr.mxu0 0.0
        %3306 = vmatpush1.msra.mxu0 0.0
        %3307 = vmatprep.subr.mxu0 0.0
        %3308 = vmatpush1.msra.mxu0 0.0
        %3309 = vmatprep.subr.mxu0 0.0
        %3310 = vmatpush1.msra.mxu0 0.0
        %3311 = vmatprep.subr.mxu0 0.0
        %3312 = vmatpush1.msra.mxu0 0.0
        %3313 = vmatprep.mubr.f32.mxu0 0.0
        %3314 = vmatmul.mubr.f32.gmra.mrb[0].mxu0 %v3176
        %v3315 = vpop.f32.mrb[0].mxu0
        %v3316 = vadd.f32 0.0, %v3315
        %v3317 = vpop.f32.mrb[0].mxu0
        %v3318 = vadd.f32 0.0, %v3317
        %3319 = vdwg.mxu0
        %3320 = vmatprep.subr.mxu0 %v3163
        %3321 = vmatpush1.msra.mxu0 %v3162
        %3322 = vmatprep.subr.mxu0 0.0
        %3323 = vmatpush1.msra.mxu0 0.0
        %3324 = vmatprep.subr.mxu0 0.0
        %3325 = vmatpush1.msra.mxu0 0.0
        %3326 = vmatprep.subr.mxu0 0.0
        %3327 = vmatpush1.msra.mxu0 0.0
        %3328 = vmatprep.subr.mxu0 0.0
        %3329 = vmatpush1.msra.mxu0 0.0
        %3330 = vmatprep.subr.mxu0 0.0
        %3331 = vmatpush1.msra.mxu0 0.0
        %3332 = vmatprep.subr.mxu0 0.0
        %3333 = vmatpush1.msra.mxu0 0.0
        %3334 = vmatprep.subr.mxu0 0.0
        %3335 = vmatpush1.msra.mxu0 0.0
        %3336 = vmatprep.subr.mxu0 0.0
        %3337 = vmatpush1.msra.mxu0 0.0
        %3338 = vmatprep.subr.mxu0 0.0
        %3339 = vmatpush1.msra.mxu0 0.0
        %3340 = vmatprep.subr.mxu0 0.0
        %3341 = vmatpush1.msra.mxu0 0.0
        %3342 = vmatprep.subr.mxu0 0.0
        %3343 = vmatpush1.msra.mxu0 0.0
        %3344 = vmatprep.subr.mxu0 0.0
        %3345 = vmatpush1.msra.mxu0 0.0
        %3346 = vmatprep.subr.mxu0 0.0
        %3347 = vmatpush1.msra.mxu0 0.0
        %3348 = vmatprep.subr.mxu0 0.0
        %3349 = vmatpush1.msra.mxu0 0.0
        %3350 = vmatprep.subr.mxu0 0.0
        %3351 = vmatpush1.msra.mxu0 0.0
        %3352 = vmatprep.subr.mxu0 0.0
        %3353 = vmatpush1.msra.mxu0 0.0
        %3354 = vmatprep.subr.mxu0 0.0
        %3355 = vmatpush1.msra.mxu0 0.0
        %3356 = vmatprep.subr.mxu0 0.0
        %3357 = vmatpush1.msra.mxu0 0.0
        %3358 = vmatprep.subr.mxu0 0.0
        %3359 = vmatpush1.msra.mxu0 0.0
        %3360 = vmatprep.subr.mxu0 0.0
        %3361 = vmatpush1.msra.mxu0 0.0
        %3362 = vmatprep.subr.mxu0 0.0
        %3363 = vmatpush1.msra.mxu0 0.0
        %3364 = vmatprep.subr.mxu0 0.0
        %3365 = vmatpush1.msra.mxu0 0.0
        %3366 = vmatprep.subr.mxu0 0.0
        %3367 = vmatpush1.msra.mxu0 0.0
        %3368 = vmatprep.subr.mxu0 0.0
        %3369 = vmatpush1.msra.mxu0 0.0
        %3370 = vmatprep.subr.mxu0 0.0
        %3371 = vmatpush1.msra.mxu0 0.0
        %3372 = vmatprep.subr.mxu0 0.0
        %3373 = vmatpush1.msra.mxu0 0.0
        %3374 = vmatprep.subr.mxu0 0.0
        %3375 = vmatpush1.msra.mxu0 0.0
        %3376 = vmatprep.subr.mxu0 0.0
        %3377 = vmatpush1.msra.mxu0 0.0
        %3378 = vmatprep.subr.mxu0 0.0
        %3379 = vmatpush1.msra.mxu0 0.0
        %3380 = vmatprep.subr.mxu0 0.0
        %3381 = vmatpush1.msra.mxu0 0.0
        %3382 = vmatprep.subr.mxu0 0.0
        %3383 = vmatpush1.msra.mxu0 0.0
        %3384 = vmatprep.mubr.f32.mxu0 0.0
        %3385 = vmatmul.mubr.f32.gmra.mrb[0].mxu0 %v3176
        %v3386 = vpop.f32.mrb[0].mxu0
        %v3387 = vadd.f32 0.0, %v3386
        %v3388 = vpop.f32.mrb[0].mxu0
        %v3389 = vadd.f32 0.0, %v3388
        %3390 = vdwg.mxu0
        %3391 = vmatprep.subr.mxu0 %v3165
        %3392 = vmatpush1.msra.mxu0 %v3164
        %3393 = vmatprep.subr.mxu0 0.0
        %3394 = vmatpush1.msra.mxu0 0.0
        %3395 = vmatprep.subr.mxu0 0.0
        %3396 = vmatpush1.msra.mxu0 0.0
        %3397 = vmatprep.subr.mxu0 0.0
        %3398 = vmatpush1.msra.mxu0 0.0
        %3399 = vmatprep.subr.mxu0 0.0
        %3400 = vmatpush1.msra.mxu0 0.0
        %3401 = vmatprep.subr.mxu0 0.0
        %3402 = vmatpush1.msra.mxu0 0.0
        %3403 = vmatprep.subr.mxu0 0.0
        %3404 = vmatpush1.msra.mxu0 0.0
        %3405 = vmatprep.subr.mxu0 0.0
        %3406 = vmatpush1.msra.mxu0 0.0
        %3407 = vmatprep.subr.mxu0 0.0
        %3408 = vmatpush1.msra.mxu0 0.0
        %3409 = vmatprep.subr.mxu0 0.0
        %3410 = vmatpush1.msra.mxu0 0.0
        %3411 = vmatprep.subr.mxu0 0.0
        %3412 = vmatpush1.msra.mxu0 0.0
        %3413 = vmatprep.subr.mxu0 0.0
        %3414 = vmatpush1.msra.mxu0 0.0
        %3415 = vmatprep.subr.mxu0 0.0
        %3416 = vmatpush1.msra.mxu0 0.0
        %3417 = vmatprep.subr.mxu0 0.0
        %3418 = vmatpush1.msra.mxu0 0.0
        %3419 = vmatprep.subr.mxu0 0.0
        %3420 = vmatpush1.msra.mxu0 0.0
        %3421 = vmatprep.subr.mxu0 0.0
        %3422 = vmatpush1.msra.mxu0 0.0
        %3423 = vmatprep.subr.mxu0 0.0
        %3424 = vmatpush1.msra.mxu0 0.0
        %3425 = vmatprep.subr.mxu0 0.0
        %3426 = vmatpush1.msra.mxu0 0.0
        %3427 = vmatprep.subr.mxu0 0.0
        %3428 = vmatpush1.msra.mxu0 0.0
        %3429 = vmatprep.subr.mxu0 0.0
        %3430 = vmatpush1.msra.mxu0 0.0
        %3431 = vmatprep.subr.mxu0 0.0
        %3432 = vmatpush1.msra.mxu0 0.0
        %3433 = vmatprep.subr.mxu0 0.0
        %3434 = vmatpush1.msra.mxu0 0.0
        %3435 = vmatprep.subr.mxu0 0.0
        %3436 = vmatpush1.msra.mxu0 0.0
        %3437 = vmatprep.subr.mxu0 0.0
        %3438 = vmatpush1.msra.mxu0 0.0
        %3439 = vmatprep.subr.mxu0 0.0
        %3440 = vmatpush1.msra.mxu0 0.0
        %3441 = vmatprep.subr.mxu0 0.0
        %3442 = vmatpush1.msra.mxu0 0.0
        %3443 = vmatprep.subr.mxu0 0.0
        %3444 = vmatpush1.msra.mxu0 0.0
        %3445 = vmatprep.subr.mxu0 0.0
        %3446 = vmatpush1.msra.mxu0 0.0
        %3447 = vmatprep.subr.mxu0 0.0
        %3448 = vmatpush1.msra.mxu0 0.0
        %3449 = vmatprep.subr.mxu0 0.0
        %3450 = vmatpush1.msra.mxu0 0.0
        %3451 = vmatprep.subr.mxu0 0.0
        %3452 = vmatpush1.msra.mxu0 0.0
        %3453 = vmatprep.subr.mxu0 0.0
        %3454 = vmatpush1.msra.mxu0 0.0
        %3455 = vmatprep.mubr.f32.mxu0 0.0
        %3456 = vmatmul.mubr.f32.gmra.mrb[0].mxu0 %v3176
        %v3457 = vpop.f32.mrb[0].mxu0
        %v3458 = vadd.f32 0.0, %v3457
        %v3459 = vpop.f32.mrb[0].mxu0
        %v3460 = vadd.f32 0.0, %v3459
        %3461 = vdwg.mxu0
        %3462 = vmatprep.subr.mxu0 0.0
        %3463 = vmatpush1.msra.mxu0 %v3166
        %3464 = vmatprep.subr.mxu0 0.0
        %3465 = vmatpush1.msra.mxu0 0.0
        %3466 = vmatprep.subr.mxu0 0.0
        %3467 = vmatpush1.msra.mxu0 0.0
        %3468 = vmatprep.subr.mxu0 0.0
        %3469 = vmatpush1.msra.mxu0 0.0
        %3470 = vmatprep.subr.mxu0 0.0
        %3471 = vmatpush1.msra.mxu0 0.0
        %3472 = vmatprep.subr.mxu0 0.0
        %3473 = vmatpush1.msra.mxu0 0.0
        %3474 = vmatprep.subr.mxu0 0.0
        %3475 = vmatpush1.msra.mxu0 0.0
        %3476 = vmatprep.subr.mxu0 0.0
        %3477 = vmatpush1.msra.mxu0 0.0
        %3478 = vmatprep.subr.mxu0 0.0
        %3479 = vmatpush1.msra.mxu0 0.0
        %3480 = vmatprep.subr.mxu0 0.0
        %3481 = vmatpush1.msra.mxu0 0.0
        %3482 = vmatprep.subr.mxu0 0.0
        %3483 = vmatpush1.msra.mxu0 0.0
        %3484 = vmatprep.subr.mxu0 0.0
        %3485 = vmatpush1.msra.mxu0 0.0
        %3486 = vmatprep.subr.mxu0 0.0
        %3487 = vmatpush1.msra.mxu0 0.0
        %3488 = vmatprep.subr.mxu0 0.0
        %3489 = vmatpush1.msra.mxu0 0.0
        %3490 = vmatprep.subr.mxu0 0.0
        %3491 = vmatpush1.msra.mxu0 0.0
        %3492 = vmatprep.subr.mxu0 0.0
        %3493 = vmatpush1.msra.mxu0 0.0
        %3494 = vmatprep.subr.mxu0 0.0
        %3495 = vmatpush1.msra.mxu0 0.0
        %3496 = vmatprep.subr.mxu0 0.0
        %3497 = vmatpush1.msra.mxu0 0.0
        %3498 = vmatprep.subr.mxu0 0.0
        %3499 = vmatpush1.msra.mxu0 0.0
        %3500 = vmatprep.subr.mxu0 0.0
        %3501 = vmatpush1.msra.mxu0 0.0
        %3502 = vmatprep.subr.mxu0 0.0
        %3503 = vmatpush1.msra.mxu0 0.0
        %3504 = vmatprep.subr.mxu0 0.0
        %3505 = vmatpush1.msra.mxu0 0.0
        %3506 = vmatprep.subr.mxu0 0.0
        %3507 = vmatpush1.msra.mxu0 0.0
        %3508 = vmatprep.subr.mxu0 0.0
        %3509 = vmatpush1.msra.mxu0 0.0
        %3510 = vmatprep.subr.mxu0 0.0
        %3511 = vmatpush1.msra.mxu0 0.0
        %3512 = vmatprep.subr.mxu0 0.0
        %3513 = vmatpush1.msra.mxu0 0.0
        %3514 = vmatprep.subr.mxu0 0.0
        %3515 = vmatpush1.msra.mxu0 0.0
        %3516 = vmatprep.subr.mxu0 0.0
        %3517 = vmatpush1.msra.mxu0 0.0
        %3518 = vmatprep.subr.mxu0 0.0
        %3519 = vmatpush1.msra.mxu0 0.0
        %3520 = vmatprep.subr.mxu0 0.0
        %3521 = vmatpush1.msra.mxu0 0.0
        %3522 = vmatprep.subr.mxu0 0.0
        %3523 = vmatpush1.msra.mxu0 0.0
        %3524 = vmatprep.subr.mxu0 0.0
        %3525 = vmatpush1.msra.mxu0 0.0
        %3526 = vmatprep.mubr.f32.mxu0 0.0
        %3527 = vmatmul.mubr.f32.gmra.mrb[0].mxu0 %v3176
        %v3528 = vpop.f32.mrb[0].mxu0
        %v3529 = vadd.f32 0.0, %v3528
        %v3530 = vpop.f32.mrb[0].mxu0
        %3531 = vdwg.mxu0
        %v3532 = vadd.f32 %v3126, %v3245
        %v3533 = vadd.f32 %v3127, %v3247
        %v3534 = vadd.f32 %v3128, %v3316
        %v3535 = vadd.f32 %v3129, %v3318
        %v3536 = vadd.f32 %v3130, %v3387
        %v3537 = vadd.f32 %v3131, %v3389
        %v3538 = vadd.f32 %v3132, %v3458
        %v3539 = vadd.f32 %v3133, %v3460
        %v3540 = vadd.f32 %v3134, %v3529
        %3541 = vrot.lane.b32.xlu0 %v338, 64
        %v3542 = vpop.permute.xlu0 %3541
        %3543 = vrot.lane.b32.xlu0 %v326, 8
        %v3544 = vpop.permute.xlu0 %3543
        %3545 = vrot.lane.b32.xlu0 %v327, 8
        %v3546 = vpop.permute.xlu0 %3545
        %3547 = vrot.lane.b32.xlu0 %v328, 8
        %v3548 = vpop.permute.xlu0 %3547
        %3549 = vrot.lane.b32.xlu0 %v329, 8
        %v3550 = vpop.permute.xlu0 %3549
        %3551 = vrot.lane.b32.xlu0 %v330, 8
        %v3552 = vpop.permute.xlu0 %3551
        %3553 = vrot.lane.b32.xlu0 %v331, 8
        %v3554 = vpop.permute.xlu0 %3553
        %3555 = vrot.lane.b32.xlu0 %v332, 8
        %v3556 = vpop.permute.xlu0 %3555
        %3557 = vrot.lane.b32.xlu0 %v333, 8
        %v3558 = vpop.permute.xlu0 %3557
        %3559 = vrot.lane.b32.xlu0 %v334, 8
        %v3560 = vpop.permute.xlu0 %3559
        %3561 = vrot.lane.b32.xlu0 %v335, 8
        %v3562 = vpop.permute.xlu0 %3561
        %v3563 = vsel %vm392, %v3544, %v3546
        %v3564 = vsel %vm392, %v3546, %v3548
        %v3565 = vsel %vm392, %v3548, %v3550
        %v3566 = vsel %vm392, %v3550, %v3552
        %v3567 = vsel %vm392, %v3552, %v3554
        %v3568 = vsel %vm392, %v3554, %v3556
        %v3569 = vsel %vm392, %v3556, %v3558
        %v3570 = vsel %vm392, %v3558, %v3560
        %v3571 = vsel %vm392, %v3560, %v3562
        %v3581 = vsel %vm392, %v3542, 0
        %3583 = vmatprep.subr.mxu0 %v3564
        %3584 = vmatpush1.msra.mxu0 %v3563
        %3585 = vmatprep.subr.mxu0 0.0
        %3586 = vmatpush1.msra.mxu0 0.0
        %3587 = vmatprep.subr.mxu0 0.0
        %3588 = vmatpush1.msra.mxu0 0.0
        %3589 = vmatprep.subr.mxu0 0.0
        %3590 = vmatpush1.msra.mxu0 0.0
        %3591 = vmatprep.subr.mxu0 0.0
        %3592 = vmatpush1.msra.mxu0 0.0
        %3593 = vmatprep.subr.mxu0 0.0
        %3594 = vmatpush1.msra.mxu0 0.0
        %3595 = vmatprep.subr.mxu0 0.0
        %3596 = vmatpush1.msra.mxu0 0.0
        %3597 = vmatprep.subr.mxu0 0.0
        %3598 = vmatpush1.msra.mxu0 0.0
        %3599 = vmatprep.subr.mxu0 0.0
        %3600 = vmatpush1.msra.mxu0 0.0
        %3601 = vmatprep.subr.mxu0 0.0
        %3602 = vmatpush1.msra.mxu0 0.0
        %3603 = vmatprep.subr.mxu0 0.0
        %3604 = vmatpush1.msra.mxu0 0.0
        %3605 = vmatprep.subr.mxu0 0.0
        %3606 = vmatpush1.msra.mxu0 0.0
        %3607 = vmatprep.subr.mxu0 0.0
        %3608 = vmatpush1.msra.mxu0 0.0
        %3609 = vmatprep.subr.mxu0 0.0
        %3610 = vmatpush1.msra.mxu0 0.0
        %3611 = vmatprep.subr.mxu0 0.0
        %3612 = vmatpush1.msra.mxu0 0.0
        %3613 = vmatprep.subr.mxu0 0.0
        %3614 = vmatpush1.msra.mxu0 0.0
        %3615 = vmatprep.subr.mxu0 0.0
        %3616 = vmatpush1.msra.mxu0 0.0
        %3617 = vmatprep.subr.mxu0 0.0
        %3618 = vmatpush1.msra.mxu0 0.0
        %3619 = vmatprep.subr.mxu0 0.0
        %3620 = vmatpush1.msra.mxu0 0.0
        %3621 = vmatprep.subr.mxu0 0.0
        %3622 = vmatpush1.msra.mxu0 0.0
        %3623 = vmatprep.subr.mxu0 0.0
        %3624 = vmatpush1.msra.mxu0 0.0
        %3625 = vmatprep.subr.mxu0 0.0
        %3626 = vmatpush1.msra.mxu0 0.0
        %3627 = vmatprep.subr.mxu0 0.0
        %3628 = vmatpush1.msra.mxu0 0.0
        %3629 = vmatprep.subr.mxu0 0.0
        %3630 = vmatpush1.msra.mxu0 0.0
        %3631 = vmatprep.subr.mxu0 0.0
        %3632 = vmatpush1.msra.mxu0 0.0
        %3633 = vmatprep.subr.mxu0 0.0
        %3634 = vmatpush1.msra.mxu0 0.0
        %3635 = vmatprep.subr.mxu0 0.0
        %3636 = vmatpush1.msra.mxu0 0.0
        %3637 = vmatprep.subr.mxu0 0.0
        %3638 = vmatpush1.msra.mxu0 0.0
        %3639 = vmatprep.subr.mxu0 0.0
        %3640 = vmatpush1.msra.mxu0 0.0
        %3641 = vmatprep.subr.mxu0 0.0
        %3642 = vmatpush1.msra.mxu0 0.0
        %3643 = vmatprep.subr.mxu0 0.0
        %3644 = vmatpush1.msra.mxu0 0.0
        %3645 = vmatprep.subr.mxu0 0.0
        %3646 = vmatpush1.msra.mxu0 0.0
        %3647 = vmatprep.mubr.f32.mxu0 0.0
        %3648 = vmatmul.mubr.f32.gmra.mrb[0].mxu0 %v3581
        %v3649 = vpop.f32.mrb[0].mxu0
        %v3650 = vadd.f32 0.0, %v3649
        %v3651 = vpop.f32.mrb[0].mxu0
        %v3652 = vadd.f32 0.0, %v3651
        %3653 = vdwg.mxu0
        %3654 = vmatprep.subr.mxu0 %v3566
        %3655 = vmatpush1.msra.mxu0 %v3565
        %3656 = vmatprep.subr.mxu0 0.0
        %3657 = vmatpush1.msra.mxu0 0.0
        %3658 = vmatprep.subr.mxu0 0.0
        %3659 = vmatpush1.msra.mxu0 0.0
        %3660 = vmatprep.subr.mxu0 0.0
        %3661 = vmatpush1.msra.mxu0 0.0
        %3662 = vmatprep.subr.mxu0 0.0
        %3663 = vmatpush1.msra.mxu0 0.0
        %3664 = vmatprep.subr.mxu0 0.0
        %3665 = vmatpush1.msra.mxu0 0.0
        %3666 = vmatprep.subr.mxu0 0.0
        %3667 = vmatpush1.msra.mxu0 0.0
        %3668 = vmatprep.subr.mxu0 0.0
        %3669 = vmatpush1.msra.mxu0 0.0
        %3670 = vmatprep.subr.mxu0 0.0
        %3671 = vmatpush1.msra.mxu0 0.0
        %3672 = vmatprep.subr.mxu0 0.0
        %3673 = vmatpush1.msra.mxu0 0.0
        %3674 = vmatprep.subr.mxu0 0.0
        %3675 = vmatpush1.msra.mxu0 0.0
        %3676 = vmatprep.subr.mxu0 0.0
        %3677 = vmatpush1.msra.mxu0 0.0
        %3678 = vmatprep.subr.mxu0 0.0
        %3679 = vmatpush1.msra.mxu0 0.0
        %3680 = vmatprep.subr.mxu0 0.0
        %3681 = vmatpush1.msra.mxu0 0.0
        %3682 = vmatprep.subr.mxu0 0.0
        %3683 = vmatpush1.msra.mxu0 0.0
        %3684 = vmatprep.subr.mxu0 0.0
        %3685 = vmatpush1.msra.mxu0 0.0
        %3686 = vmatprep.subr.mxu0 0.0
        %3687 = vmatpush1.msra.mxu0 0.0
        %3688 = vmatprep.subr.mxu0 0.0
        %3689 = vmatpush1.msra.mxu0 0.0
        %3690 = vmatprep.subr.mxu0 0.0
        %3691 = vmatpush1.msra.mxu0 0.0
        %3692 = vmatprep.subr.mxu0 0.0
        %3693 = vmatpush1.msra.mxu0 0.0
        %3694 = vmatprep.subr.mxu0 0.0
        %3695 = vmatpush1.msra.mxu0 0.0
        %3696 = vmatprep.subr.mxu0 0.0
        %3697 = vmatpush1.msra.mxu0 0.0
        %3698 = vmatprep.subr.mxu0 0.0
        %3699 = vmatpush1.msra.mxu0 0.0
        %3700 = vmatprep.subr.mxu0 0.0
        %3701 = vmatpush1.msra.mxu0 0.0
        %3702 = vmatprep.subr.mxu0 0.0
        %3703 = vmatpush1.msra.mxu0 0.0
        %3704 = vmatprep.subr.mxu0 0.0
        %3705 = vmatpush1.msra.mxu0 0.0
        %3706 = vmatprep.subr.mxu0 0.0
        %3707 = vmatpush1.msra.mxu0 0.0
        %3708 = vmatprep.subr.mxu0 0.0
        %3709 = vmatpush1.msra.mxu0 0.0
        %3710 = vmatprep.subr.mxu0 0.0
        %3711 = vmatpush1.msra.mxu0 0.0
        %3712 = vmatprep.subr.mxu0 0.0
        %3713 = vmatpush1.msra.mxu0 0.0
        %3714 = vmatprep.subr.mxu0 0.0
        %3715 = vmatpush1.msra.mxu0 0.0
        %3716 = vmatprep.subr.mxu0 0.0
        %3717 = vmatpush1.msra.mxu0 0.0
        %3718 = vmatprep.mubr.f32.mxu0 0.0
        %3719 = vmatmul.mubr.f32.gmra.mrb[0].mxu0 %v3581
        %v3720 = vpop.f32.mrb[0].mxu0
        %v3721 = vadd.f32 0.0, %v3720
        %v3722 = vpop.f32.mrb[0].mxu0
        %v3723 = vadd.f32 0.0, %v3722
        %3724 = vdwg.mxu0
        %3725 = vmatprep.subr.mxu0 %v3568
        %3726 = vmatpush1.msra.mxu0 %v3567
        %3727 = vmatprep.subr.mxu0 0.0
        %3728 = vmatpush1.msra.mxu0 0.0
        %3729 = vmatprep.subr.mxu0 0.0
        %3730 = vmatpush1.msra.mxu0 0.0
        %3731 = vmatprep.subr.mxu0 0.0
        %3732 = vmatpush1.msra.mxu0 0.0
        %3733 = vmatprep.subr.mxu0 0.0
        %3734 = vmatpush1.msra.mxu0 0.0
        %3735 = vmatprep.subr.mxu0 0.0
        %3736 = vmatpush1.msra.mxu0 0.0
        %3737 = vmatprep.subr.mxu0 0.0
        %3738 = vmatpush1.msra.mxu0 0.0
        %3739 = vmatprep.subr.mxu0 0.0
        %3740 = vmatpush1.msra.mxu0 0.0
        %3741 = vmatprep.subr.mxu0 0.0
        %3742 = vmatpush1.msra.mxu0 0.0
        %3743 = vmatprep.subr.mxu0 0.0
        %3744 = vmatpush1.msra.mxu0 0.0
        %3745 = vmatprep.subr.mxu0 0.0
        %3746 = vmatpush1.msra.mxu0 0.0
        %3747 = vmatprep.subr.mxu0 0.0
        %3748 = vmatpush1.msra.mxu0 0.0
        %3749 = vmatprep.subr.mxu0 0.0
        %3750 = vmatpush1.msra.mxu0 0.0
        %3751 = vmatprep.subr.mxu0 0.0
        %3752 = vmatpush1.msra.mxu0 0.0
        %3753 = vmatprep.subr.mxu0 0.0
        %3754 = vmatpush1.msra.mxu0 0.0
        %3755 = vmatprep.subr.mxu0 0.0
        %3756 = vmatpush1.msra.mxu0 0.0
        %3757 = vmatprep.subr.mxu0 0.0
        %3758 = vmatpush1.msra.mxu0 0.0
        %3759 = vmatprep.subr.mxu0 0.0
        %3760 = vmatpush1.msra.mxu0 0.0
        %3761 = vmatprep.subr.mxu0 0.0
        %3762 = vmatpush1.msra.mxu0 0.0
        %3763 = vmatprep.subr.mxu0 0.0
        %3764 = vmatpush1.msra.mxu0 0.0
        %3765 = vmatprep.subr.mxu0 0.0
        %3766 = vmatpush1.msra.mxu0 0.0
        %3767 = vmatprep.subr.mxu0 0.0
        %3768 = vmatpush1.msra.mxu0 0.0
        %3769 = vmatprep.subr.mxu0 0.0
        %3770 = vmatpush1.msra.mxu0 0.0
        %3771 = vmatprep.subr.mxu0 0.0
        %3772 = vmatpush1.msra.mxu0 0.0
        %3773 = vmatprep.subr.mxu0 0.0
        %3774 = vmatpush1.msra.mxu0 0.0
        %3775 = vmatprep.subr.mxu0 0.0
        %3776 = vmatpush1.msra.mxu0 0.0
        %3777 = vmatprep.subr.mxu0 0.0
        %3778 = vmatpush1.msra.mxu0 0.0
        %3779 = vmatprep.subr.mxu0 0.0
        %3780 = vmatpush1.msra.mxu0 0.0
        %3781 = vmatprep.subr.mxu0 0.0
        %3782 = vmatpush1.msra.mxu0 0.0
        %3783 = vmatprep.subr.mxu0 0.0
        %3784 = vmatpush1.msra.mxu0 0.0
        %3785 = vmatprep.subr.mxu0 0.0
        %3786 = vmatpush1.msra.mxu0 0.0
        %3787 = vmatprep.subr.mxu0 0.0
        %3788 = vmatpush1.msra.mxu0 0.0
        %3789 = vmatprep.mubr.f32.mxu0 0.0
        %3790 = vmatmul.mubr.f32.gmra.mrb[0].mxu0 %v3581
        %v3791 = vpop.f32.mrb[0].mxu0
        %v3792 = vadd.f32 0.0, %v3791
        %v3793 = vpop.f32.mrb[0].mxu0
        %v3794 = vadd.f32 0.0, %v3793
        %3795 = vdwg.mxu0
        %3796 = vmatprep.subr.mxu0 %v3570
        %3797 = vmatpush1.msra.mxu0 %v3569
        %3798 = vmatprep.subr.mxu0 0.0
        %3799 = vmatpush1.msra.mxu0 0.0
        %3800 = vmatprep.subr.mxu0 0.0
        %3801 = vmatpush1.msra.mxu0 0.0
        %3802 = vmatprep.subr.mxu0 0.0
        %3803 = vmatpush1.msra.mxu0 0.0
        %3804 = vmatprep.subr.mxu0 0.0
        %3805 = vmatpush1.msra.mxu0 0.0
        %3806 = vmatprep.subr.mxu0 0.0
        %3807 = vmatpush1.msra.mxu0 0.0
        %3808 = vmatprep.subr.mxu0 0.0
        %3809 = vmatpush1.msra.mxu0 0.0
        %3810 = vmatprep.subr.mxu0 0.0
        %3811 = vmatpush1.msra.mxu0 0.0
        %3812 = vmatprep.subr.mxu0 0.0
        %3813 = vmatpush1.msra.mxu0 0.0
        %3814 = vmatprep.subr.mxu0 0.0
        %3815 = vmatpush1.msra.mxu0 0.0
        %3816 = vmatprep.subr.mxu0 0.0
        %3817 = vmatpush1.msra.mxu0 0.0
        %3818 = vmatprep.subr.mxu0 0.0
        %3819 = vmatpush1.msra.mxu0 0.0
        %3820 = vmatprep.subr.mxu0 0.0
        %3821 = vmatpush1.msra.mxu0 0.0
        %3822 = vmatprep.subr.mxu0 0.0
        %3823 = vmatpush1.msra.mxu0 0.0
        %3824 = vmatprep.subr.mxu0 0.0
        %3825 = vmatpush1.msra.mxu0 0.0
        %3826 = vmatprep.subr.mxu0 0.0
        %3827 = vmatpush1.msra.mxu0 0.0
        %3828 = vmatprep.subr.mxu0 0.0
        %3829 = vmatpush1.msra.mxu0 0.0
        %3830 = vmatprep.subr.mxu0 0.0
        %3831 = vmatpush1.msra.mxu0 0.0
        %3832 = vmatprep.subr.mxu0 0.0
        %3833 = vmatpush1.msra.mxu0 0.0
        %3834 = vmatprep.subr.mxu0 0.0
        %3835 = vmatpush1.msra.mxu0 0.0
        %3836 = vmatprep.subr.mxu0 0.0
        %3837 = vmatpush1.msra.mxu0 0.0
        %3838 = vmatprep.subr.mxu0 0.0
        %3839 = vmatpush1.msra.mxu0 0.0
        %3840 = vmatprep.subr.mxu0 0.0
        %3841 = vmatpush1.msra.mxu0 0.0
        %3842 = vmatprep.subr.mxu0 0.0
        %3843 = vmatpush1.msra.mxu0 0.0
        %3844 = vmatprep.subr.mxu0 0.0
        %3845 = vmatpush1.msra.mxu0 0.0
        %3846 = vmatprep.subr.mxu0 0.0
        %3847 = vmatpush1.msra.mxu0 0.0
        %3848 = vmatprep.subr.mxu0 0.0
        %3849 = vmatpush1.msra.mxu0 0.0
        %3850 = vmatprep.subr.mxu0 0.0
        %3851 = vmatpush1.msra.mxu0 0.0
        %3852 = vmatprep.subr.mxu0 0.0
        %3853 = vmatpush1.msra.mxu0 0.0
        %3854 = vmatprep.subr.mxu0 0.0
        %3855 = vmatpush1.msra.mxu0 0.0
        %3856 = vmatprep.subr.mxu0 0.0
        %3857 = vmatpush1.msra.mxu0 0.0
        %3858 = vmatprep.subr.mxu0 0.0
        %3859 = vmatpush1.msra.mxu0 0.0
        %3860 = vmatprep.mubr.f32.mxu0 0.0
        %3861 = vmatmul.mubr.f32.gmra.mrb[0].mxu0 %v3581
        %v3862 = vpop.f32.mrb[0].mxu0
        %v3863 = vadd.f32 0.0, %v3862
        %v3864 = vpop.f32.mrb[0].mxu0
        %v3865 = vadd.f32 0.0, %v3864
        %3866 = vdwg.mxu0
        %3867 = vmatprep.subr.mxu0 0.0
        %3868 = vmatpush1.msra.mxu0 %v3571
        %3869 = vmatprep.subr.mxu0 0.0
        %3870 = vmatpush1.msra.mxu0 0.0
        %3871 = vmatprep.subr.mxu0 0.0
        %3872 = vmatpush1.msra.mxu0 0.0
        %3873 = vmatprep.subr.mxu0 0.0
        %3874 = vmatpush1.msra.mxu0 0.0
        %3875 = vmatprep.subr.mxu0 0.0
        %3876 = vmatpush1.msra.mxu0 0.0
        %3877 = vmatprep.subr.mxu0 0.0
        %3878 = vmatpush1.msra.mxu0 0.0
        %3879 = vmatprep.subr.mxu0 0.0
        %3880 = vmatpush1.msra.mxu0 0.0
        %3881 = vmatprep.subr.mxu0 0.0
        %3882 = vmatpush1.msra.mxu0 0.0
        %3883 = vmatprep.subr.mxu0 0.0
        %3884 = vmatpush1.msra.mxu0 0.0
        %3885 = vmatprep.subr.mxu0 0.0
        %3886 = vmatpush1.msra.mxu0 0.0
        %3887 = vmatprep.subr.mxu0 0.0
        %3888 = vmatpush1.msra.mxu0 0.0
        %3889 = vmatprep.subr.mxu0 0.0
        %3890 = vmatpush1.msra.mxu0 0.0
        %3891 = vmatprep.subr.mxu0 0.0
        %3892 = vmatpush1.msra.mxu0 0.0
        %3893 = vmatprep.subr.mxu0 0.0
        %3894 = vmatpush1.msra.mxu0 0.0
        %3895 = vmatprep.subr.mxu0 0.0
        %3896 = vmatpush1.msra.mxu0 0.0
        %3897 = vmatprep.subr.mxu0 0.0
        %3898 = vmatpush1.msra.mxu0 0.0
        %3899 = vmatprep.subr.mxu0 0.0
        %3900 = vmatpush1.msra.mxu0 0.0
        %3901 = vmatprep.subr.mxu0 0.0
        %3902 = vmatpush1.msra.mxu0 0.0
        %3903 = vmatprep.subr.mxu0 0.0
        %3904 = vmatpush1.msra.mxu0 0.0
        %3905 = vmatprep.subr.mxu0 0.0
        %3906 = vmatpush1.msra.mxu0 0.0
        %3907 = vmatprep.subr.mxu0 0.0
        %3908 = vmatpush1.msra.mxu0 0.0
        %3909 = vmatprep.subr.mxu0 0.0
        %3910 = vmatpush1.msra.mxu0 0.0
        %3911 = vmatprep.subr.mxu0 0.0
        %3912 = vmatpush1.msra.mxu0 0.0
        %3913 = vmatprep.subr.mxu0 0.0
        %3914 = vmatpush1.msra.mxu0 0.0
        %3915 = vmatprep.subr.mxu0 0.0
        %3916 = vmatpush1.msra.mxu0 0.0
        %3917 = vmatprep.subr.mxu0 0.0
        %3918 = vmatpush1.msra.mxu0 0.0
        %3919 = vmatprep.subr.mxu0 0.0
        %3920 = vmatpush1.msra.mxu0 0.0
        %3921 = vmatprep.subr.mxu0 0.0
        %3922 = vmatpush1.msra.mxu0 0.0
        %3923 = vmatprep.subr.mxu0 0.0
        %3924 = vmatpush1.msra.mxu0 0.0
        %3925 = vmatprep.subr.mxu0 0.0
        %3926 = vmatpush1.msra.mxu0 0.0
        %3927 = vmatprep.subr.mxu0 0.0
        %3928 = vmatpush1.msra.mxu0 0.0
        %3929 = vmatprep.subr.mxu0 0.0
        %3930 = vmatpush1.msra.mxu0 0.0
        %3931 = vmatprep.mubr.f32.mxu0 0.0
        %3932 = vmatmul.mubr.f32.gmra.mrb[0].mxu0 %v3581
        %v3933 = vpop.f32.mrb[0].mxu0
        %v3934 = vadd.f32 0.0, %v3933
        %v3935 = vpop.f32.mrb[0].mxu0
        %3936 = vdwg.mxu0
        %v3937 = vadd.f32 %v3532, %v3650
        %v3938 = vadd.f32 %v3533, %v3652
        %v3939 = vadd.f32 %v3534, %v3721
        %v3940 = vadd.f32 %v3535, %v3723
        %v3941 = vadd.f32 %v3536, %v3792
        %v3942 = vadd.f32 %v3537, %v3794
        %v3943 = vadd.f32 %v3538, %v3863
        %v3944 = vadd.f32 %v3539, %v3865
        %v3945 = vadd.f32 %v3540, %v3934
        %3946 = vrot.lane.b32.xlu0 %v338, 56
        %v3947 = vpop.permute.xlu0 %3946
        %3949 = vrot.lane.b32.xlu0 %v327, 88
        %v3950 = vpop.permute.xlu0 %3949
        %3951 = vrot.lane.b32.xlu0 %v328, 88
        %v3952 = vpop.permute.xlu0 %3951
        %3953 = vrot.lane.b32.xlu0 %v329, 88
        %v3954 = vpop.permute.xlu0 %3953
        %3955 = vrot.lane.b32.xlu0 %v330, 88
        %v3956 = vpop.permute.xlu0 %3955
        %3957 = vrot.lane.b32.xlu0 %v331, 88
        %v3958 = vpop.permute.xlu0 %3957
        %3959 = vrot.lane.b32.xlu0 %v332, 88
        %v3960 = vpop.permute.xlu0 %3959
        %3961 = vrot.lane.b32.xlu0 %v333, 88
        %v3962 = vpop.permute.xlu0 %3961
        %3963 = vrot.lane.b32.xlu0 %v334, 88
        %v3964 = vpop.permute.xlu0 %3963
        %3965 = vrot.lane.b32.xlu0 %v335, 88
        %v3966 = vpop.permute.xlu0 %3965
        %3967 = vrot.lane.b32.xlu0 %v336, 88
        %v3968 = vpop.permute.xlu0 %3967
        %vm3969 = vcmask 719872
        %v3970 = vsel %vm3969, %v3950, %v3952
        %v3971 = vsel %vm3969, %v3952, %v3954
        %v3972 = vsel %vm3969, %v3954, %v3956
        %v3973 = vsel %vm3969, %v3956, %v3958
        %v3974 = vsel %vm3969, %v3958, %v3960
        %v3975 = vsel %vm3969, %v3960, %v3962
        %v3976 = vsel %vm3969, %v3962, %v3964
        %v3977 = vsel %vm3969, %v3964, %v3966
        %v3978 = vsel %vm3969, %v3966, %v3968
        %v3988 = vsel %vm392, %v3947, 0
        %3990 = vmatprep.subr.mxu0 %v3971
        %3991 = vmatpush1.msra.mxu0 %v3970
        %3992 = vmatprep.subr.mxu0 0.0
        %3993 = vmatpush1.msra.mxu0 0.0
        %3994 = vmatprep.subr.mxu0 0.0
        %3995 = vmatpush1.msra.mxu0 0.0
        %3996 = vmatprep.subr.mxu0 0.0
        %3997 = vmatpush1.msra.mxu0 0.0
        %3998 = vmatprep.subr.mxu0 0.0
        %3999 = vmatpush1.msra.mxu0 0.0
        %4000 = vmatprep.subr.mxu0 0.0
        %4001 = vmatpush1.msra.mxu0 0.0
        %4002 = vmatprep.subr.mxu0 0.0
        %4003 = vmatpush1.msra.mxu0 0.0
        %4004 = vmatprep.subr.mxu0 0.0
        %4005 = vmatpush1.msra.mxu0 0.0
        %4006 = vmatprep.subr.mxu0 0.0
        %4007 = vmatpush1.msra.mxu0 0.0
        %4008 = vmatprep.subr.mxu0 0.0
        %4009 = vmatpush1.msra.mxu0 0.0
        %4010 = vmatprep.subr.mxu0 0.0
        %4011 = vmatpush1.msra.mxu0 0.0
        %4012 = vmatprep.subr.mxu0 0.0
        %4013 = vmatpush1.msra.mxu0 0.0
        %4014 = vmatprep.subr.mxu0 0.0
        %4015 = vmatpush1.msra.mxu0 0.0
        %4016 = vmatprep.subr.mxu0 0.0
        %4017 = vmatpush1.msra.mxu0 0.0
        %4018 = vmatprep.subr.mxu0 0.0
        %4019 = vmatpush1.msra.mxu0 0.0
        %4020 = vmatprep.subr.mxu0 0.0
        %4021 = vmatpush1.msra.mxu0 0.0
        %4022 = vmatprep.subr.mxu0 0.0
        %4023 = vmatpush1.msra.mxu0 0.0
        %4024 = vmatprep.subr.mxu0 0.0
        %4025 = vmatpush1.msra.mxu0 0.0
        %4026 = vmatprep.subr.mxu0 0.0
        %4027 = vmatpush1.msra.mxu0 0.0
        %4028 = vmatprep.subr.mxu0 0.0
        %4029 = vmatpush1.msra.mxu0 0.0
        %4030 = vmatprep.subr.mxu0 0.0
        %4031 = vmatpush1.msra.mxu0 0.0
        %4032 = vmatprep.subr.mxu0 0.0
        %4033 = vmatpush1.msra.mxu0 0.0
        %4034 = vmatprep.subr.mxu0 0.0
        %4035 = vmatpush1.msra.mxu0 0.0
        %4036 = vmatprep.subr.mxu0 0.0
        %4037 = vmatpush1.msra.mxu0 0.0
        %4038 = vmatprep.subr.mxu0 0.0
        %4039 = vmatpush1.msra.mxu0 0.0
        %4040 = vmatprep.subr.mxu0 0.0
        %4041 = vmatpush1.msra.mxu0 0.0
        %4042 = vmatprep.subr.mxu0 0.0
        %4043 = vmatpush1.msra.mxu0 0.0
        %4044 = vmatprep.subr.mxu0 0.0
        %4045 = vmatpush1.msra.mxu0 0.0
        %4046 = vmatprep.subr.mxu0 0.0
        %4047 = vmatpush1.msra.mxu0 0.0
        %4048 = vmatprep.subr.mxu0 0.0
        %4049 = vmatpush1.msra.mxu0 0.0
        %4050 = vmatprep.subr.mxu0 0.0
        %4051 = vmatpush1.msra.mxu0 0.0
        %4052 = vmatprep.subr.mxu0 0.0
        %4053 = vmatpush1.msra.mxu0 0.0
        %4054 = vmatprep.mubr.f32.mxu0 0.0
        %4055 = vmatmul.mubr.f32.gmra.mrb[0].mxu0 %v3988
        %v4056 = vpop.f32.mrb[0].mxu0
        %v4057 = vadd.f32 0.0, %v4056
        %v4058 = vpop.f32.mrb[0].mxu0
        %v4059 = vadd.f32 0.0, %v4058
        %4060 = vdwg.mxu0
        %4061 = vmatprep.subr.mxu0 %v3973
        %4062 = vmatpush1.msra.mxu0 %v3972
        %4063 = vmatprep.subr.mxu0 0.0
        %4064 = vmatpush1.msra.mxu0 0.0
        %4065 = vmatprep.subr.mxu0 0.0
        %4066 = vmatpush1.msra.mxu0 0.0
        %4067 = vmatprep.subr.mxu0 0.0
        %4068 = vmatpush1.msra.mxu0 0.0
        %4069 = vmatprep.subr.mxu0 0.0
        %4070 = vmatpush1.msra.mxu0 0.0
        %4071 = vmatprep.subr.mxu0 0.0
        %4072 = vmatpush1.msra.mxu0 0.0
        %4073 = vmatprep.subr.mxu0 0.0
        %4074 = vmatpush1.msra.mxu0 0.0
        %4075 = vmatprep.subr.mxu0 0.0
        %4076 = vmatpush1.msra.mxu0 0.0
        %4077 = vmatprep.subr.mxu0 0.0
        %4078 = vmatpush1.msra.mxu0 0.0
        %4079 = vmatprep.subr.mxu0 0.0
        %4080 = vmatpush1.msra.mxu0 0.0
        %4081 = vmatprep.subr.mxu0 0.0
        %4082 = vmatpush1.msra.mxu0 0.0
        %4083 = vmatprep.subr.mxu0 0.0
        %4084 = vmatpush1.msra.mxu0 0.0
        %4085 = vmatprep.subr.mxu0 0.0
        %4086 = vmatpush1.msra.mxu0 0.0
        %4087 = vmatprep.subr.mxu0 0.0
        %4088 = vmatpush1.msra.mxu0 0.0
        %4089 = vmatprep.subr.mxu0 0.0
        %4090 = vmatpush1.msra.mxu0 0.0
        %4091 = vmatprep.subr.mxu0 0.0
        %4092 = vmatpush1.msra.mxu0 0.0
        %4093 = vmatprep.subr.mxu0 0.0
        %4094 = vmatpush1.msra.mxu0 0.0
        %4095 = vmatprep.subr.mxu0 0.0
        %4096 = vmatpush1.msra.mxu0 0.0
        %4097 = vmatprep.subr.mxu0 0.0
        %4098 = vmatpush1.msra.mxu0 0.0
        %4099 = vmatprep.subr.mxu0 0.0
        %4100 = vmatpush1.msra.mxu0 0.0
        %4101 = vmatprep.subr.mxu0 0.0
        %4102 = vmatpush1.msra.mxu0 0.0
        %4103 = vmatprep.subr.mxu0 0.0
        %4104 = vmatpush1.msra.mxu0 0.0
        %4105 = vmatprep.subr.mxu0 0.0
        %4106 = vmatpush1.msra.mxu0 0.0
        %4107 = vmatprep.subr.mxu0 0.0
        %4108 = vmatpush1.msra.mxu0 0.0
        %4109 = vmatprep.subr.mxu0 0.0
        %4110 = vmatpush1.msra.mxu0 0.0
        %4111 = vmatprep.subr.mxu0 0.0
        %4112 = vmatpush1.msra.mxu0 0.0
        %4113 = vmatprep.subr.mxu0 0.0
        %4114 = vmatpush1.msra.mxu0 0.0
        %4115 = vmatprep.subr.mxu0 0.0
        %4116 = vmatpush1.msra.mxu0 0.0
        %4117 = vmatprep.subr.mxu0 0.0
        %4118 = vmatpush1.msra.mxu0 0.0
        %4119 = vmatprep.subr.mxu0 0.0
        %4120 = vmatpush1.msra.mxu0 0.0
        %4121 = vmatprep.subr.mxu0 0.0
        %4122 = vmatpush1.msra.mxu0 0.0
        %4123 = vmatprep.subr.mxu0 0.0
        %4124 = vmatpush1.msra.mxu0 0.0
        %4125 = vmatprep.mubr.f32.mxu0 0.0
        %4126 = vmatmul.mubr.f32.gmra.mrb[0].mxu0 %v3988
        %v4127 = vpop.f32.mrb[0].mxu0
        %v4128 = vadd.f32 0.0, %v4127
        %v4129 = vpop.f32.mrb[0].mxu0
        %v4130 = vadd.f32 0.0, %v4129
        %4131 = vdwg.mxu0
        %4132 = vmatprep.subr.mxu0 %v3975
        %4133 = vmatpush1.msra.mxu0 %v3974
        %4134 = vmatprep.subr.mxu0 0.0
        %4135 = vmatpush1.msra.mxu0 0.0
        %4136 = vmatprep.subr.mxu0 0.0
        %4137 = vmatpush1.msra.mxu0 0.0
        %4138 = vmatprep.subr.mxu0 0.0
        %4139 = vmatpush1.msra.mxu0 0.0
        %4140 = vmatprep.subr.mxu0 0.0
        %4141 = vmatpush1.msra.mxu0 0.0
        %4142 = vmatprep.subr.mxu0 0.0
        %4143 = vmatpush1.msra.mxu0 0.0
        %4144 = vmatprep.subr.mxu0 0.0
        %4145 = vmatpush1.msra.mxu0 0.0
        %4146 = vmatprep.subr.mxu0 0.0
        %4147 = vmatpush1.msra.mxu0 0.0
        %4148 = vmatprep.subr.mxu0 0.0
        %4149 = vmatpush1.msra.mxu0 0.0
        %4150 = vmatprep.subr.mxu0 0.0
        %4151 = vmatpush1.msra.mxu0 0.0
        %4152 = vmatprep.subr.mxu0 0.0
        %4153 = vmatpush1.msra.mxu0 0.0
        %4154 = vmatprep.subr.mxu0 0.0
        %4155 = vmatpush1.msra.mxu0 0.0
        %4156 = vmatprep.subr.mxu0 0.0
        %4157 = vmatpush1.msra.mxu0 0.0
        %4158 = vmatprep.subr.mxu0 0.0
        %4159 = vmatpush1.msra.mxu0 0.0
        %4160 = vmatprep.subr.mxu0 0.0
        %4161 = vmatpush1.msra.mxu0 0.0
        %4162 = vmatprep.subr.mxu0 0.0
        %4163 = vmatpush1.msra.mxu0 0.0
        %4164 = vmatprep.subr.mxu0 0.0
        %4165 = vmatpush1.msra.mxu0 0.0
        %4166 = vmatprep.subr.mxu0 0.0
        %4167 = vmatpush1.msra.mxu0 0.0
        %4168 = vmatprep.subr.mxu0 0.0
        %4169 = vmatpush1.msra.mxu0 0.0
        %4170 = vmatprep.subr.mxu0 0.0
        %4171 = vmatpush1.msra.mxu0 0.0
        %4172 = vmatprep.subr.mxu0 0.0
        %4173 = vmatpush1.msra.mxu0 0.0
        %4174 = vmatprep.subr.mxu0 0.0
        %4175 = vmatpush1.msra.mxu0 0.0
        %4176 = vmatprep.subr.mxu0 0.0
        %4177 = vmatpush1.msra.mxu0 0.0
        %4178 = vmatprep.subr.mxu0 0.0
        %4179 = vmatpush1.msra.mxu0 0.0
        %4180 = vmatprep.subr.mxu0 0.0
        %4181 = vmatpush1.msra.mxu0 0.0
        %4182 = vmatprep.subr.mxu0 0.0
        %4183 = vmatpush1.msra.mxu0 0.0
        %4184 = vmatprep.subr.mxu0 0.0
        %4185 = vmatpush1.msra.mxu0 0.0
        %4186 = vmatprep.subr.mxu0 0.0
        %4187 = vmatpush1.msra.mxu0 0.0
        %4188 = vmatprep.subr.mxu0 0.0
        %4189 = vmatpush1.msra.mxu0 0.0
        %4190 = vmatprep.subr.mxu0 0.0
        %4191 = vmatpush1.msra.mxu0 0.0
        %4192 = vmatprep.subr.mxu0 0.0
        %4193 = vmatpush1.msra.mxu0 0.0
        %4194 = vmatprep.subr.mxu0 0.0
        %4195 = vmatpush1.msra.mxu0 0.0
        %4196 = vmatprep.mubr.f32.mxu0 0.0
        %4197 = vmatmul.mubr.f32.gmra.mrb[0].mxu0 %v3988
        %v4198 = vpop.f32.mrb[0].mxu0
        %v4199 = vadd.f32 0.0, %v4198
        %v4200 = vpop.f32.mrb[0].mxu0
        %v4201 = vadd.f32 0.0, %v4200
        %4202 = vdwg.mxu0
        %4203 = vmatprep.subr.mxu0 %v3977
        %4204 = vmatpush1.msra.mxu0 %v3976
        %4205 = vmatprep.subr.mxu0 0.0
        %4206 = vmatpush1.msra.mxu0 0.0
        %4207 = vmatprep.subr.mxu0 0.0
        %4208 = vmatpush1.msra.mxu0 0.0
        %4209 = vmatprep.subr.mxu0 0.0
        %4210 = vmatpush1.msra.mxu0 0.0
        %4211 = vmatprep.subr.mxu0 0.0
        %4212 = vmatpush1.msra.mxu0 0.0
        %4213 = vmatprep.subr.mxu0 0.0
        %4214 = vmatpush1.msra.mxu0 0.0
        %4215 = vmatprep.subr.mxu0 0.0
        %4216 = vmatpush1.msra.mxu0 0.0
        %4217 = vmatprep.subr.mxu0 0.0
        %4218 = vmatpush1.msra.mxu0 0.0
        %4219 = vmatprep.subr.mxu0 0.0
        %4220 = vmatpush1.msra.mxu0 0.0
        %4221 = vmatprep.subr.mxu0 0.0
        %4222 = vmatpush1.msra.mxu0 0.0
        %4223 = vmatprep.subr.mxu0 0.0
        %4224 = vmatpush1.msra.mxu0 0.0
        %4225 = vmatprep.subr.mxu0 0.0
        %4226 = vmatpush1.msra.mxu0 0.0
        %4227 = vmatprep.subr.mxu0 0.0
        %4228 = vmatpush1.msra.mxu0 0.0
        %4229 = vmatprep.subr.mxu0 0.0
        %4230 = vmatpush1.msra.mxu0 0.0
        %4231 = vmatprep.subr.mxu0 0.0
        %4232 = vmatpush1.msra.mxu0 0.0
        %4233 = vmatprep.subr.mxu0 0.0
        %4234 = vmatpush1.msra.mxu0 0.0
        %4235 = vmatprep.subr.mxu0 0.0
        %4236 = vmatpush1.msra.mxu0 0.0
        %4237 = vmatprep.subr.mxu0 0.0
        %4238 = vmatpush1.msra.mxu0 0.0
        %4239 = vmatprep.subr.mxu0 0.0
        %4240 = vmatpush1.msra.mxu0 0.0
        %4241 = vmatprep.subr.mxu0 0.0
        %4242 = vmatpush1.msra.mxu0 0.0
        %4243 = vmatprep.subr.mxu0 0.0
        %4244 = vmatpush1.msra.mxu0 0.0
        %4245 = vmatprep.subr.mxu0 0.0
        %4246 = vmatpush1.msra.mxu0 0.0
        %4247 = vmatprep.subr.mxu0 0.0
        %4248 = vmatpush1.msra.mxu0 0.0
        %4249 = vmatprep.subr.mxu0 0.0
        %4250 = vmatpush1.msra.mxu0 0.0
        %4251 = vmatprep.subr.mxu0 0.0
        %4252 = vmatpush1.msra.mxu0 0.0
        %4253 = vmatprep.subr.mxu0 0.0
        %4254 = vmatpush1.msra.mxu0 0.0
        %4255 = vmatprep.subr.mxu0 0.0
        %4256 = vmatpush1.msra.mxu0 0.0
        %4257 = vmatprep.subr.mxu0 0.0
        %4258 = vmatpush1.msra.mxu0 0.0
        %4259 = vmatprep.subr.mxu0 0.0
        %4260 = vmatpush1.msra.mxu0 0.0
        %4261 = vmatprep.subr.mxu0 0.0
        %4262 = vmatpush1.msra.mxu0 0.0
        %4263 = vmatprep.subr.mxu0 0.0
        %4264 = vmatpush1.msra.mxu0 0.0
        %4265 = vmatprep.subr.mxu0 0.0
        %4266 = vmatpush1.msra.mxu0 0.0
        %4267 = vmatprep.mubr.f32.mxu0 0.0
        %4268 = vmatmul.mubr.f32.gmra.mrb[0].mxu0 %v3988
        %v4269 = vpop.f32.mrb[0].mxu0
        %v4270 = vadd.f32 0.0, %v4269
        %v4271 = vpop.f32.mrb[0].mxu0
        %v4272 = vadd.f32 0.0, %v4271
        %4273 = vdwg.mxu0
        %4274 = vmatprep.subr.mxu0 0.0
        %4275 = vmatpush1.msra.mxu0 %v3978
        %4276 = vmatprep.subr.mxu0 0.0
        %4277 = vmatpush1.msra.mxu0 0.0
        %4278 = vmatprep.subr.mxu0 0.0
        %4279 = vmatpush1.msra.mxu0 0.0
        %4280 = vmatprep.subr.mxu0 0.0
        %4281 = vmatpush1.msra.mxu0 0.0
        %4282 = vmatprep.subr.mxu0 0.0
        %4283 = vmatpush1.msra.mxu0 0.0
        %4284 = vmatprep.subr.mxu0 0.0
        %4285 = vmatpush1.msra.mxu0 0.0
        %4286 = vmatprep.subr.mxu0 0.0
        %4287 = vmatpush1.msra.mxu0 0.0
        %4288 = vmatprep.subr.mxu0 0.0
        %4289 = vmatpush1.msra.mxu0 0.0
        %4290 = vmatprep.subr.mxu0 0.0
        %4291 = vmatpush1.msra.mxu0 0.0
        %4292 = vmatprep.subr.mxu0 0.0
        %4293 = vmatpush1.msra.mxu0 0.0
        %4294 = vmatprep.subr.mxu0 0.0
        %4295 = vmatpush1.msra.mxu0 0.0
        %4296 = vmatprep.subr.mxu0 0.0
        %4297 = vmatpush1.msra.mxu0 0.0
        %4298 = vmatprep.subr.mxu0 0.0
        %4299 = vmatpush1.msra.mxu0 0.0
        %4300 = vmatprep.subr.mxu0 0.0
        %4301 = vmatpush1.msra.mxu0 0.0
        %4302 = vmatprep.subr.mxu0 0.0
        %4303 = vmatpush1.msra.mxu0 0.0
        %4304 = vmatprep.subr.mxu0 0.0
        %4305 = vmatpush1.msra.mxu0 0.0
        %4306 = vmatprep.subr.mxu0 0.0
        %4307 = vmatpush1.msra.mxu0 0.0
        %4308 = vmatprep.subr.mxu0 0.0
        %4309 = vmatpush1.msra.mxu0 0.0
        %4310 = vmatprep.subr.mxu0 0.0
        %4311 = vmatpush1.msra.mxu0 0.0
        %4312 = vmatprep.subr.mxu0 0.0
        %4313 = vmatpush1.msra.mxu0 0.0
        %4314 = vmatprep.subr.mxu0 0.0
        %4315 = vmatpush1.msra.mxu0 0.0
        %4316 = vmatprep.subr.mxu0 0.0
        %4317 = vmatpush1.msra.mxu0 0.0
        %4318 = vmatprep.subr.mxu0 0.0
        %4319 = vmatpush1.msra.mxu0 0.0
        %4320 = vmatprep.subr.mxu0 0.0
        %4321 = vmatpush1.msra.mxu0 0.0
        %4322 = vmatprep.subr.mxu0 0.0
        %4323 = vmatpush1.msra.mxu0 0.0
        %4324 = vmatprep.subr.mxu0 0.0
        %4325 = vmatpush1.msra.mxu0 0.0
        %4326 = vmatprep.subr.mxu0 0.0
        %4327 = vmatpush1.msra.mxu0 0.0
        %4328 = vmatprep.subr.mxu0 0.0
        %4329 = vmatpush1.msra.mxu0 0.0
        %4330 = vmatprep.subr.mxu0 0.0
        %4331 = vmatpush1.msra.mxu0 0.0
        %4332 = vmatprep.subr.mxu0 0.0
        %4333 = vmatpush1.msra.mxu0 0.0
        %4334 = vmatprep.subr.mxu0 0.0
        %4335 = vmatpush1.msra.mxu0 0.0
        %4336 = vmatprep.subr.mxu0 0.0
        %4337 = vmatpush1.msra.mxu0 0.0
        %4338 = vmatprep.mubr.f32.mxu0 0.0
        %4339 = vmatmul.mubr.f32.gmra.mrb[0].mxu0 %v3988
        %v4340 = vpop.f32.mrb[0].mxu0
        %v4341 = vadd.f32 0.0, %v4340
        %v4342 = vpop.f32.mrb[0].mxu0
        %4343 = vdwg.mxu0
        %v4344 = vadd.f32 %v3937, %v4057
        %v4345 = vadd.f32 %v3938, %v4059
        %v4346 = vadd.f32 %v3939, %v4128
        %v4347 = vadd.f32 %v3940, %v4130
        %v4348 = vadd.f32 %v3941, %v4199
        %v4349 = vadd.f32 %v3942, %v4201
        %v4350 = vadd.f32 %v3943, %v4270
        %v4351 = vadd.f32 %v3944, %v4272
        %v4352 = vadd.f32 %v3945, %v4341
        %4353 = vrot.lane.b32.xlu0 %v338, 48
        %v4354 = vpop.permute.xlu0 %4353
        %4355 = vrot.lane.b32.xlu0 %v327, 86
        %v4356 = vpop.permute.xlu0 %4355
        %4357 = vrot.lane.b32.xlu0 %v328, 86
        %v4358 = vpop.permute.xlu0 %4357
        %4359 = vrot.lane.b32.xlu0 %v329, 86
        %v4360 = vpop.permute.xlu0 %4359
        %4361 = vrot.lane.b32.xlu0 %v330, 86
        %v4362 = vpop.permute.xlu0 %4361
        %4363 = vrot.lane.b32.xlu0 %v331, 86
        %v4364 = vpop.permute.xlu0 %4363
        %4365 = vrot.lane.b32.xlu0 %v332, 86
        %v4366 = vpop.permute.xlu0 %4365
        %4367 = vrot.lane.b32.xlu0 %v333, 86
        %v4368 = vpop.permute.xlu0 %4367
        %4369 = vrot.lane.b32.xlu0 %v334, 86
        %v4370 = vpop.permute.xlu0 %4369
        %4371 = vrot.lane.b32.xlu0 %v335, 86
        %v4372 = vpop.permute.xlu0 %4371
        %4373 = vrot.lane.b32.xlu0 %v336, 86
        %v4374 = vpop.permute.xlu0 %4373
        %vm4375 = vcmask 703488
        %v4376 = vsel %vm4375, %v4356, %v4358
        %v4377 = vsel %vm4375, %v4358, %v4360
        %v4378 = vsel %vm4375, %v4360, %v4362
        %v4379 = vsel %vm4375, %v4362, %v4364
        %v4380 = vsel %vm4375, %v4364, %v4366
        %v4381 = vsel %vm4375, %v4366, %v4368
        %v4382 = vsel %vm4375, %v4368, %v4370
        %v4383 = vsel %vm4375, %v4370, %v4372
        %v4384 = vsel %vm4375, %v4372, %v4374
        %v4394 = vsel %vm392, %v4354, 0
        %4396 = vmatprep.subr.mxu0 %v4377
        %4397 = vmatpush1.msra.mxu0 %v4376
        %4398 = vmatprep.subr.mxu0 0.0
        %4399 = vmatpush1.msra.mxu0 0.0
        %4400 = vmatprep.subr.mxu0 0.0
        %4401 = vmatpush1.msra.mxu0 0.0
        %4402 = vmatprep.subr.mxu0 0.0
        %4403 = vmatpush1.msra.mxu0 0.0
        %4404 = vmatprep.subr.mxu0 0.0
        %4405 = vmatpush1.msra.mxu0 0.0
        %4406 = vmatprep.subr.mxu0 0.0
        %4407 = vmatpush1.msra.mxu0 0.0
        %4408 = vmatprep.subr.mxu0 0.0
        %4409 = vmatpush1.msra.mxu0 0.0
        %4410 = vmatprep.subr.mxu0 0.0
        %4411 = vmatpush1.msra.mxu0 0.0
        %4412 = vmatprep.subr.mxu0 0.0
        %4413 = vmatpush1.msra.mxu0 0.0
        %4414 = vmatprep.subr.mxu0 0.0
        %4415 = vmatpush1.msra.mxu0 0.0
        %4416 = vmatprep.subr.mxu0 0.0
        %4417 = vmatpush1.msra.mxu0 0.0
        %4418 = vmatprep.subr.mxu0 0.0
        %4419 = vmatpush1.msra.mxu0 0.0
        %4420 = vmatprep.subr.mxu0 0.0
        %4421 = vmatpush1.msra.mxu0 0.0
        %4422 = vmatprep.subr.mxu0 0.0
        %4423 = vmatpush1.msra.mxu0 0.0
        %4424 = vmatprep.subr.mxu0 0.0
        %4425 = vmatpush1.msra.mxu0 0.0
        %4426 = vmatprep.subr.mxu0 0.0
        %4427 = vmatpush1.msra.mxu0 0.0
        %4428 = vmatprep.subr.mxu0 0.0
        %4429 = vmatpush1.msra.mxu0 0.0
        %4430 = vmatprep.subr.mxu0 0.0
        %4431 = vmatpush1.msra.mxu0 0.0
        %4432 = vmatprep.subr.mxu0 0.0
        %4433 = vmatpush1.msra.mxu0 0.0
        %4434 = vmatprep.subr.mxu0 0.0
        %4435 = vmatpush1.msra.mxu0 0.0
        %4436 = vmatprep.subr.mxu0 0.0
        %4437 = vmatpush1.msra.mxu0 0.0
        %4438 = vmatprep.subr.mxu0 0.0
        %4439 = vmatpush1.msra.mxu0 0.0
        %4440 = vmatprep.subr.mxu0 0.0
        %4441 = vmatpush1.msra.mxu0 0.0
        %4442 = vmatprep.subr.mxu0 0.0
        %4443 = vmatpush1.msra.mxu0 0.0
        %4444 = vmatprep.subr.mxu0 0.0
        %4445 = vmatpush1.msra.mxu0 0.0
        %4446 = vmatprep.subr.mxu0 0.0
        %4447 = vmatpush1.msra.mxu0 0.0
        %4448 = vmatprep.subr.mxu0 0.0
        %4449 = vmatpush1.msra.mxu0 0.0
        %4450 = vmatprep.subr.mxu0 0.0
        %4451 = vmatpush1.msra.mxu0 0.0
        %4452 = vmatprep.subr.mxu0 0.0
        %4453 = vmatpush1.msra.mxu0 0.0
        %4454 = vmatprep.subr.mxu0 0.0
        %4455 = vmatpush1.msra.mxu0 0.0
        %4456 = vmatprep.subr.mxu0 0.0
        %4457 = vmatpush1.msra.mxu0 0.0
        %4458 = vmatprep.subr.mxu0 0.0
        %4459 = vmatpush1.msra.mxu0 0.0
        %4460 = vmatprep.mubr.f32.mxu0 0.0
        %4461 = vmatmul.mubr.f32.gmra.mrb[0].mxu0 %v4394
        %v4462 = vpop.f32.mrb[0].mxu0
        %v4463 = vadd.f32 0.0, %v4462
        %v4464 = vpop.f32.mrb[0].mxu0
        %v4465 = vadd.f32 0.0, %v4464
        %4466 = vdwg.mxu0
        %4467 = vmatprep.subr.mxu0 %v4379
        %4468 = vmatpush1.msra.mxu0 %v4378
        %4469 = vmatprep.subr.mxu0 0.0
        %4470 = vmatpush1.msra.mxu0 0.0
        %4471 = vmatprep.subr.mxu0 0.0
        %4472 = vmatpush1.msra.mxu0 0.0
        %4473 = vmatprep.subr.mxu0 0.0
        %4474 = vmatpush1.msra.mxu0 0.0
        %4475 = vmatprep.subr.mxu0 0.0
        %4476 = vmatpush1.msra.mxu0 0.0
        %4477 = vmatprep.subr.mxu0 0.0
        %4478 = vmatpush1.msra.mxu0 0.0
        %4479 = vmatprep.subr.mxu0 0.0
        %4480 = vmatpush1.msra.mxu0 0.0
        %4481 = vmatprep.subr.mxu0 0.0
        %4482 = vmatpush1.msra.mxu0 0.0
        %4483 = vmatprep.subr.mxu0 0.0
        %4484 = vmatpush1.msra.mxu0 0.0
        %4485 = vmatprep.subr.mxu0 0.0
        %4486 = vmatpush1.msra.mxu0 0.0
        %4487 = vmatprep.subr.mxu0 0.0
        %4488 = vmatpush1.msra.mxu0 0.0
        %4489 = vmatprep.subr.mxu0 0.0
        %4490 = vmatpush1.msra.mxu0 0.0
        %4491 = vmatprep.subr.mxu0 0.0
        %4492 = vmatpush1.msra.mxu0 0.0
        %4493 = vmatprep.subr.mxu0 0.0
        %4494 = vmatpush1.msra.mxu0 0.0
        %4495 = vmatprep.subr.mxu0 0.0
        %4496 = vmatpush1.msra.mxu0 0.0
        %4497 = vmatprep.subr.mxu0 0.0
        %4498 = vmatpush1.msra.mxu0 0.0
        %4499 = vmatprep.subr.mxu0 0.0
        %4500 = vmatpush1.msra.mxu0 0.0
        %4501 = vmatprep.subr.mxu0 0.0
        %4502 = vmatpush1.msra.mxu0 0.0
        %4503 = vmatprep.subr.mxu0 0.0
        %4504 = vmatpush1.msra.mxu0 0.0
        %4505 = vmatprep.subr.mxu0 0.0
        %4506 = vmatpush1.msra.mxu0 0.0
        %4507 = vmatprep.subr.mxu0 0.0
        %4508 = vmatpush1.msra.mxu0 0.0
        %4509 = vmatprep.subr.mxu0 0.0
        %4510 = vmatpush1.msra.mxu0 0.0
        %4511 = vmatprep.subr.mxu0 0.0
        %4512 = vmatpush1.msra.mxu0 0.0
        %4513 = vmatprep.subr.mxu0 0.0
        %4514 = vmatpush1.msra.mxu0 0.0
        %4515 = vmatprep.subr.mxu0 0.0
        %4516 = vmatpush1.msra.mxu0 0.0
        %4517 = vmatprep.subr.mxu0 0.0
        %4518 = vmatpush1.msra.mxu0 0.0
        %4519 = vmatprep.subr.mxu0 0.0
        %4520 = vmatpush1.msra.mxu0 0.0
        %4521 = vmatprep.subr.mxu0 0.0
        %4522 = vmatpush1.msra.mxu0 0.0
        %4523 = vmatprep.subr.mxu0 0.0
        %4524 = vmatpush1.msra.mxu0 0.0
        %4525 = vmatprep.subr.mxu0 0.0
        %4526 = vmatpush1.msra.mxu0 0.0
        %4527 = vmatprep.subr.mxu0 0.0
        %4528 = vmatpush1.msra.mxu0 0.0
        %4529 = vmatprep.subr.mxu0 0.0
        %4530 = vmatpush1.msra.mxu0 0.0
        %4531 = vmatprep.mubr.f32.mxu0 0.0
        %4532 = vmatmul.mubr.f32.gmra.mrb[0].mxu0 %v4394
        %v4533 = vpop.f32.mrb[0].mxu0
        %v4534 = vadd.f32 0.0, %v4533
        %v4535 = vpop.f32.mrb[0].mxu0
        %v4536 = vadd.f32 0.0, %v4535
        %4537 = vdwg.mxu0
        %4538 = vmatprep.subr.mxu0 %v4381
        %4539 = vmatpush1.msra.mxu0 %v4380
        %4540 = vmatprep.subr.mxu0 0.0
        %4541 = vmatpush1.msra.mxu0 0.0
        %4542 = vmatprep.subr.mxu0 0.0
        %4543 = vmatpush1.msra.mxu0 0.0
        %4544 = vmatprep.subr.mxu0 0.0
        %4545 = vmatpush1.msra.mxu0 0.0
        %4546 = vmatprep.subr.mxu0 0.0
        %4547 = vmatpush1.msra.mxu0 0.0
        %4548 = vmatprep.subr.mxu0 0.0
        %4549 = vmatpush1.msra.mxu0 0.0
        %4550 = vmatprep.subr.mxu0 0.0
        %4551 = vmatpush1.msra.mxu0 0.0
        %4552 = vmatprep.subr.mxu0 0.0
        %4553 = vmatpush1.msra.mxu0 0.0
        %4554 = vmatprep.subr.mxu0 0.0
        %4555 = vmatpush1.msra.mxu0 0.0
        %4556 = vmatprep.subr.mxu0 0.0
        %4557 = vmatpush1.msra.mxu0 0.0
        %4558 = vmatprep.subr.mxu0 0.0
        %4559 = vmatpush1.msra.mxu0 0.0
        %4560 = vmatprep.subr.mxu0 0.0
        %4561 = vmatpush1.msra.mxu0 0.0
        %4562 = vmatprep.subr.mxu0 0.0
        %4563 = vmatpush1.msra.mxu0 0.0
        %4564 = vmatprep.subr.mxu0 0.0
        %4565 = vmatpush1.msra.mxu0 0.0
        %4566 = vmatprep.subr.mxu0 0.0
        %4567 = vmatpush1.msra.mxu0 0.0
        %4568 = vmatprep.subr.mxu0 0.0
        %4569 = vmatpush1.msra.mxu0 0.0
        %4570 = vmatprep.subr.mxu0 0.0
        %4571 = vmatpush1.msra.mxu0 0.0
        %4572 = vmatprep.subr.mxu0 0.0
        %4573 = vmatpush1.msra.mxu0 0.0
        %4574 = vmatprep.subr.mxu0 0.0
        %4575 = vmatpush1.msra.mxu0 0.0
        %4576 = vmatprep.subr.mxu0 0.0
        %4577 = vmatpush1.msra.mxu0 0.0
        %4578 = vmatprep.subr.mxu0 0.0
        %4579 = vmatpush1.msra.mxu0 0.0
        %4580 = vmatprep.subr.mxu0 0.0
        %4581 = vmatpush1.msra.mxu0 0.0
        %4582 = vmatprep.subr.mxu0 0.0
        %4583 = vmatpush1.msra.mxu0 0.0
        %4584 = vmatprep.subr.mxu0 0.0
        %4585 = vmatpush1.msra.mxu0 0.0
        %4586 = vmatprep.subr.mxu0 0.0
        %4587 = vmatpush1.msra.mxu0 0.0
        %4588 = vmatprep.subr.mxu0 0.0
        %4589 = vmatpush1.msra.mxu0 0.0
        %4590 = vmatprep.subr.mxu0 0.0
        %4591 = vmatpush1.msra.mxu0 0.0
        %4592 = vmatprep.subr.mxu0 0.0
        %4593 = vmatpush1.msra.mxu0 0.0
        %4594 = vmatprep.subr.mxu0 0.0
        %4595 = vmatpush1.msra.mxu0 0.0
        %4596 = vmatprep.subr.mxu0 0.0
        %4597 = vmatpush1.msra.mxu0 0.0
        %4598 = vmatprep.subr.mxu0 0.0
        %4599 = vmatpush1.msra.mxu0 0.0
        %4600 = vmatprep.subr.mxu0 0.0
        %4601 = vmatpush1.msra.mxu0 0.0
        %4602 = vmatprep.mubr.f32.mxu0 0.0
        %4603 = vmatmul.mubr.f32.gmra.mrb[0].mxu0 %v4394
        %v4604 = vpop.f32.mrb[0].mxu0
        %v4605 = vadd.f32 0.0, %v4604
        %v4606 = vpop.f32.mrb[0].mxu0
        %v4607 = vadd.f32 0.0, %v4606
        %4608 = vdwg.mxu0
        %4609 = vmatprep.subr.mxu0 %v4383
        %4610 = vmatpush1.msra.mxu0 %v4382
        %4611 = vmatprep.subr.mxu0 0.0
        %4612 = vmatpush1.msra.mxu0 0.0
        %4613 = vmatprep.subr.mxu0 0.0
        %4614 = vmatpush1.msra.mxu0 0.0
        %4615 = vmatprep.subr.mxu0 0.0
        %4616 = vmatpush1.msra.mxu0 0.0
        %4617 = vmatprep.subr.mxu0 0.0
        %4618 = vmatpush1.msra.mxu0 0.0
        %4619 = vmatprep.subr.mxu0 0.0
        %4620 = vmatpush1.msra.mxu0 0.0
        %4621 = vmatprep.subr.mxu0 0.0
        %4622 = vmatpush1.msra.mxu0 0.0
        %4623 = vmatprep.subr.mxu0 0.0
        %4624 = vmatpush1.msra.mxu0 0.0
        %4625 = vmatprep.subr.mxu0 0.0
        %4626 = vmatpush1.msra.mxu0 0.0
        %4627 = vmatprep.subr.mxu0 0.0
        %4628 = vmatpush1.msra.mxu0 0.0
        %4629 = vmatprep.subr.mxu0 0.0
        %4630 = vmatpush1.msra.mxu0 0.0
        %4631 = vmatprep.subr.mxu0 0.0
        %4632 = vmatpush1.msra.mxu0 0.0
        %4633 = vmatprep.subr.mxu0 0.0
        %4634 = vmatpush1.msra.mxu0 0.0
        %4635 = vmatprep.subr.mxu0 0.0
        %4636 = vmatpush1.msra.mxu0 0.0
        %4637 = vmatprep.subr.mxu0 0.0
        %4638 = vmatpush1.msra.mxu0 0.0
        %4639 = vmatprep.subr.mxu0 0.0
        %4640 = vmatpush1.msra.mxu0 0.0
        %4641 = vmatprep.subr.mxu0 0.0
        %4642 = vmatpush1.msra.mxu0 0.0
        %4643 = vmatprep.subr.mxu0 0.0
        %4644 = vmatpush1.msra.mxu0 0.0
        %4645 = vmatprep.subr.mxu0 0.0
        %4646 = vmatpush1.msra.mxu0 0.0
        %4647 = vmatprep.subr.mxu0 0.0
        %4648 = vmatpush1.msra.mxu0 0.0
        %4649 = vmatprep.subr.mxu0 0.0
        %4650 = vmatpush1.msra.mxu0 0.0
        %4651 = vmatprep.subr.mxu0 0.0
        %4652 = vmatpush1.msra.mxu0 0.0
        %4653 = vmatprep.subr.mxu0 0.0
        %4654 = vmatpush1.msra.mxu0 0.0
        %4655 = vmatprep.subr.mxu0 0.0
        %4656 = vmatpush1.msra.mxu0 0.0
        %4657 = vmatprep.subr.mxu0 0.0
        %4658 = vmatpush1.msra.mxu0 0.0
        %4659 = vmatprep.subr.mxu0 0.0
        %4660 = vmatpush1.msra.mxu0 0.0
        %4661 = vmatprep.subr.mxu0 0.0
        %4662 = vmatpush1.msra.mxu0 0.0
        %4663 = vmatprep.subr.mxu0 0.0
        %4664 = vmatpush1.msra.mxu0 0.0
        %4665 = vmatprep.subr.mxu0 0.0
        %4666 = vmatpush1.msra.mxu0 0.0
        %4667 = vmatprep.subr.mxu0 0.0
        %4668 = vmatpush1.msra.mxu0 0.0
        %4669 = vmatprep.subr.mxu0 0.0
        %4670 = vmatpush1.msra.mxu0 0.0
        %4671 = vmatprep.subr.mxu0 0.0
        %4672 = vmatpush1.msra.mxu0 0.0
        %4673 = vmatprep.mubr.f32.mxu0 0.0
        %4674 = vmatmul.mubr.f32.gmra.mrb[0].mxu0 %v4394
        %v4675 = vpop.f32.mrb[0].mxu0
        %v4676 = vadd.f32 0.0, %v4675
        %v4677 = vpop.f32.mrb[0].mxu0
        %v4678 = vadd.f32 0.0, %v4677
        %4679 = vdwg.mxu0
        %4680 = vmatprep.subr.mxu0 0.0
        %4681 = vmatpush1.msra.mxu0 %v4384
        %4682 = vmatprep.subr.mxu0 0.0
        %4683 = vmatpush1.msra.mxu0 0.0
        %4684 = vmatprep.subr.mxu0 0.0
        %4685 = vmatpush1.msra.mxu0 0.0
        %4686 = vmatprep.subr.mxu0 0.0
        %4687 = vmatpush1.msra.mxu0 0.0
        %4688 = vmatprep.subr.mxu0 0.0
        %4689 = vmatpush1.msra.mxu0 0.0
        %4690 = vmatprep.subr.mxu0 0.0
        %4691 = vmatpush1.msra.mxu0 0.0
        %4692 = vmatprep.subr.mxu0 0.0
        %4693 = vmatpush1.msra.mxu0 0.0
        %4694 = vmatprep.subr.mxu0 0.0
        %4695 = vmatpush1.msra.mxu0 0.0
        %4696 = vmatprep.subr.mxu0 0.0
        %4697 = vmatpush1.msra.mxu0 0.0
        %4698 = vmatprep.subr.mxu0 0.0
        %4699 = vmatpush1.msra.mxu0 0.0
        %4700 = vmatprep.subr.mxu0 0.0
        %4701 = vmatpush1.msra.mxu0 0.0
        %4702 = vmatprep.subr.mxu0 0.0
        %4703 = vmatpush1.msra.mxu0 0.0
        %4704 = vmatprep.subr.mxu0 0.0
        %4705 = vmatpush1.msra.mxu0 0.0
        %4706 = vmatprep.subr.mxu0 0.0
        %4707 = vmatpush1.msra.mxu0 0.0
        %4708 = vmatprep.subr.mxu0 0.0
        %4709 = vmatpush1.msra.mxu0 0.0
        %4710 = vmatprep.subr.mxu0 0.0
        %4711 = vmatpush1.msra.mxu0 0.0
        %4712 = vmatprep.subr.mxu0 0.0
        %4713 = vmatpush1.msra.mxu0 0.0
        %4714 = vmatprep.subr.mxu0 0.0
        %4715 = vmatpush1.msra.mxu0 0.0
        %4716 = vmatprep.subr.mxu0 0.0
        %4717 = vmatpush1.msra.mxu0 0.0
        %4718 = vmatprep.subr.mxu0 0.0
        %4719 = vmatpush1.msra.mxu0 0.0
        %4720 = vmatprep.subr.mxu0 0.0
        %4721 = vmatpush1.msra.mxu0 0.0
        %4722 = vmatprep.subr.mxu0 0.0
        %4723 = vmatpush1.msra.mxu0 0.0
        %4724 = vmatprep.subr.mxu0 0.0
        %4725 = vmatpush1.msra.mxu0 0.0
        %4726 = vmatprep.subr.mxu0 0.0
        %4727 = vmatpush1.msra.mxu0 0.0
        %4728 = vmatprep.subr.mxu0 0.0
        %4729 = vmatpush1.msra.mxu0 0.0
        %4730 = vmatprep.subr.mxu0 0.0
        %4731 = vmatpush1.msra.mxu0 0.0
        %4732 = vmatprep.subr.mxu0 0.0
        %4733 = vmatpush1.msra.mxu0 0.0
        %4734 = vmatprep.subr.mxu0 0.0
        %4735 = vmatpush1.msra.mxu0 0.0
        %4736 = vmatprep.subr.mxu0 0.0
        %4737 = vmatpush1.msra.mxu0 0.0
        %4738 = vmatprep.subr.mxu0 0.0
        %4739 = vmatpush1.msra.mxu0 0.0
        %4740 = vmatprep.subr.mxu0 0.0
        %4741 = vmatpush1.msra.mxu0 0.0
        %4742 = vmatprep.subr.mxu0 0.0
        %4743 = vmatpush1.msra.mxu0 0.0
        %4744 = vmatprep.mubr.f32.mxu0 0.0
        %4745 = vmatmul.mubr.f32.gmra.mrb[0].mxu0 %v4394
        %v4746 = vpop.f32.mrb[0].mxu0
        %v4747 = vadd.f32 0.0, %v4746
        %v4748 = vpop.f32.mrb[0].mxu0
        %4749 = vdwg.mxu0
        %v4750 = vadd.f32 %v4344, %v4463
        %v4751 = vadd.f32 %v4345, %v4465
        %v4752 = vadd.f32 %v4346, %v4534
        %v4753 = vadd.f32 %v4347, %v4536
        %v4754 = vadd.f32 %v4348, %v4605
        %v4755 = vadd.f32 %v4349, %v4607
        %v4756 = vadd.f32 %v4350, %v4676
        %v4757 = vadd.f32 %v4351, %v4678
        %v4758 = vadd.f32 %v4352, %v4747
        %4759 = vrot.lane.b32.xlu0 %v338, 40
        %v4760 = vpop.permute.xlu0 %4759
        %4761 = vrot.lane.b32.xlu0 %v327, 84
        %v4762 = vpop.permute.xlu0 %4761
        %4763 = vrot.lane.b32.xlu0 %v328, 84
        %v4764 = vpop.permute.xlu0 %4763
        %4765 = vrot.lane.b32.xlu0 %v329, 84
        %v4766 = vpop.permute.xlu0 %4765
        %4767 = vrot.lane.b32.xlu0 %v330, 84
        %v4768 = vpop.permute.xlu0 %4767
        %4769 = vrot.lane.b32.xlu0 %v331, 84
        %v4770 = vpop.permute.xlu0 %4769
        %4771 = vrot.lane.b32.xlu0 %v332, 84
        %v4772 = vpop.permute.xlu0 %4771
        %4773 = vrot.lane.b32.xlu0 %v333, 84
        %v4774 = vpop.permute.xlu0 %4773
        %4775 = vrot.lane.b32.xlu0 %v334, 84
        %v4776 = vpop.permute.xlu0 %4775
        %4777 = vrot.lane.b32.xlu0 %v335, 84
        %v4778 = vpop.permute.xlu0 %4777
        %4779 = vrot.lane.b32.xlu0 %v336, 84
        %v4780 = vpop.permute.xlu0 %4779
        %vm4781 = vcmask 687104
        %v4782 = vsel %vm4781, %v4762, %v4764
        %v4783 = vsel %vm4781, %v4764, %v4766
        %v4784 = vsel %vm4781, %v4766, %v4768
        %v4785 = vsel %vm4781, %v4768, %v4770
        %v4786 = vsel %vm4781, %v4770, %v4772
        %v4787 = vsel %vm4781, %v4772, %v4774
        %v4788 = vsel %vm4781, %v4774, %v4776
        %v4789 = vsel %vm4781, %v4776, %v4778
        %v4790 = vsel %vm4781, %v4778, %v4780
        %v4800 = vsel %vm392, %v4760, 0
        %4802 = vmatprep.subr.mxu0 %v4783
        %4803 = vmatpush1.msra.mxu0 %v4782
        %4804 = vmatprep.subr.mxu0 0.0
        %4805 = vmatpush1.msra.mxu0 0.0
        %4806 = vmatprep.subr.mxu0 0.0
        %4807 = vmatpush1.msra.mxu0 0.0
        %4808 = vmatprep.subr.mxu0 0.0
        %4809 = vmatpush1.msra.mxu0 0.0
        %4810 = vmatprep.subr.mxu0 0.0
        %4811 = vmatpush1.msra.mxu0 0.0
        %4812 = vmatprep.subr.mxu0 0.0
        %4813 = vmatpush1.msra.mxu0 0.0
        %4814 = vmatprep.subr.mxu0 0.0
        %4815 = vmatpush1.msra.mxu0 0.0
        %4816 = vmatprep.subr.mxu0 0.0
        %4817 = vmatpush1.msra.mxu0 0.0
        %4818 = vmatprep.subr.mxu0 0.0
        %4819 = vmatpush1.msra.mxu0 0.0
        %4820 = vmatprep.subr.mxu0 0.0
        %4821 = vmatpush1.msra.mxu0 0.0
        %4822 = vmatprep.subr.mxu0 0.0
        %4823 = vmatpush1.msra.mxu0 0.0
        %4824 = vmatprep.subr.mxu0 0.0
        %4825 = vmatpush1.msra.mxu0 0.0
        %4826 = vmatprep.subr.mxu0 0.0
        %4827 = vmatpush1.msra.mxu0 0.0
        %4828 = vmatprep.subr.mxu0 0.0
        %4829 = vmatpush1.msra.mxu0 0.0
        %4830 = vmatprep.subr.mxu0 0.0
        %4831 = vmatpush1.msra.mxu0 0.0
        %4832 = vmatprep.subr.mxu0 0.0
        %4833 = vmatpush1.msra.mxu0 0.0
        %4834 = vmatprep.subr.mxu0 0.0
        %4835 = vmatpush1.msra.mxu0 0.0
        %4836 = vmatprep.subr.mxu0 0.0
        %4837 = vmatpush1.msra.mxu0 0.0
        %4838 = vmatprep.subr.mxu0 0.0
        %4839 = vmatpush1.msra.mxu0 0.0
        %4840 = vmatprep.subr.mxu0 0.0
        %4841 = vmatpush1.msra.mxu0 0.0
        %4842 = vmatprep.subr.mxu0 0.0
        %4843 = vmatpush1.msra.mxu0 0.0
        %4844 = vmatprep.subr.mxu0 0.0
        %4845 = vmatpush1.msra.mxu0 0.0
        %4846 = vmatprep.subr.mxu0 0.0
        %4847 = vmatpush1.msra.mxu0 0.0
        %4848 = vmatprep.subr.mxu0 0.0
        %4849 = vmatpush1.msra.mxu0 0.0
        %4850 = vmatprep.subr.mxu0 0.0
        %4851 = vmatpush1.msra.mxu0 0.0
        %4852 = vmatprep.subr.mxu0 0.0
        %4853 = vmatpush1.msra.mxu0 0.0
        %4854 = vmatprep.subr.mxu0 0.0
        %4855 = vmatpush1.msra.mxu0 0.0
        %4856 = vmatprep.subr.mxu0 0.0
        %4857 = vmatpush1.msra.mxu0 0.0
        %4858 = vmatprep.subr.mxu0 0.0
        %4859 = vmatpush1.msra.mxu0 0.0
        %4860 = vmatprep.subr.mxu0 0.0
        %4861 = vmatpush1.msra.mxu0 0.0
        %4862 = vmatprep.subr.mxu0 0.0
        %4863 = vmatpush1.msra.mxu0 0.0
        %4864 = vmatprep.subr.mxu0 0.0
        %4865 = vmatpush1.msra.mxu0 0.0
        %4866 = vmatprep.mubr.f32.mxu0 0.0
        %4867 = vmatmul.mubr.f32.gmra.mrb[0].mxu0 %v4800
        %v4868 = vpop.f32.mrb[0].mxu0
        %v4869 = vadd.f32 0.0, %v4868
        %v4870 = vpop.f32.mrb[0].mxu0
        %v4871 = vadd.f32 0.0, %v4870
        %4872 = vdwg.mxu0
        %4873 = vmatprep.subr.mxu0 %v4785
        %4874 = vmatpush1.msra.mxu0 %v4784
        %4875 = vmatprep.subr.mxu0 0.0
        %4876 = vmatpush1.msra.mxu0 0.0
        %4877 = vmatprep.subr.mxu0 0.0
        %4878 = vmatpush1.msra.mxu0 0.0
        %4879 = vmatprep.subr.mxu0 0.0
        %4880 = vmatpush1.msra.mxu0 0.0
        %4881 = vmatprep.subr.mxu0 0.0
        %4882 = vmatpush1.msra.mxu0 0.0
        %4883 = vmatprep.subr.mxu0 0.0
        %4884 = vmatpush1.msra.mxu0 0.0
        %4885 = vmatprep.subr.mxu0 0.0
        %4886 = vmatpush1.msra.mxu0 0.0
        %4887 = vmatprep.subr.mxu0 0.0
        %4888 = vmatpush1.msra.mxu0 0.0
        %4889 = vmatprep.subr.mxu0 0.0
        %4890 = vmatpush1.msra.mxu0 0.0
        %4891 = vmatprep.subr.mxu0 0.0
        %4892 = vmatpush1.msra.mxu0 0.0
        %4893 = vmatprep.subr.mxu0 0.0
        %4894 = vmatpush1.msra.mxu0 0.0
        %4895 = vmatprep.subr.mxu0 0.0
        %4896 = vmatpush1.msra.mxu0 0.0
        %4897 = vmatprep.subr.mxu0 0.0
        %4898 = vmatpush1.msra.mxu0 0.0
        %4899 = vmatprep.subr.mxu0 0.0
        %4900 = vmatpush1.msra.mxu0 0.0
        %4901 = vmatprep.subr.mxu0 0.0
        %4902 = vmatpush1.msra.mxu0 0.0
        %4903 = vmatprep.subr.mxu0 0.0
        %4904 = vmatpush1.msra.mxu0 0.0
        %4905 = vmatprep.subr.mxu0 0.0
        %4906 = vmatpush1.msra.mxu0 0.0
        %4907 = vmatprep.subr.mxu0 0.0
        %4908 = vmatpush1.msra.mxu0 0.0
        %4909 = vmatprep.subr.mxu0 0.0
        %4910 = vmatpush1.msra.mxu0 0.0
        %4911 = vmatprep.subr.mxu0 0.0
        %4912 = vmatpush1.msra.mxu0 0.0
        %4913 = vmatprep.subr.mxu0 0.0
        %4914 = vmatpush1.msra.mxu0 0.0
        %4915 = vmatprep.subr.mxu0 0.0
        %4916 = vmatpush1.msra.mxu0 0.0
        %4917 = vmatprep.subr.mxu0 0.0
        %4918 = vmatpush1.msra.mxu0 0.0
        %4919 = vmatprep.subr.mxu0 0.0
        %4920 = vmatpush1.msra.mxu0 0.0
        %4921 = vmatprep.subr.mxu0 0.0
        %4922 = vmatpush1.msra.mxu0 0.0
        %4923 = vmatprep.subr.mxu0 0.0
        %4924 = vmatpush1.msra.mxu0 0.0
        %4925 = vmatprep.subr.mxu0 0.0
        %4926 = vmatpush1.msra.mxu0 0.0
        %4927 = vmatprep.subr.mxu0 0.0
        %4928 = vmatpush1.msra.mxu0 0.0
        %4929 = vmatprep.subr.mxu0 0.0
        %4930 = vmatpush1.msra.mxu0 0.0
        %4931 = vmatprep.subr.mxu0 0.0
        %4932 = vmatpush1.msra.mxu0 0.0
        %4933 = vmatprep.subr.mxu0 0.0
        %4934 = vmatpush1.msra.mxu0 0.0
        %4935 = vmatprep.subr.mxu0 0.0
        %4936 = vmatpush1.msra.mxu0 0.0
        %4937 = vmatprep.mubr.f32.mxu0 0.0
        %4938 = vmatmul.mubr.f32.gmra.mrb[0].mxu0 %v4800
        %v4939 = vpop.f32.mrb[0].mxu0
        %v4940 = vadd.f32 0.0, %v4939
        %v4941 = vpop.f32.mrb[0].mxu0
        %v4942 = vadd.f32 0.0, %v4941
        %4943 = vdwg.mxu0
        %4944 = vmatprep.subr.mxu0 %v4787
        %4945 = vmatpush1.msra.mxu0 %v4786
        %4946 = vmatprep.subr.mxu0 0.0
        %4947 = vmatpush1.msra.mxu0 0.0
        %4948 = vmatprep.subr.mxu0 0.0
        %4949 = vmatpush1.msra.mxu0 0.0
        %4950 = vmatprep.subr.mxu0 0.0
        %4951 = vmatpush1.msra.mxu0 0.0
        %4952 = vmatprep.subr.mxu0 0.0
        %4953 = vmatpush1.msra.mxu0 0.0
        %4954 = vmatprep.subr.mxu0 0.0
        %4955 = vmatpush1.msra.mxu0 0.0
        %4956 = vmatprep.subr.mxu0 0.0
        %4957 = vmatpush1.msra.mxu0 0.0
        %4958 = vmatprep.subr.mxu0 0.0
        %4959 = vmatpush1.msra.mxu0 0.0
        %4960 = vmatprep.subr.mxu0 0.0
        %4961 = vmatpush1.msra.mxu0 0.0
        %4962 = vmatprep.subr.mxu0 0.0
        %4963 = vmatpush1.msra.mxu0 0.0
        %4964 = vmatprep.subr.mxu0 0.0
        %4965 = vmatpush1.msra.mxu0 0.0
        %4966 = vmatprep.subr.mxu0 0.0
        %4967 = vmatpush1.msra.mxu0 0.0
        %4968 = vmatprep.subr.mxu0 0.0
        %4969 = vmatpush1.msra.mxu0 0.0
        %4970 = vmatprep.subr.mxu0 0.0
        %4971 = vmatpush1.msra.mxu0 0.0
        %4972 = vmatprep.subr.mxu0 0.0
        %4973 = vmatpush1.msra.mxu0 0.0
        %4974 = vmatprep.subr.mxu0 0.0
        %4975 = vmatpush1.msra.mxu0 0.0
        %4976 = vmatprep.subr.mxu0 0.0
        %4977 = vmatpush1.msra.mxu0 0.0
        %4978 = vmatprep.subr.mxu0 0.0
        %4979 = vmatpush1.msra.mxu0 0.0
        %4980 = vmatprep.subr.mxu0 0.0
        %4981 = vmatpush1.msra.mxu0 0.0
        %4982 = vmatprep.subr.mxu0 0.0
        %4983 = vmatpush1.msra.mxu0 0.0
        %4984 = vmatprep.subr.mxu0 0.0
        %4985 = vmatpush1.msra.mxu0 0.0
        %4986 = vmatprep.subr.mxu0 0.0
        %4987 = vmatpush1.msra.mxu0 0.0
        %4988 = vmatprep.subr.mxu0 0.0
        %4989 = vmatpush1.msra.mxu0 0.0
        %4990 = vmatprep.subr.mxu0 0.0
        %4991 = vmatpush1.msra.mxu0 0.0
        %4992 = vmatprep.subr.mxu0 0.0
        %4993 = vmatpush1.msra.mxu0 0.0
        %4994 = vmatprep.subr.mxu0 0.0
        %4995 = vmatpush1.msra.mxu0 0.0
        %4996 = vmatprep.subr.mxu0 0.0
        %4997 = vmatpush1.msra.mxu0 0.0
        %4998 = vmatprep.subr.mxu0 0.0
        %4999 = vmatpush1.msra.mxu0 0.0
        %5000 = vmatprep.subr.mxu0 0.0
        %5001 = vmatpush1.msra.mxu0 0.0
        %5002 = vmatprep.subr.mxu0 0.0
        %5003 = vmatpush1.msra.mxu0 0.0
        %5004 = vmatprep.subr.mxu0 0.0
        %5005 = vmatpush1.msra.mxu0 0.0
        %5006 = vmatprep.subr.mxu0 0.0
        %5007 = vmatpush1.msra.mxu0 0.0
        %5008 = vmatprep.mubr.f32.mxu0 0.0
        %5009 = vmatmul.mubr.f32.gmra.mrb[0].mxu0 %v4800
        %v5010 = vpop.f32.mrb[0].mxu0
        %v5011 = vadd.f32 0.0, %v5010
        %v5012 = vpop.f32.mrb[0].mxu0
        %v5013 = vadd.f32 0.0, %v5012
        %5014 = vdwg.mxu0
        %5015 = vmatprep.subr.mxu0 %v4789
        %5016 = vmatpush1.msra.mxu0 %v4788
        %5017 = vmatprep.subr.mxu0 0.0
        %5018 = vmatpush1.msra.mxu0 0.0
        %5019 = vmatprep.subr.mxu0 0.0
        %5020 = vmatpush1.msra.mxu0 0.0
        %5021 = vmatprep.subr.mxu0 0.0
        %5022 = vmatpush1.msra.mxu0 0.0
        %5023 = vmatprep.subr.mxu0 0.0
        %5024 = vmatpush1.msra.mxu0 0.0
        %5025 = vmatprep.subr.mxu0 0.0
        %5026 = vmatpush1.msra.mxu0 0.0
        %5027 = vmatprep.subr.mxu0 0.0
        %5028 = vmatpush1.msra.mxu0 0.0
        %5029 = vmatprep.subr.mxu0 0.0
        %5030 = vmatpush1.msra.mxu0 0.0
        %5031 = vmatprep.subr.mxu0 0.0
        %5032 = vmatpush1.msra.mxu0 0.0
        %5033 = vmatprep.subr.mxu0 0.0
        %5034 = vmatpush1.msra.mxu0 0.0
        %5035 = vmatprep.subr.mxu0 0.0
        %5036 = vmatpush1.msra.mxu0 0.0
        %5037 = vmatprep.subr.mxu0 0.0
        %5038 = vmatpush1.msra.mxu0 0.0
        %5039 = vmatprep.subr.mxu0 0.0
        %5040 = vmatpush1.msra.mxu0 0.0
        %5041 = vmatprep.subr.mxu0 0.0
        %5042 = vmatpush1.msra.mxu0 0.0
        %5043 = vmatprep.subr.mxu0 0.0
        %5044 = vmatpush1.msra.mxu0 0.0
        %5045 = vmatprep.subr.mxu0 0.0
        %5046 = vmatpush1.msra.mxu0 0.0
        %5047 = vmatprep.subr.mxu0 0.0
        %5048 = vmatpush1.msra.mxu0 0.0
        %5049 = vmatprep.subr.mxu0 0.0
        %5050 = vmatpush1.msra.mxu0 0.0
        %5051 = vmatprep.subr.mxu0 0.0
        %5052 = vmatpush1.msra.mxu0 0.0
        %5053 = vmatprep.subr.mxu0 0.0
        %5054 = vmatpush1.msra.mxu0 0.0
        %5055 = vmatprep.subr.mxu0 0.0
        %5056 = vmatpush1.msra.mxu0 0.0
        %5057 = vmatprep.subr.mxu0 0.0
        %5058 = vmatpush1.msra.mxu0 0.0
        %5059 = vmatprep.subr.mxu0 0.0
        %5060 = vmatpush1.msra.mxu0 0.0
        %5061 = vmatprep.subr.mxu0 0.0
        %5062 = vmatpush1.msra.mxu0 0.0
        %5063 = vmatprep.subr.mxu0 0.0
        %5064 = vmatpush1.msra.mxu0 0.0
        %5065 = vmatprep.subr.mxu0 0.0
        %5066 = vmatpush1.msra.mxu0 0.0
        %5067 = vmatprep.subr.mxu0 0.0
        %5068 = vmatpush1.msra.mxu0 0.0
        %5069 = vmatprep.subr.mxu0 0.0
        %5070 = vmatpush1.msra.mxu0 0.0
        %5071 = vmatprep.subr.mxu0 0.0
        %5072 = vmatpush1.msra.mxu0 0.0
        %5073 = vmatprep.subr.mxu0 0.0
        %5074 = vmatpush1.msra.mxu0 0.0
        %5075 = vmatprep.subr.mxu0 0.0
        %5076 = vmatpush1.msra.mxu0 0.0
        %5077 = vmatprep.subr.mxu0 0.0
        %5078 = vmatpush1.msra.mxu0 0.0
        %5079 = vmatprep.mubr.f32.mxu0 0.0
        %5080 = vmatmul.mubr.f32.gmra.mrb[0].mxu0 %v4800
        %v5081 = vpop.f32.mrb[0].mxu0
        %v5082 = vadd.f32 0.0, %v5081
        %v5083 = vpop.f32.mrb[0].mxu0
        %v5084 = vadd.f32 0.0, %v5083
        %5085 = vdwg.mxu0
        %5086 = vmatprep.subr.mxu0 0.0
        %5087 = vmatpush1.msra.mxu0 %v4790
        %5088 = vmatprep.subr.mxu0 0.0
        %5089 = vmatpush1.msra.mxu0 0.0
        %5090 = vmatprep.subr.mxu0 0.0
        %5091 = vmatpush1.msra.mxu0 0.0
        %5092 = vmatprep.subr.mxu0 0.0
        %5093 = vmatpush1.msra.mxu0 0.0
        %5094 = vmatprep.subr.mxu0 0.0
        %5095 = vmatpush1.msra.mxu0 0.0
        %5096 = vmatprep.subr.mxu0 0.0
        %5097 = vmatpush1.msra.mxu0 0.0
        %5098 = vmatprep.subr.mxu0 0.0
        %5099 = vmatpush1.msra.mxu0 0.0
        %5100 = vmatprep.subr.mxu0 0.0
        %5101 = vmatpush1.msra.mxu0 0.0
        %5102 = vmatprep.subr.mxu0 0.0
        %5103 = vmatpush1.msra.mxu0 0.0
        %5104 = vmatprep.subr.mxu0 0.0
        %5105 = vmatpush1.msra.mxu0 0.0
        %5106 = vmatprep.subr.mxu0 0.0
        %5107 = vmatpush1.msra.mxu0 0.0
        %5108 = vmatprep.subr.mxu0 0.0
        %5109 = vmatpush1.msra.mxu0 0.0
        %5110 = vmatprep.subr.mxu0 0.0
        %5111 = vmatpush1.msra.mxu0 0.0
        %5112 = vmatprep.subr.mxu0 0.0
        %5113 = vmatpush1.msra.mxu0 0.0
        %5114 = vmatprep.subr.mxu0 0.0
        %5115 = vmatpush1.msra.mxu0 0.0
        %5116 = vmatprep.subr.mxu0 0.0
        %5117 = vmatpush1.msra.mxu0 0.0
        %5118 = vmatprep.subr.mxu0 0.0
        %5119 = vmatpush1.msra.mxu0 0.0
        %5120 = vmatprep.subr.mxu0 0.0
        %5121 = vmatpush1.msra.mxu0 0.0
        %5122 = vmatprep.subr.mxu0 0.0
        %5123 = vmatpush1.msra.mxu0 0.0
        %5124 = vmatprep.subr.mxu0 0.0
        %5125 = vmatpush1.msra.mxu0 0.0
        %5126 = vmatprep.subr.mxu0 0.0
        %5127 = vmatpush1.msra.mxu0 0.0
        %5128 = vmatprep.subr.mxu0 0.0
        %5129 = vmatpush1.msra.mxu0 0.0
        %5130 = vmatprep.subr.mxu0 0.0
        %5131 = vmatpush1.msra.mxu0 0.0
        %5132 = vmatprep.subr.mxu0 0.0
        %5133 = vmatpush1.msra.mxu0 0.0
        %5134 = vmatprep.subr.mxu0 0.0
        %5135 = vmatpush1.msra.mxu0 0.0
        %5136 = vmatprep.subr.mxu0 0.0
        %5137 = vmatpush1.msra.mxu0 0.0
        %5138 = vmatprep.subr.mxu0 0.0
        %5139 = vmatpush1.msra.mxu0 0.0
        %5140 = vmatprep.subr.mxu0 0.0
        %5141 = vmatpush1.msra.mxu0 0.0
        %5142 = vmatprep.subr.mxu0 0.0
        %5143 = vmatpush1.msra.mxu0 0.0
        %5144 = vmatprep.subr.mxu0 0.0
        %5145 = vmatpush1.msra.mxu0 0.0
        %5146 = vmatprep.subr.mxu0 0.0
        %5147 = vmatpush1.msra.mxu0 0.0
        %5148 = vmatprep.subr.mxu0 0.0
        %5149 = vmatpush1.msra.mxu0 0.0
        %5150 = vmatprep.mubr.f32.mxu0 0.0
        %5151 = vmatmul.mubr.f32.gmra.mrb[0].mxu0 %v4800
        %v5152 = vpop.f32.mrb[0].mxu0
        %v5153 = vadd.f32 0.0, %v5152
        %v5154 = vpop.f32.mrb[0].mxu0
        %5155 = vdwg.mxu0
        %v5156 = vadd.f32 %v4750, %v4869
        %v5157 = vadd.f32 %v4751, %v4871
        %v5158 = vadd.f32 %v4752, %v4940
        %v5159 = vadd.f32 %v4753, %v4942
        %v5160 = vadd.f32 %v4754, %v5011
        %v5161 = vadd.f32 %v4755, %v5013
        %v5162 = vadd.f32 %v4756, %v5082
        %v5163 = vadd.f32 %v4757, %v5084
        %v5164 = vadd.f32 %v4758, %v5153
        %5165 = vrot.lane.b32.xlu0 %v338, 32
        %v5166 = vpop.permute.xlu0 %5165
        %5167 = vrot.lane.b32.xlu0 %v327, 82
        %v5168 = vpop.permute.xlu0 %5167
        %5169 = vrot.lane.b32.xlu0 %v328, 82
        %v5170 = vpop.permute.xlu0 %5169
        %5171 = vrot.lane.b32.xlu0 %v329, 82
        %v5172 = vpop.permute.xlu0 %5171
        %5173 = vrot.lane.b32.xlu0 %v330, 82
        %v5174 = vpop.permute.xlu0 %5173
        %5175 = vrot.lane.b32.xlu0 %v331, 82
        %v5176 = vpop.permute.xlu0 %5175
        %5177 = vrot.lane.b32.xlu0 %v332, 82
        %v5178 = vpop.permute.xlu0 %5177
        %5179 = vrot.lane.b32.xlu0 %v333, 82
        %v5180 = vpop.permute.xlu0 %5179
        %5181 = vrot.lane.b32.xlu0 %v334, 82
        %v5182 = vpop.permute.xlu0 %5181
        %5183 = vrot.lane.b32.xlu0 %v335, 82
        %v5184 = vpop.permute.xlu0 %5183
        %5185 = vrot.lane.b32.xlu0 %v336, 82
        %v5186 = vpop.permute.xlu0 %5185
        %vm5187 = vcmask 670720
        %v5188 = vsel %vm5187, %v5168, %v5170
        %v5189 = vsel %vm5187, %v5170, %v5172
        %v5190 = vsel %vm5187, %v5172, %v5174
        %v5191 = vsel %vm5187, %v5174, %v5176
        %v5192 = vsel %vm5187, %v5176, %v5178
        %v5193 = vsel %vm5187, %v5178, %v5180
        %v5194 = vsel %vm5187, %v5180, %v5182
        %v5195 = vsel %vm5187, %v5182, %v5184
        %v5196 = vsel %vm5187, %v5184, %v5186
        %v5206 = vsel %vm392, %v5166, 0
        %5208 = vmatprep.subr.mxu0 %v5189
        %5209 = vmatpush1.msra.mxu0 %v5188
        %5210 = vmatprep.subr.mxu0 0.0
        %5211 = vmatpush1.msra.mxu0 0.0
        %5212 = vmatprep.subr.mxu0 0.0
        %5213 = vmatpush1.msra.mxu0 0.0
        %5214 = vmatprep.subr.mxu0 0.0
        %5215 = vmatpush1.msra.mxu0 0.0
        %5216 = vmatprep.subr.mxu0 0.0
        %5217 = vmatpush1.msra.mxu0 0.0
        %5218 = vmatprep.subr.mxu0 0.0
        %5219 = vmatpush1.msra.mxu0 0.0
        %5220 = vmatprep.subr.mxu0 0.0
        %5221 = vmatpush1.msra.mxu0 0.0
        %5222 = vmatprep.subr.mxu0 0.0
        %5223 = vmatpush1.msra.mxu0 0.0
        %5224 = vmatprep.subr.mxu0 0.0
        %5225 = vmatpush1.msra.mxu0 0.0
        %5226 = vmatprep.subr.mxu0 0.0
        %5227 = vmatpush1.msra.mxu0 0.0
        %5228 = vmatprep.subr.mxu0 0.0
        %5229 = vmatpush1.msra.mxu0 0.0
        %5230 = vmatprep.subr.mxu0 0.0
        %5231 = vmatpush1.msra.mxu0 0.0
        %5232 = vmatprep.subr.mxu0 0.0
        %5233 = vmatpush1.msra.mxu0 0.0
        %5234 = vmatprep.subr.mxu0 0.0
        %5235 = vmatpush1.msra.mxu0 0.0
        %5236 = vmatprep.subr.mxu0 0.0
        %5237 = vmatpush1.msra.mxu0 0.0
        %5238 = vmatprep.subr.mxu0 0.0
        %5239 = vmatpush1.msra.mxu0 0.0
        %5240 = vmatprep.subr.mxu0 0.0
        %5241 = vmatpush1.msra.mxu0 0.0
        %5242 = vmatprep.subr.mxu0 0.0
        %5243 = vmatpush1.msra.mxu0 0.0
        %5244 = vmatprep.subr.mxu0 0.0
        %5245 = vmatpush1.msra.mxu0 0.0
        %5246 = vmatprep.subr.mxu0 0.0
        %5247 = vmatpush1.msra.mxu0 0.0
        %5248 = vmatprep.subr.mxu0 0.0
        %5249 = vmatpush1.msra.mxu0 0.0
        %5250 = vmatprep.subr.mxu0 0.0
        %5251 = vmatpush1.msra.mxu0 0.0
        %5252 = vmatprep.subr.mxu0 0.0
        %5253 = vmatpush1.msra.mxu0 0.0
        %5254 = vmatprep.subr.mxu0 0.0
        %5255 = vmatpush1.msra.mxu0 0.0
        %5256 = vmatprep.subr.mxu0 0.0
        %5257 = vmatpush1.msra.mxu0 0.0
        %5258 = vmatprep.subr.mxu0 0.0
        %5259 = vmatpush1.msra.mxu0 0.0
        %5260 = vmatprep.subr.mxu0 0.0
        %5261 = vmatpush1.msra.mxu0 0.0
        %5262 = vmatprep.subr.mxu0 0.0
        %5263 = vmatpush1.msra.mxu0 0.0
        %5264 = vmatprep.subr.mxu0 0.0
        %5265 = vmatpush1.msra.mxu0 0.0
        %5266 = vmatprep.subr.mxu0 0.0
        %5267 = vmatpush1.msra.mxu0 0.0
        %5268 = vmatprep.subr.mxu0 0.0
        %5269 = vmatpush1.msra.mxu0 0.0
        %5270 = vmatprep.subr.mxu0 0.0
        %5271 = vmatpush1.msra.mxu0 0.0
        %5272 = vmatprep.mubr.f32.mxu0 0.0
        %5273 = vmatmul.mubr.f32.gmra.mrb[0].mxu0 %v5206
        %v5274 = vpop.f32.mrb[0].mxu0
        %v5275 = vadd.f32 0.0, %v5274
        %v5276 = vpop.f32.mrb[0].mxu0
        %v5277 = vadd.f32 0.0, %v5276
        %5278 = vdwg.mxu0
        %5279 = vmatprep.subr.mxu0 %v5191
        %5280 = vmatpush1.msra.mxu0 %v5190
        %5281 = vmatprep.subr.mxu0 0.0
        %5282 = vmatpush1.msra.mxu0 0.0
        %5283 = vmatprep.subr.mxu0 0.0
        %5284 = vmatpush1.msra.mxu0 0.0
        %5285 = vmatprep.subr.mxu0 0.0
        %5286 = vmatpush1.msra.mxu0 0.0
        %5287 = vmatprep.subr.mxu0 0.0
        %5288 = vmatpush1.msra.mxu0 0.0
        %5289 = vmatprep.subr.mxu0 0.0
        %5290 = vmatpush1.msra.mxu0 0.0
        %5291 = vmatprep.subr.mxu0 0.0
        %5292 = vmatpush1.msra.mxu0 0.0
        %5293 = vmatprep.subr.mxu0 0.0
        %5294 = vmatpush1.msra.mxu0 0.0
        %5295 = vmatprep.subr.mxu0 0.0
        %5296 = vmatpush1.msra.mxu0 0.0
        %5297 = vmatprep.subr.mxu0 0.0
        %5298 = vmatpush1.msra.mxu0 0.0
        %5299 = vmatprep.subr.mxu0 0.0
        %5300 = vmatpush1.msra.mxu0 0.0
        %5301 = vmatprep.subr.mxu0 0.0
        %5302 = vmatpush1.msra.mxu0 0.0
        %5303 = vmatprep.subr.mxu0 0.0
        %5304 = vmatpush1.msra.mxu0 0.0
        %5305 = vmatprep.subr.mxu0 0.0
        %5306 = vmatpush1.msra.mxu0 0.0
        %5307 = vmatprep.subr.mxu0 0.0
        %5308 = vmatpush1.msra.mxu0 0.0
        %5309 = vmatprep.subr.mxu0 0.0
        %5310 = vmatpush1.msra.mxu0 0.0
        %5311 = vmatprep.subr.mxu0 0.0
        %5312 = vmatpush1.msra.mxu0 0.0
        %5313 = vmatprep.subr.mxu0 0.0
        %5314 = vmatpush1.msra.mxu0 0.0
        %5315 = vmatprep.subr.mxu0 0.0
        %5316 = vmatpush1.msra.mxu0 0.0
        %5317 = vmatprep.subr.mxu0 0.0
        %5318 = vmatpush1.msra.mxu0 0.0
        %5319 = vmatprep.subr.mxu0 0.0
        %5320 = vmatpush1.msra.mxu0 0.0
        %5321 = vmatprep.subr.mxu0 0.0
        %5322 = vmatpush1.msra.mxu0 0.0
        %5323 = vmatprep.subr.mxu0 0.0
        %5324 = vmatpush1.msra.mxu0 0.0
        %5325 = vmatprep.subr.mxu0 0.0
        %5326 = vmatpush1.msra.mxu0 0.0
        %5327 = vmatprep.subr.mxu0 0.0
        %5328 = vmatpush1.msra.mxu0 0.0
        %5329 = vmatprep.subr.mxu0 0.0
        %5330 = vmatpush1.msra.mxu0 0.0
        %5331 = vmatprep.subr.mxu0 0.0
        %5332 = vmatpush1.msra.mxu0 0.0
        %5333 = vmatprep.subr.mxu0 0.0
        %5334 = vmatpush1.msra.mxu0 0.0
        %5335 = vmatprep.subr.mxu0 0.0
        %5336 = vmatpush1.msra.mxu0 0.0
        %5337 = vmatprep.subr.mxu0 0.0
        %5338 = vmatpush1.msra.mxu0 0.0
        %5339 = vmatprep.subr.mxu0 0.0
        %5340 = vmatpush1.msra.mxu0 0.0
        %5341 = vmatprep.subr.mxu0 0.0
        %5342 = vmatpush1.msra.mxu0 0.0
        %5343 = vmatprep.mubr.f32.mxu0 0.0
        %5344 = vmatmul.mubr.f32.gmra.mrb[0].mxu0 %v5206
        %v5345 = vpop.f32.mrb[0].mxu0
        %v5346 = vadd.f32 0.0, %v5345
        %v5347 = vpop.f32.mrb[0].mxu0
        %v5348 = vadd.f32 0.0, %v5347
        %5349 = vdwg.mxu0
        %5350 = vmatprep.subr.mxu0 %v5193
        %5351 = vmatpush1.msra.mxu0 %v5192
        %5352 = vmatprep.subr.mxu0 0.0
        %5353 = vmatpush1.msra.mxu0 0.0
        %5354 = vmatprep.subr.mxu0 0.0
        %5355 = vmatpush1.msra.mxu0 0.0
        %5356 = vmatprep.subr.mxu0 0.0
        %5357 = vmatpush1.msra.mxu0 0.0
        %5358 = vmatprep.subr.mxu0 0.0
        %5359 = vmatpush1.msra.mxu0 0.0
        %5360 = vmatprep.subr.mxu0 0.0
        %5361 = vmatpush1.msra.mxu0 0.0
        %5362 = vmatprep.subr.mxu0 0.0
        %5363 = vmatpush1.msra.mxu0 0.0
        %5364 = vmatprep.subr.mxu0 0.0
        %5365 = vmatpush1.msra.mxu0 0.0
        %5366 = vmatprep.subr.mxu0 0.0
        %5367 = vmatpush1.msra.mxu0 0.0
        %5368 = vmatprep.subr.mxu0 0.0
        %5369 = vmatpush1.msra.mxu0 0.0
        %5370 = vmatprep.subr.mxu0 0.0
        %5371 = vmatpush1.msra.mxu0 0.0
        %5372 = vmatprep.subr.mxu0 0.0
        %5373 = vmatpush1.msra.mxu0 0.0
        %5374 = vmatprep.subr.mxu0 0.0
        %5375 = vmatpush1.msra.mxu0 0.0
        %5376 = vmatprep.subr.mxu0 0.0
        %5377 = vmatpush1.msra.mxu0 0.0
        %5378 = vmatprep.subr.mxu0 0.0
        %5379 = vmatpush1.msra.mxu0 0.0
        %5380 = vmatprep.subr.mxu0 0.0
        %5381 = vmatpush1.msra.mxu0 0.0
        %5382 = vmatprep.subr.mxu0 0.0
        %5383 = vmatpush1.msra.mxu0 0.0
        %5384 = vmatprep.subr.mxu0 0.0
        %5385 = vmatpush1.msra.mxu0 0.0
        %5386 = vmatprep.subr.mxu0 0.0
        %5387 = vmatpush1.msra.mxu0 0.0
        %5388 = vmatprep.subr.mxu0 0.0
        %5389 = vmatpush1.msra.mxu0 0.0
        %5390 = vmatprep.subr.mxu0 0.0
        %5391 = vmatpush1.msra.mxu0 0.0
        %5392 = vmatprep.subr.mxu0 0.0
        %5393 = vmatpush1.msra.mxu0 0.0
        %5394 = vmatprep.subr.mxu0 0.0
        %5395 = vmatpush1.msra.mxu0 0.0
        %5396 = vmatprep.subr.mxu0 0.0
        %5397 = vmatpush1.msra.mxu0 0.0
        %5398 = vmatprep.subr.mxu0 0.0
        %5399 = vmatpush1.msra.mxu0 0.0
        %5400 = vmatprep.subr.mxu0 0.0
        %5401 = vmatpush1.msra.mxu0 0.0
        %5402 = vmatprep.subr.mxu0 0.0
        %5403 = vmatpush1.msra.mxu0 0.0
        %5404 = vmatprep.subr.mxu0 0.0
        %5405 = vmatpush1.msra.mxu0 0.0
        %5406 = vmatprep.subr.mxu0 0.0
        %5407 = vmatpush1.msra.mxu0 0.0
        %5408 = vmatprep.subr.mxu0 0.0
        %5409 = vmatpush1.msra.mxu0 0.0
        %5410 = vmatprep.subr.mxu0 0.0
        %5411 = vmatpush1.msra.mxu0 0.0
        %5412 = vmatprep.subr.mxu0 0.0
        %5413 = vmatpush1.msra.mxu0 0.0
        %5414 = vmatprep.mubr.f32.mxu0 0.0
        %5415 = vmatmul.mubr.f32.gmra.mrb[0].mxu0 %v5206
        %v5416 = vpop.f32.mrb[0].mxu0
        %v5417 = vadd.f32 0.0, %v5416
        %v5418 = vpop.f32.mrb[0].mxu0
        %v5419 = vadd.f32 0.0, %v5418
        %5420 = vdwg.mxu0
        %5421 = vmatprep.subr.mxu0 %v5195
        %5422 = vmatpush1.msra.mxu0 %v5194
        %5423 = vmatprep.subr.mxu0 0.0
        %5424 = vmatpush1.msra.mxu0 0.0
        %5425 = vmatprep.subr.mxu0 0.0
        %5426 = vmatpush1.msra.mxu0 0.0
        %5427 = vmatprep.subr.mxu0 0.0
        %5428 = vmatpush1.msra.mxu0 0.0
        %5429 = vmatprep.subr.mxu0 0.0
        %5430 = vmatpush1.msra.mxu0 0.0
        %5431 = vmatprep.subr.mxu0 0.0
        %5432 = vmatpush1.msra.mxu0 0.0
        %5433 = vmatprep.subr.mxu0 0.0
        %5434 = vmatpush1.msra.mxu0 0.0
        %5435 = vmatprep.subr.mxu0 0.0
        %5436 = vmatpush1.msra.mxu0 0.0
        %5437 = vmatprep.subr.mxu0 0.0
        %5438 = vmatpush1.msra.mxu0 0.0
        %5439 = vmatprep.subr.mxu0 0.0
        %5440 = vmatpush1.msra.mxu0 0.0
        %5441 = vmatprep.subr.mxu0 0.0
        %5442 = vmatpush1.msra.mxu0 0.0
        %5443 = vmatprep.subr.mxu0 0.0
        %5444 = vmatpush1.msra.mxu0 0.0
        %5445 = vmatprep.subr.mxu0 0.0
        %5446 = vmatpush1.msra.mxu0 0.0
        %5447 = vmatprep.subr.mxu0 0.0
        %5448 = vmatpush1.msra.mxu0 0.0
        %5449 = vmatprep.subr.mxu0 0.0
        %5450 = vmatpush1.msra.mxu0 0.0
        %5451 = vmatprep.subr.mxu0 0.0
        %5452 = vmatpush1.msra.mxu0 0.0
        %5453 = vmatprep.subr.mxu0 0.0
        %5454 = vmatpush1.msra.mxu0 0.0
        %5455 = vmatprep.subr.mxu0 0.0
        %5456 = vmatpush1.msra.mxu0 0.0
        %5457 = vmatprep.subr.mxu0 0.0
        %5458 = vmatpush1.msra.mxu0 0.0
        %5459 = vmatprep.subr.mxu0 0.0
        %5460 = vmatpush1.msra.mxu0 0.0
        %5461 = vmatprep.subr.mxu0 0.0
        %5462 = vmatpush1.msra.mxu0 0.0
        %5463 = vmatprep.subr.mxu0 0.0
        %5464 = vmatpush1.msra.mxu0 0.0
        %5465 = vmatprep.subr.mxu0 0.0
        %5466 = vmatpush1.msra.mxu0 0.0
        %5467 = vmatprep.subr.mxu0 0.0
        %5468 = vmatpush1.msra.mxu0 0.0
        %5469 = vmatprep.subr.mxu0 0.0
        %5470 = vmatpush1.msra.mxu0 0.0
        %5471 = vmatprep.subr.mxu0 0.0
        %5472 = vmatpush1.msra.mxu0 0.0
        %5473 = vmatprep.subr.mxu0 0.0
        %5474 = vmatpush1.msra.mxu0 0.0
        %5475 = vmatprep.subr.mxu0 0.0
        %5476 = vmatpush1.msra.mxu0 0.0
        %5477 = vmatprep.subr.mxu0 0.0
        %5478 = vmatpush1.msra.mxu0 0.0
        %5479 = vmatprep.subr.mxu0 0.0
        %5480 = vmatpush1.msra.mxu0 0.0
        %5481 = vmatprep.subr.mxu0 0.0
        %5482 = vmatpush1.msra.mxu0 0.0
        %5483 = vmatprep.subr.mxu0 0.0
        %5484 = vmatpush1.msra.mxu0 0.0
        %5485 = vmatprep.mubr.f32.mxu0 0.0
        %5486 = vmatmul.mubr.f32.gmra.mrb[0].mxu0 %v5206
        %v5487 = vpop.f32.mrb[0].mxu0
        %v5488 = vadd.f32 0.0, %v5487
        %v5489 = vpop.f32.mrb[0].mxu0
        %v5490 = vadd.f32 0.0, %v5489
        %5491 = vdwg.mxu0
        %5492 = vmatprep.subr.mxu0 0.0
        %5493 = vmatpush1.msra.mxu0 %v5196
        %5494 = vmatprep.subr.mxu0 0.0
        %5495 = vmatpush1.msra.mxu0 0.0
        %5496 = vmatprep.subr.mxu0 0.0
        %5497 = vmatpush1.msra.mxu0 0.0
        %5498 = vmatprep.subr.mxu0 0.0
        %5499 = vmatpush1.msra.mxu0 0.0
        %5500 = vmatprep.subr.mxu0 0.0
        %5501 = vmatpush1.msra.mxu0 0.0
        %5502 = vmatprep.subr.mxu0 0.0
        %5503 = vmatpush1.msra.mxu0 0.0
        %5504 = vmatprep.subr.mxu0 0.0
        %5505 = vmatpush1.msra.mxu0 0.0
        %5506 = vmatprep.subr.mxu0 0.0
        %5507 = vmatpush1.msra.mxu0 0.0
        %5508 = vmatprep.subr.mxu0 0.0
        %5509 = vmatpush1.msra.mxu0 0.0
        %5510 = vmatprep.subr.mxu0 0.0
        %5511 = vmatpush1.msra.mxu0 0.0
        %5512 = vmatprep.subr.mxu0 0.0
        %5513 = vmatpush1.msra.mxu0 0.0
        %5514 = vmatprep.subr.mxu0 0.0
        %5515 = vmatpush1.msra.mxu0 0.0
        %5516 = vmatprep.subr.mxu0 0.0
        %5517 = vmatpush1.msra.mxu0 0.0
        %5518 = vmatprep.subr.mxu0 0.0
        %5519 = vmatpush1.msra.mxu0 0.0
        %5520 = vmatprep.subr.mxu0 0.0
        %5521 = vmatpush1.msra.mxu0 0.0
        %5522 = vmatprep.subr.mxu0 0.0
        %5523 = vmatpush1.msra.mxu0 0.0
        %5524 = vmatprep.subr.mxu0 0.0
        %5525 = vmatpush1.msra.mxu0 0.0
        %5526 = vmatprep.subr.mxu0 0.0
        %5527 = vmatpush1.msra.mxu0 0.0
        %5528 = vmatprep.subr.mxu0 0.0
        %5529 = vmatpush1.msra.mxu0 0.0
        %5530 = vmatprep.subr.mxu0 0.0
        %5531 = vmatpush1.msra.mxu0 0.0
        %5532 = vmatprep.subr.mxu0 0.0
        %5533 = vmatpush1.msra.mxu0 0.0
        %5534 = vmatprep.subr.mxu0 0.0
        %5535 = vmatpush1.msra.mxu0 0.0
        %5536 = vmatprep.subr.mxu0 0.0
        %5537 = vmatpush1.msra.mxu0 0.0
        %5538 = vmatprep.subr.mxu0 0.0
        %5539 = vmatpush1.msra.mxu0 0.0
        %5540 = vmatprep.subr.mxu0 0.0
        %5541 = vmatpush1.msra.mxu0 0.0
        %5542 = vmatprep.subr.mxu0 0.0
        %5543 = vmatpush1.msra.mxu0 0.0
        %5544 = vmatprep.subr.mxu0 0.0
        %5545 = vmatpush1.msra.mxu0 0.0
        %5546 = vmatprep.subr.mxu0 0.0
        %5547 = vmatpush1.msra.mxu0 0.0
        %5548 = vmatprep.subr.mxu0 0.0
        %5549 = vmatpush1.msra.mxu0 0.0
        %5550 = vmatprep.subr.mxu0 0.0
        %5551 = vmatpush1.msra.mxu0 0.0
        %5552 = vmatprep.subr.mxu0 0.0
        %5553 = vmatpush1.msra.mxu0 0.0
        %5554 = vmatprep.subr.mxu0 0.0
        %5555 = vmatpush1.msra.mxu0 0.0
        %5556 = vmatprep.mubr.f32.mxu0 0.0
        %5557 = vmatmul.mubr.f32.gmra.mrb[0].mxu0 %v5206
        %v5558 = vpop.f32.mrb[0].mxu0
        %v5559 = vadd.f32 0.0, %v5558
        %v5560 = vpop.f32.mrb[0].mxu0
        %5561 = vdwg.mxu0
        %v5562 = vadd.f32 %v5156, %v5275
        %v5563 = vadd.f32 %v5157, %v5277
        %v5564 = vadd.f32 %v5158, %v5346
        %v5565 = vadd.f32 %v5159, %v5348
        %v5566 = vadd.f32 %v5160, %v5417
        %v5567 = vadd.f32 %v5161, %v5419
        %v5568 = vadd.f32 %v5162, %v5488
        %v5569 = vadd.f32 %v5163, %v5490
        %v5570 = vadd.f32 %v5164, %v5559
        %5571 = vrot.lane.b32.xlu0 %v338, 24
        %v5572 = vpop.permute.xlu0 %5571
        %5573 = vrot.lane.b32.xlu0 %v327, 80
        %v5574 = vpop.permute.xlu0 %5573
        %5575 = vrot.lane.b32.xlu0 %v328, 80
        %v5576 = vpop.permute.xlu0 %5575
        %5577 = vrot.lane.b32.xlu0 %v329, 80
        %v5578 = vpop.permute.xlu0 %5577
        %5579 = vrot.lane.b32.xlu0 %v330, 80
        %v5580 = vpop.permute.xlu0 %5579
        %5581 = vrot.lane.b32.xlu0 %v331, 80
        %v5582 = vpop.permute.xlu0 %5581
        %5583 = vrot.lane.b32.xlu0 %v332, 80
        %v5584 = vpop.permute.xlu0 %5583
        %5585 = vrot.lane.b32.xlu0 %v333, 80
        %v5586 = vpop.permute.xlu0 %5585
        %5587 = vrot.lane.b32.xlu0 %v334, 80
        %v5588 = vpop.permute.xlu0 %5587
        %5589 = vrot.lane.b32.xlu0 %v335, 80
        %v5590 = vpop.permute.xlu0 %5589
        %5591 = vrot.lane.b32.xlu0 %v336, 80
        %v5592 = vpop.permute.xlu0 %5591
        %vm5593 = vcmask 654336
        %v5594 = vsel %vm5593, %v5574, %v5576
        %v5595 = vsel %vm5593, %v5576, %v5578
        %v5596 = vsel %vm5593, %v5578, %v5580
        %v5597 = vsel %vm5593, %v5580, %v5582
        %v5598 = vsel %vm5593, %v5582, %v5584
        %v5599 = vsel %vm5593, %v5584, %v5586
        %v5600 = vsel %vm5593, %v5586, %v5588
        %v5601 = vsel %vm5593, %v5588, %v5590
        %v5602 = vsel %vm5593, %v5590, %v5592
        %v5612 = vsel %vm392, %v5572, 0
        %5614 = vmatprep.subr.mxu0 %v5595
        %5615 = vmatpush1.msra.mxu0 %v5594
        %5616 = vmatprep.subr.mxu0 0.0
        %5617 = vmatpush1.msra.mxu0 0.0
        %5618 = vmatprep.subr.mxu0 0.0
        %5619 = vmatpush1.msra.mxu0 0.0
        %5620 = vmatprep.subr.mxu0 0.0
        %5621 = vmatpush1.msra.mxu0 0.0
        %5622 = vmatprep.subr.mxu0 0.0
        %5623 = vmatpush1.msra.mxu0 0.0
        %5624 = vmatprep.subr.mxu0 0.0
        %5625 = vmatpush1.msra.mxu0 0.0
        %5626 = vmatprep.subr.mxu0 0.0
        %5627 = vmatpush1.msra.mxu0 0.0
        %5628 = vmatprep.subr.mxu0 0.0
        %5629 = vmatpush1.msra.mxu0 0.0
        %5630 = vmatprep.subr.mxu0 0.0
        %5631 = vmatpush1.msra.mxu0 0.0
        %5632 = vmatprep.subr.mxu0 0.0
        %5633 = vmatpush1.msra.mxu0 0.0
        %5634 = vmatprep.subr.mxu0 0.0
        %5635 = vmatpush1.msra.mxu0 0.0
        %5636 = vmatprep.subr.mxu0 0.0
        %5637 = vmatpush1.msra.mxu0 0.0
        %5638 = vmatprep.subr.mxu0 0.0
        %5639 = vmatpush1.msra.mxu0 0.0
        %5640 = vmatprep.subr.mxu0 0.0
        %5641 = vmatpush1.msra.mxu0 0.0
        %5642 = vmatprep.subr.mxu0 0.0
        %5643 = vmatpush1.msra.mxu0 0.0
        %5644 = vmatprep.subr.mxu0 0.0
        %5645 = vmatpush1.msra.mxu0 0.0
        %5646 = vmatprep.subr.mxu0 0.0
        %5647 = vmatpush1.msra.mxu0 0.0
        %5648 = vmatprep.subr.mxu0 0.0
        %5649 = vmatpush1.msra.mxu0 0.0
        %5650 = vmatprep.subr.mxu0 0.0
        %5651 = vmatpush1.msra.mxu0 0.0
        %5652 = vmatprep.subr.mxu0 0.0
        %5653 = vmatpush1.msra.mxu0 0.0
        %5654 = vmatprep.subr.mxu0 0.0
        %5655 = vmatpush1.msra.mxu0 0.0
        %5656 = vmatprep.subr.mxu0 0.0
        %5657 = vmatpush1.msra.mxu0 0.0
        %5658 = vmatprep.subr.mxu0 0.0
        %5659 = vmatpush1.msra.mxu0 0.0
        %5660 = vmatprep.subr.mxu0 0.0
        %5661 = vmatpush1.msra.mxu0 0.0
        %5662 = vmatprep.subr.mxu0 0.0
        %5663 = vmatpush1.msra.mxu0 0.0
        %5664 = vmatprep.subr.mxu0 0.0
        %5665 = vmatpush1.msra.mxu0 0.0
        %5666 = vmatprep.subr.mxu0 0.0
        %5667 = vmatpush1.msra.mxu0 0.0
        %5668 = vmatprep.subr.mxu0 0.0
        %5669 = vmatpush1.msra.mxu0 0.0
        %5670 = vmatprep.subr.mxu0 0.0
        %5671 = vmatpush1.msra.mxu0 0.0
        %5672 = vmatprep.subr.mxu0 0.0
        %5673 = vmatpush1.msra.mxu0 0.0
        %5674 = vmatprep.subr.mxu0 0.0
        %5675 = vmatpush1.msra.mxu0 0.0
        %5676 = vmatprep.subr.mxu0 0.0
        %5677 = vmatpush1.msra.mxu0 0.0
        %5678 = vmatprep.mubr.f32.mxu0 0.0
        %5679 = vmatmul.mubr.f32.gmra.mrb[0].mxu0 %v5612
        %v5680 = vpop.f32.mrb[0].mxu0
        %v5681 = vadd.f32 0.0, %v5680
        %v5682 = vpop.f32.mrb[0].mxu0
        %v5683 = vadd.f32 0.0, %v5682
        %5684 = vdwg.mxu0
        %5685 = vmatprep.subr.mxu0 %v5597
        %5686 = vmatpush1.msra.mxu0 %v5596
        %5687 = vmatprep.subr.mxu0 0.0
        %5688 = vmatpush1.msra.mxu0 0.0
        %5689 = vmatprep.subr.mxu0 0.0
        %5690 = vmatpush1.msra.mxu0 0.0
        %5691 = vmatprep.subr.mxu0 0.0
        %5692 = vmatpush1.msra.mxu0 0.0
        %5693 = vmatprep.subr.mxu0 0.0
        %5694 = vmatpush1.msra.mxu0 0.0
        %5695 = vmatprep.subr.mxu0 0.0
        %5696 = vmatpush1.msra.mxu0 0.0
        %5697 = vmatprep.subr.mxu0 0.0
        %5698 = vmatpush1.msra.mxu0 0.0
        %5699 = vmatprep.subr.mxu0 0.0
        %5700 = vmatpush1.msra.mxu0 0.0
        %5701 = vmatprep.subr.mxu0 0.0
        %5702 = vmatpush1.msra.mxu0 0.0
        %5703 = vmatprep.subr.mxu0 0.0
        %5704 = vmatpush1.msra.mxu0 0.0
        %5705 = vmatprep.subr.mxu0 0.0
        %5706 = vmatpush1.msra.mxu0 0.0
        %5707 = vmatprep.subr.mxu0 0.0
        %5708 = vmatpush1.msra.mxu0 0.0
        %5709 = vmatprep.subr.mxu0 0.0
        %5710 = vmatpush1.msra.mxu0 0.0
        %5711 = vmatprep.subr.mxu0 0.0
        %5712 = vmatpush1.msra.mxu0 0.0
        %5713 = vmatprep.subr.mxu0 0.0
        %5714 = vmatpush1.msra.mxu0 0.0
        %5715 = vmatprep.subr.mxu0 0.0
        %5716 = vmatpush1.msra.mxu0 0.0
        %5717 = vmatprep.subr.mxu0 0.0
        %5718 = vmatpush1.msra.mxu0 0.0
        %5719 = vmatprep.subr.mxu0 0.0
        %5720 = vmatpush1.msra.mxu0 0.0
        %5721 = vmatprep.subr.mxu0 0.0
        %5722 = vmatpush1.msra.mxu0 0.0
        %5723 = vmatprep.subr.mxu0 0.0
        %5724 = vmatpush1.msra.mxu0 0.0
        %5725 = vmatprep.subr.mxu0 0.0
        %5726 = vmatpush1.msra.mxu0 0.0
        %5727 = vmatprep.subr.mxu0 0.0
        %5728 = vmatpush1.msra.mxu0 0.0
        %5729 = vmatprep.subr.mxu0 0.0
        %5730 = vmatpush1.msra.mxu0 0.0
        %5731 = vmatprep.subr.mxu0 0.0
        %5732 = vmatpush1.msra.mxu0 0.0
        %5733 = vmatprep.subr.mxu0 0.0
        %5734 = vmatpush1.msra.mxu0 0.0
        %5735 = vmatprep.subr.mxu0 0.0
        %5736 = vmatpush1.msra.mxu0 0.0
        %5737 = vmatprep.subr.mxu0 0.0
        %5738 = vmatpush1.msra.mxu0 0.0
        %5739 = vmatprep.subr.mxu0 0.0
        %5740 = vmatpush1.msra.mxu0 0.0
        %5741 = vmatprep.subr.mxu0 0.0
        %5742 = vmatpush1.msra.mxu0 0.0
        %5743 = vmatprep.subr.mxu0 0.0
        %5744 = vmatpush1.msra.mxu0 0.0
        %5745 = vmatprep.subr.mxu0 0.0
        %5746 = vmatpush1.msra.mxu0 0.0
        %5747 = vmatprep.subr.mxu0 0.0
        %5748 = vmatpush1.msra.mxu0 0.0
        %5749 = vmatprep.mubr.f32.mxu0 0.0
        %5750 = vmatmul.mubr.f32.gmra.mrb[0].mxu0 %v5612
        %v5751 = vpop.f32.mrb[0].mxu0
        %v5752 = vadd.f32 0.0, %v5751
        %v5753 = vpop.f32.mrb[0].mxu0
        %v5754 = vadd.f32 0.0, %v5753
        %5755 = vdwg.mxu0
        %5756 = vmatprep.subr.mxu0 %v5599
        %5757 = vmatpush1.msra.mxu0 %v5598
        %5758 = vmatprep.subr.mxu0 0.0
        %5759 = vmatpush1.msra.mxu0 0.0
        %5760 = vmatprep.subr.mxu0 0.0
        %5761 = vmatpush1.msra.mxu0 0.0
        %5762 = vmatprep.subr.mxu0 0.0
        %5763 = vmatpush1.msra.mxu0 0.0
        %5764 = vmatprep.subr.mxu0 0.0
        %5765 = vmatpush1.msra.mxu0 0.0
        %5766 = vmatprep.subr.mxu0 0.0
        %5767 = vmatpush1.msra.mxu0 0.0
        %5768 = vmatprep.subr.mxu0 0.0
        %5769 = vmatpush1.msra.mxu0 0.0
        %5770 = vmatprep.subr.mxu0 0.0
        %5771 = vmatpush1.msra.mxu0 0.0
        %5772 = vmatprep.subr.mxu0 0.0
        %5773 = vmatpush1.msra.mxu0 0.0
        %5774 = vmatprep.subr.mxu0 0.0
        %5775 = vmatpush1.msra.mxu0 0.0
        %5776 = vmatprep.subr.mxu0 0.0
        %5777 = vmatpush1.msra.mxu0 0.0
        %5778 = vmatprep.subr.mxu0 0.0
        %5779 = vmatpush1.msra.mxu0 0.0
        %5780 = vmatprep.subr.mxu0 0.0
        %5781 = vmatpush1.msra.mxu0 0.0
        %5782 = vmatprep.subr.mxu0 0.0
        %5783 = vmatpush1.msra.mxu0 0.0
        %5784 = vmatprep.subr.mxu0 0.0
        %5785 = vmatpush1.msra.mxu0 0.0
        %5786 = vmatprep.subr.mxu0 0.0
        %5787 = vmatpush1.msra.mxu0 0.0
        %5788 = vmatprep.subr.mxu0 0.0
        %5789 = vmatpush1.msra.mxu0 0.0
        %5790 = vmatprep.subr.mxu0 0.0
        %5791 = vmatpush1.msra.mxu0 0.0
        %5792 = vmatprep.subr.mxu0 0.0
        %5793 = vmatpush1.msra.mxu0 0.0
        %5794 = vmatprep.subr.mxu0 0.0
        %5795 = vmatpush1.msra.mxu0 0.0
        %5796 = vmatprep.subr.mxu0 0.0
        %5797 = vmatpush1.msra.mxu0 0.0
        %5798 = vmatprep.subr.mxu0 0.0
        %5799 = vmatpush1.msra.mxu0 0.0
        %5800 = vmatprep.subr.mxu0 0.0
        %5801 = vmatpush1.msra.mxu0 0.0
        %5802 = vmatprep.subr.mxu0 0.0
        %5803 = vmatpush1.msra.mxu0 0.0
        %5804 = vmatprep.subr.mxu0 0.0
        %5805 = vmatpush1.msra.mxu0 0.0
        %5806 = vmatprep.subr.mxu0 0.0
        %5807 = vmatpush1.msra.mxu0 0.0
        %5808 = vmatprep.subr.mxu0 0.0
        %5809 = vmatpush1.msra.mxu0 0.0
        %5810 = vmatprep.subr.mxu0 0.0
        %5811 = vmatpush1.msra.mxu0 0.0
        %5812 = vmatprep.subr.mxu0 0.0
        %5813 = vmatpush1.msra.mxu0 0.0
        %5814 = vmatprep.subr.mxu0 0.0
        %5815 = vmatpush1.msra.mxu0 0.0
        %5816 = vmatprep.subr.mxu0 0.0
        %5817 = vmatpush1.msra.mxu0 0.0
        %5818 = vmatprep.subr.mxu0 0.0
        %5819 = vmatpush1.msra.mxu0 0.0
        %5820 = vmatprep.mubr.f32.mxu0 0.0
        %5821 = vmatmul.mubr.f32.gmra.mrb[0].mxu0 %v5612
        %v5822 = vpop.f32.mrb[0].mxu0
        %v5823 = vadd.f32 0.0, %v5822
        %v5824 = vpop.f32.mrb[0].mxu0
        %v5825 = vadd.f32 0.0, %v5824
        %5826 = vdwg.mxu0
        %5827 = vmatprep.subr.mxu0 %v5601
        %5828 = vmatpush1.msra.mxu0 %v5600
        %5829 = vmatprep.subr.mxu0 0.0
        %5830 = vmatpush1.msra.mxu0 0.0
        %5831 = vmatprep.subr.mxu0 0.0
        %5832 = vmatpush1.msra.mxu0 0.0
        %5833 = vmatprep.subr.mxu0 0.0
        %5834 = vmatpush1.msra.mxu0 0.0
        %5835 = vmatprep.subr.mxu0 0.0
        %5836 = vmatpush1.msra.mxu0 0.0
        %5837 = vmatprep.subr.mxu0 0.0
        %5838 = vmatpush1.msra.mxu0 0.0
        %5839 = vmatprep.subr.mxu0 0.0
        %5840 = vmatpush1.msra.mxu0 0.0
        %5841 = vmatprep.subr.mxu0 0.0
        %5842 = vmatpush1.msra.mxu0 0.0
        %5843 = vmatprep.subr.mxu0 0.0
        %5844 = vmatpush1.msra.mxu0 0.0
        %5845 = vmatprep.subr.mxu0 0.0
        %5846 = vmatpush1.msra.mxu0 0.0
        %5847 = vmatprep.subr.mxu0 0.0
        %5848 = vmatpush1.msra.mxu0 0.0
        %5849 = vmatprep.subr.mxu0 0.0
        %5850 = vmatpush1.msra.mxu0 0.0
        %5851 = vmatprep.subr.mxu0 0.0
        %5852 = vmatpush1.msra.mxu0 0.0
        %5853 = vmatprep.subr.mxu0 0.0
        %5854 = vmatpush1.msra.mxu0 0.0
        %5855 = vmatprep.subr.mxu0 0.0
        %5856 = vmatpush1.msra.mxu0 0.0
        %5857 = vmatprep.subr.mxu0 0.0
        %5858 = vmatpush1.msra.mxu0 0.0
        %5859 = vmatprep.subr.mxu0 0.0
        %5860 = vmatpush1.msra.mxu0 0.0
        %5861 = vmatprep.subr.mxu0 0.0
        %5862 = vmatpush1.msra.mxu0 0.0
        %5863 = vmatprep.subr.mxu0 0.0
        %5864 = vmatpush1.msra.mxu0 0.0
        %5865 = vmatprep.subr.mxu0 0.0
        %5866 = vmatpush1.msra.mxu0 0.0
        %5867 = vmatprep.subr.mxu0 0.0
        %5868 = vmatpush1.msra.mxu0 0.0
        %5869 = vmatprep.subr.mxu0 0.0
        %5870 = vmatpush1.msra.mxu0 0.0
        %5871 = vmatprep.subr.mxu0 0.0
        %5872 = vmatpush1.msra.mxu0 0.0
        %5873 = vmatprep.subr.mxu0 0.0
        %5874 = vmatpush1.msra.mxu0 0.0
        %5875 = vmatprep.subr.mxu0 0.0
        %5876 = vmatpush1.msra.mxu0 0.0
        %5877 = vmatprep.subr.mxu0 0.0
        %5878 = vmatpush1.msra.mxu0 0.0
        %5879 = vmatprep.subr.mxu0 0.0
        %5880 = vmatpush1.msra.mxu0 0.0
        %5881 = vmatprep.subr.mxu0 0.0
        %5882 = vmatpush1.msra.mxu0 0.0
        %5883 = vmatprep.subr.mxu0 0.0
        %5884 = vmatpush1.msra.mxu0 0.0
        %5885 = vmatprep.subr.mxu0 0.0
        %5886 = vmatpush1.msra.mxu0 0.0
        %5887 = vmatprep.subr.mxu0 0.0
        %5888 = vmatpush1.msra.mxu0 0.0
        %5889 = vmatprep.subr.mxu0 0.0
        %5890 = vmatpush1.msra.mxu0 0.0
        %5891 = vmatprep.mubr.f32.mxu0 0.0
        %5892 = vmatmul.mubr.f32.gmra.mrb[0].mxu0 %v5612
        %v5893 = vpop.f32.mrb[0].mxu0
        %v5894 = vadd.f32 0.0, %v5893
        %v5895 = vpop.f32.mrb[0].mxu0
        %v5896 = vadd.f32 0.0, %v5895
        %5897 = vdwg.mxu0
        %5898 = vmatprep.subr.mxu0 0.0
        %5899 = vmatpush1.msra.mxu0 %v5602
        %5900 = vmatprep.subr.mxu0 0.0
        %5901 = vmatpush1.msra.mxu0 0.0
        %5902 = vmatprep.subr.mxu0 0.0
        %5903 = vmatpush1.msra.mxu0 0.0
        %5904 = vmatprep.subr.mxu0 0.0
        %5905 = vmatpush1.msra.mxu0 0.0
        %5906 = vmatprep.subr.mxu0 0.0
        %5907 = vmatpush1.msra.mxu0 0.0
        %5908 = vmatprep.subr.mxu0 0.0
        %5909 = vmatpush1.msra.mxu0 0.0
        %5910 = vmatprep.subr.mxu0 0.0
        %5911 = vmatpush1.msra.mxu0 0.0
        %5912 = vmatprep.subr.mxu0 0.0
        %5913 = vmatpush1.msra.mxu0 0.0
        %5914 = vmatprep.subr.mxu0 0.0
        %5915 = vmatpush1.msra.mxu0 0.0
        %5916 = vmatprep.subr.mxu0 0.0
        %5917 = vmatpush1.msra.mxu0 0.0
        %5918 = vmatprep.subr.mxu0 0.0
        %5919 = vmatpush1.msra.mxu0 0.0
        %5920 = vmatprep.subr.mxu0 0.0
        %5921 = vmatpush1.msra.mxu0 0.0
        %5922 = vmatprep.subr.mxu0 0.0
        %5923 = vmatpush1.msra.mxu0 0.0
        %5924 = vmatprep.subr.mxu0 0.0
        %5925 = vmatpush1.msra.mxu0 0.0
        %5926 = vmatprep.subr.mxu0 0.0
        %5927 = vmatpush1.msra.mxu0 0.0
        %5928 = vmatprep.subr.mxu0 0.0
        %5929 = vmatpush1.msra.mxu0 0.0
        %5930 = vmatprep.subr.mxu0 0.0
        %5931 = vmatpush1.msra.mxu0 0.0
        %5932 = vmatprep.subr.mxu0 0.0
        %5933 = vmatpush1.msra.mxu0 0.0
        %5934 = vmatprep.subr.mxu0 0.0
        %5935 = vmatpush1.msra.mxu0 0.0
        %5936 = vmatprep.subr.mxu0 0.0
        %5937 = vmatpush1.msra.mxu0 0.0
        %5938 = vmatprep.subr.mxu0 0.0
        %5939 = vmatpush1.msra.mxu0 0.0
        %5940 = vmatprep.subr.mxu0 0.0
        %5941 = vmatpush1.msra.mxu0 0.0
        %5942 = vmatprep.subr.mxu0 0.0
        %5943 = vmatpush1.msra.mxu0 0.0
        %5944 = vmatprep.subr.mxu0 0.0
        %5945 = vmatpush1.msra.mxu0 0.0
        %5946 = vmatprep.subr.mxu0 0.0
        %5947 = vmatpush1.msra.mxu0 0.0
        %5948 = vmatprep.subr.mxu0 0.0
        %5949 = vmatpush1.msra.mxu0 0.0
        %5950 = vmatprep.subr.mxu0 0.0
        %5951 = vmatpush1.msra.mxu0 0.0
        %5952 = vmatprep.subr.mxu0 0.0
        %5953 = vmatpush1.msra.mxu0 0.0
        %5954 = vmatprep.subr.mxu0 0.0
        %5955 = vmatpush1.msra.mxu0 0.0
        %5956 = vmatprep.subr.mxu0 0.0
        %5957 = vmatpush1.msra.mxu0 0.0
        %5958 = vmatprep.subr.mxu0 0.0
        %5959 = vmatpush1.msra.mxu0 0.0
        %5960 = vmatprep.subr.mxu0 0.0
        %5961 = vmatpush1.msra.mxu0 0.0
        %5962 = vmatprep.mubr.f32.mxu0 0.0
        %5963 = vmatmul.mubr.f32.gmra.mrb[0].mxu0 %v5612
        %v5964 = vpop.f32.mrb[0].mxu0
        %v5965 = vadd.f32 0.0, %v5964
        %v5966 = vpop.f32.mrb[0].mxu0
        %5967 = vdwg.mxu0
        %v5968 = vadd.f32 %v5562, %v5681
        %v5969 = vadd.f32 %v5563, %v5683
        %v5970 = vadd.f32 %v5564, %v5752
        %v5971 = vadd.f32 %v5565, %v5754
        %v5972 = vadd.f32 %v5566, %v5823
        %v5973 = vadd.f32 %v5567, %v5825
        %v5974 = vadd.f32 %v5568, %v5894
        %v5975 = vadd.f32 %v5569, %v5896
        %v5976 = vadd.f32 %v5570, %v5965
        %5977 = vrot.lane.b32.xlu0 %v338, 16
        %v5978 = vpop.permute.xlu0 %5977
        %5979 = vrot.lane.b32.xlu0 %v327, 78
        %v5980 = vpop.permute.xlu0 %5979
        %5981 = vrot.lane.b32.xlu0 %v328, 78
        %v5982 = vpop.permute.xlu0 %5981
        %5983 = vrot.lane.b32.xlu0 %v329, 78
        %v5984 = vpop.permute.xlu0 %5983
        %5985 = vrot.lane.b32.xlu0 %v330, 78
        %v5986 = vpop.permute.xlu0 %5985
        %5987 = vrot.lane.b32.xlu0 %v331, 78
        %v5988 = vpop.permute.xlu0 %5987
        %5989 = vrot.lane.b32.xlu0 %v332, 78
        %v5990 = vpop.permute.xlu0 %5989
        %5991 = vrot.lane.b32.xlu0 %v333, 78
        %v5992 = vpop.permute.xlu0 %5991
        %5993 = vrot.lane.b32.xlu0 %v334, 78
        %v5994 = vpop.permute.xlu0 %5993
        %5995 = vrot.lane.b32.xlu0 %v335, 78
        %v5996 = vpop.permute.xlu0 %5995
        %5997 = vrot.lane.b32.xlu0 %v336, 78
        %v5998 = vpop.permute.xlu0 %5997
        %vm5999 = vcmask 637952
        %v6000 = vsel %vm5999, %v5980, %v5982
        %v6001 = vsel %vm5999, %v5982, %v5984
        %v6002 = vsel %vm5999, %v5984, %v5986
        %v6003 = vsel %vm5999, %v5986, %v5988
        %v6004 = vsel %vm5999, %v5988, %v5990
        %v6005 = vsel %vm5999, %v5990, %v5992
        %v6006 = vsel %vm5999, %v5992, %v5994
        %v6007 = vsel %vm5999, %v5994, %v5996
        %v6008 = vsel %vm5999, %v5996, %v5998
        %v6018 = vsel %vm392, %v5978, 0
        %6020 = vmatprep.subr.mxu0 %v6001
        %6021 = vmatpush1.msra.mxu0 %v6000
        %6022 = vmatprep.subr.mxu0 0.0
        %6023 = vmatpush1.msra.mxu0 0.0
        %6024 = vmatprep.subr.mxu0 0.0
        %6025 = vmatpush1.msra.mxu0 0.0
        %6026 = vmatprep.subr.mxu0 0.0
        %6027 = vmatpush1.msra.mxu0 0.0
        %6028 = vmatprep.subr.mxu0 0.0
        %6029 = vmatpush1.msra.mxu0 0.0
        %6030 = vmatprep.subr.mxu0 0.0
        %6031 = vmatpush1.msra.mxu0 0.0
        %6032 = vmatprep.subr.mxu0 0.0
        %6033 = vmatpush1.msra.mxu0 0.0
        %6034 = vmatprep.subr.mxu0 0.0
        %6035 = vmatpush1.msra.mxu0 0.0
        %6036 = vmatprep.subr.mxu0 0.0
        %6037 = vmatpush1.msra.mxu0 0.0
        %6038 = vmatprep.subr.mxu0 0.0
        %6039 = vmatpush1.msra.mxu0 0.0
        %6040 = vmatprep.subr.mxu0 0.0
        %6041 = vmatpush1.msra.mxu0 0.0
        %6042 = vmatprep.subr.mxu0 0.0
        %6043 = vmatpush1.msra.mxu0 0.0
        %6044 = vmatprep.subr.mxu0 0.0
        %6045 = vmatpush1.msra.mxu0 0.0
        %6046 = vmatprep.subr.mxu0 0.0
        %6047 = vmatpush1.msra.mxu0 0.0
        %6048 = vmatprep.subr.mxu0 0.0
        %6049 = vmatpush1.msra.mxu0 0.0
        %6050 = vmatprep.subr.mxu0 0.0
        %6051 = vmatpush1.msra.mxu0 0.0
        %6052 = vmatprep.subr.mxu0 0.0
        %6053 = vmatpush1.msra.mxu0 0.0
        %6054 = vmatprep.subr.mxu0 0.0
        %6055 = vmatpush1.msra.mxu0 0.0
        %6056 = vmatprep.subr.mxu0 0.0
        %6057 = vmatpush1.msra.mxu0 0.0
        %6058 = vmatprep.subr.mxu0 0.0
        %6059 = vmatpush1.msra.mxu0 0.0
        %6060 = vmatprep.subr.mxu0 0.0
        %6061 = vmatpush1.msra.mxu0 0.0
        %6062 = vmatprep.subr.mxu0 0.0
        %6063 = vmatpush1.msra.mxu0 0.0
        %6064 = vmatprep.subr.mxu0 0.0
        %6065 = vmatpush1.msra.mxu0 0.0
        %6066 = vmatprep.subr.mxu0 0.0
        %6067 = vmatpush1.msra.mxu0 0.0
        %6068 = vmatprep.subr.mxu0 0.0
        %6069 = vmatpush1.msra.mxu0 0.0
        %6070 = vmatprep.subr.mxu0 0.0
        %6071 = vmatpush1.msra.mxu0 0.0
        %6072 = vmatprep.subr.mxu0 0.0
        %6073 = vmatpush1.msra.mxu0 0.0
        %6074 = vmatprep.subr.mxu0 0.0
        %6075 = vmatpush1.msra.mxu0 0.0
        %6076 = vmatprep.subr.mxu0 0.0
        %6077 = vmatpush1.msra.mxu0 0.0
        %6078 = vmatprep.subr.mxu0 0.0
        %6079 = vmatpush1.msra.mxu0 0.0
        %6080 = vmatprep.subr.mxu0 0.0
        %6081 = vmatpush1.msra.mxu0 0.0
        %6082 = vmatprep.subr.mxu0 0.0
        %6083 = vmatpush1.msra.mxu0 0.0
        %6084 = vmatprep.mubr.f32.mxu0 0.0
        %6085 = vmatmul.mubr.f32.gmra.mrb[0].mxu0 %v6018
        %v6086 = vpop.f32.mrb[0].mxu0
        %v6087 = vadd.f32 0.0, %v6086
        %v6088 = vpop.f32.mrb[0].mxu0
        %v6089 = vadd.f32 0.0, %v6088
        %6090 = vdwg.mxu0
        %6091 = vmatprep.subr.mxu0 %v6003
        %6092 = vmatpush1.msra.mxu0 %v6002
        %6093 = vmatprep.subr.mxu0 0.0
        %6094 = vmatpush1.msra.mxu0 0.0
        %6095 = vmatprep.subr.mxu0 0.0
        %6096 = vmatpush1.msra.mxu0 0.0
        %6097 = vmatprep.subr.mxu0 0.0
        %6098 = vmatpush1.msra.mxu0 0.0
        %6099 = vmatprep.subr.mxu0 0.0
        %6100 = vmatpush1.msra.mxu0 0.0
        %6101 = vmatprep.subr.mxu0 0.0
        %6102 = vmatpush1.msra.mxu0 0.0
        %6103 = vmatprep.subr.mxu0 0.0
        %6104 = vmatpush1.msra.mxu0 0.0
        %6105 = vmatprep.subr.mxu0 0.0
        %6106 = vmatpush1.msra.mxu0 0.0
        %6107 = vmatprep.subr.mxu0 0.0
        %6108 = vmatpush1.msra.mxu0 0.0
        %6109 = vmatprep.subr.mxu0 0.0
        %6110 = vmatpush1.msra.mxu0 0.0
        %6111 = vmatprep.subr.mxu0 0.0
        %6112 = vmatpush1.msra.mxu0 0.0
        %6113 = vmatprep.subr.mxu0 0.0
        %6114 = vmatpush1.msra.mxu0 0.0
        %6115 = vmatprep.subr.mxu0 0.0
        %6116 = vmatpush1.msra.mxu0 0.0
        %6117 = vmatprep.subr.mxu0 0.0
        %6118 = vmatpush1.msra.mxu0 0.0
        %6119 = vmatprep.subr.mxu0 0.0
        %6120 = vmatpush1.msra.mxu0 0.0
        %6121 = vmatprep.subr.mxu0 0.0
        %6122 = vmatpush1.msra.mxu0 0.0
        %6123 = vmatprep.subr.mxu0 0.0
        %6124 = vmatpush1.msra.mxu0 0.0
        %6125 = vmatprep.subr.mxu0 0.0
        %6126 = vmatpush1.msra.mxu0 0.0
        %6127 = vmatprep.subr.mxu0 0.0
        %6128 = vmatpush1.msra.mxu0 0.0
        %6129 = vmatprep.subr.mxu0 0.0
        %6130 = vmatpush1.msra.mxu0 0.0
        %6131 = vmatprep.subr.mxu0 0.0
        %6132 = vmatpush1.msra.mxu0 0.0
        %6133 = vmatprep.subr.mxu0 0.0
        %6134 = vmatpush1.msra.mxu0 0.0
        %6135 = vmatprep.subr.mxu0 0.0
        %6136 = vmatpush1.msra.mxu0 0.0
        %6137 = vmatprep.subr.mxu0 0.0
        %6138 = vmatpush1.msra.mxu0 0.0
        %6139 = vmatprep.subr.mxu0 0.0
        %6140 = vmatpush1.msra.mxu0 0.0
        %6141 = vmatprep.subr.mxu0 0.0
        %6142 = vmatpush1.msra.mxu0 0.0
        %6143 = vmatprep.subr.mxu0 0.0
        %6144 = vmatpush1.msra.mxu0 0.0
        %6145 = vmatprep.subr.mxu0 0.0
        %6146 = vmatpush1.msra.mxu0 0.0
        %6147 = vmatprep.subr.mxu0 0.0
        %6148 = vmatpush1.msra.mxu0 0.0
        %6149 = vmatprep.subr.mxu0 0.0
        %6150 = vmatpush1.msra.mxu0 0.0
        %6151 = vmatprep.subr.mxu0 0.0
        %6152 = vmatpush1.msra.mxu0 0.0
        %6153 = vmatprep.subr.mxu0 0.0
        %6154 = vmatpush1.msra.mxu0 0.0
        %6155 = vmatprep.mubr.f32.mxu0 0.0
        %6156 = vmatmul.mubr.f32.gmra.mrb[0].mxu0 %v6018
        %v6157 = vpop.f32.mrb[0].mxu0
        %v6158 = vadd.f32 0.0, %v6157
        %v6159 = vpop.f32.mrb[0].mxu0
        %v6160 = vadd.f32 0.0, %v6159
        %6161 = vdwg.mxu0
        %6162 = vmatprep.subr.mxu0 %v6005
        %6163 = vmatpush1.msra.mxu0 %v6004
        %6164 = vmatprep.subr.mxu0 0.0
        %6165 = vmatpush1.msra.mxu0 0.0
        %6166 = vmatprep.subr.mxu0 0.0
        %6167 = vmatpush1.msra.mxu0 0.0
        %6168 = vmatprep.subr.mxu0 0.0
        %6169 = vmatpush1.msra.mxu0 0.0
        %6170 = vmatprep.subr.mxu0 0.0
        %6171 = vmatpush1.msra.mxu0 0.0
        %6172 = vmatprep.subr.mxu0 0.0
        %6173 = vmatpush1.msra.mxu0 0.0
        %6174 = vmatprep.subr.mxu0 0.0
        %6175 = vmatpush1.msra.mxu0 0.0
        %6176 = vmatprep.subr.mxu0 0.0
        %6177 = vmatpush1.msra.mxu0 0.0
        %6178 = vmatprep.subr.mxu0 0.0
        %6179 = vmatpush1.msra.mxu0 0.0
        %6180 = vmatprep.subr.mxu0 0.0
        %6181 = vmatpush1.msra.mxu0 0.0
        %6182 = vmatprep.subr.mxu0 0.0
        %6183 = vmatpush1.msra.mxu0 0.0
        %6184 = vmatprep.subr.mxu0 0.0
        %6185 = vmatpush1.msra.mxu0 0.0
        %6186 = vmatprep.subr.mxu0 0.0
        %6187 = vmatpush1.msra.mxu0 0.0
        %6188 = vmatprep.subr.mxu0 0.0
        %6189 = vmatpush1.msra.mxu0 0.0
        %6190 = vmatprep.subr.mxu0 0.0
        %6191 = vmatpush1.msra.mxu0 0.0
        %6192 = vmatprep.subr.mxu0 0.0
        %6193 = vmatpush1.msra.mxu0 0.0
        %6194 = vmatprep.subr.mxu0 0.0
        %6195 = vmatpush1.msra.mxu0 0.0
        %6196 = vmatprep.subr.mxu0 0.0
        %6197 = vmatpush1.msra.mxu0 0.0
        %6198 = vmatprep.subr.mxu0 0.0
        %6199 = vmatpush1.msra.mxu0 0.0
        %6200 = vmatprep.subr.mxu0 0.0
        %6201 = vmatpush1.msra.mxu0 0.0
        %6202 = vmatprep.subr.mxu0 0.0
        %6203 = vmatpush1.msra.mxu0 0.0
        %6204 = vmatprep.subr.mxu0 0.0
        %6205 = vmatpush1.msra.mxu0 0.0
        %6206 = vmatprep.subr.mxu0 0.0
        %6207 = vmatpush1.msra.mxu0 0.0
        %6208 = vmatprep.subr.mxu0 0.0
        %6209 = vmatpush1.msra.mxu0 0.0
        %6210 = vmatprep.subr.mxu0 0.0
        %6211 = vmatpush1.msra.mxu0 0.0
        %6212 = vmatprep.subr.mxu0 0.0
        %6213 = vmatpush1.msra.mxu0 0.0
        %6214 = vmatprep.subr.mxu0 0.0
        %6215 = vmatpush1.msra.mxu0 0.0
        %6216 = vmatprep.subr.mxu0 0.0
        %6217 = vmatpush1.msra.mxu0 0.0
        %6218 = vmatprep.subr.mxu0 0.0
        %6219 = vmatpush1.msra.mxu0 0.0
        %6220 = vmatprep.subr.mxu0 0.0
        %6221 = vmatpush1.msra.mxu0 0.0
        %6222 = vmatprep.subr.mxu0 0.0
        %6223 = vmatpush1.msra.mxu0 0.0
        %6224 = vmatprep.subr.mxu0 0.0
        %6225 = vmatpush1.msra.mxu0 0.0
        %6226 = vmatprep.mubr.f32.mxu0 0.0
        %6227 = vmatmul.mubr.f32.gmra.mrb[0].mxu0 %v6018
        %v6228 = vpop.f32.mrb[0].mxu0
        %v6229 = vadd.f32 0.0, %v6228
        %v6230 = vpop.f32.mrb[0].mxu0
        %v6231 = vadd.f32 0.0, %v6230
        %6232 = vdwg.mxu0
        %6233 = vmatprep.subr.mxu0 %v6007
        %6234 = vmatpush1.msra.mxu0 %v6006
        %6235 = vmatprep.subr.mxu0 0.0
        %6236 = vmatpush1.msra.mxu0 0.0
        %6237 = vmatprep.subr.mxu0 0.0
        %6238 = vmatpush1.msra.mxu0 0.0
        %6239 = vmatprep.subr.mxu0 0.0
        %6240 = vmatpush1.msra.mxu0 0.0
        %6241 = vmatprep.subr.mxu0 0.0
        %6242 = vmatpush1.msra.mxu0 0.0
        %6243 = vmatprep.subr.mxu0 0.0
        %6244 = vmatpush1.msra.mxu0 0.0
        %6245 = vmatprep.subr.mxu0 0.0
        %6246 = vmatpush1.msra.mxu0 0.0
        %6247 = vmatprep.subr.mxu0 0.0
        %6248 = vmatpush1.msra.mxu0 0.0
        %6249 = vmatprep.subr.mxu0 0.0
        %6250 = vmatpush1.msra.mxu0 0.0
        %6251 = vmatprep.subr.mxu0 0.0
        %6252 = vmatpush1.msra.mxu0 0.0
        %6253 = vmatprep.subr.mxu0 0.0
        %6254 = vmatpush1.msra.mxu0 0.0
        %6255 = vmatprep.subr.mxu0 0.0
        %6256 = vmatpush1.msra.mxu0 0.0
        %6257 = vmatprep.subr.mxu0 0.0
        %6258 = vmatpush1.msra.mxu0 0.0
        %6259 = vmatprep.subr.mxu0 0.0
        %6260 = vmatpush1.msra.mxu0 0.0
        %6261 = vmatprep.subr.mxu0 0.0
        %6262 = vmatpush1.msra.mxu0 0.0
        %6263 = vmatprep.subr.mxu0 0.0
        %6264 = vmatpush1.msra.mxu0 0.0
        %6265 = vmatprep.subr.mxu0 0.0
        %6266 = vmatpush1.msra.mxu0 0.0
        %6267 = vmatprep.subr.mxu0 0.0
        %6268 = vmatpush1.msra.mxu0 0.0
        %6269 = vmatprep.subr.mxu0 0.0
        %6270 = vmatpush1.msra.mxu0 0.0
        %6271 = vmatprep.subr.mxu0 0.0
        %6272 = vmatpush1.msra.mxu0 0.0
        %6273 = vmatprep.subr.mxu0 0.0
        %6274 = vmatpush1.msra.mxu0 0.0
        %6275 = vmatprep.subr.mxu0 0.0
        %6276 = vmatpush1.msra.mxu0 0.0
        %6277 = vmatprep.subr.mxu0 0.0
        %6278 = vmatpush1.msra.mxu0 0.0
        %6279 = vmatprep.subr.mxu0 0.0
        %6280 = vmatpush1.msra.mxu0 0.0
        %6281 = vmatprep.subr.mxu0 0.0
        %6282 = vmatpush1.msra.mxu0 0.0
        %6283 = vmatprep.subr.mxu0 0.0
        %6284 = vmatpush1.msra.mxu0 0.0
        %6285 = vmatprep.subr.mxu0 0.0
        %6286 = vmatpush1.msra.mxu0 0.0
        %6287 = vmatprep.subr.mxu0 0.0
        %6288 = vmatpush1.msra.mxu0 0.0
        %6289 = vmatprep.subr.mxu0 0.0
        %6290 = vmatpush1.msra.mxu0 0.0
        %6291 = vmatprep.subr.mxu0 0.0
        %6292 = vmatpush1.msra.mxu0 0.0
        %6293 = vmatprep.subr.mxu0 0.0
        %6294 = vmatpush1.msra.mxu0 0.0
        %6295 = vmatprep.subr.mxu0 0.0
        %6296 = vmatpush1.msra.mxu0 0.0
        %6297 = vmatprep.mubr.f32.mxu0 0.0
        %6298 = vmatmul.mubr.f32.gmra.mrb[0].mxu0 %v6018
        %v6299 = vpop.f32.mrb[0].mxu0
        %v6300 = vadd.f32 0.0, %v6299
        %v6301 = vpop.f32.mrb[0].mxu0
        %v6302 = vadd.f32 0.0, %v6301
        %6303 = vdwg.mxu0
        %6304 = vmatprep.subr.mxu0 0.0
        %6305 = vmatpush1.msra.mxu0 %v6008
        %6306 = vmatprep.subr.mxu0 0.0
        %6307 = vmatpush1.msra.mxu0 0.0
        %6308 = vmatprep.subr.mxu0 0.0
        %6309 = vmatpush1.msra.mxu0 0.0
        %6310 = vmatprep.subr.mxu0 0.0
        %6311 = vmatpush1.msra.mxu0 0.0
        %6312 = vmatprep.subr.mxu0 0.0
        %6313 = vmatpush1.msra.mxu0 0.0
        %6314 = vmatprep.subr.mxu0 0.0
        %6315 = vmatpush1.msra.mxu0 0.0
        %6316 = vmatprep.subr.mxu0 0.0
        %6317 = vmatpush1.msra.mxu0 0.0
        %6318 = vmatprep.subr.mxu0 0.0
        %6319 = vmatpush1.msra.mxu0 0.0
        %6320 = vmatprep.subr.mxu0 0.0
        %6321 = vmatpush1.msra.mxu0 0.0
        %6322 = vmatprep.subr.mxu0 0.0
        %6323 = vmatpush1.msra.mxu0 0.0
        %6324 = vmatprep.subr.mxu0 0.0
        %6325 = vmatpush1.msra.mxu0 0.0
        %6326 = vmatprep.subr.mxu0 0.0
        %6327 = vmatpush1.msra.mxu0 0.0
        %6328 = vmatprep.subr.mxu0 0.0
        %6329 = vmatpush1.msra.mxu0 0.0
        %6330 = vmatprep.subr.mxu0 0.0
        %6331 = vmatpush1.msra.mxu0 0.0
        %6332 = vmatprep.subr.mxu0 0.0
        %6333 = vmatpush1.msra.mxu0 0.0
        %6334 = vmatprep.subr.mxu0 0.0
        %6335 = vmatpush1.msra.mxu0 0.0
        %6336 = vmatprep.subr.mxu0 0.0
        %6337 = vmatpush1.msra.mxu0 0.0
        %6338 = vmatprep.subr.mxu0 0.0
        %6339 = vmatpush1.msra.mxu0 0.0
        %6340 = vmatprep.subr.mxu0 0.0
        %6341 = vmatpush1.msra.mxu0 0.0
        %6342 = vmatprep.subr.mxu0 0.0
        %6343 = vmatpush1.msra.mxu0 0.0
        %6344 = vmatprep.subr.mxu0 0.0
        %6345 = vmatpush1.msra.mxu0 0.0
        %6346 = vmatprep.subr.mxu0 0.0
        %6347 = vmatpush1.msra.mxu0 0.0
        %6348 = vmatprep.subr.mxu0 0.0
        %6349 = vmatpush1.msra.mxu0 0.0
        %6350 = vmatprep.subr.mxu0 0.0
        %6351 = vmatpush1.msra.mxu0 0.0
        %6352 = vmatprep.subr.mxu0 0.0
        %6353 = vmatpush1.msra.mxu0 0.0
        %6354 = vmatprep.subr.mxu0 0.0
        %6355 = vmatpush1.msra.mxu0 0.0
        %6356 = vmatprep.subr.mxu0 0.0
        %6357 = vmatpush1.msra.mxu0 0.0
        %6358 = vmatprep.subr.mxu0 0.0
        %6359 = vmatpush1.msra.mxu0 0.0
        %6360 = vmatprep.subr.mxu0 0.0
        %6361 = vmatpush1.msra.mxu0 0.0
        %6362 = vmatprep.subr.mxu0 0.0
        %6363 = vmatpush1.msra.mxu0 0.0
        %6364 = vmatprep.subr.mxu0 0.0
        %6365 = vmatpush1.msra.mxu0 0.0
        %6366 = vmatprep.subr.mxu0 0.0
        %6367 = vmatpush1.msra.mxu0 0.0
        %6368 = vmatprep.mubr.f32.mxu0 0.0
        %6369 = vmatmul.mubr.f32.gmra.mrb[0].mxu0 %v6018
        %v6370 = vpop.f32.mrb[0].mxu0
        %v6371 = vadd.f32 0.0, %v6370
        %v6372 = vpop.f32.mrb[0].mxu0
        %6373 = vdwg.mxu0
        %v6374 = vadd.f32 %v5968, %v6087
        %v6375 = vadd.f32 %v5969, %v6089
        %v6376 = vadd.f32 %v5970, %v6158
        %v6377 = vadd.f32 %v5971, %v6160
        %v6378 = vadd.f32 %v5972, %v6229
        %v6379 = vadd.f32 %v5973, %v6231
        %v6380 = vadd.f32 %v5974, %v6300
        %v6381 = vadd.f32 %v5975, %v6302
        %v6382 = vadd.f32 %v5976, %v6371
        %6383 = vrot.lane.b32.xlu0 %v338, 8
        %v6384 = vpop.permute.xlu0 %6383
        %6385 = vrot.lane.b32.xlu0 %v327, 76
        %v6386 = vpop.permute.xlu0 %6385
        %6387 = vrot.lane.b32.xlu0 %v328, 76
        %v6388 = vpop.permute.xlu0 %6387
        %6389 = vrot.lane.b32.xlu0 %v329, 76
        %v6390 = vpop.permute.xlu0 %6389
        %6391 = vrot.lane.b32.xlu0 %v330, 76
        %v6392 = vpop.permute.xlu0 %6391
        %6393 = vrot.lane.b32.xlu0 %v331, 76
        %v6394 = vpop.permute.xlu0 %6393
        %6395 = vrot.lane.b32.xlu0 %v332, 76
        %v6396 = vpop.permute.xlu0 %6395
        %6397 = vrot.lane.b32.xlu0 %v333, 76
        %v6398 = vpop.permute.xlu0 %6397
        %6399 = vrot.lane.b32.xlu0 %v334, 76
        %v6400 = vpop.permute.xlu0 %6399
        %6401 = vrot.lane.b32.xlu0 %v335, 76
        %v6402 = vpop.permute.xlu0 %6401
        %6403 = vrot.lane.b32.xlu0 %v336, 76
        %v6404 = vpop.permute.xlu0 %6403
        %vm6405 = vcmask 621568
        %v6406 = vsel %vm6405, %v6386, %v6388
        %v6407 = vsel %vm6405, %v6388, %v6390
        %v6408 = vsel %vm6405, %v6390, %v6392
        %v6409 = vsel %vm6405, %v6392, %v6394
        %v6410 = vsel %vm6405, %v6394, %v6396
        %v6411 = vsel %vm6405, %v6396, %v6398
        %v6412 = vsel %vm6405, %v6398, %v6400
        %v6413 = vsel %vm6405, %v6400, %v6402
        %v6414 = vsel %vm6405, %v6402, %v6404
        %v6424 = vsel %vm392, %v6384, 0
        %6426 = vmatprep.subr.mxu0 %v6407
        %6427 = vmatpush1.msra.mxu0 %v6406
        %6428 = vmatprep.subr.mxu0 0.0
        %6429 = vmatpush1.msra.mxu0 0.0
        %6430 = vmatprep.subr.mxu0 0.0
        %6431 = vmatpush1.msra.mxu0 0.0
        %6432 = vmatprep.subr.mxu0 0.0
        %6433 = vmatpush1.msra.mxu0 0.0
        %6434 = vmatprep.subr.mxu0 0.0
        %6435 = vmatpush1.msra.mxu0 0.0
        %6436 = vmatprep.subr.mxu0 0.0
        %6437 = vmatpush1.msra.mxu0 0.0
        %6438 = vmatprep.subr.mxu0 0.0
        %6439 = vmatpush1.msra.mxu0 0.0
        %6440 = vmatprep.subr.mxu0 0.0
        %6441 = vmatpush1.msra.mxu0 0.0
        %6442 = vmatprep.subr.mxu0 0.0
        %6443 = vmatpush1.msra.mxu0 0.0
        %6444 = vmatprep.subr.mxu0 0.0
        %6445 = vmatpush1.msra.mxu0 0.0
        %6446 = vmatprep.subr.mxu0 0.0
        %6447 = vmatpush1.msra.mxu0 0.0
        %6448 = vmatprep.subr.mxu0 0.0
        %6449 = vmatpush1.msra.mxu0 0.0
        %6450 = vmatprep.subr.mxu0 0.0
        %6451 = vmatpush1.msra.mxu0 0.0
        %6452 = vmatprep.subr.mxu0 0.0
        %6453 = vmatpush1.msra.mxu0 0.0
        %6454 = vmatprep.subr.mxu0 0.0
        %6455 = vmatpush1.msra.mxu0 0.0
        %6456 = vmatprep.subr.mxu0 0.0
        %6457 = vmatpush1.msra.mxu0 0.0
        %6458 = vmatprep.subr.mxu0 0.0
        %6459 = vmatpush1.msra.mxu0 0.0
        %6460 = vmatprep.subr.mxu0 0.0
        %6461 = vmatpush1.msra.mxu0 0.0
        %6462 = vmatprep.subr.mxu0 0.0
        %6463 = vmatpush1.msra.mxu0 0.0
        %6464 = vmatprep.subr.mxu0 0.0
        %6465 = vmatpush1.msra.mxu0 0.0
        %6466 = vmatprep.subr.mxu0 0.0
        %6467 = vmatpush1.msra.mxu0 0.0
        %6468 = vmatprep.subr.mxu0 0.0
        %6469 = vmatpush1.msra.mxu0 0.0
        %6470 = vmatprep.subr.mxu0 0.0
        %6471 = vmatpush1.msra.mxu0 0.0
        %6472 = vmatprep.subr.mxu0 0.0
        %6473 = vmatpush1.msra.mxu0 0.0
        %6474 = vmatprep.subr.mxu0 0.0
        %6475 = vmatpush1.msra.mxu0 0.0
        %6476 = vmatprep.subr.mxu0 0.0
        %6477 = vmatpush1.msra.mxu0 0.0
        %6478 = vmatprep.subr.mxu0 0.0
        %6479 = vmatpush1.msra.mxu0 0.0
        %6480 = vmatprep.subr.mxu0 0.0
        %6481 = vmatpush1.msra.mxu0 0.0
        %6482 = vmatprep.subr.mxu0 0.0
        %6483 = vmatpush1.msra.mxu0 0.0
        %6484 = vmatprep.subr.mxu0 0.0
        %6485 = vmatpush1.msra.mxu0 0.0
        %6486 = vmatprep.subr.mxu0 0.0
        %6487 = vmatpush1.msra.mxu0 0.0
        %6488 = vmatprep.subr.mxu0 0.0
        %6489 = vmatpush1.msra.mxu0 0.0
        %6490 = vmatprep.mubr.f32.mxu0 0.0
        %6491 = vmatmul.mubr.f32.gmra.mrb[0].mxu0 %v6424
        %v6492 = vpop.f32.mrb[0].mxu0
        %v6493 = vadd.f32 0.0, %v6492
        %v6494 = vpop.f32.mrb[0].mxu0
        %v6495 = vadd.f32 0.0, %v6494
        %6496 = vdwg.mxu0
        %6497 = vmatprep.subr.mxu0 %v6409
        %6498 = vmatpush1.msra.mxu0 %v6408
        %6499 = vmatprep.subr.mxu0 0.0
        %6500 = vmatpush1.msra.mxu0 0.0
        %6501 = vmatprep.subr.mxu0 0.0
        %6502 = vmatpush1.msra.mxu0 0.0
        %6503 = vmatprep.subr.mxu0 0.0
        %6504 = vmatpush1.msra.mxu0 0.0
        %6505 = vmatprep.subr.mxu0 0.0
        %6506 = vmatpush1.msra.mxu0 0.0
        %6507 = vmatprep.subr.mxu0 0.0
        %6508 = vmatpush1.msra.mxu0 0.0
        %6509 = vmatprep.subr.mxu0 0.0
        %6510 = vmatpush1.msra.mxu0 0.0
        %6511 = vmatprep.subr.mxu0 0.0
        %6512 = vmatpush1.msra.mxu0 0.0
        %6513 = vmatprep.subr.mxu0 0.0
        %6514 = vmatpush1.msra.mxu0 0.0
        %6515 = vmatprep.subr.mxu0 0.0
        %6516 = vmatpush1.msra.mxu0 0.0
        %6517 = vmatprep.subr.mxu0 0.0
        %6518 = vmatpush1.msra.mxu0 0.0
        %6519 = vmatprep.subr.mxu0 0.0
        %6520 = vmatpush1.msra.mxu0 0.0
        %6521 = vmatprep.subr.mxu0 0.0
        %6522 = vmatpush1.msra.mxu0 0.0
        %6523 = vmatprep.subr.mxu0 0.0
        %6524 = vmatpush1.msra.mxu0 0.0
        %6525 = vmatprep.subr.mxu0 0.0
        %6526 = vmatpush1.msra.mxu0 0.0
        %6527 = vmatprep.subr.mxu0 0.0
        %6528 = vmatpush1.msra.mxu0 0.0
        %6529 = vmatprep.subr.mxu0 0.0
        %6530 = vmatpush1.msra.mxu0 0.0
        %6531 = vmatprep.subr.mxu0 0.0
        %6532 = vmatpush1.msra.mxu0 0.0
        %6533 = vmatprep.subr.mxu0 0.0
        %6534 = vmatpush1.msra.mxu0 0.0
        %6535 = vmatprep.subr.mxu0 0.0
        %6536 = vmatpush1.msra.mxu0 0.0
        %6537 = vmatprep.subr.mxu0 0.0
        %6538 = vmatpush1.msra.mxu0 0.0
        %6539 = vmatprep.subr.mxu0 0.0
        %6540 = vmatpush1.msra.mxu0 0.0
        %6541 = vmatprep.subr.mxu0 0.0
        %6542 = vmatpush1.msra.mxu0 0.0
        %6543 = vmatprep.subr.mxu0 0.0
        %6544 = vmatpush1.msra.mxu0 0.0
        %6545 = vmatprep.subr.mxu0 0.0
        %6546 = vmatpush1.msra.mxu0 0.0
        %6547 = vmatprep.subr.mxu0 0.0
        %6548 = vmatpush1.msra.mxu0 0.0
        %6549 = vmatprep.subr.mxu0 0.0
        %6550 = vmatpush1.msra.mxu0 0.0
        %6551 = vmatprep.subr.mxu0 0.0
        %6552 = vmatpush1.msra.mxu0 0.0
        %6553 = vmatprep.subr.mxu0 0.0
        %6554 = vmatpush1.msra.mxu0 0.0
        %6555 = vmatprep.subr.mxu0 0.0
        %6556 = vmatpush1.msra.mxu0 0.0
        %6557 = vmatprep.subr.mxu0 0.0
        %6558 = vmatpush1.msra.mxu0 0.0
        %6559 = vmatprep.subr.mxu0 0.0
        %6560 = vmatpush1.msra.mxu0 0.0
        %6561 = vmatprep.mubr.f32.mxu0 0.0
        %6562 = vmatmul.mubr.f32.gmra.mrb[0].mxu0 %v6424
        %v6563 = vpop.f32.mrb[0].mxu0
        %v6564 = vadd.f32 0.0, %v6563
        %v6565 = vpop.f32.mrb[0].mxu0
        %v6566 = vadd.f32 0.0, %v6565
        %6567 = vdwg.mxu0
        %6568 = vmatprep.subr.mxu0 %v6411
        %6569 = vmatpush1.msra.mxu0 %v6410
        %6570 = vmatprep.subr.mxu0 0.0
        %6571 = vmatpush1.msra.mxu0 0.0
        %6572 = vmatprep.subr.mxu0 0.0
        %6573 = vmatpush1.msra.mxu0 0.0
        %6574 = vmatprep.subr.mxu0 0.0
        %6575 = vmatpush1.msra.mxu0 0.0
        %6576 = vmatprep.subr.mxu0 0.0
        %6577 = vmatpush1.msra.mxu0 0.0
        %6578 = vmatprep.subr.mxu0 0.0
        %6579 = vmatpush1.msra.mxu0 0.0
        %6580 = vmatprep.subr.mxu0 0.0
        %6581 = vmatpush1.msra.mxu0 0.0
        %6582 = vmatprep.subr.mxu0 0.0
        %6583 = vmatpush1.msra.mxu0 0.0
        %6584 = vmatprep.subr.mxu0 0.0
        %6585 = vmatpush1.msra.mxu0 0.0
        %6586 = vmatprep.subr.mxu0 0.0
        %6587 = vmatpush1.msra.mxu0 0.0
        %6588 = vmatprep.subr.mxu0 0.0
        %6589 = vmatpush1.msra.mxu0 0.0
        %6590 = vmatprep.subr.mxu0 0.0
        %6591 = vmatpush1.msra.mxu0 0.0
        %6592 = vmatprep.subr.mxu0 0.0
        %6593 = vmatpush1.msra.mxu0 0.0
        %6594 = vmatprep.subr.mxu0 0.0
        %6595 = vmatpush1.msra.mxu0 0.0
        %6596 = vmatprep.subr.mxu0 0.0
        %6597 = vmatpush1.msra.mxu0 0.0
        %6598 = vmatprep.subr.mxu0 0.0
        %6599 = vmatpush1.msra.mxu0 0.0
        %6600 = vmatprep.subr.mxu0 0.0
        %6601 = vmatpush1.msra.mxu0 0.0
        %6602 = vmatprep.subr.mxu0 0.0
        %6603 = vmatpush1.msra.mxu0 0.0
        %6604 = vmatprep.subr.mxu0 0.0
        %6605 = vmatpush1.msra.mxu0 0.0
        %6606 = vmatprep.subr.mxu0 0.0
        %6607 = vmatpush1.msra.mxu0 0.0
        %6608 = vmatprep.subr.mxu0 0.0
        %6609 = vmatpush1.msra.mxu0 0.0
        %6610 = vmatprep.subr.mxu0 0.0
        %6611 = vmatpush1.msra.mxu0 0.0
        %6612 = vmatprep.subr.mxu0 0.0
        %6613 = vmatpush1.msra.mxu0 0.0
        %6614 = vmatprep.subr.mxu0 0.0
        %6615 = vmatpush1.msra.mxu0 0.0
        %6616 = vmatprep.subr.mxu0 0.0
        %6617 = vmatpush1.msra.mxu0 0.0
        %6618 = vmatprep.subr.mxu0 0.0
        %6619 = vmatpush1.msra.mxu0 0.0
        %6620 = vmatprep.subr.mxu0 0.0
        %6621 = vmatpush1.msra.mxu0 0.0
        %6622 = vmatprep.subr.mxu0 0.0
        %6623 = vmatpush1.msra.mxu0 0.0
        %6624 = vmatprep.subr.mxu0 0.0
        %6625 = vmatpush1.msra.mxu0 0.0
        %6626 = vmatprep.subr.mxu0 0.0
        %6627 = vmatpush1.msra.mxu0 0.0
        %6628 = vmatprep.subr.mxu0 0.0
        %6629 = vmatpush1.msra.mxu0 0.0
        %6630 = vmatprep.subr.mxu0 0.0
        %6631 = vmatpush1.msra.mxu0 0.0
        %6632 = vmatprep.mubr.f32.mxu0 0.0
        %6633 = vmatmul.mubr.f32.gmra.mrb[0].mxu0 %v6424
        %v6634 = vpop.f32.mrb[0].mxu0
        %v6635 = vadd.f32 0.0, %v6634
        %v6636 = vpop.f32.mrb[0].mxu0
        %v6637 = vadd.f32 0.0, %v6636
        %6638 = vdwg.mxu0
        %6639 = vmatprep.subr.mxu0 %v6413
        %6640 = vmatpush1.msra.mxu0 %v6412
        %6641 = vmatprep.subr.mxu0 0.0
        %6642 = vmatpush1.msra.mxu0 0.0
        %6643 = vmatprep.subr.mxu0 0.0
        %6644 = vmatpush1.msra.mxu0 0.0
        %6645 = vmatprep.subr.mxu0 0.0
        %6646 = vmatpush1.msra.mxu0 0.0
        %6647 = vmatprep.subr.mxu0 0.0
        %6648 = vmatpush1.msra.mxu0 0.0
        %6649 = vmatprep.subr.mxu0 0.0
        %6650 = vmatpush1.msra.mxu0 0.0
        %6651 = vmatprep.subr.mxu0 0.0
        %6652 = vmatpush1.msra.mxu0 0.0
        %6653 = vmatprep.subr.mxu0 0.0
        %6654 = vmatpush1.msra.mxu0 0.0
        %6655 = vmatprep.subr.mxu0 0.0
        %6656 = vmatpush1.msra.mxu0 0.0
        %6657 = vmatprep.subr.mxu0 0.0
        %6658 = vmatpush1.msra.mxu0 0.0
        %6659 = vmatprep.subr.mxu0 0.0
        %6660 = vmatpush1.msra.mxu0 0.0
        %6661 = vmatprep.subr.mxu0 0.0
        %6662 = vmatpush1.msra.mxu0 0.0
        %6663 = vmatprep.subr.mxu0 0.0
        %6664 = vmatpush1.msra.mxu0 0.0
        %6665 = vmatprep.subr.mxu0 0.0
        %6666 = vmatpush1.msra.mxu0 0.0
        %6667 = vmatprep.subr.mxu0 0.0
        %6668 = vmatpush1.msra.mxu0 0.0
        %6669 = vmatprep.subr.mxu0 0.0
        %6670 = vmatpush1.msra.mxu0 0.0
        %6671 = vmatprep.subr.mxu0 0.0
        %6672 = vmatpush1.msra.mxu0 0.0
        %6673 = vmatprep.subr.mxu0 0.0
        %6674 = vmatpush1.msra.mxu0 0.0
        %6675 = vmatprep.subr.mxu0 0.0
        %6676 = vmatpush1.msra.mxu0 0.0
        %6677 = vmatprep.subr.mxu0 0.0
        %6678 = vmatpush1.msra.mxu0 0.0
        %6679 = vmatprep.subr.mxu0 0.0
        %6680 = vmatpush1.msra.mxu0 0.0
        %6681 = vmatprep.subr.mxu0 0.0
        %6682 = vmatpush1.msra.mxu0 0.0
        %6683 = vmatprep.subr.mxu0 0.0
        %6684 = vmatpush1.msra.mxu0 0.0
        %6685 = vmatprep.subr.mxu0 0.0
        %6686 = vmatpush1.msra.mxu0 0.0
        %6687 = vmatprep.subr.mxu0 0.0
        %6688 = vmatpush1.msra.mxu0 0.0
        %6689 = vmatprep.subr.mxu0 0.0
        %6690 = vmatpush1.msra.mxu0 0.0
        %6691 = vmatprep.subr.mxu0 0.0
        %6692 = vmatpush1.msra.mxu0 0.0
        %6693 = vmatprep.subr.mxu0 0.0
        %6694 = vmatpush1.msra.mxu0 0.0
        %6695 = vmatprep.subr.mxu0 0.0
        %6696 = vmatpush1.msra.mxu0 0.0
        %6697 = vmatprep.subr.mxu0 0.0
        %6698 = vmatpush1.msra.mxu0 0.0
        %6699 = vmatprep.subr.mxu0 0.0
        %6700 = vmatpush1.msra.mxu0 0.0
        %6701 = vmatprep.subr.mxu0 0.0
        %6702 = vmatpush1.msra.mxu0 0.0
        %6703 = vmatprep.mubr.f32.mxu0 0.0
        %6704 = vmatmul.mubr.f32.gmra.mrb[0].mxu0 %v6424
        %v6705 = vpop.f32.mrb[0].mxu0
        %v6706 = vadd.f32 0.0, %v6705
        %v6707 = vpop.f32.mrb[0].mxu0
        %v6708 = vadd.f32 0.0, %v6707
        %6709 = vdwg.mxu0
        %6710 = vmatprep.subr.mxu0 0.0
        %6711 = vmatpush1.msra.mxu0 %v6414
        %6712 = vmatprep.subr.mxu0 0.0
        %6713 = vmatpush1.msra.mxu0 0.0
        %6714 = vmatprep.subr.mxu0 0.0
        %6715 = vmatpush1.msra.mxu0 0.0
        %6716 = vmatprep.subr.mxu0 0.0
        %6717 = vmatpush1.msra.mxu0 0.0
        %6718 = vmatprep.subr.mxu0 0.0
        %6719 = vmatpush1.msra.mxu0 0.0
        %6720 = vmatprep.subr.mxu0 0.0
        %6721 = vmatpush1.msra.mxu0 0.0
        %6722 = vmatprep.subr.mxu0 0.0
        %6723 = vmatpush1.msra.mxu0 0.0
        %6724 = vmatprep.subr.mxu0 0.0
        %6725 = vmatpush1.msra.mxu0 0.0
        %6726 = vmatprep.subr.mxu0 0.0
        %6727 = vmatpush1.msra.mxu0 0.0
        %6728 = vmatprep.subr.mxu0 0.0
        %6729 = vmatpush1.msra.mxu0 0.0
        %6730 = vmatprep.subr.mxu0 0.0
        %6731 = vmatpush1.msra.mxu0 0.0
        %6732 = vmatprep.subr.mxu0 0.0
        %6733 = vmatpush1.msra.mxu0 0.0
        %6734 = vmatprep.subr.mxu0 0.0
        %6735 = vmatpush1.msra.mxu0 0.0
        %6736 = vmatprep.subr.mxu0 0.0
        %6737 = vmatpush1.msra.mxu0 0.0
        %6738 = vmatprep.subr.mxu0 0.0
        %6739 = vmatpush1.msra.mxu0 0.0
        %6740 = vmatprep.subr.mxu0 0.0
        %6741 = vmatpush1.msra.mxu0 0.0
        %6742 = vmatprep.subr.mxu0 0.0
        %6743 = vmatpush1.msra.mxu0 0.0
        %6744 = vmatprep.subr.mxu0 0.0
        %6745 = vmatpush1.msra.mxu0 0.0
        %6746 = vmatprep.subr.mxu0 0.0
        %6747 = vmatpush1.msra.mxu0 0.0
        %6748 = vmatprep.subr.mxu0 0.0
        %6749 = vmatpush1.msra.mxu0 0.0
        %6750 = vmatprep.subr.mxu0 0.0
        %6751 = vmatpush1.msra.mxu0 0.0
        %6752 = vmatprep.subr.mxu0 0.0
        %6753 = vmatpush1.msra.mxu0 0.0
        %6754 = vmatprep.subr.mxu0 0.0
        %6755 = vmatpush1.msra.mxu0 0.0
        %6756 = vmatprep.subr.mxu0 0.0
        %6757 = vmatpush1.msra.mxu0 0.0
        %6758 = vmatprep.subr.mxu0 0.0
        %6759 = vmatpush1.msra.mxu0 0.0
        %6760 = vmatprep.subr.mxu0 0.0
        %6761 = vmatpush1.msra.mxu0 0.0
        %6762 = vmatprep.subr.mxu0 0.0
        %6763 = vmatpush1.msra.mxu0 0.0
        %6764 = vmatprep.subr.mxu0 0.0
        %6765 = vmatpush1.msra.mxu0 0.0
        %6766 = vmatprep.subr.mxu0 0.0
        %6767 = vmatpush1.msra.mxu0 0.0
        %6768 = vmatprep.subr.mxu0 0.0
        %6769 = vmatpush1.msra.mxu0 0.0
        %6770 = vmatprep.subr.mxu0 0.0
        %6771 = vmatpush1.msra.mxu0 0.0
        %6772 = vmatprep.subr.mxu0 0.0
        %6773 = vmatpush1.msra.mxu0 0.0
        %6774 = vmatprep.mubr.f32.mxu0 0.0
        %6775 = vmatmul.mubr.f32.gmra.mrb[0].mxu0 %v6424
        %v6776 = vpop.f32.mrb[0].mxu0
        %v6777 = vadd.f32 0.0, %v6776
        %v6778 = vpop.f32.mrb[0].mxu0
        %6779 = vdwg.mxu0
        %v6780 = vadd.f32 %v6374, %v6493
        %v6781 = vadd.f32 %v6375, %v6495
        %v6782 = vadd.f32 %v6376, %v6564
        %v6783 = vadd.f32 %v6377, %v6566
        %v6784 = vadd.f32 %v6378, %v6635
        %v6785 = vadd.f32 %v6379, %v6637
        %v6786 = vadd.f32 %v6380, %v6706
        %v6787 = vadd.f32 %v6381, %v6708
        %v6788 = vadd.f32 %v6382, %v6777
        %6789 = vrot.lane.b32.xlu0 %v327, 28
        %v6790 = vpop.permute.xlu0 %6789
        %6791 = vrot.lane.b32.xlu0 %v328, 28
        %v6792 = vpop.permute.xlu0 %6791
        %6793 = vrot.lane.b32.xlu0 %v329, 28
        %v6794 = vpop.permute.xlu0 %6793
        %6795 = vrot.lane.b32.xlu0 %v330, 28
        %v6796 = vpop.permute.xlu0 %6795
        %6797 = vrot.lane.b32.xlu0 %v331, 28
        %v6798 = vpop.permute.xlu0 %6797
        %6799 = vrot.lane.b32.xlu0 %v332, 28
        %v6800 = vpop.permute.xlu0 %6799
        %6801 = vrot.lane.b32.xlu0 %v333, 28
        %v6802 = vpop.permute.xlu0 %6801
        %6803 = vrot.lane.b32.xlu0 %v334, 28
        %v6804 = vpop.permute.xlu0 %6803
        %6805 = vrot.lane.b32.xlu0 %v335, 28
        %v6806 = vpop.permute.xlu0 %6805
        %6807 = vrot.lane.b32.xlu0 %v336, 28
        %v6808 = vpop.permute.xlu0 %6807
        %vm6809 = vcmask 228352
        %v6810 = vsel %vm6809, %v6790, %v6792
        %v6811 = vsel %vm6809, %v6792, %v6794
        %v6812 = vsel %vm6809, %v6794, %v6796
        %v6813 = vsel %vm6809, %v6796, %v6798
        %v6814 = vsel %vm6809, %v6798, %v6800
        %v6815 = vsel %vm6809, %v6800, %v6802
        %v6816 = vsel %vm6809, %v6802, %v6804
        %v6817 = vsel %vm6809, %v6804, %v6806
        %v6818 = vsel %vm6809, %v6806, %v6808
        %v6829 = vsel %vm392, %v339, 0
        %6831 = vmatprep.subr.mxu0 %v6811
        %6832 = vmatpush1.msra.mxu0 %v6810
        %6833 = vmatprep.subr.mxu0 0.0
        %6834 = vmatpush1.msra.mxu0 0.0
        %6835 = vmatprep.subr.mxu0 0.0
        %6836 = vmatpush1.msra.mxu0 0.0
        %6837 = vmatprep.subr.mxu0 0.0
        %6838 = vmatpush1.msra.mxu0 0.0
        %6839 = vmatprep.subr.mxu0 0.0
        %6840 = vmatpush1.msra.mxu0 0.0
        %6841 = vmatprep.subr.mxu0 0.0
        %6842 = vmatpush1.msra.mxu0 0.0
        %6843 = vmatprep.subr.mxu0 0.0
        %6844 = vmatpush1.msra.mxu0 0.0
        %6845 = vmatprep.subr.mxu0 0.0
        %6846 = vmatpush1.msra.mxu0 0.0
        %6847 = vmatprep.subr.mxu0 0.0
        %6848 = vmatpush1.msra.mxu0 0.0
        %6849 = vmatprep.subr.mxu0 0.0
        %6850 = vmatpush1.msra.mxu0 0.0
        %6851 = vmatprep.subr.mxu0 0.0
        %6852 = vmatpush1.msra.mxu0 0.0
        %6853 = vmatprep.subr.mxu0 0.0
        %6854 = vmatpush1.msra.mxu0 0.0
        %6855 = vmatprep.subr.mxu0 0.0
        %6856 = vmatpush1.msra.mxu0 0.0
        %6857 = vmatprep.subr.mxu0 0.0
        %6858 = vmatpush1.msra.mxu0 0.0
        %6859 = vmatprep.subr.mxu0 0.0
        %6860 = vmatpush1.msra.mxu0 0.0
        %6861 = vmatprep.subr.mxu0 0.0
        %6862 = vmatpush1.msra.mxu0 0.0
        %6863 = vmatprep.subr.mxu0 0.0
        %6864 = vmatpush1.msra.mxu0 0.0
        %6865 = vmatprep.subr.mxu0 0.0
        %6866 = vmatpush1.msra.mxu0 0.0
        %6867 = vmatprep.subr.mxu0 0.0
        %6868 = vmatpush1.msra.mxu0 0.0
        %6869 = vmatprep.subr.mxu0 0.0
        %6870 = vmatpush1.msra.mxu0 0.0
        %6871 = vmatprep.subr.mxu0 0.0
        %6872 = vmatpush1.msra.mxu0 0.0
        %6873 = vmatprep.subr.mxu0 0.0
        %6874 = vmatpush1.msra.mxu0 0.0
        %6875 = vmatprep.subr.mxu0 0.0
        %6876 = vmatpush1.msra.mxu0 0.0
        %6877 = vmatprep.subr.mxu0 0.0
        %6878 = vmatpush1.msra.mxu0 0.0
        %6879 = vmatprep.subr.mxu0 0.0
        %6880 = vmatpush1.msra.mxu0 0.0
        %6881 = vmatprep.subr.mxu0 0.0
        %6882 = vmatpush1.msra.mxu0 0.0
        %6883 = vmatprep.subr.mxu0 0.0
        %6884 = vmatpush1.msra.mxu0 0.0
        %6885 = vmatprep.subr.mxu0 0.0
        %6886 = vmatpush1.msra.mxu0 0.0
        %6887 = vmatprep.subr.mxu0 0.0
        %6888 = vmatpush1.msra.mxu0 0.0
        %6889 = vmatprep.subr.mxu0 0.0
        %6890 = vmatpush1.msra.mxu0 0.0
        %6891 = vmatprep.subr.mxu0 0.0
        %6892 = vmatpush1.msra.mxu0 0.0
        %6893 = vmatprep.subr.mxu0 0.0
        %6894 = vmatpush1.msra.mxu0 0.0
        %6895 = vmatprep.mubr.f32.mxu0 0.0
        %6896 = vmatmul.mubr.f32.gmra.mrb[0].mxu0 %v6829
        %v6897 = vpop.f32.mrb[0].mxu0
        %v6898 = vadd.f32 0.0, %v6897
        %v6899 = vpop.f32.mrb[0].mxu0
        %v6900 = vadd.f32 0.0, %v6899
        %6901 = vdwg.mxu0
        %6902 = vmatprep.subr.mxu0 %v6813
        %6903 = vmatpush1.msra.mxu0 %v6812
        %6904 = vmatprep.subr.mxu0 0.0
        %6905 = vmatpush1.msra.mxu0 0.0
        %6906 = vmatprep.subr.mxu0 0.0
        %6907 = vmatpush1.msra.mxu0 0.0
        %6908 = vmatprep.subr.mxu0 0.0
        %6909 = vmatpush1.msra.mxu0 0.0
        %6910 = vmatprep.subr.mxu0 0.0
        %6911 = vmatpush1.msra.mxu0 0.0
        %6912 = vmatprep.subr.mxu0 0.0
        %6913 = vmatpush1.msra.mxu0 0.0
        %6914 = vmatprep.subr.mxu0 0.0
        %6915 = vmatpush1.msra.mxu0 0.0
        %6916 = vmatprep.subr.mxu0 0.0
        %6917 = vmatpush1.msra.mxu0 0.0
        %6918 = vmatprep.subr.mxu0 0.0
        %6919 = vmatpush1.msra.mxu0 0.0
        %6920 = vmatprep.subr.mxu0 0.0
        %6921 = vmatpush1.msra.mxu0 0.0
        %6922 = vmatprep.subr.mxu0 0.0
        %6923 = vmatpush1.msra.mxu0 0.0
        %6924 = vmatprep.subr.mxu0 0.0
        %6925 = vmatpush1.msra.mxu0 0.0
        %6926 = vmatprep.subr.mxu0 0.0
        %6927 = vmatpush1.msra.mxu0 0.0
        %6928 = vmatprep.subr.mxu0 0.0
        %6929 = vmatpush1.msra.mxu0 0.0
        %6930 = vmatprep.subr.mxu0 0.0
        %6931 = vmatpush1.msra.mxu0 0.0
        %6932 = vmatprep.subr.mxu0 0.0
        %6933 = vmatpush1.msra.mxu0 0.0
        %6934 = vmatprep.subr.mxu0 0.0
        %6935 = vmatpush1.msra.mxu0 0.0
        %6936 = vmatprep.subr.mxu0 0.0
        %6937 = vmatpush1.msra.mxu0 0.0
        %6938 = vmatprep.subr.mxu0 0.0
        %6939 = vmatpush1.msra.mxu0 0.0
        %6940 = vmatprep.subr.mxu0 0.0
        %6941 = vmatpush1.msra.mxu0 0.0
        %6942 = vmatprep.subr.mxu0 0.0
        %6943 = vmatpush1.msra.mxu0 0.0
        %6944 = vmatprep.subr.mxu0 0.0
        %6945 = vmatpush1.msra.mxu0 0.0
        %6946 = vmatprep.subr.mxu0 0.0
        %6947 = vmatpush1.msra.mxu0 0.0
        %6948 = vmatprep.subr.mxu0 0.0
        %6949 = vmatpush1.msra.mxu0 0.0
        %6950 = vmatprep.subr.mxu0 0.0
        %6951 = vmatpush1.msra.mxu0 0.0
        %6952 = vmatprep.subr.mxu0 0.0
        %6953 = vmatpush1.msra.mxu0 0.0
        %6954 = vmatprep.subr.mxu0 0.0
        %6955 = vmatpush1.msra.mxu0 0.0
        %6956 = vmatprep.subr.mxu0 0.0
        %6957 = vmatpush1.msra.mxu0 0.0
        %6958 = vmatprep.subr.mxu0 0.0
        %6959 = vmatpush1.msra.mxu0 0.0
        %6960 = vmatprep.subr.mxu0 0.0
        %6961 = vmatpush1.msra.mxu0 0.0
        %6962 = vmatprep.subr.mxu0 0.0
        %6963 = vmatpush1.msra.mxu0 0.0
        %6964 = vmatprep.subr.mxu0 0.0
        %6965 = vmatpush1.msra.mxu0 0.0
        %6966 = vmatprep.mubr.f32.mxu0 0.0
        %6967 = vmatmul.mubr.f32.gmra.mrb[0].mxu0 %v6829
        %v6968 = vpop.f32.mrb[0].mxu0
        %v6969 = vadd.f32 0.0, %v6968
        %v6970 = vpop.f32.mrb[0].mxu0
        %v6971 = vadd.f32 0.0, %v6970
        %6972 = vdwg.mxu0
        %6973 = vmatprep.subr.mxu0 %v6815
        %6974 = vmatpush1.msra.mxu0 %v6814
        %6975 = vmatprep.subr.mxu0 0.0
        %6976 = vmatpush1.msra.mxu0 0.0
        %6977 = vmatprep.subr.mxu0 0.0
        %6978 = vmatpush1.msra.mxu0 0.0
        %6979 = vmatprep.subr.mxu0 0.0
        %6980 = vmatpush1.msra.mxu0 0.0
        %6981 = vmatprep.subr.mxu0 0.0
        %6982 = vmatpush1.msra.mxu0 0.0
        %6983 = vmatprep.subr.mxu0 0.0
        %6984 = vmatpush1.msra.mxu0 0.0
        %6985 = vmatprep.subr.mxu0 0.0
        %6986 = vmatpush1.msra.mxu0 0.0
        %6987 = vmatprep.subr.mxu0 0.0
        %6988 = vmatpush1.msra.mxu0 0.0
        %6989 = vmatprep.subr.mxu0 0.0
        %6990 = vmatpush1.msra.mxu0 0.0
        %6991 = vmatprep.subr.mxu0 0.0
        %6992 = vmatpush1.msra.mxu0 0.0
        %6993 = vmatprep.subr.mxu0 0.0
        %6994 = vmatpush1.msra.mxu0 0.0
        %6995 = vmatprep.subr.mxu0 0.0
        %6996 = vmatpush1.msra.mxu0 0.0
        %6997 = vmatprep.subr.mxu0 0.0
        %6998 = vmatpush1.msra.mxu0 0.0
        %6999 = vmatprep.subr.mxu0 0.0
        %7000 = vmatpush1.msra.mxu0 0.0
        %7001 = vmatprep.subr.mxu0 0.0
        %7002 = vmatpush1.msra.mxu0 0.0
        %7003 = vmatprep.subr.mxu0 0.0
        %7004 = vmatpush1.msra.mxu0 0.0
        %7005 = vmatprep.subr.mxu0 0.0
        %7006 = vmatpush1.msra.mxu0 0.0
        %7007 = vmatprep.subr.mxu0 0.0
        %7008 = vmatpush1.msra.mxu0 0.0
        %7009 = vmatprep.subr.mxu0 0.0
        %7010 = vmatpush1.msra.mxu0 0.0
        %7011 = vmatprep.subr.mxu0 0.0
        %7012 = vmatpush1.msra.mxu0 0.0
        %7013 = vmatprep.subr.mxu0 0.0
        %7014 = vmatpush1.msra.mxu0 0.0
        %7015 = vmatprep.subr.mxu0 0.0
        %7016 = vmatpush1.msra.mxu0 0.0
        %7017 = vmatprep.subr.mxu0 0.0
        %7018 = vmatpush1.msra.mxu0 0.0
        %7019 = vmatprep.subr.mxu0 0.0
        %7020 = vmatpush1.msra.mxu0 0.0
        %7021 = vmatprep.subr.mxu0 0.0
        %7022 = vmatpush1.msra.mxu0 0.0
        %7023 = vmatprep.subr.mxu0 0.0
        %7024 = vmatpush1.msra.mxu0 0.0
        %7025 = vmatprep.subr.mxu0 0.0
        %7026 = vmatpush1.msra.mxu0 0.0
        %7027 = vmatprep.subr.mxu0 0.0
        %7028 = vmatpush1.msra.mxu0 0.0
        %7029 = vmatprep.subr.mxu0 0.0
        %7030 = vmatpush1.msra.mxu0 0.0
        %7031 = vmatprep.subr.mxu0 0.0
        %7032 = vmatpush1.msra.mxu0 0.0
        %7033 = vmatprep.subr.mxu0 0.0
        %7034 = vmatpush1.msra.mxu0 0.0
        %7035 = vmatprep.subr.mxu0 0.0
        %7036 = vmatpush1.msra.mxu0 0.0
        %7037 = vmatprep.mubr.f32.mxu0 0.0
        %7038 = vmatmul.mubr.f32.gmra.mrb[0].mxu0 %v6829
        %v7039 = vpop.f32.mrb[0].mxu0
        %v7040 = vadd.f32 0.0, %v7039
        %v7041 = vpop.f32.mrb[0].mxu0
        %v7042 = vadd.f32 0.0, %v7041
        %7043 = vdwg.mxu0
        %7044 = vmatprep.subr.mxu0 %v6817
        %7045 = vmatpush1.msra.mxu0 %v6816
        %7046 = vmatprep.subr.mxu0 0.0
        %7047 = vmatpush1.msra.mxu0 0.0
        %7048 = vmatprep.subr.mxu0 0.0
        %7049 = vmatpush1.msra.mxu0 0.0
        %7050 = vmatprep.subr.mxu0 0.0
        %7051 = vmatpush1.msra.mxu0 0.0
        %7052 = vmatprep.subr.mxu0 0.0
        %7053 = vmatpush1.msra.mxu0 0.0
        %7054 = vmatprep.subr.mxu0 0.0
        %7055 = vmatpush1.msra.mxu0 0.0
        %7056 = vmatprep.subr.mxu0 0.0
        %7057 = vmatpush1.msra.mxu0 0.0
        %7058 = vmatprep.subr.mxu0 0.0
        %7059 = vmatpush1.msra.mxu0 0.0
        %7060 = vmatprep.subr.mxu0 0.0
        %7061 = vmatpush1.msra.mxu0 0.0
        %7062 = vmatprep.subr.mxu0 0.0
        %7063 = vmatpush1.msra.mxu0 0.0
        %7064 = vmatprep.subr.mxu0 0.0
        %7065 = vmatpush1.msra.mxu0 0.0
        %7066 = vmatprep.subr.mxu0 0.0
        %7067 = vmatpush1.msra.mxu0 0.0
        %7068 = vmatprep.subr.mxu0 0.0
        %7069 = vmatpush1.msra.mxu0 0.0
        %7070 = vmatprep.subr.mxu0 0.0
        %7071 = vmatpush1.msra.mxu0 0.0
        %7072 = vmatprep.subr.mxu0 0.0
        %7073 = vmatpush1.msra.mxu0 0.0
        %7074 = vmatprep.subr.mxu0 0.0
        %7075 = vmatpush1.msra.mxu0 0.0
        %7076 = vmatprep.subr.mxu0 0.0
        %7077 = vmatpush1.msra.mxu0 0.0
        %7078 = vmatprep.subr.mxu0 0.0
        %7079 = vmatpush1.msra.mxu0 0.0
        %7080 = vmatprep.subr.mxu0 0.0
        %7081 = vmatpush1.msra.mxu0 0.0
        %7082 = vmatprep.subr.mxu0 0.0
        %7083 = vmatpush1.msra.mxu0 0.0
        %7084 = vmatprep.subr.mxu0 0.0
        %7085 = vmatpush1.msra.mxu0 0.0
        %7086 = vmatprep.subr.mxu0 0.0
        %7087 = vmatpush1.msra.mxu0 0.0
        %7088 = vmatprep.subr.mxu0 0.0
        %7089 = vmatpush1.msra.mxu0 0.0
        %7090 = vmatprep.subr.mxu0 0.0
        %7091 = vmatpush1.msra.mxu0 0.0
        %7092 = vmatprep.subr.mxu0 0.0
        %7093 = vmatpush1.msra.mxu0 0.0
        %7094 = vmatprep.subr.mxu0 0.0
        %7095 = vmatpush1.msra.mxu0 0.0
        %7096 = vmatprep.subr.mxu0 0.0
        %7097 = vmatpush1.msra.mxu0 0.0
        %7098 = vmatprep.subr.mxu0 0.0
        %7099 = vmatpush1.msra.mxu0 0.0
        %7100 = vmatprep.subr.mxu0 0.0
        %7101 = vmatpush1.msra.mxu0 0.0
        %7102 = vmatprep.subr.mxu0 0.0
        %7103 = vmatpush1.msra.mxu0 0.0
        %7104 = vmatprep.subr.mxu0 0.0
        %7105 = vmatpush1.msra.mxu0 0.0
        %7106 = vmatprep.subr.mxu0 0.0
        %7107 = vmatpush1.msra.mxu0 0.0
        %7108 = vmatprep.mubr.f32.mxu0 0.0
        %7109 = vmatmul.mubr.f32.gmra.mrb[0].mxu0 %v6829
        %v7110 = vpop.f32.mrb[0].mxu0
        %v7111 = vadd.f32 0.0, %v7110
        %v7112 = vpop.f32.mrb[0].mxu0
        %v7113 = vadd.f32 0.0, %v7112
        %7114 = vdwg.mxu0
        %7115 = vmatprep.subr.mxu0 0.0
        %7116 = vmatpush1.msra.mxu0 %v6818
        %7117 = vmatprep.subr.mxu0 0.0
        %7118 = vmatpush1.msra.mxu0 0.0
        %7119 = vmatprep.subr.mxu0 0.0
        %7120 = vmatpush1.msra.mxu0 0.0
        %7121 = vmatprep.subr.mxu0 0.0
        %7122 = vmatpush1.msra.mxu0 0.0
        %7123 = vmatprep.subr.mxu0 0.0
        %7124 = vmatpush1.msra.mxu0 0.0
        %7125 = vmatprep.subr.mxu0 0.0
        %7126 = vmatpush1.msra.mxu0 0.0
        %7127 = vmatprep.subr.mxu0 0.0
        %7128 = vmatpush1.msra.mxu0 0.0
        %7129 = vmatprep.subr.mxu0 0.0
        %7130 = vmatpush1.msra.mxu0 0.0
        %7131 = vmatprep.subr.mxu0 0.0
        %7132 = vmatpush1.msra.mxu0 0.0
        %7133 = vmatprep.subr.mxu0 0.0
        %7134 = vmatpush1.msra.mxu0 0.0
        %7135 = vmatprep.subr.mxu0 0.0
        %7136 = vmatpush1.msra.mxu0 0.0
        %7137 = vmatprep.subr.mxu0 0.0
        %7138 = vmatpush1.msra.mxu0 0.0
        %7139 = vmatprep.subr.mxu0 0.0
        %7140 = vmatpush1.msra.mxu0 0.0
        %7141 = vmatprep.subr.mxu0 0.0
        %7142 = vmatpush1.msra.mxu0 0.0
        %7143 = vmatprep.subr.mxu0 0.0
        %7144 = vmatpush1.msra.mxu0 0.0
        %7145 = vmatprep.subr.mxu0 0.0
        %7146 = vmatpush1.msra.mxu0 0.0
        %7147 = vmatprep.subr.mxu0 0.0
        %7148 = vmatpush1.msra.mxu0 0.0
        %7149 = vmatprep.subr.mxu0 0.0
        %7150 = vmatpush1.msra.mxu0 0.0
        %7151 = vmatprep.subr.mxu0 0.0
        %7152 = vmatpush1.msra.mxu0 0.0
        %7153 = vmatprep.subr.mxu0 0.0
        %7154 = vmatpush1.msra.mxu0 0.0
        %7155 = vmatprep.subr.mxu0 0.0
        %7156 = vmatpush1.msra.mxu0 0.0
        %7157 = vmatprep.subr.mxu0 0.0
        %7158 = vmatpush1.msra.mxu0 0.0
        %7159 = vmatprep.subr.mxu0 0.0
        %7160 = vmatpush1.msra.mxu0 0.0
        %7161 = vmatprep.subr.mxu0 0.0
        %7162 = vmatpush1.msra.mxu0 0.0
        %7163 = vmatprep.subr.mxu0 0.0
        %7164 = vmatpush1.msra.mxu0 0.0
        %7165 = vmatprep.subr.mxu0 0.0
        %7166 = vmatpush1.msra.mxu0 0.0
        %7167 = vmatprep.subr.mxu0 0.0
        %7168 = vmatpush1.msra.mxu0 0.0
        %7169 = vmatprep.subr.mxu0 0.0
        %7170 = vmatpush1.msra.mxu0 0.0
        %7171 = vmatprep.subr.mxu0 0.0
        %7172 = vmatpush1.msra.mxu0 0.0
        %7173 = vmatprep.subr.mxu0 0.0
        %7174 = vmatpush1.msra.mxu0 0.0
        %7175 = vmatprep.subr.mxu0 0.0
        %7176 = vmatpush1.msra.mxu0 0.0
        %7177 = vmatprep.subr.mxu0 0.0
        %7178 = vmatpush1.msra.mxu0 0.0
        %7179 = vmatprep.mubr.f32.mxu0 0.0
        %7180 = vmatmul.mubr.f32.gmra.mrb[0].mxu0 %v6829
        %v7181 = vpop.f32.mrb[0].mxu0
        %v7182 = vadd.f32 0.0, %v7181
        %v7183 = vpop.f32.mrb[0].mxu0
        %7184 = vdwg.mxu0
        %v7185 = vadd.f32 %v6780, %v6898
        %v7186 = vadd.f32 %v6781, %v6900
        %v7187 = vadd.f32 %v6782, %v6969
        %v7188 = vadd.f32 %v6783, %v6971
        %v7189 = vadd.f32 %v6784, %v7040
        %v7190 = vadd.f32 %v6785, %v7042
        %v7191 = vadd.f32 %v6786, %v7111
        %v7192 = vadd.f32 %v6787, %v7113
        %v7193 = vadd.f32 %v6788, %v7182
        %7194 = vrot.lane.b32.xlu0 %v339, 120
        %v7195 = vpop.permute.xlu0 %7194
        %7196 = vrot.lane.b32.xlu0 %v327, 26
        %v7197 = vpop.permute.xlu0 %7196
        %7198 = vrot.lane.b32.xlu0 %v328, 26
        %v7199 = vpop.permute.xlu0 %7198
        %7200 = vrot.lane.b32.xlu0 %v329, 26
        %v7201 = vpop.permute.xlu0 %7200
        %7202 = vrot.lane.b32.xlu0 %v330, 26
        %v7203 = vpop.permute.xlu0 %7202
        %7204 = vrot.lane.b32.xlu0 %v331, 26
        %v7205 = vpop.permute.xlu0 %7204
        %7206 = vrot.lane.b32.xlu0 %v332, 26
        %v7207 = vpop.permute.xlu0 %7206
        %7208 = vrot.lane.b32.xlu0 %v333, 26
        %v7209 = vpop.permute.xlu0 %7208
        %7210 = vrot.lane.b32.xlu0 %v334, 26
        %v7211 = vpop.permute.xlu0 %7210
        %7212 = vrot.lane.b32.xlu0 %v335, 26
        %v7213 = vpop.permute.xlu0 %7212
        %7214 = vrot.lane.b32.xlu0 %v336, 26
        %v7215 = vpop.permute.xlu0 %7214
        %vm7216 = vcmask 211968
        %v7217 = vsel %vm7216, %v7197, %v7199
        %v7218 = vsel %vm7216, %v7199, %v7201
        %v7219 = vsel %vm7216, %v7201, %v7203
        %v7220 = vsel %vm7216, %v7203, %v7205
        %v7221 = vsel %vm7216, %v7205, %v7207
        %v7222 = vsel %vm7216, %v7207, %v7209
        %v7223 = vsel %vm7216, %v7209, %v7211
        %v7224 = vsel %vm7216, %v7211, %v7213
        %v7225 = vsel %vm7216, %v7213, %v7215
        %v7235 = vsel %vm392, %v7195, 0
        %7237 = vmatprep.subr.mxu0 %v7218
        %7238 = vmatpush1.msra.mxu0 %v7217
        %7239 = vmatprep.subr.mxu0 0.0
        %7240 = vmatpush1.msra.mxu0 0.0
        %7241 = vmatprep.subr.mxu0 0.0
        %7242 = vmatpush1.msra.mxu0 0.0
        %7243 = vmatprep.subr.mxu0 0.0
        %7244 = vmatpush1.msra.mxu0 0.0
        %7245 = vmatprep.subr.mxu0 0.0
        %7246 = vmatpush1.msra.mxu0 0.0
        %7247 = vmatprep.subr.mxu0 0.0
        %7248 = vmatpush1.msra.mxu0 0.0
        %7249 = vmatprep.subr.mxu0 0.0
        %7250 = vmatpush1.msra.mxu0 0.0
        %7251 = vmatprep.subr.mxu0 0.0
        %7252 = vmatpush1.msra.mxu0 0.0
        %7253 = vmatprep.subr.mxu0 0.0
        %7254 = vmatpush1.msra.mxu0 0.0
        %7255 = vmatprep.subr.mxu0 0.0
        %7256 = vmatpush1.msra.mxu0 0.0
        %7257 = vmatprep.subr.mxu0 0.0
        %7258 = vmatpush1.msra.mxu0 0.0
        %7259 = vmatprep.subr.mxu0 0.0
        %7260 = vmatpush1.msra.mxu0 0.0
        %7261 = vmatprep.subr.mxu0 0.0
        %7262 = vmatpush1.msra.mxu0 0.0
        %7263 = vmatprep.subr.mxu0 0.0
        %7264 = vmatpush1.msra.mxu0 0.0
        %7265 = vmatprep.subr.mxu0 0.0
        %7266 = vmatpush1.msra.mxu0 0.0
        %7267 = vmatprep.subr.mxu0 0.0
        %7268 = vmatpush1.msra.mxu0 0.0
        %7269 = vmatprep.subr.mxu0 0.0
        %7270 = vmatpush1.msra.mxu0 0.0
        %7271 = vmatprep.subr.mxu0 0.0
        %7272 = vmatpush1.msra.mxu0 0.0
        %7273 = vmatprep.subr.mxu0 0.0
        %7274 = vmatpush1.msra.mxu0 0.0
        %7275 = vmatprep.subr.mxu0 0.0
        %7276 = vmatpush1.msra.mxu0 0.0
        %7277 = vmatprep.subr.mxu0 0.0
        %7278 = vmatpush1.msra.mxu0 0.0
        %7279 = vmatprep.subr.mxu0 0.0
        %7280 = vmatpush1.msra.mxu0 0.0
        %7281 = vmatprep.subr.mxu0 0.0
        %7282 = vmatpush1.msra.mxu0 0.0
        %7283 = vmatprep.subr.mxu0 0.0
        %7284 = vmatpush1.msra.mxu0 0.0
        %7285 = vmatprep.subr.mxu0 0.0
        %7286 = vmatpush1.msra.mxu0 0.0
        %7287 = vmatprep.subr.mxu0 0.0
        %7288 = vmatpush1.msra.mxu0 0.0
        %7289 = vmatprep.subr.mxu0 0.0
        %7290 = vmatpush1.msra.mxu0 0.0
        %7291 = vmatprep.subr.mxu0 0.0
        %7292 = vmatpush1.msra.mxu0 0.0
        %7293 = vmatprep.subr.mxu0 0.0
        %7294 = vmatpush1.msra.mxu0 0.0
        %7295 = vmatprep.subr.mxu0 0.0
        %7296 = vmatpush1.msra.mxu0 0.0
        %7297 = vmatprep.subr.mxu0 0.0
        %7298 = vmatpush1.msra.mxu0 0.0
        %7299 = vmatprep.subr.mxu0 0.0
        %7300 = vmatpush1.msra.mxu0 0.0
        %7301 = vmatprep.mubr.f32.mxu0 0.0
        %7302 = vmatmul.mubr.f32.gmra.mrb[0].mxu0 %v7235
        %v7303 = vpop.f32.mrb[0].mxu0
        %v7304 = vadd.f32 0.0, %v7303
        %v7305 = vpop.f32.mrb[0].mxu0
        %v7306 = vadd.f32 0.0, %v7305
        %7307 = vdwg.mxu0
        %7308 = vmatprep.subr.mxu0 %v7220
        %7309 = vmatpush1.msra.mxu0 %v7219
        %7310 = vmatprep.subr.mxu0 0.0
        %7311 = vmatpush1.msra.mxu0 0.0
        %7312 = vmatprep.subr.mxu0 0.0
        %7313 = vmatpush1.msra.mxu0 0.0
        %7314 = vmatprep.subr.mxu0 0.0
        %7315 = vmatpush1.msra.mxu0 0.0
        %7316 = vmatprep.subr.mxu0 0.0
        %7317 = vmatpush1.msra.mxu0 0.0
        %7318 = vmatprep.subr.mxu0 0.0
        %7319 = vmatpush1.msra.mxu0 0.0
        %7320 = vmatprep.subr.mxu0 0.0
        %7321 = vmatpush1.msra.mxu0 0.0
        %7322 = vmatprep.subr.mxu0 0.0
        %7323 = vmatpush1.msra.mxu0 0.0
        %7324 = vmatprep.subr.mxu0 0.0
        %7325 = vmatpush1.msra.mxu0 0.0
        %7326 = vmatprep.subr.mxu0 0.0
        %7327 = vmatpush1.msra.mxu0 0.0
        %7328 = vmatprep.subr.mxu0 0.0
        %7329 = vmatpush1.msra.mxu0 0.0
        %7330 = vmatprep.subr.mxu0 0.0
        %7331 = vmatpush1.msra.mxu0 0.0
        %7332 = vmatprep.subr.mxu0 0.0
        %7333 = vmatpush1.msra.mxu0 0.0
        %7334 = vmatprep.subr.mxu0 0.0
        %7335 = vmatpush1.msra.mxu0 0.0
        %7336 = vmatprep.subr.mxu0 0.0
        %7337 = vmatpush1.msra.mxu0 0.0
        %7338 = vmatprep.subr.mxu0 0.0
        %7339 = vmatpush1.msra.mxu0 0.0
        %7340 = vmatprep.subr.mxu0 0.0
        %7341 = vmatpush1.msra.mxu0 0.0
        %7342 = vmatprep.subr.mxu0 0.0
        %7343 = vmatpush1.msra.mxu0 0.0
        %7344 = vmatprep.subr.mxu0 0.0
        %7345 = vmatpush1.msra.mxu0 0.0
        %7346 = vmatprep.subr.mxu0 0.0
        %7347 = vmatpush1.msra.mxu0 0.0
        %7348 = vmatprep.subr.mxu0 0.0
        %7349 = vmatpush1.msra.mxu0 0.0
        %7350 = vmatprep.subr.mxu0 0.0
        %7351 = vmatpush1.msra.mxu0 0.0
        %7352 = vmatprep.subr.mxu0 0.0
        %7353 = vmatpush1.msra.mxu0 0.0
        %7354 = vmatprep.subr.mxu0 0.0
        %7355 = vmatpush1.msra.mxu0 0.0
        %7356 = vmatprep.subr.mxu0 0.0
        %7357 = vmatpush1.msra.mxu0 0.0
        %7358 = vmatprep.subr.mxu0 0.0
        %7359 = vmatpush1.msra.mxu0 0.0
        %7360 = vmatprep.subr.mxu0 0.0
        %7361 = vmatpush1.msra.mxu0 0.0
        %7362 = vmatprep.subr.mxu0 0.0
        %7363 = vmatpush1.msra.mxu0 0.0
        %7364 = vmatprep.subr.mxu0 0.0
        %7365 = vmatpush1.msra.mxu0 0.0
        %7366 = vmatprep.subr.mxu0 0.0
        %7367 = vmatpush1.msra.mxu0 0.0
        %7368 = vmatprep.subr.mxu0 0.0
        %7369 = vmatpush1.msra.mxu0 0.0
        %7370 = vmatprep.subr.mxu0 0.0
        %7371 = vmatpush1.msra.mxu0 0.0
        %7372 = vmatprep.mubr.f32.mxu0 0.0
        %7373 = vmatmul.mubr.f32.gmra.mrb[0].mxu0 %v7235
        %v7374 = vpop.f32.mrb[0].mxu0
        %v7375 = vadd.f32 0.0, %v7374
        %v7376 = vpop.f32.mrb[0].mxu0
        %v7377 = vadd.f32 0.0, %v7376
        %7378 = vdwg.mxu0
        %7379 = vmatprep.subr.mxu0 %v7222
        %7380 = vmatpush1.msra.mxu0 %v7221
        %7381 = vmatprep.subr.mxu0 0.0
        %7382 = vmatpush1.msra.mxu0 0.0
        %7383 = vmatprep.subr.mxu0 0.0
        %7384 = vmatpush1.msra.mxu0 0.0
        %7385 = vmatprep.subr.mxu0 0.0
        %7386 = vmatpush1.msra.mxu0 0.0
        %7387 = vmatprep.subr.mxu0 0.0
        %7388 = vmatpush1.msra.mxu0 0.0
        %7389 = vmatprep.subr.mxu0 0.0
        %7390 = vmatpush1.msra.mxu0 0.0
        %7391 = vmatprep.subr.mxu0 0.0
        %7392 = vmatpush1.msra.mxu0 0.0
        %7393 = vmatprep.subr.mxu0 0.0
        %7394 = vmatpush1.msra.mxu0 0.0
        %7395 = vmatprep.subr.mxu0 0.0
        %7396 = vmatpush1.msra.mxu0 0.0
        %7397 = vmatprep.subr.mxu0 0.0
        %7398 = vmatpush1.msra.mxu0 0.0
        %7399 = vmatprep.subr.mxu0 0.0
        %7400 = vmatpush1.msra.mxu0 0.0
        %7401 = vmatprep.subr.mxu0 0.0
        %7402 = vmatpush1.msra.mxu0 0.0
        %7403 = vmatprep.subr.mxu0 0.0
        %7404 = vmatpush1.msra.mxu0 0.0
        %7405 = vmatprep.subr.mxu0 0.0
        %7406 = vmatpush1.msra.mxu0 0.0
        %7407 = vmatprep.subr.mxu0 0.0
        %7408 = vmatpush1.msra.mxu0 0.0
        %7409 = vmatprep.subr.mxu0 0.0
        %7410 = vmatpush1.msra.mxu0 0.0
        %7411 = vmatprep.subr.mxu0 0.0
        %7412 = vmatpush1.msra.mxu0 0.0
        %7413 = vmatprep.subr.mxu0 0.0
        %7414 = vmatpush1.msra.mxu0 0.0
        %7415 = vmatprep.subr.mxu0 0.0
        %7416 = vmatpush1.msra.mxu0 0.0
        %7417 = vmatprep.subr.mxu0 0.0
        %7418 = vmatpush1.msra.mxu0 0.0
        %7419 = vmatprep.subr.mxu0 0.0
        %7420 = vmatpush1.msra.mxu0 0.0
        %7421 = vmatprep.subr.mxu0 0.0
        %7422 = vmatpush1.msra.mxu0 0.0
        %7423 = vmatprep.subr.mxu0 0.0
        %7424 = vmatpush1.msra.mxu0 0.0
        %7425 = vmatprep.subr.mxu0 0.0
        %7426 = vmatpush1.msra.mxu0 0.0
        %7427 = vmatprep.subr.mxu0 0.0
        %7428 = vmatpush1.msra.mxu0 0.0
        %7429 = vmatprep.subr.mxu0 0.0
        %7430 = vmatpush1.msra.mxu0 0.0
        %7431 = vmatprep.subr.mxu0 0.0
        %7432 = vmatpush1.msra.mxu0 0.0
        %7433 = vmatprep.subr.mxu0 0.0
        %7434 = vmatpush1.msra.mxu0 0.0
        %7435 = vmatprep.subr.mxu0 0.0
        %7436 = vmatpush1.msra.mxu0 0.0
        %7437 = vmatprep.subr.mxu0 0.0
        %7438 = vmatpush1.msra.mxu0 0.0
        %7439 = vmatprep.subr.mxu0 0.0
        %7440 = vmatpush1.msra.mxu0 0.0
        %7441 = vmatprep.subr.mxu0 0.0
        %7442 = vmatpush1.msra.mxu0 0.0
        %7443 = vmatprep.mubr.f32.mxu0 0.0
        %7444 = vmatmul.mubr.f32.gmra.mrb[0].mxu0 %v7235
        %v7445 = vpop.f32.mrb[0].mxu0
        %v7446 = vadd.f32 0.0, %v7445
        %v7447 = vpop.f32.mrb[0].mxu0
        %v7448 = vadd.f32 0.0, %v7447
        %7449 = vdwg.mxu0
        %7450 = vmatprep.subr.mxu0 %v7224
        %7451 = vmatpush1.msra.mxu0 %v7223
        %7452 = vmatprep.subr.mxu0 0.0
        %7453 = vmatpush1.msra.mxu0 0.0
        %7454 = vmatprep.subr.mxu0 0.0
        %7455 = vmatpush1.msra.mxu0 0.0
        %7456 = vmatprep.subr.mxu0 0.0
        %7457 = vmatpush1.msra.mxu0 0.0
        %7458 = vmatprep.subr.mxu0 0.0
        %7459 = vmatpush1.msra.mxu0 0.0
        %7460 = vmatprep.subr.mxu0 0.0
        %7461 = vmatpush1.msra.mxu0 0.0
        %7462 = vmatprep.subr.mxu0 0.0
        %7463 = vmatpush1.msra.mxu0 0.0
        %7464 = vmatprep.subr.mxu0 0.0
        %7465 = vmatpush1.msra.mxu0 0.0
        %7466 = vmatprep.subr.mxu0 0.0
        %7467 = vmatpush1.msra.mxu0 0.0
        %7468 = vmatprep.subr.mxu0 0.0
        %7469 = vmatpush1.msra.mxu0 0.0
        %7470 = vmatprep.subr.mxu0 0.0
        %7471 = vmatpush1.msra.mxu0 0.0
        %7472 = vmatprep.subr.mxu0 0.0
        %7473 = vmatpush1.msra.mxu0 0.0
        %7474 = vmatprep.subr.mxu0 0.0
        %7475 = vmatpush1.msra.mxu0 0.0
        %7476 = vmatprep.subr.mxu0 0.0
        %7477 = vmatpush1.msra.mxu0 0.0
        %7478 = vmatprep.subr.mxu0 0.0
        %7479 = vmatpush1.msra.mxu0 0.0
        %7480 = vmatprep.subr.mxu0 0.0
        %7481 = vmatpush1.msra.mxu0 0.0
        %7482 = vmatprep.subr.mxu0 0.0
        %7483 = vmatpush1.msra.mxu0 0.0
        %7484 = vmatprep.subr.mxu0 0.0
        %7485 = vmatpush1.msra.mxu0 0.0
        %7486 = vmatprep.subr.mxu0 0.0
        %7487 = vmatpush1.msra.mxu0 0.0
        %7488 = vmatprep.subr.mxu0 0.0
        %7489 = vmatpush1.msra.mxu0 0.0
        %7490 = vmatprep.subr.mxu0 0.0
        %7491 = vmatpush1.msra.mxu0 0.0
        %7492 = vmatprep.subr.mxu0 0.0
        %7493 = vmatpush1.msra.mxu0 0.0
        %7494 = vmatprep.subr.mxu0 0.0
        %7495 = vmatpush1.msra.mxu0 0.0
        %7496 = vmatprep.subr.mxu0 0.0
        %7497 = vmatpush1.msra.mxu0 0.0
        %7498 = vmatprep.subr.mxu0 0.0
        %7499 = vmatpush1.msra.mxu0 0.0
        %7500 = vmatprep.subr.mxu0 0.0
        %7501 = vmatpush1.msra.mxu0 0.0
        %7502 = vmatprep.subr.mxu0 0.0
        %7503 = vmatpush1.msra.mxu0 0.0
        %7504 = vmatprep.subr.mxu0 0.0
        %7505 = vmatpush1.msra.mxu0 0.0
        %7506 = vmatprep.subr.mxu0 0.0
        %7507 = vmatpush1.msra.mxu0 0.0
        %7508 = vmatprep.subr.mxu0 0.0
        %7509 = vmatpush1.msra.mxu0 0.0
        %7510 = vmatprep.subr.mxu0 0.0
        %7511 = vmatpush1.msra.mxu0 0.0
        %7512 = vmatprep.subr.mxu0 0.0
        %7513 = vmatpush1.msra.mxu0 0.0
        %7514 = vmatprep.mubr.f32.mxu0 0.0
        %7515 = vmatmul.mubr.f32.gmra.mrb[0].mxu0 %v7235
        %v7516 = vpop.f32.mrb[0].mxu0
        %v7517 = vadd.f32 0.0, %v7516
        %v7518 = vpop.f32.mrb[0].mxu0
        %v7519 = vadd.f32 0.0, %v7518
        %7520 = vdwg.mxu0
        %7521 = vmatprep.subr.mxu0 0.0
        %7522 = vmatpush1.msra.mxu0 %v7225
        %7523 = vmatprep.subr.mxu0 0.0
        %7524 = vmatpush1.msra.mxu0 0.0
        %7525 = vmatprep.subr.mxu0 0.0
        %7526 = vmatpush1.msra.mxu0 0.0
        %7527 = vmatprep.subr.mxu0 0.0
        %7528 = vmatpush1.msra.mxu0 0.0
        %7529 = vmatprep.subr.mxu0 0.0
        %7530 = vmatpush1.msra.mxu0 0.0
        %7531 = vmatprep.subr.mxu0 0.0
        %7532 = vmatpush1.msra.mxu0 0.0
        %7533 = vmatprep.subr.mxu0 0.0
        %7534 = vmatpush1.msra.mxu0 0.0
        %7535 = vmatprep.subr.mxu0 0.0
        %7536 = vmatpush1.msra.mxu0 0.0
        %7537 = vmatprep.subr.mxu0 0.0
        %7538 = vmatpush1.msra.mxu0 0.0
        %7539 = vmatprep.subr.mxu0 0.0
        %7540 = vmatpush1.msra.mxu0 0.0
        %7541 = vmatprep.subr.mxu0 0.0
        %7542 = vmatpush1.msra.mxu0 0.0
        %7543 = vmatprep.subr.mxu0 0.0
        %7544 = vmatpush1.msra.mxu0 0.0
        %7545 = vmatprep.subr.mxu0 0.0
        %7546 = vmatpush1.msra.mxu0 0.0
        %7547 = vmatprep.subr.mxu0 0.0
        %7548 = vmatpush1.msra.mxu0 0.0
        %7549 = vmatprep.subr.mxu0 0.0
        %7550 = vmatpush1.msra.mxu0 0.0
        %7551 = vmatprep.subr.mxu0 0.0
        %7552 = vmatpush1.msra.mxu0 0.0
        %7553 = vmatprep.subr.mxu0 0.0
        %7554 = vmatpush1.msra.mxu0 0.0
        %7555 = vmatprep.subr.mxu0 0.0
        %7556 = vmatpush1.msra.mxu0 0.0
        %7557 = vmatprep.subr.mxu0 0.0
        %7558 = vmatpush1.msra.mxu0 0.0
        %7559 = vmatprep.subr.mxu0 0.0
        %7560 = vmatpush1.msra.mxu0 0.0
        %7561 = vmatprep.subr.mxu0 0.0
        %7562 = vmatpush1.msra.mxu0 0.0
        %7563 = vmatprep.subr.mxu0 0.0
        %7564 = vmatpush1.msra.mxu0 0.0
        %7565 = vmatprep.subr.mxu0 0.0
        %7566 = vmatpush1.msra.mxu0 0.0
        %7567 = vmatprep.subr.mxu0 0.0
        %7568 = vmatpush1.msra.mxu0 0.0
        %7569 = vmatprep.subr.mxu0 0.0
        %7570 = vmatpush1.msra.mxu0 0.0
        %7571 = vmatprep.subr.mxu0 0.0
        %7572 = vmatpush1.msra.mxu0 0.0
        %7573 = vmatprep.subr.mxu0 0.0
        %7574 = vmatpush1.msra.mxu0 0.0
        %7575 = vmatprep.subr.mxu0 0.0
        %7576 = vmatpush1.msra.mxu0 0.0
        %7577 = vmatprep.subr.mxu0 0.0
        %7578 = vmatpush1.msra.mxu0 0.0
        %7579 = vmatprep.subr.mxu0 0.0
        %7580 = vmatpush1.msra.mxu0 0.0
        %7581 = vmatprep.subr.mxu0 0.0
        %7582 = vmatpush1.msra.mxu0 0.0
        %7583 = vmatprep.subr.mxu0 0.0
        %7584 = vmatpush1.msra.mxu0 0.0
        %7585 = vmatprep.mubr.f32.mxu0 0.0
        %7586 = vmatmul.mubr.f32.gmra.mrb[0].mxu0 %v7235
        %v7587 = vpop.f32.mrb[0].mxu0
        %v7588 = vadd.f32 0.0, %v7587
        %v7589 = vpop.f32.mrb[0].mxu0
        %7590 = vdwg.mxu0
        %v7591 = vadd.f32 %v7185, %v7304
        %v7592 = vadd.f32 %v7186, %v7306
        %v7593 = vadd.f32 %v7187, %v7375
        %v7594 = vadd.f32 %v7188, %v7377
        %v7595 = vadd.f32 %v7189, %v7446
        %v7596 = vadd.f32 %v7190, %v7448
        %v7597 = vadd.f32 %v7191, %v7517
        %v7598 = vadd.f32 %v7192, %v7519
        %v7599 = vadd.f32 %v7193, %v7588
        %7600 = vrot.lane.b32.xlu0 %v339, 112
        %v7601 = vpop.permute.xlu0 %7600
        %7602 = vrot.lane.b32.xlu0 %v327, 24
        %v7603 = vpop.permute.xlu0 %7602
        %7604 = vrot.lane.b32.xlu0 %v328, 24
        %v7605 = vpop.permute.xlu0 %7604
        %7606 = vrot.lane.b32.xlu0 %v329, 24
        %v7607 = vpop.permute.xlu0 %7606
        %7608 = vrot.lane.b32.xlu0 %v330, 24
        %v7609 = vpop.permute.xlu0 %7608
        %7610 = vrot.lane.b32.xlu0 %v331, 24
        %v7611 = vpop.permute.xlu0 %7610
        %7612 = vrot.lane.b32.xlu0 %v332, 24
        %v7613 = vpop.permute.xlu0 %7612
        %7614 = vrot.lane.b32.xlu0 %v333, 24
        %v7615 = vpop.permute.xlu0 %7614
        %7616 = vrot.lane.b32.xlu0 %v334, 24
        %v7617 = vpop.permute.xlu0 %7616
        %7618 = vrot.lane.b32.xlu0 %v335, 24
        %v7619 = vpop.permute.xlu0 %7618
        %7620 = vrot.lane.b32.xlu0 %v336, 24
        %v7621 = vpop.permute.xlu0 %7620
        %vm7622 = vcmask 195584
        %v7623 = vsel %vm7622, %v7603, %v7605
        %v7624 = vsel %vm7622, %v7605, %v7607
        %v7625 = vsel %vm7622, %v7607, %v7609
        %v7626 = vsel %vm7622, %v7609, %v7611
        %v7627 = vsel %vm7622, %v7611, %v7613
        %v7628 = vsel %vm7622, %v7613, %v7615
        %v7629 = vsel %vm7622, %v7615, %v7617
        %v7630 = vsel %vm7622, %v7617, %v7619
        %v7631 = vsel %vm7622, %v7619, %v7621
        %v7641 = vsel %vm392, %v7601, 0
        %7643 = vmatprep.subr.mxu0 %v7624
        %7644 = vmatpush1.msra.mxu0 %v7623
        %7645 = vmatprep.subr.mxu0 0.0
        %7646 = vmatpush1.msra.mxu0 0.0
        %7647 = vmatprep.subr.mxu0 0.0
        %7648 = vmatpush1.msra.mxu0 0.0
        %7649 = vmatprep.subr.mxu0 0.0
        %7650 = vmatpush1.msra.mxu0 0.0
        %7651 = vmatprep.subr.mxu0 0.0
        %7652 = vmatpush1.msra.mxu0 0.0
        %7653 = vmatprep.subr.mxu0 0.0
        %7654 = vmatpush1.msra.mxu0 0.0
        %7655 = vmatprep.subr.mxu0 0.0
        %7656 = vmatpush1.msra.mxu0 0.0
        %7657 = vmatprep.subr.mxu0 0.0
        %7658 = vmatpush1.msra.mxu0 0.0
        %7659 = vmatprep.subr.mxu0 0.0
        %7660 = vmatpush1.msra.mxu0 0.0
        %7661 = vmatprep.subr.mxu0 0.0
        %7662 = vmatpush1.msra.mxu0 0.0
        %7663 = vmatprep.subr.mxu0 0.0
        %7664 = vmatpush1.msra.mxu0 0.0
        %7665 = vmatprep.subr.mxu0 0.0
        %7666 = vmatpush1.msra.mxu0 0.0
        %7667 = vmatprep.subr.mxu0 0.0
        %7668 = vmatpush1.msra.mxu0 0.0
        %7669 = vmatprep.subr.mxu0 0.0
        %7670 = vmatpush1.msra.mxu0 0.0
        %7671 = vmatprep.subr.mxu0 0.0
        %7672 = vmatpush1.msra.mxu0 0.0
        %7673 = vmatprep.subr.mxu0 0.0
        %7674 = vmatpush1.msra.mxu0 0.0
        %7675 = vmatprep.subr.mxu0 0.0
        %7676 = vmatpush1.msra.mxu0 0.0
        %7677 = vmatprep.subr.mxu0 0.0
        %7678 = vmatpush1.msra.mxu0 0.0
        %7679 = vmatprep.subr.mxu0 0.0
        %7680 = vmatpush1.msra.mxu0 0.0
        %7681 = vmatprep.subr.mxu0 0.0
        %7682 = vmatpush1.msra.mxu0 0.0
        %7683 = vmatprep.subr.mxu0 0.0
        %7684 = vmatpush1.msra.mxu0 0.0
        %7685 = vmatprep.subr.mxu0 0.0
        %7686 = vmatpush1.msra.mxu0 0.0
        %7687 = vmatprep.subr.mxu0 0.0
        %7688 = vmatpush1.msra.mxu0 0.0
        %7689 = vmatprep.subr.mxu0 0.0
        %7690 = vmatpush1.msra.mxu0 0.0
        %7691 = vmatprep.subr.mxu0 0.0
        %7692 = vmatpush1.msra.mxu0 0.0
        %7693 = vmatprep.subr.mxu0 0.0
        %7694 = vmatpush1.msra.mxu0 0.0
        %7695 = vmatprep.subr.mxu0 0.0
        %7696 = vmatpush1.msra.mxu0 0.0
        %7697 = vmatprep.subr.mxu0 0.0
        %7698 = vmatpush1.msra.mxu0 0.0
        %7699 = vmatprep.subr.mxu0 0.0
        %7700 = vmatpush1.msra.mxu0 0.0
        %7701 = vmatprep.subr.mxu0 0.0
        %7702 = vmatpush1.msra.mxu0 0.0
        %7703 = vmatprep.subr.mxu0 0.0
        %7704 = vmatpush1.msra.mxu0 0.0
        %7705 = vmatprep.subr.mxu0 0.0
        %7706 = vmatpush1.msra.mxu0 0.0
        %7707 = vmatprep.mubr.f32.mxu0 0.0
        %7708 = vmatmul.mubr.f32.gmra.mrb[0].mxu0 %v7641
        %v7709 = vpop.f32.mrb[0].mxu0
        %v7710 = vadd.f32 0.0, %v7709
        %v7711 = vpop.f32.mrb[0].mxu0
        %v7712 = vadd.f32 0.0, %v7711
        %7713 = vdwg.mxu0
        %7714 = vmatprep.subr.mxu0 %v7626
        %7715 = vmatpush1.msra.mxu0 %v7625
        %7716 = vmatprep.subr.mxu0 0.0
        %7717 = vmatpush1.msra.mxu0 0.0
        %7718 = vmatprep.subr.mxu0 0.0
        %7719 = vmatpush1.msra.mxu0 0.0
        %7720 = vmatprep.subr.mxu0 0.0
        %7721 = vmatpush1.msra.mxu0 0.0
        %7722 = vmatprep.subr.mxu0 0.0
        %7723 = vmatpush1.msra.mxu0 0.0
        %7724 = vmatprep.subr.mxu0 0.0
        %7725 = vmatpush1.msra.mxu0 0.0
        %7726 = vmatprep.subr.mxu0 0.0
        %7727 = vmatpush1.msra.mxu0 0.0
        %7728 = vmatprep.subr.mxu0 0.0
        %7729 = vmatpush1.msra.mxu0 0.0
        %7730 = vmatprep.subr.mxu0 0.0
        %7731 = vmatpush1.msra.mxu0 0.0
        %7732 = vmatprep.subr.mxu0 0.0
        %7733 = vmatpush1.msra.mxu0 0.0
        %7734 = vmatprep.subr.mxu0 0.0
        %7735 = vmatpush1.msra.mxu0 0.0
        %7736 = vmatprep.subr.mxu0 0.0
        %7737 = vmatpush1.msra.mxu0 0.0
        %7738 = vmatprep.subr.mxu0 0.0
        %7739 = vmatpush1.msra.mxu0 0.0
        %7740 = vmatprep.subr.mxu0 0.0
        %7741 = vmatpush1.msra.mxu0 0.0
        %7742 = vmatprep.subr.mxu0 0.0
        %7743 = vmatpush1.msra.mxu0 0.0
        %7744 = vmatprep.subr.mxu0 0.0
        %7745 = vmatpush1.msra.mxu0 0.0
        %7746 = vmatprep.subr.mxu0 0.0
        %7747 = vmatpush1.msra.mxu0 0.0
        %7748 = vmatprep.subr.mxu0 0.0
        %7749 = vmatpush1.msra.mxu0 0.0
        %7750 = vmatprep.subr.mxu0 0.0
        %7751 = vmatpush1.msra.mxu0 0.0
        %7752 = vmatprep.subr.mxu0 0.0
        %7753 = vmatpush1.msra.mxu0 0.0
        %7754 = vmatprep.subr.mxu0 0.0
        %7755 = vmatpush1.msra.mxu0 0.0
        %7756 = vmatprep.subr.mxu0 0.0
        %7757 = vmatpush1.msra.mxu0 0.0
        %7758 = vmatprep.subr.mxu0 0.0
        %7759 = vmatpush1.msra.mxu0 0.0
        %7760 = vmatprep.subr.mxu0 0.0
        %7761 = vmatpush1.msra.mxu0 0.0
        %7762 = vmatprep.subr.mxu0 0.0
        %7763 = vmatpush1.msra.mxu0 0.0
        %7764 = vmatprep.subr.mxu0 0.0
        %7765 = vmatpush1.msra.mxu0 0.0
        %7766 = vmatprep.subr.mxu0 0.0
        %7767 = vmatpush1.msra.mxu0 0.0
        %7768 = vmatprep.subr.mxu0 0.0
        %7769 = vmatpush1.msra.mxu0 0.0
        %7770 = vmatprep.subr.mxu0 0.0
        %7771 = vmatpush1.msra.mxu0 0.0
        %7772 = vmatprep.subr.mxu0 0.0
        %7773 = vmatpush1.msra.mxu0 0.0
        %7774 = vmatprep.subr.mxu0 0.0
        %7775 = vmatpush1.msra.mxu0 0.0
        %7776 = vmatprep.subr.mxu0 0.0
        %7777 = vmatpush1.msra.mxu0 0.0
        %7778 = vmatprep.mubr.f32.mxu0 0.0
        %7779 = vmatmul.mubr.f32.gmra.mrb[0].mxu0 %v7641
        %v7780 = vpop.f32.mrb[0].mxu0
        %v7781 = vadd.f32 0.0, %v7780
        %v7782 = vpop.f32.mrb[0].mxu0
        %v7783 = vadd.f32 0.0, %v7782
        %7784 = vdwg.mxu0
        %7785 = vmatprep.subr.mxu0 %v7628
        %7786 = vmatpush1.msra.mxu0 %v7627
        %7787 = vmatprep.subr.mxu0 0.0
        %7788 = vmatpush1.msra.mxu0 0.0
        %7789 = vmatprep.subr.mxu0 0.0
        %7790 = vmatpush1.msra.mxu0 0.0
        %7791 = vmatprep.subr.mxu0 0.0
        %7792 = vmatpush1.msra.mxu0 0.0
        %7793 = vmatprep.subr.mxu0 0.0
        %7794 = vmatpush1.msra.mxu0 0.0
        %7795 = vmatprep.subr.mxu0 0.0
        %7796 = vmatpush1.msra.mxu0 0.0
        %7797 = vmatprep.subr.mxu0 0.0
        %7798 = vmatpush1.msra.mxu0 0.0
        %7799 = vmatprep.subr.mxu0 0.0
        %7800 = vmatpush1.msra.mxu0 0.0
        %7801 = vmatprep.subr.mxu0 0.0
        %7802 = vmatpush1.msra.mxu0 0.0
        %7803 = vmatprep.subr.mxu0 0.0
        %7804 = vmatpush1.msra.mxu0 0.0
        %7805 = vmatprep.subr.mxu0 0.0
        %7806 = vmatpush1.msra.mxu0 0.0
        %7807 = vmatprep.subr.mxu0 0.0
        %7808 = vmatpush1.msra.mxu0 0.0
        %7809 = vmatprep.subr.mxu0 0.0
        %7810 = vmatpush1.msra.mxu0 0.0
        %7811 = vmatprep.subr.mxu0 0.0
        %7812 = vmatpush1.msra.mxu0 0.0
        %7813 = vmatprep.subr.mxu0 0.0
        %7814 = vmatpush1.msra.mxu0 0.0
        %7815 = vmatprep.subr.mxu0 0.0
        %7816 = vmatpush1.msra.mxu0 0.0
        %7817 = vmatprep.subr.mxu0 0.0
        %7818 = vmatpush1.msra.mxu0 0.0
        %7819 = vmatprep.subr.mxu0 0.0
        %7820 = vmatpush1.msra.mxu0 0.0
        %7821 = vmatprep.subr.mxu0 0.0
        %7822 = vmatpush1.msra.mxu0 0.0
        %7823 = vmatprep.subr.mxu0 0.0
        %7824 = vmatpush1.msra.mxu0 0.0
        %7825 = vmatprep.subr.mxu0 0.0
        %7826 = vmatpush1.msra.mxu0 0.0
        %7827 = vmatprep.subr.mxu0 0.0
        %7828 = vmatpush1.msra.mxu0 0.0
        %7829 = vmatprep.subr.mxu0 0.0
        %7830 = vmatpush1.msra.mxu0 0.0
        %7831 = vmatprep.subr.mxu0 0.0
        %7832 = vmatpush1.msra.mxu0 0.0
        %7833 = vmatprep.subr.mxu0 0.0
        %7834 = vmatpush1.msra.mxu0 0.0
        %7835 = vmatprep.subr.mxu0 0.0
        %7836 = vmatpush1.msra.mxu0 0.0
        %7837 = vmatprep.subr.mxu0 0.0
        %7838 = vmatpush1.msra.mxu0 0.0
        %7839 = vmatprep.subr.mxu0 0.0
        %7840 = vmatpush1.msra.mxu0 0.0
        %7841 = vmatprep.subr.mxu0 0.0
        %7842 = vmatpush1.msra.mxu0 0.0
        %7843 = vmatprep.subr.mxu0 0.0
        %7844 = vmatpush1.msra.mxu0 0.0
        %7845 = vmatprep.subr.mxu0 0.0
        %7846 = vmatpush1.msra.mxu0 0.0
        %7847 = vmatprep.subr.mxu0 0.0
        %7848 = vmatpush1.msra.mxu0 0.0
        %7849 = vmatprep.mubr.f32.mxu0 0.0
        %7850 = vmatmul.mubr.f32.gmra.mrb[0].mxu0 %v7641
        %v7851 = vpop.f32.mrb[0].mxu0
        %v7852 = vadd.f32 0.0, %v7851
        %v7853 = vpop.f32.mrb[0].mxu0
        %v7854 = vadd.f32 0.0, %v7853
        %7855 = vdwg.mxu0
        %7856 = vmatprep.subr.mxu0 %v7630
        %7857 = vmatpush1.msra.mxu0 %v7629
        %7858 = vmatprep.subr.mxu0 0.0
        %7859 = vmatpush1.msra.mxu0 0.0
        %7860 = vmatprep.subr.mxu0 0.0
        %7861 = vmatpush1.msra.mxu0 0.0
        %7862 = vmatprep.subr.mxu0 0.0
        %7863 = vmatpush1.msra.mxu0 0.0
        %7864 = vmatprep.subr.mxu0 0.0
        %7865 = vmatpush1.msra.mxu0 0.0
        %7866 = vmatprep.subr.mxu0 0.0
        %7867 = vmatpush1.msra.mxu0 0.0
        %7868 = vmatprep.subr.mxu0 0.0
        %7869 = vmatpush1.msra.mxu0 0.0
        %7870 = vmatprep.subr.mxu0 0.0
        %7871 = vmatpush1.msra.mxu0 0.0
        %7872 = vmatprep.subr.mxu0 0.0
        %7873 = vmatpush1.msra.mxu0 0.0
        %7874 = vmatprep.subr.mxu0 0.0
        %7875 = vmatpush1.msra.mxu0 0.0
        %7876 = vmatprep.subr.mxu0 0.0
        %7877 = vmatpush1.msra.mxu0 0.0
        %7878 = vmatprep.subr.mxu0 0.0
        %7879 = vmatpush1.msra.mxu0 0.0
        %7880 = vmatprep.subr.mxu0 0.0
        %7881 = vmatpush1.msra.mxu0 0.0
        %7882 = vmatprep.subr.mxu0 0.0
        %7883 = vmatpush1.msra.mxu0 0.0
        %7884 = vmatprep.subr.mxu0 0.0
        %7885 = vmatpush1.msra.mxu0 0.0
        %7886 = vmatprep.subr.mxu0 0.0
        %7887 = vmatpush1.msra.mxu0 0.0
        %7888 = vmatprep.subr.mxu0 0.0
        %7889 = vmatpush1.msra.mxu0 0.0
        %7890 = vmatprep.subr.mxu0 0.0
        %7891 = vmatpush1.msra.mxu0 0.0
        %7892 = vmatprep.subr.mxu0 0.0
        %7893 = vmatpush1.msra.mxu0 0.0
        %7894 = vmatprep.subr.mxu0 0.0
        %7895 = vmatpush1.msra.mxu0 0.0
        %7896 = vmatprep.subr.mxu0 0.0
        %7897 = vmatpush1.msra.mxu0 0.0
        %7898 = vmatprep.subr.mxu0 0.0
        %7899 = vmatpush1.msra.mxu0 0.0
        %7900 = vmatprep.subr.mxu0 0.0
        %7901 = vmatpush1.msra.mxu0 0.0
        %7902 = vmatprep.subr.mxu0 0.0
        %7903 = vmatpush1.msra.mxu0 0.0
        %7904 = vmatprep.subr.mxu0 0.0
        %7905 = vmatpush1.msra.mxu0 0.0
        %7906 = vmatprep.subr.mxu0 0.0
        %7907 = vmatpush1.msra.mxu0 0.0
        %7908 = vmatprep.subr.mxu0 0.0
        %7909 = vmatpush1.msra.mxu0 0.0
        %7910 = vmatprep.subr.mxu0 0.0
        %7911 = vmatpush1.msra.mxu0 0.0
        %7912 = vmatprep.subr.mxu0 0.0
        %7913 = vmatpush1.msra.mxu0 0.0
        %7914 = vmatprep.subr.mxu0 0.0
        %7915 = vmatpush1.msra.mxu0 0.0
        %7916 = vmatprep.subr.mxu0 0.0
        %7917 = vmatpush1.msra.mxu0 0.0
        %7918 = vmatprep.subr.mxu0 0.0
        %7919 = vmatpush1.msra.mxu0 0.0
        %7920 = vmatprep.mubr.f32.mxu0 0.0
        %7921 = vmatmul.mubr.f32.gmra.mrb[0].mxu0 %v7641
        %v7922 = vpop.f32.mrb[0].mxu0
        %v7923 = vadd.f32 0.0, %v7922
        %v7924 = vpop.f32.mrb[0].mxu0
        %v7925 = vadd.f32 0.0, %v7924
        %7926 = vdwg.mxu0
        %7927 = vmatprep.subr.mxu0 0.0
        %7928 = vmatpush1.msra.mxu0 %v7631
        %7929 = vmatprep.subr.mxu0 0.0
        %7930 = vmatpush1.msra.mxu0 0.0
        %7931 = vmatprep.subr.mxu0 0.0
        %7932 = vmatpush1.msra.mxu0 0.0
        %7933 = vmatprep.subr.mxu0 0.0
        %7934 = vmatpush1.msra.mxu0 0.0
        %7935 = vmatprep.subr.mxu0 0.0
        %7936 = vmatpush1.msra.mxu0 0.0
        %7937 = vmatprep.subr.mxu0 0.0
        %7938 = vmatpush1.msra.mxu0 0.0
        %7939 = vmatprep.subr.mxu0 0.0
        %7940 = vmatpush1.msra.mxu0 0.0
        %7941 = vmatprep.subr.mxu0 0.0
        %7942 = vmatpush1.msra.mxu0 0.0
        %7943 = vmatprep.subr.mxu0 0.0
        %7944 = vmatpush1.msra.mxu0 0.0
        %7945 = vmatprep.subr.mxu0 0.0
        %7946 = vmatpush1.msra.mxu0 0.0
        %7947 = vmatprep.subr.mxu0 0.0
        %7948 = vmatpush1.msra.mxu0 0.0
        %7949 = vmatprep.subr.mxu0 0.0
        %7950 = vmatpush1.msra.mxu0 0.0
        %7951 = vmatprep.subr.mxu0 0.0
        %7952 = vmatpush1.msra.mxu0 0.0
        %7953 = vmatprep.subr.mxu0 0.0
        %7954 = vmatpush1.msra.mxu0 0.0
        %7955 = vmatprep.subr.mxu0 0.0
        %7956 = vmatpush1.msra.mxu0 0.0
        %7957 = vmatprep.subr.mxu0 0.0
        %7958 = vmatpush1.msra.mxu0 0.0
        %7959 = vmatprep.subr.mxu0 0.0
        %7960 = vmatpush1.msra.mxu0 0.0
        %7961 = vmatprep.subr.mxu0 0.0
        %7962 = vmatpush1.msra.mxu0 0.0
        %7963 = vmatprep.subr.mxu0 0.0
        %7964 = vmatpush1.msra.mxu0 0.0
        %7965 = vmatprep.subr.mxu0 0.0
        %7966 = vmatpush1.msra.mxu0 0.0
        %7967 = vmatprep.subr.mxu0 0.0
        %7968 = vmatpush1.msra.mxu0 0.0
        %7969 = vmatprep.subr.mxu0 0.0
        %7970 = vmatpush1.msra.mxu0 0.0
        %7971 = vmatprep.subr.mxu0 0.0
        %7972 = vmatpush1.msra.mxu0 0.0
        %7973 = vmatprep.subr.mxu0 0.0
        %7974 = vmatpush1.msra.mxu0 0.0
        %7975 = vmatprep.subr.mxu0 0.0
        %7976 = vmatpush1.msra.mxu0 0.0
        %7977 = vmatprep.subr.mxu0 0.0
        %7978 = vmatpush1.msra.mxu0 0.0
        %7979 = vmatprep.subr.mxu0 0.0
        %7980 = vmatpush1.msra.mxu0 0.0
        %7981 = vmatprep.subr.mxu0 0.0
        %7982 = vmatpush1.msra.mxu0 0.0
        %7983 = vmatprep.subr.mxu0 0.0
        %7984 = vmatpush1.msra.mxu0 0.0
        %7985 = vmatprep.subr.mxu0 0.0
        %7986 = vmatpush1.msra.mxu0 0.0
        %7987 = vmatprep.subr.mxu0 0.0
        %7988 = vmatpush1.msra.mxu0 0.0
        %7989 = vmatprep.subr.mxu0 0.0
        %7990 = vmatpush1.msra.mxu0 0.0
        %7991 = vmatprep.mubr.f32.mxu0 0.0
        %7992 = vmatmul.mubr.f32.gmra.mrb[0].mxu0 %v7641
        %v7993 = vpop.f32.mrb[0].mxu0
        %v7994 = vadd.f32 0.0, %v7993
        %v7995 = vpop.f32.mrb[0].mxu0
        %7996 = vdwg.mxu0
        %v7997 = vadd.f32 %v7591, %v7710
        %v7998 = vadd.f32 %v7592, %v7712
        %v7999 = vadd.f32 %v7593, %v7781
        %v8000 = vadd.f32 %v7594, %v7783
        %v8001 = vadd.f32 %v7595, %v7852
        %v8002 = vadd.f32 %v7596, %v7854
        %v8003 = vadd.f32 %v7597, %v7923
        %v8004 = vadd.f32 %v7598, %v7925
        %v8005 = vadd.f32 %v7599, %v7994
        %8006 = vrot.lane.b32.xlu0 %v339, 104
        %v8007 = vpop.permute.xlu0 %8006
        %8009 = vrot.lane.b32.xlu0 %v328, 102
        %v8010 = vpop.permute.xlu0 %8009
        %8011 = vrot.lane.b32.xlu0 %v329, 102
        %v8012 = vpop.permute.xlu0 %8011
        %8013 = vrot.lane.b32.xlu0 %v330, 102
        %v8014 = vpop.permute.xlu0 %8013
        %8015 = vrot.lane.b32.xlu0 %v331, 102
        %v8016 = vpop.permute.xlu0 %8015
        %8017 = vrot.lane.b32.xlu0 %v332, 102
        %v8018 = vpop.permute.xlu0 %8017
        %8019 = vrot.lane.b32.xlu0 %v333, 102
        %v8020 = vpop.permute.xlu0 %8019
        %8021 = vrot.lane.b32.xlu0 %v334, 102
        %v8022 = vpop.permute.xlu0 %8021
        %8023 = vrot.lane.b32.xlu0 %v335, 102
        %v8024 = vpop.permute.xlu0 %8023
        %8025 = vrot.lane.b32.xlu0 %v336, 102
        %v8026 = vpop.permute.xlu0 %8025
        %8027 = vrot.lane.b32.xlu0 %v337, 102
        %v8028 = vpop.permute.xlu0 %8027
        %vm8029 = vcmask 834560
        %v8030 = vsel %vm8029, %v8010, %v8012
        %v8031 = vsel %vm8029, %v8012, %v8014
        %v8032 = vsel %vm8029, %v8014, %v8016
        %v8033 = vsel %vm8029, %v8016, %v8018
        %v8034 = vsel %vm8029, %v8018, %v8020
        %v8035 = vsel %vm8029, %v8020, %v8022
        %v8036 = vsel %vm8029, %v8022, %v8024
        %v8037 = vsel %vm8029, %v8024, %v8026
        %v8038 = vsel %vm8029, %v8026, %v8028
        %v8048 = vsel %vm392, %v8007, 0
        %8050 = vmatprep.subr.mxu0 %v8031
        %8051 = vmatpush1.msra.mxu0 %v8030
        %8052 = vmatprep.subr.mxu0 0.0
        %8053 = vmatpush1.msra.mxu0 0.0
        %8054 = vmatprep.subr.mxu0 0.0
        %8055 = vmatpush1.msra.mxu0 0.0
        %8056 = vmatprep.subr.mxu0 0.0
        %8057 = vmatpush1.msra.mxu0 0.0
        %8058 = vmatprep.subr.mxu0 0.0
        %8059 = vmatpush1.msra.mxu0 0.0
        %8060 = vmatprep.subr.mxu0 0.0
        %8061 = vmatpush1.msra.mxu0 0.0
        %8062 = vmatprep.subr.mxu0 0.0
        %8063 = vmatpush1.msra.mxu0 0.0
        %8064 = vmatprep.subr.mxu0 0.0
        %8065 = vmatpush1.msra.mxu0 0.0
        %8066 = vmatprep.subr.mxu0 0.0
        %8067 = vmatpush1.msra.mxu0 0.0
        %8068 = vmatprep.subr.mxu0 0.0
        %8069 = vmatpush1.msra.mxu0 0.0
        %8070 = vmatprep.subr.mxu0 0.0
        %8071 = vmatpush1.msra.mxu0 0.0
        %8072 = vmatprep.subr.mxu0 0.0
        %8073 = vmatpush1.msra.mxu0 0.0
        %8074 = vmatprep.subr.mxu0 0.0
        %8075 = vmatpush1.msra.mxu0 0.0
        %8076 = vmatprep.subr.mxu0 0.0
        %8077 = vmatpush1.msra.mxu0 0.0
        %8078 = vmatprep.subr.mxu0 0.0
        %8079 = vmatpush1.msra.mxu0 0.0
        %8080 = vmatprep.subr.mxu0 0.0
        %8081 = vmatpush1.msra.mxu0 0.0
        %8082 = vmatprep.subr.mxu0 0.0
        %8083 = vmatpush1.msra.mxu0 0.0
        %8084 = vmatprep.subr.mxu0 0.0
        %8085 = vmatpush1.msra.mxu0 0.0
        %8086 = vmatprep.subr.mxu0 0.0
        %8087 = vmatpush1.msra.mxu0 0.0
        %8088 = vmatprep.subr.mxu0 0.0
        %8089 = vmatpush1.msra.mxu0 0.0
        %8090 = vmatprep.subr.mxu0 0.0
        %8091 = vmatpush1.msra.mxu0 0.0
        %8092 = vmatprep.subr.mxu0 0.0
        %8093 = vmatpush1.msra.mxu0 0.0
        %8094 = vmatprep.subr.mxu0 0.0
        %8095 = vmatpush1.msra.mxu0 0.0
        %8096 = vmatprep.subr.mxu0 0.0
        %8097 = vmatpush1.msra.mxu0 0.0
        %8098 = vmatprep.subr.mxu0 0.0
        %8099 = vmatpush1.msra.mxu0 0.0
        %8100 = vmatprep.subr.mxu0 0.0
        %8101 = vmatpush1.msra.mxu0 0.0
        %8102 = vmatprep.subr.mxu0 0.0
        %8103 = vmatpush1.msra.mxu0 0.0
        %8104 = vmatprep.subr.mxu0 0.0
        %8105 = vmatpush1.msra.mxu0 0.0
        %8106 = vmatprep.subr.mxu0 0.0
        %8107 = vmatpush1.msra.mxu0 0.0
        %8108 = vmatprep.subr.mxu0 0.0
        %8109 = vmatpush1.msra.mxu0 0.0
        %8110 = vmatprep.subr.mxu0 0.0
        %8111 = vmatpush1.msra.mxu0 0.0
        %8112 = vmatprep.subr.mxu0 0.0
        %8113 = vmatpush1.msra.mxu0 0.0
        %8114 = vmatprep.mubr.f32.mxu0 0.0
        %8115 = vmatmul.mubr.f32.gmra.mrb[0].mxu0 %v8048
        %v8116 = vpop.f32.mrb[0].mxu0
        %v8117 = vadd.f32 0.0, %v8116
        %v8118 = vpop.f32.mrb[0].mxu0
        %v8119 = vadd.f32 0.0, %v8118
        %8120 = vdwg.mxu0
        %8121 = vmatprep.subr.mxu0 %v8033
        %8122 = vmatpush1.msra.mxu0 %v8032
        %8123 = vmatprep.subr.mxu0 0.0
        %8124 = vmatpush1.msra.mxu0 0.0
        %8125 = vmatprep.subr.mxu0 0.0
        %8126 = vmatpush1.msra.mxu0 0.0
        %8127 = vmatprep.subr.mxu0 0.0
        %8128 = vmatpush1.msra.mxu0 0.0
        %8129 = vmatprep.subr.mxu0 0.0
        %8130 = vmatpush1.msra.mxu0 0.0
        %8131 = vmatprep.subr.mxu0 0.0
        %8132 = vmatpush1.msra.mxu0 0.0
        %8133 = vmatprep.subr.mxu0 0.0
        %8134 = vmatpush1.msra.mxu0 0.0
        %8135 = vmatprep.subr.mxu0 0.0
        %8136 = vmatpush1.msra.mxu0 0.0
        %8137 = vmatprep.subr.mxu0 0.0
        %8138 = vmatpush1.msra.mxu0 0.0
        %8139 = vmatprep.subr.mxu0 0.0
        %8140 = vmatpush1.msra.mxu0 0.0
        %8141 = vmatprep.subr.mxu0 0.0
        %8142 = vmatpush1.msra.mxu0 0.0
        %8143 = vmatprep.subr.mxu0 0.0
        %8144 = vmatpush1.msra.mxu0 0.0
        %8145 = vmatprep.subr.mxu0 0.0
        %8146 = vmatpush1.msra.mxu0 0.0
        %8147 = vmatprep.subr.mxu0 0.0
        %8148 = vmatpush1.msra.mxu0 0.0
        %8149 = vmatprep.subr.mxu0 0.0
        %8150 = vmatpush1.msra.mxu0 0.0
        %8151 = vmatprep.subr.mxu0 0.0
        %8152 = vmatpush1.msra.mxu0 0.0
        %8153 = vmatprep.subr.mxu0 0.0
        %8154 = vmatpush1.msra.mxu0 0.0
        %8155 = vmatprep.subr.mxu0 0.0
        %8156 = vmatpush1.msra.mxu0 0.0
        %8157 = vmatprep.subr.mxu0 0.0
        %8158 = vmatpush1.msra.mxu0 0.0
        %8159 = vmatprep.subr.mxu0 0.0
        %8160 = vmatpush1.msra.mxu0 0.0
        %8161 = vmatprep.subr.mxu0 0.0
        %8162 = vmatpush1.msra.mxu0 0.0
        %8163 = vmatprep.subr.mxu0 0.0
        %8164 = vmatpush1.msra.mxu0 0.0
        %8165 = vmatprep.subr.mxu0 0.0
        %8166 = vmatpush1.msra.mxu0 0.0
        %8167 = vmatprep.subr.mxu0 0.0
        %8168 = vmatpush1.msra.mxu0 0.0
        %8169 = vmatprep.subr.mxu0 0.0
        %8170 = vmatpush1.msra.mxu0 0.0
        %8171 = vmatprep.subr.mxu0 0.0
        %8172 = vmatpush1.msra.mxu0 0.0
        %8173 = vmatprep.subr.mxu0 0.0
        %8174 = vmatpush1.msra.mxu0 0.0
        %8175 = vmatprep.subr.mxu0 0.0
        %8176 = vmatpush1.msra.mxu0 0.0
        %8177 = vmatprep.subr.mxu0 0.0
        %8178 = vmatpush1.msra.mxu0 0.0
        %8179 = vmatprep.subr.mxu0 0.0
        %8180 = vmatpush1.msra.mxu0 0.0
        %8181 = vmatprep.subr.mxu0 0.0
        %8182 = vmatpush1.msra.mxu0 0.0
        %8183 = vmatprep.subr.mxu0 0.0
        %8184 = vmatpush1.msra.mxu0 0.0
        %8185 = vmatprep.mubr.f32.mxu0 0.0
        %8186 = vmatmul.mubr.f32.gmra.mrb[0].mxu0 %v8048
        %v8187 = vpop.f32.mrb[0].mxu0
        %v8188 = vadd.f32 0.0, %v8187
        %v8189 = vpop.f32.mrb[0].mxu0
        %v8190 = vadd.f32 0.0, %v8189
        %8191 = vdwg.mxu0
        %8192 = vmatprep.subr.mxu0 %v8035
        %8193 = vmatpush1.msra.mxu0 %v8034
        %8194 = vmatprep.subr.mxu0 0.0
        %8195 = vmatpush1.msra.mxu0 0.0
        %8196 = vmatprep.subr.mxu0 0.0
        %8197 = vmatpush1.msra.mxu0 0.0
        %8198 = vmatprep.subr.mxu0 0.0
        %8199 = vmatpush1.msra.mxu0 0.0
        %8200 = vmatprep.subr.mxu0 0.0
        %8201 = vmatpush1.msra.mxu0 0.0
        %8202 = vmatprep.subr.mxu0 0.0
        %8203 = vmatpush1.msra.mxu0 0.0
        %8204 = vmatprep.subr.mxu0 0.0
        %8205 = vmatpush1.msra.mxu0 0.0
        %8206 = vmatprep.subr.mxu0 0.0
        %8207 = vmatpush1.msra.mxu0 0.0
        %8208 = vmatprep.subr.mxu0 0.0
        %8209 = vmatpush1.msra.mxu0 0.0
        %8210 = vmatprep.subr.mxu0 0.0
        %8211 = vmatpush1.msra.mxu0 0.0
        %8212 = vmatprep.subr.mxu0 0.0
        %8213 = vmatpush1.msra.mxu0 0.0
        %8214 = vmatprep.subr.mxu0 0.0
        %8215 = vmatpush1.msra.mxu0 0.0
        %8216 = vmatprep.subr.mxu0 0.0
        %8217 = vmatpush1.msra.mxu0 0.0
        %8218 = vmatprep.subr.mxu0 0.0
        %8219 = vmatpush1.msra.mxu0 0.0
        %8220 = vmatprep.subr.mxu0 0.0
        %8221 = vmatpush1.msra.mxu0 0.0
        %8222 = vmatprep.subr.mxu0 0.0
        %8223 = vmatpush1.msra.mxu0 0.0
        %8224 = vmatprep.subr.mxu0 0.0
        %8225 = vmatpush1.msra.mxu0 0.0
        %8226 = vmatprep.subr.mxu0 0.0
        %8227 = vmatpush1.msra.mxu0 0.0
        %8228 = vmatprep.subr.mxu0 0.0
        %8229 = vmatpush1.msra.mxu0 0.0
        %8230 = vmatprep.subr.mxu0 0.0
        %8231 = vmatpush1.msra.mxu0 0.0
        %8232 = vmatprep.subr.mxu0 0.0
        %8233 = vmatpush1.msra.mxu0 0.0
        %8234 = vmatprep.subr.mxu0 0.0
        %8235 = vmatpush1.msra.mxu0 0.0
        %8236 = vmatprep.subr.mxu0 0.0
        %8237 = vmatpush1.msra.mxu0 0.0
        %8238 = vmatprep.subr.mxu0 0.0
        %8239 = vmatpush1.msra.mxu0 0.0
        %8240 = vmatprep.subr.mxu0 0.0
        %8241 = vmatpush1.msra.mxu0 0.0
        %8242 = vmatprep.subr.mxu0 0.0
        %8243 = vmatpush1.msra.mxu0 0.0
        %8244 = vmatprep.subr.mxu0 0.0
        %8245 = vmatpush1.msra.mxu0 0.0
        %8246 = vmatprep.subr.mxu0 0.0
        %8247 = vmatpush1.msra.mxu0 0.0
        %8248 = vmatprep.subr.mxu0 0.0
        %8249 = vmatpush1.msra.mxu0 0.0
        %8250 = vmatprep.subr.mxu0 0.0
        %8251 = vmatpush1.msra.mxu0 0.0
        %8252 = vmatprep.subr.mxu0 0.0
        %8253 = vmatpush1.msra.mxu0 0.0
        %8254 = vmatprep.subr.mxu0 0.0
        %8255 = vmatpush1.msra.mxu0 0.0
        %8256 = vmatprep.mubr.f32.mxu0 0.0
        %8257 = vmatmul.mubr.f32.gmra.mrb[0].mxu0 %v8048
        %v8258 = vpop.f32.mrb[0].mxu0
        %v8259 = vadd.f32 0.0, %v8258
        %v8260 = vpop.f32.mrb[0].mxu0
        %v8261 = vadd.f32 0.0, %v8260
        %8262 = vdwg.mxu0
        %8263 = vmatprep.subr.mxu0 %v8037
        %8264 = vmatpush1.msra.mxu0 %v8036
        %8265 = vmatprep.subr.mxu0 0.0
        %8266 = vmatpush1.msra.mxu0 0.0
        %8267 = vmatprep.subr.mxu0 0.0
        %8268 = vmatpush1.msra.mxu0 0.0
        %8269 = vmatprep.subr.mxu0 0.0
        %8270 = vmatpush1.msra.mxu0 0.0
        %8271 = vmatprep.subr.mxu0 0.0
        %8272 = vmatpush1.msra.mxu0 0.0
        %8273 = vmatprep.subr.mxu0 0.0
        %8274 = vmatpush1.msra.mxu0 0.0
        %8275 = vmatprep.subr.mxu0 0.0
        %8276 = vmatpush1.msra.mxu0 0.0
        %8277 = vmatprep.subr.mxu0 0.0
        %8278 = vmatpush1.msra.mxu0 0.0
        %8279 = vmatprep.subr.mxu0 0.0
        %8280 = vmatpush1.msra.mxu0 0.0
        %8281 = vmatprep.subr.mxu0 0.0
        %8282 = vmatpush1.msra.mxu0 0.0
        %8283 = vmatprep.subr.mxu0 0.0
        %8284 = vmatpush1.msra.mxu0 0.0
        %8285 = vmatprep.subr.mxu0 0.0
        %8286 = vmatpush1.msra.mxu0 0.0
        %8287 = vmatprep.subr.mxu0 0.0
        %8288 = vmatpush1.msra.mxu0 0.0
        %8289 = vmatprep.subr.mxu0 0.0
        %8290 = vmatpush1.msra.mxu0 0.0
        %8291 = vmatprep.subr.mxu0 0.0
        %8292 = vmatpush1.msra.mxu0 0.0
        %8293 = vmatprep.subr.mxu0 0.0
        %8294 = vmatpush1.msra.mxu0 0.0
        %8295 = vmatprep.subr.mxu0 0.0
        %8296 = vmatpush1.msra.mxu0 0.0
        %8297 = vmatprep.subr.mxu0 0.0
        %8298 = vmatpush1.msra.mxu0 0.0
        %8299 = vmatprep.subr.mxu0 0.0
        %8300 = vmatpush1.msra.mxu0 0.0
        %8301 = vmatprep.subr.mxu0 0.0
        %8302 = vmatpush1.msra.mxu0 0.0
        %8303 = vmatprep.subr.mxu0 0.0
        %8304 = vmatpush1.msra.mxu0 0.0
        %8305 = vmatprep.subr.mxu0 0.0
        %8306 = vmatpush1.msra.mxu0 0.0
        %8307 = vmatprep.subr.mxu0 0.0
        %8308 = vmatpush1.msra.mxu0 0.0
        %8309 = vmatprep.subr.mxu0 0.0
        %8310 = vmatpush1.msra.mxu0 0.0
        %8311 = vmatprep.subr.mxu0 0.0
        %8312 = vmatpush1.msra.mxu0 0.0
        %8313 = vmatprep.subr.mxu0 0.0
        %8314 = vmatpush1.msra.mxu0 0.0
        %8315 = vmatprep.subr.mxu0 0.0
        %8316 = vmatpush1.msra.mxu0 0.0
        %8317 = vmatprep.subr.mxu0 0.0
        %8318 = vmatpush1.msra.mxu0 0.0
        %8319 = vmatprep.subr.mxu0 0.0
        %8320 = vmatpush1.msra.mxu0 0.0
        %8321 = vmatprep.subr.mxu0 0.0
        %8322 = vmatpush1.msra.mxu0 0.0
        %8323 = vmatprep.subr.mxu0 0.0
        %8324 = vmatpush1.msra.mxu0 0.0
        %8325 = vmatprep.subr.mxu0 0.0
        %8326 = vmatpush1.msra.mxu0 0.0
        %8327 = vmatprep.mubr.f32.mxu0 0.0
        %8328 = vmatmul.mubr.f32.gmra.mrb[0].mxu0 %v8048
        %v8329 = vpop.f32.mrb[0].mxu0
        %v8330 = vadd.f32 0.0, %v8329
        %v8331 = vpop.f32.mrb[0].mxu0
        %v8332 = vadd.f32 0.0, %v8331
        %8333 = vdwg.mxu0
        %8334 = vmatprep.subr.mxu0 0.0
        %8335 = vmatpush1.msra.mxu0 %v8038
        %8336 = vmatprep.subr.mxu0 0.0
        %8337 = vmatpush1.msra.mxu0 0.0
        %8338 = vmatprep.subr.mxu0 0.0
        %8339 = vmatpush1.msra.mxu0 0.0
        %8340 = vmatprep.subr.mxu0 0.0
        %8341 = vmatpush1.msra.mxu0 0.0
        %8342 = vmatprep.subr.mxu0 0.0
        %8343 = vmatpush1.msra.mxu0 0.0
        %8344 = vmatprep.subr.mxu0 0.0
        %8345 = vmatpush1.msra.mxu0 0.0
        %8346 = vmatprep.subr.mxu0 0.0
        %8347 = vmatpush1.msra.mxu0 0.0
        %8348 = vmatprep.subr.mxu0 0.0
        %8349 = vmatpush1.msra.mxu0 0.0
        %8350 = vmatprep.subr.mxu0 0.0
        %8351 = vmatpush1.msra.mxu0 0.0
        %8352 = vmatprep.subr.mxu0 0.0
        %8353 = vmatpush1.msra.mxu0 0.0
        %8354 = vmatprep.subr.mxu0 0.0
        %8355 = vmatpush1.msra.mxu0 0.0
        %8356 = vmatprep.subr.mxu0 0.0
        %8357 = vmatpush1.msra.mxu0 0.0
        %8358 = vmatprep.subr.mxu0 0.0
        %8359 = vmatpush1.msra.mxu0 0.0
        %8360 = vmatprep.subr.mxu0 0.0
        %8361 = vmatpush1.msra.mxu0 0.0
        %8362 = vmatprep.subr.mxu0 0.0
        %8363 = vmatpush1.msra.mxu0 0.0
        %8364 = vmatprep.subr.mxu0 0.0
        %8365 = vmatpush1.msra.mxu0 0.0
        %8366 = vmatprep.subr.mxu0 0.0
        %8367 = vmatpush1.msra.mxu0 0.0
        %8368 = vmatprep.subr.mxu0 0.0
        %8369 = vmatpush1.msra.mxu0 0.0
        %8370 = vmatprep.subr.mxu0 0.0
        %8371 = vmatpush1.msra.mxu0 0.0
        %8372 = vmatprep.subr.mxu0 0.0
        %8373 = vmatpush1.msra.mxu0 0.0
        %8374 = vmatprep.subr.mxu0 0.0
        %8375 = vmatpush1.msra.mxu0 0.0
        %8376 = vmatprep.subr.mxu0 0.0
        %8377 = vmatpush1.msra.mxu0 0.0
        %8378 = vmatprep.subr.mxu0 0.0
        %8379 = vmatpush1.msra.mxu0 0.0
        %8380 = vmatprep.subr.mxu0 0.0
        %8381 = vmatpush1.msra.mxu0 0.0
        %8382 = vmatprep.subr.mxu0 0.0
        %8383 = vmatpush1.msra.mxu0 0.0
        %8384 = vmatprep.subr.mxu0 0.0
        %8385 = vmatpush1.msra.mxu0 0.0
        %8386 = vmatprep.subr.mxu0 0.0
        %8387 = vmatpush1.msra.mxu0 0.0
        %8388 = vmatprep.subr.mxu0 0.0
        %8389 = vmatpush1.msra.mxu0 0.0
        %8390 = vmatprep.subr.mxu0 0.0
        %8391 = vmatpush1.msra.mxu0 0.0
        %8392 = vmatprep.subr.mxu0 0.0
        %8393 = vmatpush1.msra.mxu0 0.0
        %8394 = vmatprep.subr.mxu0 0.0
        %8395 = vmatpush1.msra.mxu0 0.0
        %8396 = vmatprep.subr.mxu0 0.0
        %8397 = vmatpush1.msra.mxu0 0.0
        %8398 = vmatprep.mubr.f32.mxu0 0.0
        %8399 = vmatmul.mubr.f32.gmra.mrb[0].mxu0 %v8048
        %v8400 = vpop.f32.mrb[0].mxu0
        %v8401 = vadd.f32 0.0, %v8400
        %v8402 = vpop.f32.mrb[0].mxu0
        %8403 = vdwg.mxu0
        %v8404 = vadd.f32 %v7997, %v8117
        %v8405 = vadd.f32 %v7998, %v8119
        %v8406 = vadd.f32 %v7999, %v8188
        %v8407 = vadd.f32 %v8000, %v8190
        %v8408 = vadd.f32 %v8001, %v8259
        %v8409 = vadd.f32 %v8002, %v8261
        %v8410 = vadd.f32 %v8003, %v8330
        %v8411 = vadd.f32 %v8004, %v8332
        %v8412 = vadd.f32 %v8005, %v8401
        %8413 = vrot.lane.b32.xlu0 %v339, 96
        %v8414 = vpop.permute.xlu0 %8413
        %8415 = vrot.lane.b32.xlu0 %v328, 98
        %v8416 = vpop.permute.xlu0 %8415
        %8417 = vrot.lane.b32.xlu0 %v329, 98
        %v8418 = vpop.permute.xlu0 %8417
        %8419 = vrot.lane.b32.xlu0 %v330, 98
        %v8420 = vpop.permute.xlu0 %8419
        %8421 = vrot.lane.b32.xlu0 %v331, 98
        %v8422 = vpop.permute.xlu0 %8421
        %8423 = vrot.lane.b32.xlu0 %v332, 98
        %v8424 = vpop.permute.xlu0 %8423
        %8425 = vrot.lane.b32.xlu0 %v333, 98
        %v8426 = vpop.permute.xlu0 %8425
        %8427 = vrot.lane.b32.xlu0 %v334, 98
        %v8428 = vpop.permute.xlu0 %8427
        %8429 = vrot.lane.b32.xlu0 %v335, 98
        %v8430 = vpop.permute.xlu0 %8429
        %8431 = vrot.lane.b32.xlu0 %v336, 98
        %v8432 = vpop.permute.xlu0 %8431
        %8433 = vrot.lane.b32.xlu0 %v337, 98
        %v8434 = vpop.permute.xlu0 %8433
        %vm8435 = vcmask 801792
        %v8436 = vsel %vm8435, %v8416, %v8418
        %v8437 = vsel %vm8435, %v8418, %v8420
        %v8438 = vsel %vm8435, %v8420, %v8422
        %v8439 = vsel %vm8435, %v8422, %v8424
        %v8440 = vsel %vm8435, %v8424, %v8426
        %v8441 = vsel %vm8435, %v8426, %v8428
        %v8442 = vsel %vm8435, %v8428, %v8430
        %v8443 = vsel %vm8435, %v8430, %v8432
        %v8444 = vsel %vm8435, %v8432, %v8434
        %v8454 = vsel %vm392, %v8414, 0
        %8456 = vmatprep.subr.mxu0 %v8437
        %8457 = vmatpush1.msra.mxu0 %v8436
        %8458 = vmatprep.subr.mxu0 0.0
        %8459 = vmatpush1.msra.mxu0 0.0
        %8460 = vmatprep.subr.mxu0 0.0
        %8461 = vmatpush1.msra.mxu0 0.0
        %8462 = vmatprep.subr.mxu0 0.0
        %8463 = vmatpush1.msra.mxu0 0.0
        %8464 = vmatprep.subr.mxu0 0.0
        %8465 = vmatpush1.msra.mxu0 0.0
        %8466 = vmatprep.subr.mxu0 0.0
        %8467 = vmatpush1.msra.mxu0 0.0
        %8468 = vmatprep.subr.mxu0 0.0
        %8469 = vmatpush1.msra.mxu0 0.0
        %8470 = vmatprep.subr.mxu0 0.0
        %8471 = vmatpush1.msra.mxu0 0.0
        %8472 = vmatprep.subr.mxu0 0.0
        %8473 = vmatpush1.msra.mxu0 0.0
        %8474 = vmatprep.subr.mxu0 0.0
        %8475 = vmatpush1.msra.mxu0 0.0
        %8476 = vmatprep.subr.mxu0 0.0
        %8477 = vmatpush1.msra.mxu0 0.0
        %8478 = vmatprep.subr.mxu0 0.0
        %8479 = vmatpush1.msra.mxu0 0.0
        %8480 = vmatprep.subr.mxu0 0.0
        %8481 = vmatpush1.msra.mxu0 0.0
        %8482 = vmatprep.subr.mxu0 0.0
        %8483 = vmatpush1.msra.mxu0 0.0
        %8484 = vmatprep.subr.mxu0 0.0
        %8485 = vmatpush1.msra.mxu0 0.0
        %8486 = vmatprep.subr.mxu0 0.0
        %8487 = vmatpush1.msra.mxu0 0.0
        %8488 = vmatprep.subr.mxu0 0.0
        %8489 = vmatpush1.msra.mxu0 0.0
        %8490 = vmatprep.subr.mxu0 0.0
        %8491 = vmatpush1.msra.mxu0 0.0
        %8492 = vmatprep.subr.mxu0 0.0
        %8493 = vmatpush1.msra.mxu0 0.0
        %8494 = vmatprep.subr.mxu0 0.0
        %8495 = vmatpush1.msra.mxu0 0.0
        %8496 = vmatprep.subr.mxu0 0.0
        %8497 = vmatpush1.msra.mxu0 0.0
        %8498 = vmatprep.subr.mxu0 0.0
        %8499 = vmatpush1.msra.mxu0 0.0
        %8500 = vmatprep.subr.mxu0 0.0
        %8501 = vmatpush1.msra.mxu0 0.0
        %8502 = vmatprep.subr.mxu0 0.0
        %8503 = vmatpush1.msra.mxu0 0.0
        %8504 = vmatprep.subr.mxu0 0.0
        %8505 = vmatpush1.msra.mxu0 0.0
        %8506 = vmatprep.subr.mxu0 0.0
        %8507 = vmatpush1.msra.mxu0 0.0
        %8508 = vmatprep.subr.mxu0 0.0
        %8509 = vmatpush1.msra.mxu0 0.0
        %8510 = vmatprep.subr.mxu0 0.0
        %8511 = vmatpush1.msra.mxu0 0.0
        %8512 = vmatprep.subr.mxu0 0.0
        %8513 = vmatpush1.msra.mxu0 0.0
        %8514 = vmatprep.subr.mxu0 0.0
        %8515 = vmatpush1.msra.mxu0 0.0
        %8516 = vmatprep.subr.mxu0 0.0
        %8517 = vmatpush1.msra.mxu0 0.0
        %8518 = vmatprep.subr.mxu0 0.0
        %8519 = vmatpush1.msra.mxu0 0.0
        %8520 = vmatprep.mubr.f32.mxu0 0.0
        %8521 = vmatmul.mubr.f32.gmra.mrb[0].mxu0 %v8454
        %v8522 = vpop.f32.mrb[0].mxu0
        %v8523 = vadd.f32 0.0, %v8522
        %v8524 = vpop.f32.mrb[0].mxu0
        %v8525 = vadd.f32 0.0, %v8524
        %8526 = vdwg.mxu0
        %8527 = vmatprep.subr.mxu0 %v8439
        %8528 = vmatpush1.msra.mxu0 %v8438
        %8529 = vmatprep.subr.mxu0 0.0
        %8530 = vmatpush1.msra.mxu0 0.0
        %8531 = vmatprep.subr.mxu0 0.0
        %8532 = vmatpush1.msra.mxu0 0.0
        %8533 = vmatprep.subr.mxu0 0.0
        %8534 = vmatpush1.msra.mxu0 0.0
        %8535 = vmatprep.subr.mxu0 0.0
        %8536 = vmatpush1.msra.mxu0 0.0
        %8537 = vmatprep.subr.mxu0 0.0
        %8538 = vmatpush1.msra.mxu0 0.0
        %8539 = vmatprep.subr.mxu0 0.0
        %8540 = vmatpush1.msra.mxu0 0.0
        %8541 = vmatprep.subr.mxu0 0.0
        %8542 = vmatpush1.msra.mxu0 0.0
        %8543 = vmatprep.subr.mxu0 0.0
        %8544 = vmatpush1.msra.mxu0 0.0
        %8545 = vmatprep.subr.mxu0 0.0
        %8546 = vmatpush1.msra.mxu0 0.0
        %8547 = vmatprep.subr.mxu0 0.0
        %8548 = vmatpush1.msra.mxu0 0.0
        %8549 = vmatprep.subr.mxu0 0.0
        %8550 = vmatpush1.msra.mxu0 0.0
        %8551 = vmatprep.subr.mxu0 0.0
        %8552 = vmatpush1.msra.mxu0 0.0
        %8553 = vmatprep.subr.mxu0 0.0
        %8554 = vmatpush1.msra.mxu0 0.0
        %8555 = vmatprep.subr.mxu0 0.0
        %8556 = vmatpush1.msra.mxu0 0.0
        %8557 = vmatprep.subr.mxu0 0.0
        %8558 = vmatpush1.msra.mxu0 0.0
        %8559 = vmatprep.subr.mxu0 0.0
        %8560 = vmatpush1.msra.mxu0 0.0
        %8561 = vmatprep.subr.mxu0 0.0
        %8562 = vmatpush1.msra.mxu0 0.0
        %8563 = vmatprep.subr.mxu0 0.0
        %8564 = vmatpush1.msra.mxu0 0.0
        %8565 = vmatprep.subr.mxu0 0.0
        %8566 = vmatpush1.msra.mxu0 0.0
        %8567 = vmatprep.subr.mxu0 0.0
        %8568 = vmatpush1.msra.mxu0 0.0
        %8569 = vmatprep.subr.mxu0 0.0
        %8570 = vmatpush1.msra.mxu0 0.0
        %8571 = vmatprep.subr.mxu0 0.0
        %8572 = vmatpush1.msra.mxu0 0.0
        %8573 = vmatprep.subr.mxu0 0.0
        %8574 = vmatpush1.msra.mxu0 0.0
        %8575 = vmatprep.subr.mxu0 0.0
        %8576 = vmatpush1.msra.mxu0 0.0
        %8577 = vmatprep.subr.mxu0 0.0
        %8578 = vmatpush1.msra.mxu0 0.0
        %8579 = vmatprep.subr.mxu0 0.0
        %8580 = vmatpush1.msra.mxu0 0.0
        %8581 = vmatprep.subr.mxu0 0.0
        %8582 = vmatpush1.msra.mxu0 0.0
        %8583 = vmatprep.subr.mxu0 0.0
        %8584 = vmatpush1.msra.mxu0 0.0
        %8585 = vmatprep.subr.mxu0 0.0
        %8586 = vmatpush1.msra.mxu0 0.0
        %8587 = vmatprep.subr.mxu0 0.0
        %8588 = vmatpush1.msra.mxu0 0.0
        %8589 = vmatprep.subr.mxu0 0.0
        %8590 = vmatpush1.msra.mxu0 0.0
        %8591 = vmatprep.mubr.f32.mxu0 0.0
        %8592 = vmatmul.mubr.f32.gmra.mrb[0].mxu0 %v8454
        %v8593 = vpop.f32.mrb[0].mxu0
        %v8594 = vadd.f32 0.0, %v8593
        %v8595 = vpop.f32.mrb[0].mxu0
        %v8596 = vadd.f32 0.0, %v8595
        %8597 = vdwg.mxu0
        %8598 = vmatprep.subr.mxu0 %v8441
        %8599 = vmatpush1.msra.mxu0 %v8440
        %8600 = vmatprep.subr.mxu0 0.0
        %8601 = vmatpush1.msra.mxu0 0.0
        %8602 = vmatprep.subr.mxu0 0.0
        %8603 = vmatpush1.msra.mxu0 0.0
        %8604 = vmatprep.subr.mxu0 0.0
        %8605 = vmatpush1.msra.mxu0 0.0
        %8606 = vmatprep.subr.mxu0 0.0
        %8607 = vmatpush1.msra.mxu0 0.0
        %8608 = vmatprep.subr.mxu0 0.0
        %8609 = vmatpush1.msra.mxu0 0.0
        %8610 = vmatprep.subr.mxu0 0.0
        %8611 = vmatpush1.msra.mxu0 0.0
        %8612 = vmatprep.subr.mxu0 0.0
        %8613 = vmatpush1.msra.mxu0 0.0
        %8614 = vmatprep.subr.mxu0 0.0
        %8615 = vmatpush1.msra.mxu0 0.0
        %8616 = vmatprep.subr.mxu0 0.0
        %8617 = vmatpush1.msra.mxu0 0.0
        %8618 = vmatprep.subr.mxu0 0.0
        %8619 = vmatpush1.msra.mxu0 0.0
        %8620 = vmatprep.subr.mxu0 0.0
        %8621 = vmatpush1.msra.mxu0 0.0
        %8622 = vmatprep.subr.mxu0 0.0
        %8623 = vmatpush1.msra.mxu0 0.0
        %8624 = vmatprep.subr.mxu0 0.0
        %8625 = vmatpush1.msra.mxu0 0.0
        %8626 = vmatprep.subr.mxu0 0.0
        %8627 = vmatpush1.msra.mxu0 0.0
        %8628 = vmatprep.subr.mxu0 0.0
        %8629 = vmatpush1.msra.mxu0 0.0
        %8630 = vmatprep.subr.mxu0 0.0
        %8631 = vmatpush1.msra.mxu0 0.0
        %8632 = vmatprep.subr.mxu0 0.0
        %8633 = vmatpush1.msra.mxu0 0.0
        %8634 = vmatprep.subr.mxu0 0.0
        %8635 = vmatpush1.msra.mxu0 0.0
        %8636 = vmatprep.subr.mxu0 0.0
        %8637 = vmatpush1.msra.mxu0 0.0
        %8638 = vmatprep.subr.mxu0 0.0
        %8639 = vmatpush1.msra.mxu0 0.0
        %8640 = vmatprep.subr.mxu0 0.0
        %8641 = vmatpush1.msra.mxu0 0.0
        %8642 = vmatprep.subr.mxu0 0.0
        %8643 = vmatpush1.msra.mxu0 0.0
        %8644 = vmatprep.subr.mxu0 0.0
        %8645 = vmatpush1.msra.mxu0 0.0
        %8646 = vmatprep.subr.mxu0 0.0
        %8647 = vmatpush1.msra.mxu0 0.0
        %8648 = vmatprep.subr.mxu0 0.0
        %8649 = vmatpush1.msra.mxu0 0.0
        %8650 = vmatprep.subr.mxu0 0.0
        %8651 = vmatpush1.msra.mxu0 0.0
        %8652 = vmatprep.subr.mxu0 0.0
        %8653 = vmatpush1.msra.mxu0 0.0
        %8654 = vmatprep.subr.mxu0 0.0
        %8655 = vmatpush1.msra.mxu0 0.0
        %8656 = vmatprep.subr.mxu0 0.0
        %8657 = vmatpush1.msra.mxu0 0.0
        %8658 = vmatprep.subr.mxu0 0.0
        %8659 = vmatpush1.msra.mxu0 0.0
        %8660 = vmatprep.subr.mxu0 0.0
        %8661 = vmatpush1.msra.mxu0 0.0
        %8662 = vmatprep.mubr.f32.mxu0 0.0
        %8663 = vmatmul.mubr.f32.gmra.mrb[0].mxu0 %v8454
        %v8664 = vpop.f32.mrb[0].mxu0
        %v8665 = vadd.f32 0.0, %v8664
        %v8666 = vpop.f32.mrb[0].mxu0
        %v8667 = vadd.f32 0.0, %v8666
        %8668 = vdwg.mxu0
        %8669 = vmatprep.subr.mxu0 %v8443
        %8670 = vmatpush1.msra.mxu0 %v8442
        %8671 = vmatprep.subr.mxu0 0.0
        %8672 = vmatpush1.msra.mxu0 0.0
        %8673 = vmatprep.subr.mxu0 0.0
        %8674 = vmatpush1.msra.mxu0 0.0
        %8675 = vmatprep.subr.mxu0 0.0
        %8676 = vmatpush1.msra.mxu0 0.0
        %8677 = vmatprep.subr.mxu0 0.0
        %8678 = vmatpush1.msra.mxu0 0.0
        %8679 = vmatprep.subr.mxu0 0.0
        %8680 = vmatpush1.msra.mxu0 0.0
        %8681 = vmatprep.subr.mxu0 0.0
        %8682 = vmatpush1.msra.mxu0 0.0
        %8683 = vmatprep.subr.mxu0 0.0
        %8684 = vmatpush1.msra.mxu0 0.0
        %8685 = vmatprep.subr.mxu0 0.0
        %8686 = vmatpush1.msra.mxu0 0.0
        %8687 = vmatprep.subr.mxu0 0.0
        %8688 = vmatpush1.msra.mxu0 0.0
        %8689 = vmatprep.subr.mxu0 0.0
        %8690 = vmatpush1.msra.mxu0 0.0
        %8691 = vmatprep.subr.mxu0 0.0
        %8692 = vmatpush1.msra.mxu0 0.0
        %8693 = vmatprep.subr.mxu0 0.0
        %8694 = vmatpush1.msra.mxu0 0.0
        %8695 = vmatprep.subr.mxu0 0.0
        %8696 = vmatpush1.msra.mxu0 0.0
        %8697 = vmatprep.subr.mxu0 0.0
        %8698 = vmatpush1.msra.mxu0 0.0
        %8699 = vmatprep.subr.mxu0 0.0
        %8700 = vmatpush1.msra.mxu0 0.0
        %8701 = vmatprep.subr.mxu0 0.0
        %8702 = vmatpush1.msra.mxu0 0.0
        %8703 = vmatprep.subr.mxu0 0.0
        %8704 = vmatpush1.msra.mxu0 0.0
        %8705 = vmatprep.subr.mxu0 0.0
        %8706 = vmatpush1.msra.mxu0 0.0
        %8707 = vmatprep.subr.mxu0 0.0
        %8708 = vmatpush1.msra.mxu0 0.0
        %8709 = vmatprep.subr.mxu0 0.0
        %8710 = vmatpush1.msra.mxu0 0.0
        %8711 = vmatprep.subr.mxu0 0.0
        %8712 = vmatpush1.msra.mxu0 0.0
        %8713 = vmatprep.subr.mxu0 0.0
        %8714 = vmatpush1.msra.mxu0 0.0
        %8715 = vmatprep.subr.mxu0 0.0
        %8716 = vmatpush1.msra.mxu0 0.0
        %8717 = vmatprep.subr.mxu0 0.0
        %8718 = vmatpush1.msra.mxu0 0.0
        %8719 = vmatprep.subr.mxu0 0.0
        %8720 = vmatpush1.msra.mxu0 0.0
        %8721 = vmatprep.subr.mxu0 0.0
        %8722 = vmatpush1.msra.mxu0 0.0
        %8723 = vmatprep.subr.mxu0 0.0
        %8724 = vmatpush1.msra.mxu0 0.0
        %8725 = vmatprep.subr.mxu0 0.0
        %8726 = vmatpush1.msra.mxu0 0.0
        %8727 = vmatprep.subr.mxu0 0.0
        %8728 = vmatpush1.msra.mxu0 0.0
        %8729 = vmatprep.subr.mxu0 0.0
        %8730 = vmatpush1.msra.mxu0 0.0
        %8731 = vmatprep.subr.mxu0 0.0
        %8732 = vmatpush1.msra.mxu0 0.0
        %8733 = vmatprep.mubr.f32.mxu0 0.0
        %8734 = vmatmul.mubr.f32.gmra.mrb[0].mxu0 %v8454
        %v8735 = vpop.f32.mrb[0].mxu0
        %v8736 = vadd.f32 0.0, %v8735
        %v8737 = vpop.f32.mrb[0].mxu0
        %v8738 = vadd.f32 0.0, %v8737
        %8739 = vdwg.mxu0
        %8740 = vmatprep.subr.mxu0 0.0
        %8741 = vmatpush1.msra.mxu0 %v8444
        %8742 = vmatprep.subr.mxu0 0.0
        %8743 = vmatpush1.msra.mxu0 0.0
        %8744 = vmatprep.subr.mxu0 0.0
        %8745 = vmatpush1.msra.mxu0 0.0
        %8746 = vmatprep.subr.mxu0 0.0
        %8747 = vmatpush1.msra.mxu0 0.0
        %8748 = vmatprep.subr.mxu0 0.0
        %8749 = vmatpush1.msra.mxu0 0.0
        %8750 = vmatprep.subr.mxu0 0.0
        %8751 = vmatpush1.msra.mxu0 0.0
        %8752 = vmatprep.subr.mxu0 0.0
        %8753 = vmatpush1.msra.mxu0 0.0
        %8754 = vmatprep.subr.mxu0 0.0
        %8755 = vmatpush1.msra.mxu0 0.0
        %8756 = vmatprep.subr.mxu0 0.0
        %8757 = vmatpush1.msra.mxu0 0.0
        %8758 = vmatprep.subr.mxu0 0.0
        %8759 = vmatpush1.msra.mxu0 0.0
        %8760 = vmatprep.subr.mxu0 0.0
        %8761 = vmatpush1.msra.mxu0 0.0
        %8762 = vmatprep.subr.mxu0 0.0
        %8763 = vmatpush1.msra.mxu0 0.0
        %8764 = vmatprep.subr.mxu0 0.0
        %8765 = vmatpush1.msra.mxu0 0.0
        %8766 = vmatprep.subr.mxu0 0.0
        %8767 = vmatpush1.msra.mxu0 0.0
        %8768 = vmatprep.subr.mxu0 0.0
        %8769 = vmatpush1.msra.mxu0 0.0
        %8770 = vmatprep.subr.mxu0 0.0
        %8771 = vmatpush1.msra.mxu0 0.0
        %8772 = vmatprep.subr.mxu0 0.0
        %8773 = vmatpush1.msra.mxu0 0.0
        %8774 = vmatprep.subr.mxu0 0.0
        %8775 = vmatpush1.msra.mxu0 0.0
        %8776 = vmatprep.subr.mxu0 0.0
        %8777 = vmatpush1.msra.mxu0 0.0
        %8778 = vmatprep.subr.mxu0 0.0
        %8779 = vmatpush1.msra.mxu0 0.0
        %8780 = vmatprep.subr.mxu0 0.0
        %8781 = vmatpush1.msra.mxu0 0.0
        %8782 = vmatprep.subr.mxu0 0.0
        %8783 = vmatpush1.msra.mxu0 0.0
        %8784 = vmatprep.subr.mxu0 0.0
        %8785 = vmatpush1.msra.mxu0 0.0
        %8786 = vmatprep.subr.mxu0 0.0
        %8787 = vmatpush1.msra.mxu0 0.0
        %8788 = vmatprep.subr.mxu0 0.0
        %8789 = vmatpush1.msra.mxu0 0.0
        %8790 = vmatprep.subr.mxu0 0.0
        %8791 = vmatpush1.msra.mxu0 0.0
        %8792 = vmatprep.subr.mxu0 0.0
        %8793 = vmatpush1.msra.mxu0 0.0
        %8794 = vmatprep.subr.mxu0 0.0
        %8795 = vmatpush1.msra.mxu0 0.0
        %8796 = vmatprep.subr.mxu0 0.0
        %8797 = vmatpush1.msra.mxu0 0.0
        %8798 = vmatprep.subr.mxu0 0.0
        %8799 = vmatpush1.msra.mxu0 0.0
        %8800 = vmatprep.subr.mxu0 0.0
        %8801 = vmatpush1.msra.mxu0 0.0
        %8802 = vmatprep.subr.mxu0 0.0
        %8803 = vmatpush1.msra.mxu0 0.0
        %8804 = vmatprep.mubr.f32.mxu0 0.0
        %8805 = vmatmul.mubr.f32.gmra.mrb[0].mxu0 %v8454
        %v8806 = vpop.f32.mrb[0].mxu0
        %v8807 = vadd.f32 0.0, %v8806
        %v8808 = vpop.f32.mrb[0].mxu0
        %8809 = vdwg.mxu0
        %v8810 = vadd.f32 %v8404, %v8523
        %v8811 = vadd.f32 %v8405, %v8525
        %v8812 = vadd.f32 %v8406, %v8594
        %v8813 = vadd.f32 %v8407, %v8596
        %v8814 = vadd.f32 %v8408, %v8665
        %v8815 = vadd.f32 %v8409, %v8667
        %v8816 = vadd.f32 %v8410, %v8736
        %v8817 = vadd.f32 %v8411, %v8738
        %v8818 = vadd.f32 %v8412, %v8807
        %8819 = vrot.lane.b32.xlu0 %v339, 88
        %v8820 = vpop.permute.xlu0 %8819
        %8821 = vrot.lane.b32.xlu0 %v328, 94
        %v8822 = vpop.permute.xlu0 %8821
        %8823 = vrot.lane.b32.xlu0 %v329, 94
        %v8824 = vpop.permute.xlu0 %8823
        %8825 = vrot.lane.b32.xlu0 %v330, 94
        %v8826 = vpop.permute.xlu0 %8825
        %8827 = vrot.lane.b32.xlu0 %v331, 94
        %v8828 = vpop.permute.xlu0 %8827
        %8829 = vrot.lane.b32.xlu0 %v332, 94
        %v8830 = vpop.permute.xlu0 %8829
        %8831 = vrot.lane.b32.xlu0 %v333, 94
        %v8832 = vpop.permute.xlu0 %8831
        %8833 = vrot.lane.b32.xlu0 %v334, 94
        %v8834 = vpop.permute.xlu0 %8833
        %8835 = vrot.lane.b32.xlu0 %v335, 94
        %v8836 = vpop.permute.xlu0 %8835
        %8837 = vrot.lane.b32.xlu0 %v336, 94
        %v8838 = vpop.permute.xlu0 %8837
        %8839 = vrot.lane.b32.xlu0 %v337, 94
        %v8840 = vpop.permute.xlu0 %8839
        %vm8841 = vcmask 769024
        %v8842 = vsel %vm8841, %v8822, %v8824
        %v8843 = vsel %vm8841, %v8824, %v8826
        %v8844 = vsel %vm8841, %v8826, %v8828
        %v8845 = vsel %vm8841, %v8828, %v8830
        %v8846 = vsel %vm8841, %v8830, %v8832
        %v8847 = vsel %vm8841, %v8832, %v8834
        %v8848 = vsel %vm8841, %v8834, %v8836
        %v8849 = vsel %vm8841, %v8836, %v8838
        %v8850 = vsel %vm8841, %v8838, %v8840
        %v8860 = vsel %vm392, %v8820, 0
        %8862 = vmatprep.subr.mxu0 %v8843
        %8863 = vmatpush1.msra.mxu0 %v8842
        %8864 = vmatprep.subr.mxu0 0.0
        %8865 = vmatpush1.msra.mxu0 0.0
        %8866 = vmatprep.subr.mxu0 0.0
        %8867 = vmatpush1.msra.mxu0 0.0
        %8868 = vmatprep.subr.mxu0 0.0
        %8869 = vmatpush1.msra.mxu0 0.0
        %8870 = vmatprep.subr.mxu0 0.0
        %8871 = vmatpush1.msra.mxu0 0.0
        %8872 = vmatprep.subr.mxu0 0.0
        %8873 = vmatpush1.msra.mxu0 0.0
        %8874 = vmatprep.subr.mxu0 0.0
        %8875 = vmatpush1.msra.mxu0 0.0
        %8876 = vmatprep.subr.mxu0 0.0
        %8877 = vmatpush1.msra.mxu0 0.0
        %8878 = vmatprep.subr.mxu0 0.0
        %8879 = vmatpush1.msra.mxu0 0.0
        %8880 = vmatprep.subr.mxu0 0.0
        %8881 = vmatpush1.msra.mxu0 0.0
        %8882 = vmatprep.subr.mxu0 0.0
        %8883 = vmatpush1.msra.mxu0 0.0
        %8884 = vmatprep.subr.mxu0 0.0
        %8885 = vmatpush1.msra.mxu0 0.0
        %8886 = vmatprep.subr.mxu0 0.0
        %8887 = vmatpush1.msra.mxu0 0.0
        %8888 = vmatprep.subr.mxu0 0.0
        %8889 = vmatpush1.msra.mxu0 0.0
        %8890 = vmatprep.subr.mxu0 0.0
        %8891 = vmatpush1.msra.mxu0 0.0
        %8892 = vmatprep.subr.mxu0 0.0
        %8893 = vmatpush1.msra.mxu0 0.0
        %8894 = vmatprep.subr.mxu0 0.0
        %8895 = vmatpush1.msra.mxu0 0.0
        %8896 = vmatprep.subr.mxu0 0.0
        %8897 = vmatpush1.msra.mxu0 0.0
        %8898 = vmatprep.subr.mxu0 0.0
        %8899 = vmatpush1.msra.mxu0 0.0
        %8900 = vmatprep.subr.mxu0 0.0
        %8901 = vmatpush1.msra.mxu0 0.0
        %8902 = vmatprep.subr.mxu0 0.0
        %8903 = vmatpush1.msra.mxu0 0.0
        %8904 = vmatprep.subr.mxu0 0.0
        %8905 = vmatpush1.msra.mxu0 0.0
        %8906 = vmatprep.subr.mxu0 0.0
        %8907 = vmatpush1.msra.mxu0 0.0
        %8908 = vmatprep.subr.mxu0 0.0
        %8909 = vmatpush1.msra.mxu0 0.0
        %8910 = vmatprep.subr.mxu0 0.0
        %8911 = vmatpush1.msra.mxu0 0.0
        %8912 = vmatprep.subr.mxu0 0.0
        %8913 = vmatpush1.msra.mxu0 0.0
        %8914 = vmatprep.subr.mxu0 0.0
        %8915 = vmatpush1.msra.mxu0 0.0
        %8916 = vmatprep.subr.mxu0 0.0
        %8917 = vmatpush1.msra.mxu0 0.0
        %8918 = vmatprep.subr.mxu0 0.0
        %8919 = vmatpush1.msra.mxu0 0.0
        %8920 = vmatprep.subr.mxu0 0.0
        %8921 = vmatpush1.msra.mxu0 0.0
        %8922 = vmatprep.subr.mxu0 0.0
        %8923 = vmatpush1.msra.mxu0 0.0
        %8924 = vmatprep.subr.mxu0 0.0
        %8925 = vmatpush1.msra.mxu0 0.0
        %8926 = vmatprep.mubr.f32.mxu0 0.0
        %8927 = vmatmul.mubr.f32.gmra.mrb[0].mxu0 %v8860
        %v8928 = vpop.f32.mrb[0].mxu0
        %v8929 = vadd.f32 0.0, %v8928
        %v8930 = vpop.f32.mrb[0].mxu0
        %v8931 = vadd.f32 0.0, %v8930
        %8932 = vdwg.mxu0
        %8933 = vmatprep.subr.mxu0 %v8845
        %8934 = vmatpush1.msra.mxu0 %v8844
        %8935 = vmatprep.subr.mxu0 0.0
        %8936 = vmatpush1.msra.mxu0 0.0
        %8937 = vmatprep.subr.mxu0 0.0
        %8938 = vmatpush1.msra.mxu0 0.0
        %8939 = vmatprep.subr.mxu0 0.0
        %8940 = vmatpush1.msra.mxu0 0.0
        %8941 = vmatprep.subr.mxu0 0.0
        %8942 = vmatpush1.msra.mxu0 0.0
        %8943 = vmatprep.subr.mxu0 0.0
        %8944 = vmatpush1.msra.mxu0 0.0
        %8945 = vmatprep.subr.mxu0 0.0
        %8946 = vmatpush1.msra.mxu0 0.0
        %8947 = vmatprep.subr.mxu0 0.0
        %8948 = vmatpush1.msra.mxu0 0.0
        %8949 = vmatprep.subr.mxu0 0.0
        %8950 = vmatpush1.msra.mxu0 0.0
        %8951 = vmatprep.subr.mxu0 0.0
        %8952 = vmatpush1.msra.mxu0 0.0
        %8953 = vmatprep.subr.mxu0 0.0
        %8954 = vmatpush1.msra.mxu0 0.0
        %8955 = vmatprep.subr.mxu0 0.0
        %8956 = vmatpush1.msra.mxu0 0.0
        %8957 = vmatprep.subr.mxu0 0.0
        %8958 = vmatpush1.msra.mxu0 0.0
        %8959 = vmatprep.subr.mxu0 0.0
        %8960 = vmatpush1.msra.mxu0 0.0
        %8961 = vmatprep.subr.mxu0 0.0
        %8962 = vmatpush1.msra.mxu0 0.0
        %8963 = vmatprep.subr.mxu0 0.0
        %8964 = vmatpush1.msra.mxu0 0.0
        %8965 = vmatprep.subr.mxu0 0.0
        %8966 = vmatpush1.msra.mxu0 0.0
        %8967 = vmatprep.subr.mxu0 0.0
        %8968 = vmatpush1.msra.mxu0 0.0
        %8969 = vmatprep.subr.mxu0 0.0
        %8970 = vmatpush1.msra.mxu0 0.0
        %8971 = vmatprep.subr.mxu0 0.0
        %8972 = vmatpush1.msra.mxu0 0.0
        %8973 = vmatprep.subr.mxu0 0.0
        %8974 = vmatpush1.msra.mxu0 0.0
        %8975 = vmatprep.subr.mxu0 0.0
        %8976 = vmatpush1.msra.mxu0 0.0
        %8977 = vmatprep.subr.mxu0 0.0
        %8978 = vmatpush1.msra.mxu0 0.0
        %8979 = vmatprep.subr.mxu0 0.0
        %8980 = vmatpush1.msra.mxu0 0.0
        %8981 = vmatprep.subr.mxu0 0.0
        %8982 = vmatpush1.msra.mxu0 0.0
        %8983 = vmatprep.subr.mxu0 0.0
        %8984 = vmatpush1.msra.mxu0 0.0
        %8985 = vmatprep.subr.mxu0 0.0
        %8986 = vmatpush1.msra.mxu0 0.0
        %8987 = vmatprep.subr.mxu0 0.0
        %8988 = vmatpush1.msra.mxu0 0.0
        %8989 = vmatprep.subr.mxu0 0.0
        %8990 = vmatpush1.msra.mxu0 0.0
        %8991 = vmatprep.subr.mxu0 0.0
        %8992 = vmatpush1.msra.mxu0 0.0
        %8993 = vmatprep.subr.mxu0 0.0
        %8994 = vmatpush1.msra.mxu0 0.0
        %8995 = vmatprep.subr.mxu0 0.0
        %8996 = vmatpush1.msra.mxu0 0.0
        %8997 = vmatprep.mubr.f32.mxu0 0.0
        %8998 = vmatmul.mubr.f32.gmra.mrb[0].mxu0 %v8860
        %v8999 = vpop.f32.mrb[0].mxu0
        %v9000 = vadd.f32 0.0, %v8999
        %v9001 = vpop.f32.mrb[0].mxu0
        %v9002 = vadd.f32 0.0, %v9001
        %9003 = vdwg.mxu0
        %9004 = vmatprep.subr.mxu0 %v8847
        %9005 = vmatpush1.msra.mxu0 %v8846
        %9006 = vmatprep.subr.mxu0 0.0
        %9007 = vmatpush1.msra.mxu0 0.0
        %9008 = vmatprep.subr.mxu0 0.0
        %9009 = vmatpush1.msra.mxu0 0.0
        %9010 = vmatprep.subr.mxu0 0.0
        %9011 = vmatpush1.msra.mxu0 0.0
        %9012 = vmatprep.subr.mxu0 0.0
        %9013 = vmatpush1.msra.mxu0 0.0
        %9014 = vmatprep.subr.mxu0 0.0
        %9015 = vmatpush1.msra.mxu0 0.0
        %9016 = vmatprep.subr.mxu0 0.0
        %9017 = vmatpush1.msra.mxu0 0.0
        %9018 = vmatprep.subr.mxu0 0.0
        %9019 = vmatpush1.msra.mxu0 0.0
        %9020 = vmatprep.subr.mxu0 0.0
        %9021 = vmatpush1.msra.mxu0 0.0
        %9022 = vmatprep.subr.mxu0 0.0
        %9023 = vmatpush1.msra.mxu0 0.0
        %9024 = vmatprep.subr.mxu0 0.0
        %9025 = vmatpush1.msra.mxu0 0.0
        %9026 = vmatprep.subr.mxu0 0.0
        %9027 = vmatpush1.msra.mxu0 0.0
        %9028 = vmatprep.subr.mxu0 0.0
        %9029 = vmatpush1.msra.mxu0 0.0
        %9030 = vmatprep.subr.mxu0 0.0
        %9031 = vmatpush1.msra.mxu0 0.0
        %9032 = vmatprep.subr.mxu0 0.0
        %9033 = vmatpush1.msra.mxu0 0.0
        %9034 = vmatprep.subr.mxu0 0.0
        %9035 = vmatpush1.msra.mxu0 0.0
        %9036 = vmatprep.subr.mxu0 0.0
        %9037 = vmatpush1.msra.mxu0 0.0
        %9038 = vmatprep.subr.mxu0 0.0
        %9039 = vmatpush1.msra.mxu0 0.0
        %9040 = vmatprep.subr.mxu0 0.0
        %9041 = vmatpush1.msra.mxu0 0.0
        %9042 = vmatprep.subr.mxu0 0.0
        %9043 = vmatpush1.msra.mxu0 0.0
        %9044 = vmatprep.subr.mxu0 0.0
        %9045 = vmatpush1.msra.mxu0 0.0
        %9046 = vmatprep.subr.mxu0 0.0
        %9047 = vmatpush1.msra.mxu0 0.0
        %9048 = vmatprep.subr.mxu0 0.0
        %9049 = vmatpush1.msra.mxu0 0.0
        %9050 = vmatprep.subr.mxu0 0.0
        %9051 = vmatpush1.msra.mxu0 0.0
        %9052 = vmatprep.subr.mxu0 0.0
        %9053 = vmatpush1.msra.mxu0 0.0
        %9054 = vmatprep.subr.mxu0 0.0
        %9055 = vmatpush1.msra.mxu0 0.0
        %9056 = vmatprep.subr.mxu0 0.0
        %9057 = vmatpush1.msra.mxu0 0.0
        %9058 = vmatprep.subr.mxu0 0.0
        %9059 = vmatpush1.msra.mxu0 0.0
        %9060 = vmatprep.subr.mxu0 0.0
        %9061 = vmatpush1.msra.mxu0 0.0
        %9062 = vmatprep.subr.mxu0 0.0
        %9063 = vmatpush1.msra.mxu0 0.0
        %9064 = vmatprep.subr.mxu0 0.0
        %9065 = vmatpush1.msra.mxu0 0.0
        %9066 = vmatprep.subr.mxu0 0.0
        %9067 = vmatpush1.msra.mxu0 0.0
        %9068 = vmatprep.mubr.f32.mxu0 0.0
        %9069 = vmatmul.mubr.f32.gmra.mrb[0].mxu0 %v8860
        %v9070 = vpop.f32.mrb[0].mxu0
        %v9071 = vadd.f32 0.0, %v9070
        %v9072 = vpop.f32.mrb[0].mxu0
        %v9073 = vadd.f32 0.0, %v9072
        %9074 = vdwg.mxu0
        %9075 = vmatprep.subr.mxu0 %v8849
        %9076 = vmatpush1.msra.mxu0 %v8848
        %9077 = vmatprep.subr.mxu0 0.0
        %9078 = vmatpush1.msra.mxu0 0.0
        %9079 = vmatprep.subr.mxu0 0.0
        %9080 = vmatpush1.msra.mxu0 0.0
        %9081 = vmatprep.subr.mxu0 0.0
        %9082 = vmatpush1.msra.mxu0 0.0
        %9083 = vmatprep.subr.mxu0 0.0
        %9084 = vmatpush1.msra.mxu0 0.0
        %9085 = vmatprep.subr.mxu0 0.0
        %9086 = vmatpush1.msra.mxu0 0.0
        %9087 = vmatprep.subr.mxu0 0.0
        %9088 = vmatpush1.msra.mxu0 0.0
        %9089 = vmatprep.subr.mxu0 0.0
        %9090 = vmatpush1.msra.mxu0 0.0
        %9091 = vmatprep.subr.mxu0 0.0
        %9092 = vmatpush1.msra.mxu0 0.0
        %9093 = vmatprep.subr.mxu0 0.0
        %9094 = vmatpush1.msra.mxu0 0.0
        %9095 = vmatprep.subr.mxu0 0.0
        %9096 = vmatpush1.msra.mxu0 0.0
        %9097 = vmatprep.subr.mxu0 0.0
        %9098 = vmatpush1.msra.mxu0 0.0
        %9099 = vmatprep.subr.mxu0 0.0
        %9100 = vmatpush1.msra.mxu0 0.0
        %9101 = vmatprep.subr.mxu0 0.0
        %9102 = vmatpush1.msra.mxu0 0.0
        %9103 = vmatprep.subr.mxu0 0.0
        %9104 = vmatpush1.msra.mxu0 0.0
        %9105 = vmatprep.subr.mxu0 0.0
        %9106 = vmatpush1.msra.mxu0 0.0
        %9107 = vmatprep.subr.mxu0 0.0
        %9108 = vmatpush1.msra.mxu0 0.0
        %9109 = vmatprep.subr.mxu0 0.0
        %9110 = vmatpush1.msra.mxu0 0.0
        %9111 = vmatprep.subr.mxu0 0.0
        %9112 = vmatpush1.msra.mxu0 0.0
        %9113 = vmatprep.subr.mxu0 0.0
        %9114 = vmatpush1.msra.mxu0 0.0
        %9115 = vmatprep.subr.mxu0 0.0
        %9116 = vmatpush1.msra.mxu0 0.0
        %9117 = vmatprep.subr.mxu0 0.0
        %9118 = vmatpush1.msra.mxu0 0.0
        %9119 = vmatprep.subr.mxu0 0.0
        %9120 = vmatpush1.msra.mxu0 0.0
        %9121 = vmatprep.subr.mxu0 0.0
        %9122 = vmatpush1.msra.mxu0 0.0
        %9123 = vmatprep.subr.mxu0 0.0
        %9124 = vmatpush1.msra.mxu0 0.0
        %9125 = vmatprep.subr.mxu0 0.0
        %9126 = vmatpush1.msra.mxu0 0.0
        %9127 = vmatprep.subr.mxu0 0.0
        %9128 = vmatpush1.msra.mxu0 0.0
        %9129 = vmatprep.subr.mxu0 0.0
        %9130 = vmatpush1.msra.mxu0 0.0
        %9131 = vmatprep.subr.mxu0 0.0
        %9132 = vmatpush1.msra.mxu0 0.0
        %9133 = vmatprep.subr.mxu0 0.0
        %9134 = vmatpush1.msra.mxu0 0.0
        %9135 = vmatprep.subr.mxu0 0.0
        %9136 = vmatpush1.msra.mxu0 0.0
        %9137 = vmatprep.subr.mxu0 0.0
        %9138 = vmatpush1.msra.mxu0 0.0
        %9139 = vmatprep.mubr.f32.mxu0 0.0
        %9140 = vmatmul.mubr.f32.gmra.mrb[0].mxu0 %v8860
        %v9141 = vpop.f32.mrb[0].mxu0
        %v9142 = vadd.f32 0.0, %v9141
        %v9143 = vpop.f32.mrb[0].mxu0
        %v9144 = vadd.f32 0.0, %v9143
        %9145 = vdwg.mxu0
        %9146 = vmatprep.subr.mxu0 0.0
        %9147 = vmatpush1.msra.mxu0 %v8850
        %9148 = vmatprep.subr.mxu0 0.0
        %9149 = vmatpush1.msra.mxu0 0.0
        %9150 = vmatprep.subr.mxu0 0.0
        %9151 = vmatpush1.msra.mxu0 0.0
        %9152 = vmatprep.subr.mxu0 0.0
        %9153 = vmatpush1.msra.mxu0 0.0
        %9154 = vmatprep.subr.mxu0 0.0
        %9155 = vmatpush1.msra.mxu0 0.0
        %9156 = vmatprep.subr.mxu0 0.0
        %9157 = vmatpush1.msra.mxu0 0.0
        %9158 = vmatprep.subr.mxu0 0.0
        %9159 = vmatpush1.msra.mxu0 0.0
        %9160 = vmatprep.subr.mxu0 0.0
        %9161 = vmatpush1.msra.mxu0 0.0
        %9162 = vmatprep.subr.mxu0 0.0
        %9163 = vmatpush1.msra.mxu0 0.0
        %9164 = vmatprep.subr.mxu0 0.0
        %9165 = vmatpush1.msra.mxu0 0.0
        %9166 = vmatprep.subr.mxu0 0.0
        %9167 = vmatpush1.msra.mxu0 0.0
        %9168 = vmatprep.subr.mxu0 0.0
        %9169 = vmatpush1.msra.mxu0 0.0
        %9170 = vmatprep.subr.mxu0 0.0
        %9171 = vmatpush1.msra.mxu0 0.0
        %9172 = vmatprep.subr.mxu0 0.0
        %9173 = vmatpush1.msra.mxu0 0.0
        %9174 = vmatprep.subr.mxu0 0.0
        %9175 = vmatpush1.msra.mxu0 0.0
        %9176 = vmatprep.subr.mxu0 0.0
        %9177 = vmatpush1.msra.mxu0 0.0
        %9178 = vmatprep.subr.mxu0 0.0
        %9179 = vmatpush1.msra.mxu0 0.0
        %9180 = vmatprep.subr.mxu0 0.0
        %9181 = vmatpush1.msra.mxu0 0.0
        %9182 = vmatprep.subr.mxu0 0.0
        %9183 = vmatpush1.msra.mxu0 0.0
        %9184 = vmatprep.subr.mxu0 0.0
        %9185 = vmatpush1.msra.mxu0 0.0
        %9186 = vmatprep.subr.mxu0 0.0
        %9187 = vmatpush1.msra.mxu0 0.0
        %9188 = vmatprep.subr.mxu0 0.0
        %9189 = vmatpush1.msra.mxu0 0.0
        %9190 = vmatprep.subr.mxu0 0.0
        %9191 = vmatpush1.msra.mxu0 0.0
        %9192 = vmatprep.subr.mxu0 0.0
        %9193 = vmatpush1.msra.mxu0 0.0
        %9194 = vmatprep.subr.mxu0 0.0
        %9195 = vmatpush1.msra.mxu0 0.0
        %9196 = vmatprep.subr.mxu0 0.0
        %9197 = vmatpush1.msra.mxu0 0.0
        %9198 = vmatprep.subr.mxu0 0.0
        %9199 = vmatpush1.msra.mxu0 0.0
        %9200 = vmatprep.subr.mxu0 0.0
        %9201 = vmatpush1.msra.mxu0 0.0
        %9202 = vmatprep.subr.mxu0 0.0
        %9203 = vmatpush1.msra.mxu0 0.0
        %9204 = vmatprep.subr.mxu0 0.0
        %9205 = vmatpush1.msra.mxu0 0.0
        %9206 = vmatprep.subr.mxu0 0.0
        %9207 = vmatpush1.msra.mxu0 0.0
        %9208 = vmatprep.subr.mxu0 0.0
        %9209 = vmatpush1.msra.mxu0 0.0
        %9210 = vmatprep.mubr.f32.mxu0 0.0
        %9211 = vmatmul.mubr.f32.gmra.mrb[0].mxu0 %v8860
        %v9212 = vpop.f32.mrb[0].mxu0
        %v9213 = vadd.f32 0.0, %v9212
        %v9214 = vpop.f32.mrb[0].mxu0
        %9215 = vdwg.mxu0
        %v9216 = vadd.f32 %v8810, %v8929
        %v9217 = vadd.f32 %v8811, %v8931
        %v9218 = vadd.f32 %v8812, %v9000
        %v9219 = vadd.f32 %v8813, %v9002
        %v9220 = vadd.f32 %v8814, %v9071
        %v9221 = vadd.f32 %v8815, %v9073
        %v9222 = vadd.f32 %v8816, %v9142
        %v9223 = vadd.f32 %v8817, %v9144
        %v9224 = vadd.f32 %v8818, %v9213
        %9225 = vrot.lane.b32.xlu0 %v339, 80
        %v9226 = vpop.permute.xlu0 %9225
        %9227 = vrot.lane.b32.xlu0 %v328, 48
        %v9228 = vpop.permute.xlu0 %9227
        %9229 = vrot.lane.b32.xlu0 %v329, 48
        %v9230 = vpop.permute.xlu0 %9229
        %9231 = vrot.lane.b32.xlu0 %v330, 48
        %v9232 = vpop.permute.xlu0 %9231
        %9233 = vrot.lane.b32.xlu0 %v331, 48
        %v9234 = vpop.permute.xlu0 %9233
        %9235 = vrot.lane.b32.xlu0 %v332, 48
        %v9236 = vpop.permute.xlu0 %9235
        %9237 = vrot.lane.b32.xlu0 %v333, 48
        %v9238 = vpop.permute.xlu0 %9237
        %9239 = vrot.lane.b32.xlu0 %v334, 48
        %v9240 = vpop.permute.xlu0 %9239
        %9241 = vrot.lane.b32.xlu0 %v335, 48
        %v9242 = vpop.permute.xlu0 %9241
        %9243 = vrot.lane.b32.xlu0 %v336, 48
        %v9244 = vpop.permute.xlu0 %9243
        %9245 = vrot.lane.b32.xlu0 %v337, 48
        %v9246 = vpop.permute.xlu0 %9245
        %vm9247 = vcmask 392192
        %v9248 = vsel %vm9247, %v9228, %v9230
        %v9249 = vsel %vm9247, %v9230, %v9232
        %v9250 = vsel %vm9247, %v9232, %v9234
        %v9251 = vsel %vm9247, %v9234, %v9236
        %v9252 = vsel %vm9247, %v9236, %v9238
        %v9253 = vsel %vm9247, %v9238, %v9240
        %v9254 = vsel %vm9247, %v9240, %v9242
        %v9255 = vsel %vm9247, %v9242, %v9244
        %v9256 = vsel %vm9247, %v9244, %v9246
        %v9266 = vsel %vm392, %v9226, 0
        %9268 = vmatprep.subr.mxu0 %v9249
        %9269 = vmatpush1.msra.mxu0 %v9248
        %9270 = vmatprep.subr.mxu0 0.0
        %9271 = vmatpush1.msra.mxu0 0.0
        %9272 = vmatprep.subr.mxu0 0.0
        %9273 = vmatpush1.msra.mxu0 0.0
        %9274 = vmatprep.subr.mxu0 0.0
        %9275 = vmatpush1.msra.mxu0 0.0
        %9276 = vmatprep.subr.mxu0 0.0
        %9277 = vmatpush1.msra.mxu0 0.0
        %9278 = vmatprep.subr.mxu0 0.0
        %9279 = vmatpush1.msra.mxu0 0.0
        %9280 = vmatprep.subr.mxu0 0.0
        %9281 = vmatpush1.msra.mxu0 0.0
        %9282 = vmatprep.subr.mxu0 0.0
        %9283 = vmatpush1.msra.mxu0 0.0
        %9284 = vmatprep.subr.mxu0 0.0
        %9285 = vmatpush1.msra.mxu0 0.0
        %9286 = vmatprep.subr.mxu0 0.0
        %9287 = vmatpush1.msra.mxu0 0.0
        %9288 = vmatprep.subr.mxu0 0.0
        %9289 = vmatpush1.msra.mxu0 0.0
        %9290 = vmatprep.subr.mxu0 0.0
        %9291 = vmatpush1.msra.mxu0 0.0
        %9292 = vmatprep.subr.mxu0 0.0
        %9293 = vmatpush1.msra.mxu0 0.0
        %9294 = vmatprep.subr.mxu0 0.0
        %9295 = vmatpush1.msra.mxu0 0.0
        %9296 = vmatprep.subr.mxu0 0.0
        %9297 = vmatpush1.msra.mxu0 0.0
        %9298 = vmatprep.subr.mxu0 0.0
        %9299 = vmatpush1.msra.mxu0 0.0
        %9300 = vmatprep.subr.mxu0 0.0
        %9301 = vmatpush1.msra.mxu0 0.0
        %9302 = vmatprep.subr.mxu0 0.0
        %9303 = vmatpush1.msra.mxu0 0.0
        %9304 = vmatprep.subr.mxu0 0.0
        %9305 = vmatpush1.msra.mxu0 0.0
        %9306 = vmatprep.subr.mxu0 0.0
        %9307 = vmatpush1.msra.mxu0 0.0
        %9308 = vmatprep.subr.mxu0 0.0
        %9309 = vmatpush1.msra.mxu0 0.0
        %9310 = vmatprep.subr.mxu0 0.0
        %9311 = vmatpush1.msra.mxu0 0.0
        %9312 = vmatprep.subr.mxu0 0.0
        %9313 = vmatpush1.msra.mxu0 0.0
        %9314 = vmatprep.subr.mxu0 0.0
        %9315 = vmatpush1.msra.mxu0 0.0
        %9316 = vmatprep.subr.mxu0 0.0
        %9317 = vmatpush1.msra.mxu0 0.0
        %9318 = vmatprep.subr.mxu0 0.0
        %9319 = vmatpush1.msra.mxu0 0.0
        %9320 = vmatprep.subr.mxu0 0.0
        %9321 = vmatpush1.msra.mxu0 0.0
        %9322 = vmatprep.subr.mxu0 0.0
        %9323 = vmatpush1.msra.mxu0 0.0
        %9324 = vmatprep.subr.mxu0 0.0
        %9325 = vmatpush1.msra.mxu0 0.0
        %9326 = vmatprep.subr.mxu0 0.0
        %9327 = vmatpush1.msra.mxu0 0.0
        %9328 = vmatprep.subr.mxu0 0.0
        %9329 = vmatpush1.msra.mxu0 0.0
        %9330 = vmatprep.subr.mxu0 0.0
        %9331 = vmatpush1.msra.mxu0 0.0
        %9332 = vmatprep.mubr.f32.mxu0 0.0
        %9333 = vmatmul.mubr.f32.gmra.mrb[0].mxu0 %v9266
        %v9334 = vpop.f32.mrb[0].mxu0
        %v9335 = vadd.f32 0.0, %v9334
        %v9336 = vpop.f32.mrb[0].mxu0
        %v9337 = vadd.f32 0.0, %v9336
        %9338 = vdwg.mxu0
        %9339 = vmatprep.subr.mxu0 %v9251
        %9340 = vmatpush1.msra.mxu0 %v9250
        %9341 = vmatprep.subr.mxu0 0.0
        %9342 = vmatpush1.msra.mxu0 0.0
        %9343 = vmatprep.subr.mxu0 0.0
        %9344 = vmatpush1.msra.mxu0 0.0
        %9345 = vmatprep.subr.mxu0 0.0
        %9346 = vmatpush1.msra.mxu0 0.0
        %9347 = vmatprep.subr.mxu0 0.0
        %9348 = vmatpush1.msra.mxu0 0.0
        %9349 = vmatprep.subr.mxu0 0.0
        %9350 = vmatpush1.msra.mxu0 0.0
        %9351 = vmatprep.subr.mxu0 0.0
        %9352 = vmatpush1.msra.mxu0 0.0
        %9353 = vmatprep.subr.mxu0 0.0
        %9354 = vmatpush1.msra.mxu0 0.0
        %9355 = vmatprep.subr.mxu0 0.0
        %9356 = vmatpush1.msra.mxu0 0.0
        %9357 = vmatprep.subr.mxu0 0.0
        %9358 = vmatpush1.msra.mxu0 0.0
        %9359 = vmatprep.subr.mxu0 0.0
        %9360 = vmatpush1.msra.mxu0 0.0
        %9361 = vmatprep.subr.mxu0 0.0
        %9362 = vmatpush1.msra.mxu0 0.0
        %9363 = vmatprep.subr.mxu0 0.0
        %9364 = vmatpush1.msra.mxu0 0.0
        %9365 = vmatprep.subr.mxu0 0.0
        %9366 = vmatpush1.msra.mxu0 0.0
        %9367 = vmatprep.subr.mxu0 0.0
        %9368 = vmatpush1.msra.mxu0 0.0
        %9369 = vmatprep.subr.mxu0 0.0
        %9370 = vmatpush1.msra.mxu0 0.0
        %9371 = vmatprep.subr.mxu0 0.0
        %9372 = vmatpush1.msra.mxu0 0.0
        %9373 = vmatprep.subr.mxu0 0.0
        %9374 = vmatpush1.msra.mxu0 0.0
        %9375 = vmatprep.subr.mxu0 0.0
        %9376 = vmatpush1.msra.mxu0 0.0
        %9377 = vmatprep.subr.mxu0 0.0
        %9378 = vmatpush1.msra.mxu0 0.0
        %9379 = vmatprep.subr.mxu0 0.0
        %9380 = vmatpush1.msra.mxu0 0.0
        %9381 = vmatprep.subr.mxu0 0.0
        %9382 = vmatpush1.msra.mxu0 0.0
        %9383 = vmatprep.subr.mxu0 0.0
        %9384 = vmatpush1.msra.mxu0 0.0
        %9385 = vmatprep.subr.mxu0 0.0
        %9386 = vmatpush1.msra.mxu0 0.0
        %9387 = vmatprep.subr.mxu0 0.0
        %9388 = vmatpush1.msra.mxu0 0.0
        %9389 = vmatprep.subr.mxu0 0.0
        %9390 = vmatpush1.msra.mxu0 0.0
        %9391 = vmatprep.subr.mxu0 0.0
        %9392 = vmatpush1.msra.mxu0 0.0
        %9393 = vmatprep.subr.mxu0 0.0
        %9394 = vmatpush1.msra.mxu0 0.0
        %9395 = vmatprep.subr.mxu0 0.0
        %9396 = vmatpush1.msra.mxu0 0.0
        %9397 = vmatprep.subr.mxu0 0.0
        %9398 = vmatpush1.msra.mxu0 0.0
        %9399 = vmatprep.subr.mxu0 0.0
        %9400 = vmatpush1.msra.mxu0 0.0
        %9401 = vmatprep.subr.mxu0 0.0
        %9402 = vmatpush1.msra.mxu0 0.0
        %9403 = vmatprep.mubr.f32.mxu0 0.0
        %9404 = vmatmul.mubr.f32.gmra.mrb[0].mxu0 %v9266
        %v9405 = vpop.f32.mrb[0].mxu0
        %v9406 = vadd.f32 0.0, %v9405
        %v9407 = vpop.f32.mrb[0].mxu0
        %v9408 = vadd.f32 0.0, %v9407
        %9409 = vdwg.mxu0
        %9410 = vmatprep.subr.mxu0 %v9253
        %9411 = vmatpush1.msra.mxu0 %v9252
        %9412 = vmatprep.subr.mxu0 0.0
        %9413 = vmatpush1.msra.mxu0 0.0
        %9414 = vmatprep.subr.mxu0 0.0
        %9415 = vmatpush1.msra.mxu0 0.0
        %9416 = vmatprep.subr.mxu0 0.0
        %9417 = vmatpush1.msra.mxu0 0.0
        %9418 = vmatprep.subr.mxu0 0.0
        %9419 = vmatpush1.msra.mxu0 0.0
        %9420 = vmatprep.subr.mxu0 0.0
        %9421 = vmatpush1.msra.mxu0 0.0
        %9422 = vmatprep.subr.mxu0 0.0
        %9423 = vmatpush1.msra.mxu0 0.0
        %9424 = vmatprep.subr.mxu0 0.0
        %9425 = vmatpush1.msra.mxu0 0.0
        %9426 = vmatprep.subr.mxu0 0.0
        %9427 = vmatpush1.msra.mxu0 0.0
        %9428 = vmatprep.subr.mxu0 0.0
        %9429 = vmatpush1.msra.mxu0 0.0
        %9430 = vmatprep.subr.mxu0 0.0
        %9431 = vmatpush1.msra.mxu0 0.0
        %9432 = vmatprep.subr.mxu0 0.0
        %9433 = vmatpush1.msra.mxu0 0.0
        %9434 = vmatprep.subr.mxu0 0.0
        %9435 = vmatpush1.msra.mxu0 0.0
        %9436 = vmatprep.subr.mxu0 0.0
        %9437 = vmatpush1.msra.mxu0 0.0
        %9438 = vmatprep.subr.mxu0 0.0
        %9439 = vmatpush1.msra.mxu0 0.0
        %9440 = vmatprep.subr.mxu0 0.0
        %9441 = vmatpush1.msra.mxu0 0.0
        %9442 = vmatprep.subr.mxu0 0.0
        %9443 = vmatpush1.msra.mxu0 0.0
        %9444 = vmatprep.subr.mxu0 0.0
        %9445 = vmatpush1.msra.mxu0 0.0
        %9446 = vmatprep.subr.mxu0 0.0
        %9447 = vmatpush1.msra.mxu0 0.0
        %9448 = vmatprep.subr.mxu0 0.0
        %9449 = vmatpush1.msra.mxu0 0.0
        %9450 = vmatprep.subr.mxu0 0.0
        %9451 = vmatpush1.msra.mxu0 0.0
        %9452 = vmatprep.subr.mxu0 0.0
        %9453 = vmatpush1.msra.mxu0 0.0
        %9454 = vmatprep.subr.mxu0 0.0
        %9455 = vmatpush1.msra.mxu0 0.0
        %9456 = vmatprep.subr.mxu0 0.0
        %9457 = vmatpush1.msra.mxu0 0.0
        %9458 = vmatprep.subr.mxu0 0.0
        %9459 = vmatpush1.msra.mxu0 0.0
        %9460 = vmatprep.subr.mxu0 0.0
        %9461 = vmatpush1.msra.mxu0 0.0
        %9462 = vmatprep.subr.mxu0 0.0
        %9463 = vmatpush1.msra.mxu0 0.0
        %9464 = vmatprep.subr.mxu0 0.0
        %9465 = vmatpush1.msra.mxu0 0.0
        %9466 = vmatprep.subr.mxu0 0.0
        %9467 = vmatpush1.msra.mxu0 0.0
        %9468 = vmatprep.subr.mxu0 0.0
        %9469 = vmatpush1.msra.mxu0 0.0
        %9470 = vmatprep.subr.mxu0 0.0
        %9471 = vmatpush1.msra.mxu0 0.0
        %9472 = vmatprep.subr.mxu0 0.0
        %9473 = vmatpush1.msra.mxu0 0.0
        %9474 = vmatprep.mubr.f32.mxu0 0.0
        %9475 = vmatmul.mubr.f32.gmra.mrb[0].mxu0 %v9266
        %v9476 = vpop.f32.mrb[0].mxu0
        %v9477 = vadd.f32 0.0, %v9476
        %v9478 = vpop.f32.mrb[0].mxu0
        %v9479 = vadd.f32 0.0, %v9478
        %9480 = vdwg.mxu0
        %9481 = vmatprep.subr.mxu0 %v9255
        %9482 = vmatpush1.msra.mxu0 %v9254
        %9483 = vmatprep.subr.mxu0 0.0
        %9484 = vmatpush1.msra.mxu0 0.0
        %9485 = vmatprep.subr.mxu0 0.0
        %9486 = vmatpush1.msra.mxu0 0.0
        %9487 = vmatprep.subr.mxu0 0.0
        %9488 = vmatpush1.msra.mxu0 0.0
        %9489 = vmatprep.subr.mxu0 0.0
        %9490 = vmatpush1.msra.mxu0 0.0
        %9491 = vmatprep.subr.mxu0 0.0
        %9492 = vmatpush1.msra.mxu0 0.0
        %9493 = vmatprep.subr.mxu0 0.0
        %9494 = vmatpush1.msra.mxu0 0.0
        %9495 = vmatprep.subr.mxu0 0.0
        %9496 = vmatpush1.msra.mxu0 0.0
        %9497 = vmatprep.subr.mxu0 0.0
        %9498 = vmatpush1.msra.mxu0 0.0
        %9499 = vmatprep.subr.mxu0 0.0
        %9500 = vmatpush1.msra.mxu0 0.0
        %9501 = vmatprep.subr.mxu0 0.0
        %9502 = vmatpush1.msra.mxu0 0.0
        %9503 = vmatprep.subr.mxu0 0.0
        %9504 = vmatpush1.msra.mxu0 0.0
        %9505 = vmatprep.subr.mxu0 0.0
        %9506 = vmatpush1.msra.mxu0 0.0
        %9507 = vmatprep.subr.mxu0 0.0
        %9508 = vmatpush1.msra.mxu0 0.0
        %9509 = vmatprep.subr.mxu0 0.0
        %9510 = vmatpush1.msra.mxu0 0.0
        %9511 = vmatprep.subr.mxu0 0.0
        %9512 = vmatpush1.msra.mxu0 0.0
        %9513 = vmatprep.subr.mxu0 0.0
        %9514 = vmatpush1.msra.mxu0 0.0
        %9515 = vmatprep.subr.mxu0 0.0
        %9516 = vmatpush1.msra.mxu0 0.0
        %9517 = vmatprep.subr.mxu0 0.0
        %9518 = vmatpush1.msra.mxu0 0.0
        %9519 = vmatprep.subr.mxu0 0.0
        %9520 = vmatpush1.msra.mxu0 0.0
        %9521 = vmatprep.subr.mxu0 0.0
        %9522 = vmatpush1.msra.mxu0 0.0
        %9523 = vmatprep.subr.mxu0 0.0
        %9524 = vmatpush1.msra.mxu0 0.0
        %9525 = vmatprep.subr.mxu0 0.0
        %9526 = vmatpush1.msra.mxu0 0.0
        %9527 = vmatprep.subr.mxu0 0.0
        %9528 = vmatpush1.msra.mxu0 0.0
        %9529 = vmatprep.subr.mxu0 0.0
        %9530 = vmatpush1.msra.mxu0 0.0
        %9531 = vmatprep.subr.mxu0 0.0
        %9532 = vmatpush1.msra.mxu0 0.0
        %9533 = vmatprep.subr.mxu0 0.0
        %9534 = vmatpush1.msra.mxu0 0.0
        %9535 = vmatprep.subr.mxu0 0.0
        %9536 = vmatpush1.msra.mxu0 0.0
        %9537 = vmatprep.subr.mxu0 0.0
        %9538 = vmatpush1.msra.mxu0 0.0
        %9539 = vmatprep.subr.mxu0 0.0
        %9540 = vmatpush1.msra.mxu0 0.0
        %9541 = vmatprep.subr.mxu0 0.0
        %9542 = vmatpush1.msra.mxu0 0.0
        %9543 = vmatprep.subr.mxu0 0.0
        %9544 = vmatpush1.msra.mxu0 0.0
        %9545 = vmatprep.mubr.f32.mxu0 0.0
        %9546 = vmatmul.mubr.f32.gmra.mrb[0].mxu0 %v9266
        %v9547 = vpop.f32.mrb[0].mxu0
        %v9548 = vadd.f32 0.0, %v9547
        %v9549 = vpop.f32.mrb[0].mxu0
        %v9550 = vadd.f32 0.0, %v9549
        %9551 = vdwg.mxu0
        %9552 = vmatprep.subr.mxu0 0.0
        %9553 = vmatpush1.msra.mxu0 %v9256
        %9554 = vmatprep.subr.mxu0 0.0
        %9555 = vmatpush1.msra.mxu0 0.0
        %9556 = vmatprep.subr.mxu0 0.0
        %9557 = vmatpush1.msra.mxu0 0.0
        %9558 = vmatprep.subr.mxu0 0.0
        %9559 = vmatpush1.msra.mxu0 0.0
        %9560 = vmatprep.subr.mxu0 0.0
        %9561 = vmatpush1.msra.mxu0 0.0
        %9562 = vmatprep.subr.mxu0 0.0
        %9563 = vmatpush1.msra.mxu0 0.0
        %9564 = vmatprep.subr.mxu0 0.0
        %9565 = vmatpush1.msra.mxu0 0.0
        %9566 = vmatprep.subr.mxu0 0.0
        %9567 = vmatpush1.msra.mxu0 0.0
        %9568 = vmatprep.subr.mxu0 0.0
        %9569 = vmatpush1.msra.mxu0 0.0
        %9570 = vmatprep.subr.mxu0 0.0
        %9571 = vmatpush1.msra.mxu0 0.0
        %9572 = vmatprep.subr.mxu0 0.0
        %9573 = vmatpush1.msra.mxu0 0.0
        %9574 = vmatprep.subr.mxu0 0.0
        %9575 = vmatpush1.msra.mxu0 0.0
        %9576 = vmatprep.subr.mxu0 0.0
        %9577 = vmatpush1.msra.mxu0 0.0
        %9578 = vmatprep.subr.mxu0 0.0
        %9579 = vmatpush1.msra.mxu0 0.0
        %9580 = vmatprep.subr.mxu0 0.0
        %9581 = vmatpush1.msra.mxu0 0.0
        %9582 = vmatprep.subr.mxu0 0.0
        %9583 = vmatpush1.msra.mxu0 0.0
        %9584 = vmatprep.subr.mxu0 0.0
        %9585 = vmatpush1.msra.mxu0 0.0
        %9586 = vmatprep.subr.mxu0 0.0
        %9587 = vmatpush1.msra.mxu0 0.0
        %9588 = vmatprep.subr.mxu0 0.0
        %9589 = vmatpush1.msra.mxu0 0.0
        %9590 = vmatprep.subr.mxu0 0.0
        %9591 = vmatpush1.msra.mxu0 0.0
        %9592 = vmatprep.subr.mxu0 0.0
        %9593 = vmatpush1.msra.mxu0 0.0
        %9594 = vmatprep.subr.mxu0 0.0
        %9595 = vmatpush1.msra.mxu0 0.0
        %9596 = vmatprep.subr.mxu0 0.0
        %9597 = vmatpush1.msra.mxu0 0.0
        %9598 = vmatprep.subr.mxu0 0.0
        %9599 = vmatpush1.msra.mxu0 0.0
        %9600 = vmatprep.subr.mxu0 0.0
        %9601 = vmatpush1.msra.mxu0 0.0
        %9602 = vmatprep.subr.mxu0 0.0
        %9603 = vmatpush1.msra.mxu0 0.0
        %9604 = vmatprep.subr.mxu0 0.0
        %9605 = vmatpush1.msra.mxu0 0.0
        %9606 = vmatprep.subr.mxu0 0.0
        %9607 = vmatpush1.msra.mxu0 0.0
        %9608 = vmatprep.subr.mxu0 0.0
        %9609 = vmatpush1.msra.mxu0 0.0
        %9610 = vmatprep.subr.mxu0 0.0
        %9611 = vmatpush1.msra.mxu0 0.0
        %9612 = vmatprep.subr.mxu0 0.0
        %9613 = vmatpush1.msra.mxu0 0.0
        %9614 = vmatprep.subr.mxu0 0.0
        %9615 = vmatpush1.msra.mxu0 0.0
        %9616 = vmatprep.mubr.f32.mxu0 0.0
        %9617 = vmatmul.mubr.f32.gmra.mrb[0].mxu0 %v9266
        %v9618 = vpop.f32.mrb[0].mxu0
        %v9619 = vadd.f32 0.0, %v9618
        %v9620 = vpop.f32.mrb[0].mxu0
        %9621 = vdwg.mxu0
        %v9622 = vadd.f32 %v9216, %v9335
        %v9623 = vadd.f32 %v9217, %v9337
        %v9624 = vadd.f32 %v9218, %v9406
        %v9625 = vadd.f32 %v9219, %v9408
        %v9626 = vadd.f32 %v9220, %v9477
        %v9627 = vadd.f32 %v9221, %v9479
        %v9628 = vadd.f32 %v9222, %v9548
        %v9629 = vadd.f32 %v9223, %v9550
        %v9630 = vadd.f32 %v9224, %v9619
        %9631 = vrot.lane.b32.xlu0 %v339, 72
        %v9632 = vpop.permute.xlu0 %9631
        %9633 = vrot.lane.b32.xlu0 %v328, 42
        %v9634 = vpop.permute.xlu0 %9633
        %9635 = vrot.lane.b32.xlu0 %v329, 42
        %v9636 = vpop.permute.xlu0 %9635
        %9637 = vrot.lane.b32.xlu0 %v330, 42
        %v9638 = vpop.permute.xlu0 %9637
        %9639 = vrot.lane.b32.xlu0 %v331, 42
        %v9640 = vpop.permute.xlu0 %9639
        %9641 = vrot.lane.b32.xlu0 %v332, 42
        %v9642 = vpop.permute.xlu0 %9641
        %9643 = vrot.lane.b32.xlu0 %v333, 42
        %v9644 = vpop.permute.xlu0 %9643
        %9645 = vrot.lane.b32.xlu0 %v334, 42
        %v9646 = vpop.permute.xlu0 %9645
        %9647 = vrot.lane.b32.xlu0 %v335, 42
        %v9648 = vpop.permute.xlu0 %9647
        %9649 = vrot.lane.b32.xlu0 %v336, 42
        %v9650 = vpop.permute.xlu0 %9649
        %9651 = vrot.lane.b32.xlu0 %v337, 42
        %v9652 = vpop.permute.xlu0 %9651
        %vm9653 = vcmask 343040
        %v9654 = vsel %vm9653, %v9634, %v9636
        %v9655 = vsel %vm9653, %v9636, %v9638
        %v9656 = vsel %vm9653, %v9638, %v9640
        %v9657 = vsel %vm9653, %v9640, %v9642
        %v9658 = vsel %vm9653, %v9642, %v9644
        %v9659 = vsel %vm9653, %v9644, %v9646
        %v9660 = vsel %vm9653, %v9646, %v9648
        %v9661 = vsel %vm9653, %v9648, %v9650
        %v9662 = vsel %vm9653, %v9650, %v9652
        %v9672 = vsel %vm392, %v9632, 0
        %9674 = vmatprep.subr.mxu0 %v9655
        %9675 = vmatpush1.msra.mxu0 %v9654
        %9676 = vmatprep.subr.mxu0 0.0
        %9677 = vmatpush1.msra.mxu0 0.0
        %9678 = vmatprep.subr.mxu0 0.0
        %9679 = vmatpush1.msra.mxu0 0.0
        %9680 = vmatprep.subr.mxu0 0.0
        %9681 = vmatpush1.msra.mxu0 0.0
        %9682 = vmatprep.subr.mxu0 0.0
        %9683 = vmatpush1.msra.mxu0 0.0
        %9684 = vmatprep.subr.mxu0 0.0
        %9685 = vmatpush1.msra.mxu0 0.0
        %9686 = vmatprep.subr.mxu0 0.0
        %9687 = vmatpush1.msra.mxu0 0.0
        %9688 = vmatprep.subr.mxu0 0.0
        %9689 = vmatpush1.msra.mxu0 0.0
        %9690 = vmatprep.subr.mxu0 0.0
        %9691 = vmatpush1.msra.mxu0 0.0
        %9692 = vmatprep.subr.mxu0 0.0
        %9693 = vmatpush1.msra.mxu0 0.0
        %9694 = vmatprep.subr.mxu0 0.0
        %9695 = vmatpush1.msra.mxu0 0.0
        %9696 = vmatprep.subr.mxu0 0.0
        %9697 = vmatpush1.msra.mxu0 0.0
        %9698 = vmatprep.subr.mxu0 0.0
        %9699 = vmatpush1.msra.mxu0 0.0
        %9700 = vmatprep.subr.mxu0 0.0
        %9701 = vmatpush1.msra.mxu0 0.0
        %9702 = vmatprep.subr.mxu0 0.0
        %9703 = vmatpush1.msra.mxu0 0.0
        %9704 = vmatprep.subr.mxu0 0.0
        %9705 = vmatpush1.msra.mxu0 0.0
        %9706 = vmatprep.subr.mxu0 0.0
        %9707 = vmatpush1.msra.mxu0 0.0
        %9708 = vmatprep.subr.mxu0 0.0
        %9709 = vmatpush1.msra.mxu0 0.0
        %9710 = vmatprep.subr.mxu0 0.0
        %9711 = vmatpush1.msra.mxu0 0.0
        %9712 = vmatprep.subr.mxu0 0.0
        %9713 = vmatpush1.msra.mxu0 0.0
        %9714 = vmatprep.subr.mxu0 0.0
        %9715 = vmatpush1.msra.mxu0 0.0
        %9716 = vmatprep.subr.mxu0 0.0
        %9717 = vmatpush1.msra.mxu0 0.0
        %9718 = vmatprep.subr.mxu0 0.0
        %9719 = vmatpush1.msra.mxu0 0.0
        %9720 = vmatprep.subr.mxu0 0.0
        %9721 = vmatpush1.msra.mxu0 0.0
        %9722 = vmatprep.subr.mxu0 0.0
        %9723 = vmatpush1.msra.mxu0 0.0
        %9724 = vmatprep.subr.mxu0 0.0
        %9725 = vmatpush1.msra.mxu0 0.0
        %9726 = vmatprep.subr.mxu0 0.0
        %9727 = vmatpush1.msra.mxu0 0.0
        %9728 = vmatprep.subr.mxu0 0.0
        %9729 = vmatpush1.msra.mxu0 0.0
        %9730 = vmatprep.subr.mxu0 0.0
        %9731 = vmatpush1.msra.mxu0 0.0
        %9732 = vmatprep.subr.mxu0 0.0
        %9733 = vmatpush1.msra.mxu0 0.0
        %9734 = vmatprep.subr.mxu0 0.0
        %9735 = vmatpush1.msra.mxu0 0.0
        %9736 = vmatprep.subr.mxu0 0.0
        %9737 = vmatpush1.msra.mxu0 0.0
        %9738 = vmatprep.mubr.f32.mxu0 0.0
        %9739 = vmatmul.mubr.f32.gmra.mrb[0].mxu0 %v9672
        %v9740 = vpop.f32.mrb[0].mxu0
        %v9741 = vadd.f32 0.0, %v9740
        %v9742 = vpop.f32.mrb[0].mxu0
        %v9743 = vadd.f32 0.0, %v9742
        %9744 = vdwg.mxu0
        %9745 = vmatprep.subr.mxu0 %v9657
        %9746 = vmatpush1.msra.mxu0 %v9656
        %9747 = vmatprep.subr.mxu0 0.0
        %9748 = vmatpush1.msra.mxu0 0.0
        %9749 = vmatprep.subr.mxu0 0.0
        %9750 = vmatpush1.msra.mxu0 0.0
        %9751 = vmatprep.subr.mxu0 0.0
        %9752 = vmatpush1.msra.mxu0 0.0
        %9753 = vmatprep.subr.mxu0 0.0
        %9754 = vmatpush1.msra.mxu0 0.0
        %9755 = vmatprep.subr.mxu0 0.0
        %9756 = vmatpush1.msra.mxu0 0.0
        %9757 = vmatprep.subr.mxu0 0.0
        %9758 = vmatpush1.msra.mxu0 0.0
        %9759 = vmatprep.subr.mxu0 0.0
        %9760 = vmatpush1.msra.mxu0 0.0
        %9761 = vmatprep.subr.mxu0 0.0
        %9762 = vmatpush1.msra.mxu0 0.0
        %9763 = vmatprep.subr.mxu0 0.0
        %9764 = vmatpush1.msra.mxu0 0.0
        %9765 = vmatprep.subr.mxu0 0.0
        %9766 = vmatpush1.msra.mxu0 0.0
        %9767 = vmatprep.subr.mxu0 0.0
        %9768 = vmatpush1.msra.mxu0 0.0
        %9769 = vmatprep.subr.mxu0 0.0
        %9770 = vmatpush1.msra.mxu0 0.0
        %9771 = vmatprep.subr.mxu0 0.0
        %9772 = vmatpush1.msra.mxu0 0.0
        %9773 = vmatprep.subr.mxu0 0.0
        %9774 = vmatpush1.msra.mxu0 0.0
        %9775 = vmatprep.subr.mxu0 0.0
        %9776 = vmatpush1.msra.mxu0 0.0
        %9777 = vmatprep.subr.mxu0 0.0
        %9778 = vmatpush1.msra.mxu0 0.0
        %9779 = vmatprep.subr.mxu0 0.0
        %9780 = vmatpush1.msra.mxu0 0.0
        %9781 = vmatprep.subr.mxu0 0.0
        %9782 = vmatpush1.msra.mxu0 0.0
        %9783 = vmatprep.subr.mxu0 0.0
        %9784 = vmatpush1.msra.mxu0 0.0
        %9785 = vmatprep.subr.mxu0 0.0
        %9786 = vmatpush1.msra.mxu0 0.0
        %9787 = vmatprep.subr.mxu0 0.0
        %9788 = vmatpush1.msra.mxu0 0.0
        %9789 = vmatprep.subr.mxu0 0.0
        %9790 = vmatpush1.msra.mxu0 0.0
        %9791 = vmatprep.subr.mxu0 0.0
        %9792 = vmatpush1.msra.mxu0 0.0
        %9793 = vmatprep.subr.mxu0 0.0
        %9794 = vmatpush1.msra.mxu0 0.0
        %9795 = vmatprep.subr.mxu0 0.0
        %9796 = vmatpush1.msra.mxu0 0.0
        %9797 = vmatprep.subr.mxu0 0.0
        %9798 = vmatpush1.msra.mxu0 0.0
        %9799 = vmatprep.subr.mxu0 0.0
        %9800 = vmatpush1.msra.mxu0 0.0
        %9801 = vmatprep.subr.mxu0 0.0
        %9802 = vmatpush1.msra.mxu0 0.0
        %9803 = vmatprep.subr.mxu0 0.0
        %9804 = vmatpush1.msra.mxu0 0.0
        %9805 = vmatprep.subr.mxu0 0.0
        %9806 = vmatpush1.msra.mxu0 0.0
        %9807 = vmatprep.subr.mxu0 0.0
        %9808 = vmatpush1.msra.mxu0 0.0
        %9809 = vmatprep.mubr.f32.mxu0 0.0
        %9810 = vmatmul.mubr.f32.gmra.mrb[0].mxu0 %v9672
        %v9811 = vpop.f32.mrb[0].mxu0
        %v9812 = vadd.f32 0.0, %v9811
        %v9813 = vpop.f32.mrb[0].mxu0
        %v9814 = vadd.f32 0.0, %v9813
        %9815 = vdwg.mxu0
        %9816 = vmatprep.subr.mxu0 %v9659
        %9817 = vmatpush1.msra.mxu0 %v9658
        %9818 = vmatprep.subr.mxu0 0.0
        %9819 = vmatpush1.msra.mxu0 0.0
        %9820 = vmatprep.subr.mxu0 0.0
        %9821 = vmatpush1.msra.mxu0 0.0
        %9822 = vmatprep.subr.mxu0 0.0
        %9823 = vmatpush1.msra.mxu0 0.0
        %9824 = vmatprep.subr.mxu0 0.0
        %9825 = vmatpush1.msra.mxu0 0.0
        %9826 = vmatprep.subr.mxu0 0.0
        %9827 = vmatpush1.msra.mxu0 0.0
        %9828 = vmatprep.subr.mxu0 0.0
        %9829 = vmatpush1.msra.mxu0 0.0
        %9830 = vmatprep.subr.mxu0 0.0
        %9831 = vmatpush1.msra.mxu0 0.0
        %9832 = vmatprep.subr.mxu0 0.0
        %9833 = vmatpush1.msra.mxu0 0.0
        %9834 = vmatprep.subr.mxu0 0.0
        %9835 = vmatpush1.msra.mxu0 0.0
        %9836 = vmatprep.subr.mxu0 0.0
        %9837 = vmatpush1.msra.mxu0 0.0
        %9838 = vmatprep.subr.mxu0 0.0
        %9839 = vmatpush1.msra.mxu0 0.0
        %9840 = vmatprep.subr.mxu0 0.0
        %9841 = vmatpush1.msra.mxu0 0.0
        %9842 = vmatprep.subr.mxu0 0.0
        %9843 = vmatpush1.msra.mxu0 0.0
        %9844 = vmatprep.subr.mxu0 0.0
        %9845 = vmatpush1.msra.mxu0 0.0
        %9846 = vmatprep.subr.mxu0 0.0
        %9847 = vmatpush1.msra.mxu0 0.0
        %9848 = vmatprep.subr.mxu0 0.0
        %9849 = vmatpush1.msra.mxu0 0.0
        %9850 = vmatprep.subr.mxu0 0.0
        %9851 = vmatpush1.msra.mxu0 0.0
        %9852 = vmatprep.subr.mxu0 0.0
        %9853 = vmatpush1.msra.mxu0 0.0
        %9854 = vmatprep.subr.mxu0 0.0
        %9855 = vmatpush1.msra.mxu0 0.0
        %9856 = vmatprep.subr.mxu0 0.0
        %9857 = vmatpush1.msra.mxu0 0.0
        %9858 = vmatprep.subr.mxu0 0.0
        %9859 = vmatpush1.msra.mxu0 0.0
        %9860 = vmatprep.subr.mxu0 0.0
        %9861 = vmatpush1.msra.mxu0 0.0
        %9862 = vmatprep.subr.mxu0 0.0
        %9863 = vmatpush1.msra.mxu0 0.0
        %9864 = vmatprep.subr.mxu0 0.0
        %9865 = vmatpush1.msra.mxu0 0.0
        %9866 = vmatprep.subr.mxu0 0.0
        %9867 = vmatpush1.msra.mxu0 0.0
        %9868 = vmatprep.subr.mxu0 0.0
        %9869 = vmatpush1.msra.mxu0 0.0
        %9870 = vmatprep.subr.mxu0 0.0
        %9871 = vmatpush1.msra.mxu0 0.0
        %9872 = vmatprep.subr.mxu0 0.0
        %9873 = vmatpush1.msra.mxu0 0.0
        %9874 = vmatprep.subr.mxu0 0.0
        %9875 = vmatpush1.msra.mxu0 0.0
        %9876 = vmatprep.subr.mxu0 0.0
        %9877 = vmatpush1.msra.mxu0 0.0
        %9878 = vmatprep.subr.mxu0 0.0
        %9879 = vmatpush1.msra.mxu0 0.0
        %9880 = vmatprep.mubr.f32.mxu0 0.0
        %9881 = vmatmul.mubr.f32.gmra.mrb[0].mxu0 %v9672
        %v9882 = vpop.f32.mrb[0].mxu0
        %v9883 = vadd.f32 0.0, %v9882
        %v9884 = vpop.f32.mrb[0].mxu0
        %v9885 = vadd.f32 0.0, %v9884
        %9886 = vdwg.mxu0
        %9887 = vmatprep.subr.mxu0 %v9661
        %9888 = vmatpush1.msra.mxu0 %v9660
        %9889 = vmatprep.subr.mxu0 0.0
        %9890 = vmatpush1.msra.mxu0 0.0
        %9891 = vmatprep.subr.mxu0 0.0
        %9892 = vmatpush1.msra.mxu0 0.0
        %9893 = vmatprep.subr.mxu0 0.0
        %9894 = vmatpush1.msra.mxu0 0.0
        %9895 = vmatprep.subr.mxu0 0.0
        %9896 = vmatpush1.msra.mxu0 0.0
        %9897 = vmatprep.subr.mxu0 0.0
        %9898 = vmatpush1.msra.mxu0 0.0
        %9899 = vmatprep.subr.mxu0 0.0
        %9900 = vmatpush1.msra.mxu0 0.0
        %9901 = vmatprep.subr.mxu0 0.0
        %9902 = vmatpush1.msra.mxu0 0.0
        %9903 = vmatprep.subr.mxu0 0.0
        %9904 = vmatpush1.msra.mxu0 0.0
        %9905 = vmatprep.subr.mxu0 0.0
        %9906 = vmatpush1.msra.mxu0 0.0
        %9907 = vmatprep.subr.mxu0 0.0
        %9908 = vmatpush1.msra.mxu0 0.0
        %9909 = vmatprep.subr.mxu0 0.0
        %9910 = vmatpush1.msra.mxu0 0.0
        %9911 = vmatprep.subr.mxu0 0.0
        %9912 = vmatpush1.msra.mxu0 0.0
        %9913 = vmatprep.subr.mxu0 0.0
        %9914 = vmatpush1.msra.mxu0 0.0
        %9915 = vmatprep.subr.mxu0 0.0
        %9916 = vmatpush1.msra.mxu0 0.0
        %9917 = vmatprep.subr.mxu0 0.0
        %9918 = vmatpush1.msra.mxu0 0.0
        %9919 = vmatprep.subr.mxu0 0.0
        %9920 = vmatpush1.msra.mxu0 0.0
        %9921 = vmatprep.subr.mxu0 0.0
        %9922 = vmatpush1.msra.mxu0 0.0
        %9923 = vmatprep.subr.mxu0 0.0
        %9924 = vmatpush1.msra.mxu0 0.0
        %9925 = vmatprep.subr.mxu0 0.0
        %9926 = vmatpush1.msra.mxu0 0.0
        %9927 = vmatprep.subr.mxu0 0.0
        %9928 = vmatpush1.msra.mxu0 0.0
        %9929 = vmatprep.subr.mxu0 0.0
        %9930 = vmatpush1.msra.mxu0 0.0
        %9931 = vmatprep.subr.mxu0 0.0
        %9932 = vmatpush1.msra.mxu0 0.0
        %9933 = vmatprep.subr.mxu0 0.0
        %9934 = vmatpush1.msra.mxu0 0.0
        %9935 = vmatprep.subr.mxu0 0.0
        %9936 = vmatpush1.msra.mxu0 0.0
        %9937 = vmatprep.subr.mxu0 0.0
        %9938 = vmatpush1.msra.mxu0 0.0
        %9939 = vmatprep.subr.mxu0 0.0
        %9940 = vmatpush1.msra.mxu0 0.0
        %9941 = vmatprep.subr.mxu0 0.0
        %9942 = vmatpush1.msra.mxu0 0.0
        %9943 = vmatprep.subr.mxu0 0.0
        %9944 = vmatpush1.msra.mxu0 0.0
        %9945 = vmatprep.subr.mxu0 0.0
        %9946 = vmatpush1.msra.mxu0 0.0
        %9947 = vmatprep.subr.mxu0 0.0
        %9948 = vmatpush1.msra.mxu0 0.0
        %9949 = vmatprep.subr.mxu0 0.0
        %9950 = vmatpush1.msra.mxu0 0.0
        %9951 = vmatprep.mubr.f32.mxu0 0.0
        %9952 = vmatmul.mubr.f32.gmra.mrb[0].mxu0 %v9672
        %v9953 = vpop.f32.mrb[0].mxu0
        %v9954 = vadd.f32 0.0, %v9953
        %v9955 = vpop.f32.mrb[0].mxu0
        %v9956 = vadd.f32 0.0, %v9955
        %9957 = vdwg.mxu0
        %9958 = vmatprep.subr.mxu0 0.0
        %9959 = vmatpush1.msra.mxu0 %v9662
        %9960 = vmatprep.subr.mxu0 0.0
        %9961 = vmatpush1.msra.mxu0 0.0
        %9962 = vmatprep.subr.mxu0 0.0
        %9963 = vmatpush1.msra.mxu0 0.0
        %9964 = vmatprep.subr.mxu0 0.0
        %9965 = vmatpush1.msra.mxu0 0.0
        %9966 = vmatprep.subr.mxu0 0.0
        %9967 = vmatpush1.msra.mxu0 0.0
        %9968 = vmatprep.subr.mxu0 0.0
        %9969 = vmatpush1.msra.mxu0 0.0
        %9970 = vmatprep.subr.mxu0 0.0
        %9971 = vmatpush1.msra.mxu0 0.0
        %9972 = vmatprep.subr.mxu0 0.0
        %9973 = vmatpush1.msra.mxu0 0.0
        %9974 = vmatprep.subr.mxu0 0.0
        %9975 = vmatpush1.msra.mxu0 0.0
        %9976 = vmatprep.subr.mxu0 0.0
        %9977 = vmatpush1.msra.mxu0 0.0
        %9978 = vmatprep.subr.mxu0 0.0
        %9979 = vmatpush1.msra.mxu0 0.0
        %9980 = vmatprep.subr.mxu0 0.0
        %9981 = vmatpush1.msra.mxu0 0.0
        %9982 = vmatprep.subr.mxu0 0.0
        %9983 = vmatpush1.msra.mxu0 0.0
        %9984 = vmatprep.subr.mxu0 0.0
        %9985 = vmatpush1.msra.mxu0 0.0
        %9986 = vmatprep.subr.mxu0 0.0
        %9987 = vmatpush1.msra.mxu0 0.0
        %9988 = vmatprep.subr.mxu0 0.0
        %9989 = vmatpush1.msra.mxu0 0.0
        %9990 = vmatprep.subr.mxu0 0.0
        %9991 = vmatpush1.msra.mxu0 0.0
        %9992 = vmatprep.subr.mxu0 0.0
        %9993 = vmatpush1.msra.mxu0 0.0
        %9994 = vmatprep.subr.mxu0 0.0
        %9995 = vmatpush1.msra.mxu0 0.0
        %9996 = vmatprep.subr.mxu0 0.0
        %9997 = vmatpush1.msra.mxu0 0.0
        %9998 = vmatprep.subr.mxu0 0.0
        %9999 = vmatpush1.msra.mxu0 0.0
        %10000 = vmatprep.subr.mxu0 0.0
        %10001 = vmatpush1.msra.mxu0 0.0
        %10002 = vmatprep.subr.mxu0 0.0
        %10003 = vmatpush1.msra.mxu0 0.0
        %10004 = vmatprep.subr.mxu0 0.0
        %10005 = vmatpush1.msra.mxu0 0.0
        %10006 = vmatprep.subr.mxu0 0.0
        %10007 = vmatpush1.msra.mxu0 0.0
        %10008 = vmatprep.subr.mxu0 0.0
        %10009 = vmatpush1.msra.mxu0 0.0
        %10010 = vmatprep.subr.mxu0 0.0
        %10011 = vmatpush1.msra.mxu0 0.0
        %10012 = vmatprep.subr.mxu0 0.0
        %10013 = vmatpush1.msra.mxu0 0.0
        %10014 = vmatprep.subr.mxu0 0.0
        %10015 = vmatpush1.msra.mxu0 0.0
        %10016 = vmatprep.subr.mxu0 0.0
        %10017 = vmatpush1.msra.mxu0 0.0
        %10018 = vmatprep.subr.mxu0 0.0
        %10019 = vmatpush1.msra.mxu0 0.0
        %10020 = vmatprep.subr.mxu0 0.0
        %10021 = vmatpush1.msra.mxu0 0.0
        %10022 = vmatprep.mubr.f32.mxu0 0.0
        %10023 = vmatmul.mubr.f32.gmra.mrb[0].mxu0 %v9672
        %v10024 = vpop.f32.mrb[0].mxu0
        %v10025 = vadd.f32 0.0, %v10024
        %v10026 = vpop.f32.mrb[0].mxu0
        %10027 = vdwg.mxu0
        %v10028 = vadd.f32 %v9622, %v9741
        %v10029 = vadd.f32 %v9623, %v9743
        %v10030 = vadd.f32 %v9624, %v9812
        %v10031 = vadd.f32 %v9625, %v9814
        %v10032 = vadd.f32 %v9626, %v9883
        %v10033 = vadd.f32 %v9627, %v9885
        %v10034 = vadd.f32 %v9628, %v9954
        %v10035 = vadd.f32 %v9629, %v9956
        %v10036 = vadd.f32 %v9630, %v10025
        %10037 = vrot.lane.b32.xlu0 %v339, 64
        %v10038 = vpop.permute.xlu0 %10037
        %10039 = vrot.lane.b32.xlu0 %v328, 36
        %v10040 = vpop.permute.xlu0 %10039
        %10041 = vrot.lane.b32.xlu0 %v329, 36
        %v10042 = vpop.permute.xlu0 %10041
        %10043 = vrot.lane.b32.xlu0 %v330, 36
        %v10044 = vpop.permute.xlu0 %10043
        %10045 = vrot.lane.b32.xlu0 %v331, 36
        %v10046 = vpop.permute.xlu0 %10045
        %10047 = vrot.lane.b32.xlu0 %v332, 36
        %v10048 = vpop.permute.xlu0 %10047
        %10049 = vrot.lane.b32.xlu0 %v333, 36
        %v10050 = vpop.permute.xlu0 %10049
        %10051 = vrot.lane.b32.xlu0 %v334, 36
        %v10052 = vpop.permute.xlu0 %10051
        %10053 = vrot.lane.b32.xlu0 %v335, 36
        %v10054 = vpop.permute.xlu0 %10053
        %10055 = vrot.lane.b32.xlu0 %v336, 36
        %v10056 = vpop.permute.xlu0 %10055
        %10057 = vrot.lane.b32.xlu0 %v337, 36
        %v10058 = vpop.permute.xlu0 %10057
        %vm10059 = vcmask 293888
        %v10060 = vsel %vm10059, %v10040, %v10042
        %v10061 = vsel %vm10059, %v10042, %v10044
        %v10062 = vsel %vm10059, %v10044, %v10046
        %v10063 = vsel %vm10059, %v10046, %v10048
        %v10064 = vsel %vm10059, %v10048, %v10050
        %v10065 = vsel %vm10059, %v10050, %v10052
        %v10066 = vsel %vm10059, %v10052, %v10054
        %v10067 = vsel %vm10059, %v10054, %v10056
        %v10068 = vsel %vm10059, %v10056, %v10058
        %v10078 = vsel %vm392, %v10038, 0
        %10080 = vmatprep.subr.mxu0 %v10061
        %10081 = vmatpush1.msra.mxu0 %v10060
        %10082 = vmatprep.subr.mxu0 0.0
        %10083 = vmatpush1.msra.mxu0 0.0
        %10084 = vmatprep.subr.mxu0 0.0
        %10085 = vmatpush1.msra.mxu0 0.0
        %10086 = vmatprep.subr.mxu0 0.0
        %10087 = vmatpush1.msra.mxu0 0.0
        %10088 = vmatprep.subr.mxu0 0.0
        %10089 = vmatpush1.msra.mxu0 0.0
        %10090 = vmatprep.subr.mxu0 0.0
        %10091 = vmatpush1.msra.mxu0 0.0
        %10092 = vmatprep.subr.mxu0 0.0
        %10093 = vmatpush1.msra.mxu0 0.0
        %10094 = vmatprep.subr.mxu0 0.0
        %10095 = vmatpush1.msra.mxu0 0.0
        %10096 = vmatprep.subr.mxu0 0.0
        %10097 = vmatpush1.msra.mxu0 0.0
        %10098 = vmatprep.subr.mxu0 0.0
        %10099 = vmatpush1.msra.mxu0 0.0
        %10100 = vmatprep.subr.mxu0 0.0
        %10101 = vmatpush1.msra.mxu0 0.0
        %10102 = vmatprep.subr.mxu0 0.0
        %10103 = vmatpush1.msra.mxu0 0.0
        %10104 = vmatprep.subr.mxu0 0.0
        %10105 = vmatpush1.msra.mxu0 0.0
        %10106 = vmatprep.subr.mxu0 0.0
        %10107 = vmatpush1.msra.mxu0 0.0
        %10108 = vmatprep.subr.mxu0 0.0
        %10109 = vmatpush1.msra.mxu0 0.0
        %10110 = vmatprep.subr.mxu0 0.0
        %10111 = vmatpush1.msra.mxu0 0.0
        %10112 = vmatprep.subr.mxu0 0.0
        %10113 = vmatpush1.msra.mxu0 0.0
        %10114 = vmatprep.subr.mxu0 0.0
        %10115 = vmatpush1.msra.mxu0 0.0
        %10116 = vmatprep.subr.mxu0 0.0
        %10117 = vmatpush1.msra.mxu0 0.0
        %10118 = vmatprep.subr.mxu0 0.0
        %10119 = vmatpush1.msra.mxu0 0.0
        %10120 = vmatprep.subr.mxu0 0.0
        %10121 = vmatpush1.msra.mxu0 0.0
        %10122 = vmatprep.subr.mxu0 0.0
        %10123 = vmatpush1.msra.mxu0 0.0
        %10124 = vmatprep.subr.mxu0 0.0
        %10125 = vmatpush1.msra.mxu0 0.0
        %10126 = vmatprep.subr.mxu0 0.0
        %10127 = vmatpush1.msra.mxu0 0.0
        %10128 = vmatprep.subr.mxu0 0.0
        %10129 = vmatpush1.msra.mxu0 0.0
        %10130 = vmatprep.subr.mxu0 0.0
        %10131 = vmatpush1.msra.mxu0 0.0
        %10132 = vmatprep.subr.mxu0 0.0
        %10133 = vmatpush1.msra.mxu0 0.0
        %10134 = vmatprep.subr.mxu0 0.0
        %10135 = vmatpush1.msra.mxu0 0.0
        %10136 = vmatprep.subr.mxu0 0.0
        %10137 = vmatpush1.msra.mxu0 0.0
        %10138 = vmatprep.subr.mxu0 0.0
        %10139 = vmatpush1.msra.mxu0 0.0
        %10140 = vmatprep.subr.mxu0 0.0
        %10141 = vmatpush1.msra.mxu0 0.0
        %10142 = vmatprep.subr.mxu0 0.0
        %10143 = vmatpush1.msra.mxu0 0.0
        %10144 = vmatprep.mubr.f32.mxu0 0.0
        %10145 = vmatmul.mubr.f32.gmra.mrb[0].mxu0 %v10078
        %v10146 = vpop.f32.mrb[0].mxu0
        %v10147 = vadd.f32 0.0, %v10146
        %v10148 = vpop.f32.mrb[0].mxu0
        %v10149 = vadd.f32 0.0, %v10148
        %10150 = vdwg.mxu0
        %10151 = vmatprep.subr.mxu0 %v10063
        %10152 = vmatpush1.msra.mxu0 %v10062
        %10153 = vmatprep.subr.mxu0 0.0
        %10154 = vmatpush1.msra.mxu0 0.0
        %10155 = vmatprep.subr.mxu0 0.0
        %10156 = vmatpush1.msra.mxu0 0.0
        %10157 = vmatprep.subr.mxu0 0.0
        %10158 = vmatpush1.msra.mxu0 0.0
        %10159 = vmatprep.subr.mxu0 0.0
        %10160 = vmatpush1.msra.mxu0 0.0
        %10161 = vmatprep.subr.mxu0 0.0
        %10162 = vmatpush1.msra.mxu0 0.0
        %10163 = vmatprep.subr.mxu0 0.0
        %10164 = vmatpush1.msra.mxu0 0.0
        %10165 = vmatprep.subr.mxu0 0.0
        %10166 = vmatpush1.msra.mxu0 0.0
        %10167 = vmatprep.subr.mxu0 0.0
        %10168 = vmatpush1.msra.mxu0 0.0
        %10169 = vmatprep.subr.mxu0 0.0
        %10170 = vmatpush1.msra.mxu0 0.0
        %10171 = vmatprep.subr.mxu0 0.0
        %10172 = vmatpush1.msra.mxu0 0.0
        %10173 = vmatprep.subr.mxu0 0.0
        %10174 = vmatpush1.msra.mxu0 0.0
        %10175 = vmatprep.subr.mxu0 0.0
        %10176 = vmatpush1.msra.mxu0 0.0
        %10177 = vmatprep.subr.mxu0 0.0
        %10178 = vmatpush1.msra.mxu0 0.0
        %10179 = vmatprep.subr.mxu0 0.0
        %10180 = vmatpush1.msra.mxu0 0.0
        %10181 = vmatprep.subr.mxu0 0.0
        %10182 = vmatpush1.msra.mxu0 0.0
        %10183 = vmatprep.subr.mxu0 0.0
        %10184 = vmatpush1.msra.mxu0 0.0
        %10185 = vmatprep.subr.mxu0 0.0
        %10186 = vmatpush1.msra.mxu0 0.0
        %10187 = vmatprep.subr.mxu0 0.0
        %10188 = vmatpush1.msra.mxu0 0.0
        %10189 = vmatprep.subr.mxu0 0.0
        %10190 = vmatpush1.msra.mxu0 0.0
        %10191 = vmatprep.subr.mxu0 0.0
        %10192 = vmatpush1.msra.mxu0 0.0
        %10193 = vmatprep.subr.mxu0 0.0
        %10194 = vmatpush1.msra.mxu0 0.0
        %10195 = vmatprep.subr.mxu0 0.0
        %10196 = vmatpush1.msra.mxu0 0.0
        %10197 = vmatprep.subr.mxu0 0.0
        %10198 = vmatpush1.msra.mxu0 0.0
        %10199 = vmatprep.subr.mxu0 0.0
        %10200 = vmatpush1.msra.mxu0 0.0
        %10201 = vmatprep.subr.mxu0 0.0
        %10202 = vmatpush1.msra.mxu0 0.0
        %10203 = vmatprep.subr.mxu0 0.0
        %10204 = vmatpush1.msra.mxu0 0.0
        %10205 = vmatprep.subr.mxu0 0.0
        %10206 = vmatpush1.msra.mxu0 0.0
        %10207 = vmatprep.subr.mxu0 0.0
        %10208 = vmatpush1.msra.mxu0 0.0
        %10209 = vmatprep.subr.mxu0 0.0
        %10210 = vmatpush1.msra.mxu0 0.0
        %10211 = vmatprep.subr.mxu0 0.0
        %10212 = vmatpush1.msra.mxu0 0.0
        %10213 = vmatprep.subr.mxu0 0.0
        %10214 = vmatpush1.msra.mxu0 0.0
        %10215 = vmatprep.mubr.f32.mxu0 0.0
        %10216 = vmatmul.mubr.f32.gmra.mrb[0].mxu0 %v10078
        %v10217 = vpop.f32.mrb[0].mxu0
        %v10218 = vadd.f32 0.0, %v10217
        %v10219 = vpop.f32.mrb[0].mxu0
        %v10220 = vadd.f32 0.0, %v10219
        %10221 = vdwg.mxu0
        %10222 = vmatprep.subr.mxu0 %v10065
        %10223 = vmatpush1.msra.mxu0 %v10064
        %10224 = vmatprep.subr.mxu0 0.0
        %10225 = vmatpush1.msra.mxu0 0.0
        %10226 = vmatprep.subr.mxu0 0.0
        %10227 = vmatpush1.msra.mxu0 0.0
        %10228 = vmatprep.subr.mxu0 0.0
        %10229 = vmatpush1.msra.mxu0 0.0
        %10230 = vmatprep.subr.mxu0 0.0
        %10231 = vmatpush1.msra.mxu0 0.0
        %10232 = vmatprep.subr.mxu0 0.0
        %10233 = vmatpush1.msra.mxu0 0.0
        %10234 = vmatprep.subr.mxu0 0.0
        %10235 = vmatpush1.msra.mxu0 0.0
        %10236 = vmatprep.subr.mxu0 0.0
        %10237 = vmatpush1.msra.mxu0 0.0
        %10238 = vmatprep.subr.mxu0 0.0
        %10239 = vmatpush1.msra.mxu0 0.0
        %10240 = vmatprep.subr.mxu0 0.0
        %10241 = vmatpush1.msra.mxu0 0.0
        %10242 = vmatprep.subr.mxu0 0.0
        %10243 = vmatpush1.msra.mxu0 0.0
        %10244 = vmatprep.subr.mxu0 0.0
        %10245 = vmatpush1.msra.mxu0 0.0
        %10246 = vmatprep.subr.mxu0 0.0
        %10247 = vmatpush1.msra.mxu0 0.0
        %10248 = vmatprep.subr.mxu0 0.0
        %10249 = vmatpush1.msra.mxu0 0.0
        %10250 = vmatprep.subr.mxu0 0.0
        %10251 = vmatpush1.msra.mxu0 0.0
        %10252 = vmatprep.subr.mxu0 0.0
        %10253 = vmatpush1.msra.mxu0 0.0
        %10254 = vmatprep.subr.mxu0 0.0
        %10255 = vmatpush1.msra.mxu0 0.0
        %10256 = vmatprep.subr.mxu0 0.0
        %10257 = vmatpush1.msra.mxu0 0.0
        %10258 = vmatprep.subr.mxu0 0.0
        %10259 = vmatpush1.msra.mxu0 0.0
        %10260 = vmatprep.subr.mxu0 0.0
        %10261 = vmatpush1.msra.mxu0 0.0
        %10262 = vmatprep.subr.mxu0 0.0
        %10263 = vmatpush1.msra.mxu0 0.0
        %10264 = vmatprep.subr.mxu0 0.0
        %10265 = vmatpush1.msra.mxu0 0.0
        %10266 = vmatprep.subr.mxu0 0.0
        %10267 = vmatpush1.msra.mxu0 0.0
        %10268 = vmatprep.subr.mxu0 0.0
        %10269 = vmatpush1.msra.mxu0 0.0
        %10270 = vmatprep.subr.mxu0 0.0
        %10271 = vmatpush1.msra.mxu0 0.0
        %10272 = vmatprep.subr.mxu0 0.0
        %10273 = vmatpush1.msra.mxu0 0.0
        %10274 = vmatprep.subr.mxu0 0.0
        %10275 = vmatpush1.msra.mxu0 0.0
        %10276 = vmatprep.subr.mxu0 0.0
        %10277 = vmatpush1.msra.mxu0 0.0
        %10278 = vmatprep.subr.mxu0 0.0
        %10279 = vmatpush1.msra.mxu0 0.0
        %10280 = vmatprep.subr.mxu0 0.0
        %10281 = vmatpush1.msra.mxu0 0.0
        %10282 = vmatprep.subr.mxu0 0.0
        %10283 = vmatpush1.msra.mxu0 0.0
        %10284 = vmatprep.subr.mxu0 0.0
        %10285 = vmatpush1.msra.mxu0 0.0
        %10286 = vmatprep.mubr.f32.mxu0 0.0
        %10287 = vmatmul.mubr.f32.gmra.mrb[0].mxu0 %v10078
        %v10288 = vpop.f32.mrb[0].mxu0
        %v10289 = vadd.f32 0.0, %v10288
        %v10290 = vpop.f32.mrb[0].mxu0
        %v10291 = vadd.f32 0.0, %v10290
        %10292 = vdwg.mxu0
        %10293 = vmatprep.subr.mxu0 %v10067
        %10294 = vmatpush1.msra.mxu0 %v10066
        %10295 = vmatprep.subr.mxu0 0.0
        %10296 = vmatpush1.msra.mxu0 0.0
        %10297 = vmatprep.subr.mxu0 0.0
        %10298 = vmatpush1.msra.mxu0 0.0
        %10299 = vmatprep.subr.mxu0 0.0
        %10300 = vmatpush1.msra.mxu0 0.0
        %10301 = vmatprep.subr.mxu0 0.0
        %10302 = vmatpush1.msra.mxu0 0.0
        %10303 = vmatprep.subr.mxu0 0.0
        %10304 = vmatpush1.msra.mxu0 0.0
        %10305 = vmatprep.subr.mxu0 0.0
        %10306 = vmatpush1.msra.mxu0 0.0
        %10307 = vmatprep.subr.mxu0 0.0
        %10308 = vmatpush1.msra.mxu0 0.0
        %10309 = vmatprep.subr.mxu0 0.0
        %10310 = vmatpush1.msra.mxu0 0.0
        %10311 = vmatprep.subr.mxu0 0.0
        %10312 = vmatpush1.msra.mxu0 0.0
        %10313 = vmatprep.subr.mxu0 0.0
        %10314 = vmatpush1.msra.mxu0 0.0
        %10315 = vmatprep.subr.mxu0 0.0
        %10316 = vmatpush1.msra.mxu0 0.0
        %10317 = vmatprep.subr.mxu0 0.0
        %10318 = vmatpush1.msra.mxu0 0.0
        %10319 = vmatprep.subr.mxu0 0.0
        %10320 = vmatpush1.msra.mxu0 0.0
        %10321 = vmatprep.subr.mxu0 0.0
        %10322 = vmatpush1.msra.mxu0 0.0
        %10323 = vmatprep.subr.mxu0 0.0
        %10324 = vmatpush1.msra.mxu0 0.0
        %10325 = vmatprep.subr.mxu0 0.0
        %10326 = vmatpush1.msra.mxu0 0.0
        %10327 = vmatprep.subr.mxu0 0.0
        %10328 = vmatpush1.msra.mxu0 0.0
        %10329 = vmatprep.subr.mxu0 0.0
        %10330 = vmatpush1.msra.mxu0 0.0
        %10331 = vmatprep.subr.mxu0 0.0
        %10332 = vmatpush1.msra.mxu0 0.0
        %10333 = vmatprep.subr.mxu0 0.0
        %10334 = vmatpush1.msra.mxu0 0.0
        %10335 = vmatprep.subr.mxu0 0.0
        %10336 = vmatpush1.msra.mxu0 0.0
        %10337 = vmatprep.subr.mxu0 0.0
        %10338 = vmatpush1.msra.mxu0 0.0
        %10339 = vmatprep.subr.mxu0 0.0
        %10340 = vmatpush1.msra.mxu0 0.0
        %10341 = vmatprep.subr.mxu0 0.0
        %10342 = vmatpush1.msra.mxu0 0.0
        %10343 = vmatprep.subr.mxu0 0.0
        %10344 = vmatpush1.msra.mxu0 0.0
        %10345 = vmatprep.subr.mxu0 0.0
        %10346 = vmatpush1.msra.mxu0 0.0
        %10347 = vmatprep.subr.mxu0 0.0
        %10348 = vmatpush1.msra.mxu0 0.0
        %10349 = vmatprep.subr.mxu0 0.0
        %10350 = vmatpush1.msra.mxu0 0.0
        %10351 = vmatprep.subr.mxu0 0.0
        %10352 = vmatpush1.msra.mxu0 0.0
        %10353 = vmatprep.subr.mxu0 0.0
        %10354 = vmatpush1.msra.mxu0 0.0
        %10355 = vmatprep.subr.mxu0 0.0
        %10356 = vmatpush1.msra.mxu0 0.0
        %10357 = vmatprep.mubr.f32.mxu0 0.0
        %10358 = vmatmul.mubr.f32.gmra.mrb[0].mxu0 %v10078
        %v10359 = vpop.f32.mrb[0].mxu0
        %v10360 = vadd.f32 0.0, %v10359
        %v10361 = vpop.f32.mrb[0].mxu0
        %v10362 = vadd.f32 0.0, %v10361
        %10363 = vdwg.mxu0
        %10364 = vmatprep.subr.mxu0 0.0
        %10365 = vmatpush1.msra.mxu0 %v10068
        %10366 = vmatprep.subr.mxu0 0.0
        %10367 = vmatpush1.msra.mxu0 0.0
        %10368 = vmatprep.subr.mxu0 0.0
        %10369 = vmatpush1.msra.mxu0 0.0
        %10370 = vmatprep.subr.mxu0 0.0
        %10371 = vmatpush1.msra.mxu0 0.0
        %10372 = vmatprep.subr.mxu0 0.0
        %10373 = vmatpush1.msra.mxu0 0.0
        %10374 = vmatprep.subr.mxu0 0.0
        %10375 = vmatpush1.msra.mxu0 0.0
        %10376 = vmatprep.subr.mxu0 0.0
        %10377 = vmatpush1.msra.mxu0 0.0
        %10378 = vmatprep.subr.mxu0 0.0
        %10379 = vmatpush1.msra.mxu0 0.0
        %10380 = vmatprep.subr.mxu0 0.0
        %10381 = vmatpush1.msra.mxu0 0.0
        %10382 = vmatprep.subr.mxu0 0.0
        %10383 = vmatpush1.msra.mxu0 0.0
        %10384 = vmatprep.subr.mxu0 0.0
        %10385 = vmatpush1.msra.mxu0 0.0
        %10386 = vmatprep.subr.mxu0 0.0
        %10387 = vmatpush1.msra.mxu0 0.0
        %10388 = vmatprep.subr.mxu0 0.0
        %10389 = vmatpush1.msra.mxu0 0.0
        %10390 = vmatprep.subr.mxu0 0.0
        %10391 = vmatpush1.msra.mxu0 0.0
        %10392 = vmatprep.subr.mxu0 0.0
        %10393 = vmatpush1.msra.mxu0 0.0
        %10394 = vmatprep.subr.mxu0 0.0
        %10395 = vmatpush1.msra.mxu0 0.0
        %10396 = vmatprep.subr.mxu0 0.0
        %10397 = vmatpush1.msra.mxu0 0.0
        %10398 = vmatprep.subr.mxu0 0.0
        %10399 = vmatpush1.msra.mxu0 0.0
        %10400 = vmatprep.subr.mxu0 0.0
        %10401 = vmatpush1.msra.mxu0 0.0
        %10402 = vmatprep.subr.mxu0 0.0
        %10403 = vmatpush1.msra.mxu0 0.0
        %10404 = vmatprep.subr.mxu0 0.0
        %10405 = vmatpush1.msra.mxu0 0.0
        %10406 = vmatprep.subr.mxu0 0.0
        %10407 = vmatpush1.msra.mxu0 0.0
        %10408 = vmatprep.subr.mxu0 0.0
        %10409 = vmatpush1.msra.mxu0 0.0
        %10410 = vmatprep.subr.mxu0 0.0
        %10411 = vmatpush1.msra.mxu0 0.0
        %10412 = vmatprep.subr.mxu0 0.0
        %10413 = vmatpush1.msra.mxu0 0.0
        %10414 = vmatprep.subr.mxu0 0.0
        %10415 = vmatpush1.msra.mxu0 0.0
        %10416 = vmatprep.subr.mxu0 0.0
        %10417 = vmatpush1.msra.mxu0 0.0
        %10418 = vmatprep.subr.mxu0 0.0
        %10419 = vmatpush1.msra.mxu0 0.0
        %10420 = vmatprep.subr.mxu0 0.0
        %10421 = vmatpush1.msra.mxu0 0.0
        %10422 = vmatprep.subr.mxu0 0.0
        %10423 = vmatpush1.msra.mxu0 0.0
        %10424 = vmatprep.subr.mxu0 0.0
        %10425 = vmatpush1.msra.mxu0 0.0
        %10426 = vmatprep.subr.mxu0 0.0
        %10427 = vmatpush1.msra.mxu0 0.0
        %10428 = vmatprep.mubr.f32.mxu0 0.0
        %10429 = vmatmul.mubr.f32.gmra.mrb[0].mxu0 %v10078
        %v10430 = vpop.f32.mrb[0].mxu0
        %v10431 = vadd.f32 0.0, %v10430
        %v10432 = vpop.f32.mrb[0].mxu0
        %10433 = vdwg.mxu0
        %v10434 = vadd.f32 %v10028, %v10147
        %v10435 = vadd.f32 %v10029, %v10149
        %v10436 = vadd.f32 %v10030, %v10218
        %v10437 = vadd.f32 %v10031, %v10220
        %v10438 = vadd.f32 %v10032, %v10289
        %v10439 = vadd.f32 %v10033, %v10291
        %v10440 = vadd.f32 %v10034, %v10360
        %v10441 = vadd.f32 %v10035, %v10362
        %v10442 = vadd.f32 %v10036, %v10431
        %v10443 = vld [vmem:[%s3] sm:$0xff]
        %10445 = vset.pattern.permute.xlu0 0
        %10446 = vperm.xlu0 %10445, %v10443
        %v10447 = vpop.permute.xlu0 %10446
        %v10449 = vadd.f32 %v10434, %v10447
        %v10450 = vadd.f32 %v10435, %v10447
        %v10451 = vadd.f32 %v10436, %v10447
        %v10452 = vadd.f32 %v10437, %v10447
        %v10453 = vadd.f32 %v10438, %v10447
        %v10454 = vadd.f32 %v10439, %v10447
        %v10455 = vadd.f32 %v10440, %v10447
        %v10456 = vadd.f32 %v10441, %v10447
        %v10457 = vadd.f32 %v10442, %v10447
        %v10458 = vrot.slane %v10449, 4
        %v10459 = vmax.f32 %v10449, %v10458
        %v10460 = vrot.slane %v10459, 2
        %v10461 = vmax.f32 %v10459, %v10460
        %v10462 = vrot.slane %v10461, 1
        %v10463 = vmax.f32 %v10461, %v10462
        %v10464 = vrot.slane %v10450, 4
        %v10465 = vmax.f32 %v10450, %v10464
        %v10466 = vrot.slane %v10465, 2
        %v10467 = vmax.f32 %v10465, %v10466
        %v10468 = vrot.slane %v10467, 1
        %v10469 = vmax.f32 %v10467, %v10468
        %v10470 = vrot.slane %v10451, 4
        %v10471 = vmax.f32 %v10451, %v10470
        %v10472 = vrot.slane %v10471, 2
        %v10473 = vmax.f32 %v10471, %v10472
        %v10474 = vrot.slane %v10473, 1
        %v10475 = vmax.f32 %v10473, %v10474
        %v10476 = vrot.slane %v10452, 4
        %v10477 = vmax.f32 %v10452, %v10476
        %v10478 = vrot.slane %v10477, 2
        %v10479 = vmax.f32 %v10477, %v10478
        %v10480 = vrot.slane %v10479, 1
        %v10481 = vmax.f32 %v10479, %v10480
        %v10482 = vrot.slane %v10453, 4
        %v10483 = vmax.f32 %v10453, %v10482
        %v10484 = vrot.slane %v10483, 2
        %v10485 = vmax.f32 %v10483, %v10484
        %v10486 = vrot.slane %v10485, 1
        %v10487 = vmax.f32 %v10485, %v10486
        %v10488 = vrot.slane %v10454, 4
        %v10489 = vmax.f32 %v10454, %v10488
        %v10490 = vrot.slane %v10489, 2
        %v10491 = vmax.f32 %v10489, %v10490
        %v10492 = vrot.slane %v10491, 1
        %v10493 = vmax.f32 %v10491, %v10492
        %v10494 = vrot.slane %v10455, 4
        %v10495 = vmax.f32 %v10455, %v10494
        %v10496 = vrot.slane %v10495, 2
        %v10497 = vmax.f32 %v10495, %v10496
        %v10498 = vrot.slane %v10497, 1
        %v10499 = vmax.f32 %v10497, %v10498
        %v10500 = vrot.slane %v10456, 4
        %v10501 = vmax.f32 %v10456, %v10500
        %v10502 = vrot.slane %v10501, 2
        %v10503 = vmax.f32 %v10501, %v10502
        %v10504 = vrot.slane %v10503, 1
        %v10505 = vmax.f32 %v10503, %v10504
        %v10506 = vrot.slane %v10457, 4
        %v10507 = vmax.f32 %v10457, %v10506
        %v10508 = vrot.slane %v10507, 2
        %v10509 = vmax.f32 %v10507, %v10508
        %v10510 = vrot.slane %v10509, 1
        %v10511 = vmax.f32 %v10509, %v10510
        %v10512 = vsub.f32 %v10449, %v10463
        %v10513 = vsub.f32 %v10450, %v10469
        %v10514 = vsub.f32 %v10451, %v10475
        %v10515 = vsub.f32 %v10452, %v10481
        %v10516 = vsub.f32 %v10453, %v10487
        %v10517 = vsub.f32 %v10454, %v10493
        %v10518 = vsub.f32 %v10455, %v10499
        %v10519 = vsub.f32 %v10456, %v10505
        %v10520 = vsub.f32 %v10457, %v10511
        %v10521 = vmul.f32 %v10512, 1.442695
        %v10522 = vpow.pop %v10521
        %v10523 = vmul.f32 %v10513, 1.442695
        %v10524 = vpow.pop %v10523
        %v10525 = vmul.f32 %v10514, 1.442695
        %v10526 = vpow.pop %v10525
        %v10527 = vmul.f32 %v10515, 1.442695
        %v10528 = vpow.pop %v10527
        %v10529 = vmul.f32 %v10516, 1.442695
        %v10530 = vpow.pop %v10529
        %v10531 = vmul.f32 %v10517, 1.442695
        %v10532 = vpow.pop %v10531
        %v10533 = vmul.f32 %v10518, 1.442695
        %v10534 = vpow.pop %v10533
        %v10535 = vmul.f32 %v10519, 1.442695
        %v10536 = vpow.pop %v10535
        %v10537 = vmul.f32 %v10520, 1.442695
        %v10538 = vpow.pop %v10537
        %v10539 = vrot.slane %v10522, 4
        %v10540 = vadd.f32 %v10522, %v10539
        %v10541 = vrot.slane %v10540, 2
        %v10542 = vadd.f32 %v10540, %v10541
        %v10543 = vrot.slane %v10542, 1
        %v10544 = vadd.f32 %v10542, %v10543
        %v10545 = vrot.slane %v10524, 4
        %v10546 = vadd.f32 %v10524, %v10545
        %v10547 = vrot.slane %v10546, 2
        %v10548 = vadd.f32 %v10546, %v10547
        %v10549 = vrot.slane %v10548, 1
        %v10550 = vadd.f32 %v10548, %v10549
        %v10551 = vrot.slane %v10526, 4
        %v10552 = vadd.f32 %v10526, %v10551
        %v10553 = vrot.slane %v10552, 2
        %v10554 = vadd.f32 %v10552, %v10553
        %v10555 = vrot.slane %v10554, 1
        %v10556 = vadd.f32 %v10554, %v10555
        %v10557 = vrot.slane %v10528, 4
        %v10558 = vadd.f32 %v10528, %v10557
        %v10559 = vrot.slane %v10558, 2
        %v10560 = vadd.f32 %v10558, %v10559
        %v10561 = vrot.slane %v10560, 1
        %v10562 = vadd.f32 %v10560, %v10561
        %v10563 = vrot.slane %v10530, 4
        %v10564 = vadd.f32 %v10530, %v10563
        %v10565 = vrot.slane %v10564, 2
        %v10566 = vadd.f32 %v10564, %v10565
        %v10567 = vrot.slane %v10566, 1
        %v10568 = vadd.f32 %v10566, %v10567
        %v10569 = vrot.slane %v10532, 4
        %v10570 = vadd.f32 %v10532, %v10569
        %v10571 = vrot.slane %v10570, 2
        %v10572 = vadd.f32 %v10570, %v10571
        %v10573 = vrot.slane %v10572, 1
        %v10574 = vadd.f32 %v10572, %v10573
        %v10575 = vrot.slane %v10534, 4
        %v10576 = vadd.f32 %v10534, %v10575
        %v10577 = vrot.slane %v10576, 2
        %v10578 = vadd.f32 %v10576, %v10577
        %v10579 = vrot.slane %v10578, 1
        %v10580 = vadd.f32 %v10578, %v10579
        %v10581 = vrot.slane %v10536, 4
        %v10582 = vadd.f32 %v10536, %v10581
        %v10583 = vrot.slane %v10582, 2
        %v10584 = vadd.f32 %v10582, %v10583
        %v10585 = vrot.slane %v10584, 1
        %v10586 = vadd.f32 %v10584, %v10585
        %v10587 = vrot.slane %v10538, 4
        %v10588 = vadd.f32 %v10538, %v10587
        %v10589 = vrot.slane %v10588, 2
        %v10590 = vadd.f32 %v10588, %v10589
        %v10591 = vrot.slane %v10590, 1
        %v10592 = vadd.f32 %v10590, %v10591
        %v10593 = vlog2.pop %v10544
        %v10594 = vmul.f32 %v10593, 0.6931472
        %v10595 = vlog2.pop %v10550
        %v10596 = vmul.f32 %v10595, 0.6931472
        %v10597 = vlog2.pop %v10556
        %v10598 = vmul.f32 %v10597, 0.6931472
        %v10599 = vlog2.pop %v10562
        %v10600 = vmul.f32 %v10599, 0.6931472
        %v10601 = vlog2.pop %v10568
        %v10602 = vmul.f32 %v10601, 0.6931472
        %v10603 = vlog2.pop %v10574
        %v10604 = vmul.f32 %v10603, 0.6931472
        %v10605 = vlog2.pop %v10580
        %v10606 = vmul.f32 %v10605, 0.6931472
        %v10607 = vlog2.pop %v10586
        %v10608 = vmul.f32 %v10607, 0.6931472
        %v10609 = vlog2.pop %v10592
        %v10610 = vmul.f32 %v10609, 0.6931472
        %v10611 = vsub.f32 %v10512, %v10594
        %v10612 = vsub.f32 %v10513, %v10596
        %v10613 = vsub.f32 %v10514, %v10598
        %v10614 = vsub.f32 %v10515, %v10600
        %v10615 = vsub.f32 %v10516, %v10602
        %v10616 = vsub.f32 %v10517, %v10604
        %v10617 = vsub.f32 %v10518, %v10606
        %v10618 = vsub.f32 %v10519, %v10608
        %v10619 = vsub.f32 %v10520, %v10610
        %10620 = vst [vmem:[%s319] sm:$0xff] %v10611
        %10621 = vst [vmem:[%s319 + $0x8] sm:$0xff] %v10612
        %10622 = vst [vmem:[%s319 + $0x10] sm:$0xff] %v10613
        %10623 = vst [vmem:[%s319 + $0x18] sm:$0xff] %v10614
        %10624 = vst [vmem:[%s319 + $0x20] sm:$0xff] %v10615
        %10625 = vst [vmem:[%s319 + $0x28] sm:$0xff] %v10616
        %10626 = vst [vmem:[%s319 + $0x30] sm:$0xff] %v10617
        %10627 = vst [vmem:[%s319 + $0x38] sm:$0xff] %v10618
        %10628 = vst [vmem:[%s319 + $0x40] sm:$0xff] %v10619
        %v10629 = vmul.f32 %v10522, %v10522
        %v10630 = vmul.f32 %v10524, %v10524
        %v10631 = vmul.f32 %v10526, %v10526
        %v10632 = vmul.f32 %v10528, %v10528
        %v10633 = vmul.f32 %v10530, %v10530
        %v10634 = vmul.f32 %v10532, %v10532
        %v10635 = vmul.f32 %v10534, %v10534
        %v10636 = vmul.f32 %v10536, %v10536
        %v10637 = vmul.f32 %v10538, %v10538
        %v10638 = vmul.f32 %v10629, %v10629
        %v10639 = vmul.f32 %v10630, %v10630
        %v10640 = vmul.f32 %v10631, %v10631
        %v10641 = vmul.f32 %v10632, %v10632
        %v10642 = vmul.f32 %v10633, %v10633
        %v10643 = vmul.f32 %v10634, %v10634
        %v10644 = vmul.f32 %v10635, %v10635
        %v10645 = vmul.f32 %v10636, %v10636
        %v10646 = vmul.f32 %v10637, %v10637
        %v10647 = vmul.f32 %v10638, %v10522
        %v10648 = vmul.f32 %v10639, %v10524
        %v10649 = vmul.f32 %v10640, %v10526
        %v10650 = vmul.f32 %v10641, %v10528
        %v10651 = vmul.f32 %v10642, %v10530
        %v10652 = vmul.f32 %v10643, %v10532
        %v10653 = vmul.f32 %v10644, %v10534
        %v10654 = vmul.f32 %v10645, %v10536
        %v10655 = vmul.f32 %v10646, %v10538
        %v10656 = vrot.slane %v10647, 4
        %v10657 = vadd.f32 %v10647, %v10656
        %v10658 = vrot.slane %v10657, 2
        %v10659 = vadd.f32 %v10657, %v10658
        %v10660 = vrot.slane %v10659, 1
        %v10661 = vadd.f32 %v10659, %v10660
        %v10662 = vrot.slane %v10648, 4
        %v10663 = vadd.f32 %v10648, %v10662
        %v10664 = vrot.slane %v10663, 2
        %v10665 = vadd.f32 %v10663, %v10664
        %v10666 = vrot.slane %v10665, 1
        %v10667 = vadd.f32 %v10665, %v10666
        %v10668 = vrot.slane %v10649, 4
        %v10669 = vadd.f32 %v10649, %v10668
        %v10670 = vrot.slane %v10669, 2
        %v10671 = vadd.f32 %v10669, %v10670
        %v10672 = vrot.slane %v10671, 1
        %v10673 = vadd.f32 %v10671, %v10672
        %v10674 = vrot.slane %v10650, 4
        %v10675 = vadd.f32 %v10650, %v10674
        %v10676 = vrot.slane %v10675, 2
        %v10677 = vadd.f32 %v10675, %v10676
        %v10678 = vrot.slane %v10677, 1
        %v10679 = vadd.f32 %v10677, %v10678
        %v10680 = vrot.slane %v10651, 4
        %v10681 = vadd.f32 %v10651, %v10680
        %v10682 = vrot.slane %v10681, 2
        %v10683 = vadd.f32 %v10681, %v10682
        %v10684 = vrot.slane %v10683, 1
        %v10685 = vadd.f32 %v10683, %v10684
        %v10686 = vrot.slane %v10652, 4
        %v10687 = vadd.f32 %v10652, %v10686
        %v10688 = vrot.slane %v10687, 2
        %v10689 = vadd.f32 %v10687, %v10688
        %v10690 = vrot.slane %v10689, 1
        %v10691 = vadd.f32 %v10689, %v10690
        %v10692 = vrot.slane %v10653, 4
        %v10693 = vadd.f32 %v10653, %v10692
        %v10694 = vrot.slane %v10693, 2
        %v10695 = vadd.f32 %v10693, %v10694
        %v10696 = vrot.slane %v10695, 1
        %v10697 = vadd.f32 %v10695, %v10696
        %v10698 = vrot.slane %v10654, 4
        %v10699 = vadd.f32 %v10654, %v10698
        %v10700 = vrot.slane %v10699, 2
        %v10701 = vadd.f32 %v10699, %v10700
        %v10702 = vrot.slane %v10701, 1
        %v10703 = vadd.f32 %v10701, %v10702
        %v10704 = vrot.slane %v10655, 4
        %v10705 = vadd.f32 %v10655, %v10704
        %v10706 = vrot.slane %v10705, 2
        %v10707 = vadd.f32 %v10705, %v10706
        %v10708 = vrot.slane %v10707, 1
        %v10709 = vadd.f32 %v10707, %v10708
        %v10710 = vrcp.pop %v10661
        %v10711 = vmul.f32 %v10647, %v10710
        %v10712 = vrcp.pop %v10667
        %v10713 = vmul.f32 %v10648, %v10712
        %v10714 = vrcp.pop %v10673
        %v10715 = vmul.f32 %v10649, %v10714
        %v10716 = vrcp.pop %v10679
        %v10717 = vmul.f32 %v10650, %v10716
        %v10718 = vrcp.pop %v10685
        %v10719 = vmul.f32 %v10651, %v10718
        %v10720 = vrcp.pop %v10691
        %v10721 = vmul.f32 %v10652, %v10720
        %v10722 = vrcp.pop %v10697
        %v10723 = vmul.f32 %v10653, %v10722
        %v10724 = vrcp.pop %v10703
        %v10725 = vmul.f32 %v10654, %v10724
        %v10726 = vrcp.pop %v10709
        %v10727 = vmul.f32 %v10655, %v10726
        %10728 = vst [vmem:[%s312] sm:$0xff] %v10711
        %10729 = vst [vmem:[%s312 + $0x8] sm:$0xff] %v10713
        %10730 = vst [vmem:[%s312 + $0x10] sm:$0xff] %v10715
        %10731 = vst [vmem:[%s312 + $0x18] sm:$0xff] %v10717
        %10732 = vst [vmem:[%s312 + $0x20] sm:$0xff] %v10719
        %10733 = vst [vmem:[%s312 + $0x28] sm:$0xff] %v10721
        %10734 = vst [vmem:[%s312 + $0x30] sm:$0xff] %v10723
        %10735 = vst [vmem:[%s312 + $0x38] sm:$0xff] %v10725
        %10736 = vst [vmem:[%s312 + $0x40] sm:$0xff] %v10727
        %s10737 = sand.u32 %s153, 1
        %s10738 = scalar_lea.sflag [#allocation4], %s10737
        %s10739 = sand.u32 %s153, 1
        %s10740 = smul.addr %s10739, 72
        %s10741 = scalar_lea.vmem [#allocation7], %s10740
        %s10742 = sand.u32 %s181, 1
        %s10743 = scalar_lea.sflag [#allocation9], %s10742
        %s10744 = sand.u32 %s181, 1
        %s10745 = smul.addr %s10744, 72
        %s10746 = scalar_lea.vmem [#allocation8], %s10745
        // Predicated region
        $region45: #{tpu_custom_call.1} parent=35 // pred_check
          %p10747 = pneg %p163
        $region46: #{tpu_custom_call.1} parent=35 // pred_check_branch
          %10749 = sbr.rel (%p10747) target = $region48
        $region47: #{tpu_custom_call.1} parent=35 // pred_region
          %s10750 = smul.u32 9, %s34
          %s10752 = ssub.s32 1152, 1152
          %10753 = vsyncadd %s10738, %s10752
          %s10754 = smul.addr %s33, 9
          %s10755 = sadd.s32 %s10750, %s10754
          %s10756 = smul.addr %s10755, 128
          %s10757 = scalar_lea.hbm %s4, %s10756
          %s10759 = sshll.u32 %s10741, 4
          %s10760 = int_to_ptr.vmem [resolvable:$true] %s10759
          %10762 = dma.vmem_to_hbm [thread:$0]  %s10760, 1152, %s10757, %s10738
        $region48: #{tpu_custom_call.1} parent=35 // pred_fallthru
          _
        // Predicated region
        $region49: #{tpu_custom_call.1} parent=35 // pred_check
          %p10763 = pneg %p191
        $region50: #{tpu_custom_call.1} parent=35 // pred_check_branch
          %10765 = sbr.rel (%p10763) target = $region52
        $region51: #{tpu_custom_call.1} parent=35 // pred_region
          %s10766 = smul.u32 9, %s34
          %s10768 = ssub.s32 1152, 1152
          %10769 = vsyncadd %s10743, %s10768
          %s10770 = smul.addr %s33, 9
          %s10771 = sadd.s32 %s10766, %s10770
          %s10772 = smul.addr %s10771, 128
          %s10773 = scalar_lea.hbm %s5, %s10772
          %s10775 = sshll.u32 %s10746, 4
          %s10776 = int_to_ptr.vmem [resolvable:$true] %s10775
          %10778 = dma.vmem_to_hbm [thread:$0]  %s10776, 1152, %s10773, %s10743
        $region52: #{tpu_custom_call.1} parent=35 // pred_fallthru
          _
      $region36: #{tpu_custom_call.1} parent=5 // pred_fallthru
        _
      %p10779 = scmp.le.s32.totalorder 2, %s24
      // Predicated region
      $region53: #{tpu_custom_call.1} parent=5 // pred_check
        %p10780 = pneg %p10779
      $region54: #{tpu_custom_call.1} parent=5 // pred_check_branch
        %10782 = sbr.rel (%p10780) target = $region56
      $region55: #{tpu_custom_call.1} parent=5 // pred_region
        %s10783 = ssub.s32 %s24, 2
        // Predicated region
        $region57: #{tpu_custom_call.1} parent=55 // pred_check
          %p10784 = pneg %p169
        $region58: #{tpu_custom_call.1} parent=55 // pred_check_branch
          %10786 = sbr.rel (%p10784) target = $region60
        $region59: #{tpu_custom_call.1} parent=55 // pred_region
          %s10787 = sand.u32 %s154, 1
          %s10788 = scalar_lea.sflag [#allocation4], %s10787
          %s10789 = sand.u32 %s154, 1
          %s10790 = smul.addr %s10789, 72
          %s10791 = scalar_lea.vmem [#allocation7], %s10790
          %10792 = dma.done %s10788, 1152
        $region60: #{tpu_custom_call.1} parent=55 // pred_fallthru
          _
        // Predicated region
        $region61: #{tpu_custom_call.1} parent=55 // pred_check
          %p10793 = pneg %p197
        $region62: #{tpu_custom_call.1} parent=55 // pred_check_branch
          %10795 = sbr.rel (%p10793) target = $region64
        $region63: #{tpu_custom_call.1} parent=55 // pred_region
          %s10796 = sand.u32 %s182, 1
          %s10797 = scalar_lea.sflag [#allocation9], %s10796
          %s10798 = sand.u32 %s182, 1
          %s10799 = smul.addr %s10798, 72
          %s10800 = scalar_lea.vmem [#allocation8], %s10799
          %10801 = dma.done %s10797, 1152
        $region64: #{tpu_custom_call.1} parent=55 // pred_fallthru
          _
      $region56: #{tpu_custom_call.1} parent=5 // pred_fallthru
        _
    $region6: #{tpu_custom_call.1} parent=1 // loop_footer
      %s28 = sadd.s32 1, %s24
    $region7: #{tpu_custom_call.1} parent=1 // loop_footer_branch
      %23 = sbr.rel target = $region3
    $region8: #{tpu_custom_call.1} parent=1 // loop_exit
      _
    %10802 = vsyncpa [#allocation3], 1
    %s10803 = scalar_lea.sflag [#allocation3], 1
    %10804 = vsyncpa %s10803, 1
    %10805 = vsyncpa [#allocation6], 1
    %s10806 = scalar_lea.sflag [#allocation6], 1
    %10807 = vsyncpa %s10806, 1
    %10808 = vsyncpa [#allocation4], 1
    %s10809 = scalar_lea.sflag [#allocation4], 1
    %10810 = vsyncpa %s10809, 1
    %10811 = vsyncpa [#allocation9], 1
    %s10812 = scalar_lea.sflag [#allocation9], 1
    %10813 = vsyncpa %s10812, 1

</llo_original>
